<compile_context>
chip_gen: v7x
topology: tpu7x:2x2x1
jax: 0.10.0
libtpu: 0.0.40
codegen_flags: <defaults>
</compile_context>

<pallas_src>
import math
from functools import partial

import jax
import jax.numpy as jnp
import numpy as np
from jax import lax
from jax.experimental import pallas as pl
from jax.experimental.pallas import tpu as pltpu

# column layout of the packed (4C, 16) per-channel / FF-bias parameter slab
_COL = dict(gn_g=0, gn_b=1, bci=2, ln1_g=3, ln1_b=4, bo1=5,
            ln2_g=6, ln2_b=7, bo2=8, ln3_g=9, ln3_b=10, bg2=11, bco=12)
_FF_A, _FF_G = 13, 14          # GEGLU biases (valid over all 4C rows)

# row layout of the packed (5, C, C) transposed square-weight slab
_WSQ = dict(conv_in=0, attn1_out=1, attn2_q=2, attn2_out=3, conv_out=4)


# ----------------------------- in-kernel helpers -----------------------------
def _erf_f32(x):
    # Abramowitz & Stegun 7.1.26 rational approximation (|err| ~1.5e-7);
    # only exp/mul/add/where, all of which lower cleanly in Mosaic.
    p = 0.3275911
    a1, a2, a3, a4, a5 = 0.254829592, -0.284496736, 1.421413741, -1.453152027, 1.061405429
    sgn = jnp.where(x >= 0.0, 1.0, -1.0)
    ax = jnp.abs(x)
    t = 1.0 / (1.0 + p * ax)
    poly = t * (a1 + t * (a2 + t * (a3 + t * (a4 + t * a5))))
    return sgn * (1.0 - poly * jnp.exp(-ax * ax))


def _gelu_exact(x):
    # matches torch.nn.GELU() (erf formulation); kept f32 (v5e-safe, accurate)
    return 0.5 * x * (1.0 + _erf_f32(x * (1.0 / math.sqrt(2.0))))


def _bf16_eup_ok():
    # bf16 VPU/EUP elementwise is only profitable/available on v6e / v7x.
    try:
        kind = jax.devices()[0].device_kind.lower()
    except Exception:
        return False
    return any(t in kind for t in ("v6", "v7", "7x"))


# --------------------------------- the kernel --------------------------------
def unet_attn_kernel(
    x_ref, cond_ref,
    colv_ref, gath_ref, scat_ref,
    wsq_ref, wqkv1_ref, wkv2_ref, wg1_ref, wg2t_ref,
    out_ref,
    qa_scr, o_scr,
    *, n_heads, inv_gcnt, eps_gn, eps_ln, exp_dtype,
):
    f32, bf16 = jnp.float32, jnp.bfloat16
    x_in = x_ref[0]                           # (C, HW) f32 -- channel-major
    C, HW = x_in.shape
    dh = C // n_heads

    def col(name):
        i = _COL[name]
        return colv_ref[0:C, i:i + 1]          # (C, 1) f32

    def layernorm_cm(v, g_name, b_name):
        # LayerNorm over channels == reduce over the sublane axis in (C, HW)
        mu = jnp.mean(v, axis=0, keepdims=True)
        vc = v - mu
        var = jnp.mean(vc * vc, axis=0, keepdims=True)
        return vc * lax.rsqrt(var + eps_ln) * col(g_name) + col(b_name)

    def run_heads(get_q, get_k, get_v):
        # Scores computed transposed, (Tk, Tq): stays channel-major / lane-dense,
        # no XLU transposes; softmax reduces over the sublane axis; per-head
        # output projected later, each head's output staged into o_scr so only
        # one head's tile is live at a time.  Softmax scale already folded into
        # the packed Q weights.
        for h in range(n_heads):
            r = h * dh
            qh, kh, vh = get_q(r), get_k(r), get_v(r)      # bf16 (dh, T*)
            sT = lax.dot_general(kh, qh, (((0,), (0,)), ((), ())),
                                 preferred_element_type=f32)          # (Tk, Tq)
            mx = jnp.max(sT, axis=0, keepdims=True)
            e = jnp.exp((sT - mx).astype(exp_dtype))
            inv = pl.reciprocal(jnp.sum(e.astype(f32), axis=0, keepdims=True),
                                approx=True)
            pT = (e * inv.astype(exp_dtype)).astype(bf16)             # (Tk, Tq)
            o_scr[r:r + dh, :] = jnp.dot(vh, pT,
                                         preferred_element_type=f32).astype(bf16)

    # ---- GroupNorm: centered two-pass stats, factored (G,C)/(C,G) combine,
    #      folded into one per-channel scale + shift (single VPU pass over x).
    s1 = jnp.sum(x_in, axis=1, keepdims=True)                         # (C, 1)
    mean_c = jnp.dot(scat_ref[...],
                     jnp.dot(gath_ref[...], s1, preferred_element_type=f32),
                     preferred_element_type=f32) * inv_gcnt
    d = x_in - mean_c
    s2 = jnp.sum(d * d, axis=1, keepdims=True)
    var_c = jnp.dot(scat_ref[...],
                    jnp.dot(gath_ref[...], s2, preferred_element_type=f32),
                    preferred_element_type=f32) * inv_gcnt
    gsc = col("gn_g") * lax.rsqrt(var_c + eps_gn)
    x = x_in * gsc + (col("gn_b") - mean_c * gsc)

    # ---- conv_in (1x1 conv == W^T @ x in channel-major layout)
    x = jnp.dot(wsq_ref[_WSQ["conv_in"]], x.astype(bf16),
                preferred_element_type=f32) + col("bci")

    # ---- self-attention (fused QKV projection staged in VMEM, N = HW)
    res = x
    h1 = layernorm_cm(x, "ln1_g", "ln1_b").astype(bf16)
    qa_scr[0:3 * C, :] = jnp.dot(wqkv1_ref[...], h1,
                                 preferred_element_type=f32).astype(bf16)
    run_heads(lambda r: qa_scr[r:r + dh, :],
              lambda r: qa_scr[C + r:C + r + dh, :],
              lambda r: qa_scr[2 * C + r:2 * C + r + dh, :])
    x = jnp.dot(wsq_ref[_WSQ["attn1_out"]], o_scr[...],
                preferred_element_type=f32) + col("bo1") + res

    # ---- cross-attention (Q staged in VMEM, fused KV from the conditioner)
    res = x
    h2 = layernorm_cm(x, "ln2_g", "ln2_b").astype(bf16)
    qa_scr[0:C, :] = jnp.dot(wsq_ref[_WSQ["attn2_q"]], h2,
                             preferred_element_type=f32).astype(bf16)
    kvT = lax.dot_general(wkv2_ref[...], cond_ref[0],      # cond already bf16
                          (((1,), (1,)), ((), ())),
                          preferred_element_type=f32).astype(bf16)     # (2C, S)
    run_heads(lambda r: qa_scr[r:r + dh, :],
              lambda r: kvT[r:r + dh, :],
              lambda r: kvT[C + r:C + r + dh, :])
    x = jnp.dot(wsq_ref[_WSQ["attn2_out"]], o_scr[...],
                preferred_element_type=f32) + col("bo2") + res

    # ---- GEGLU feed-forward (split a / gate weights; a-half staged in VMEM
    #      to halve register pressure; exact-erf gelu kept in f32)
    res = x
    h3 = layernorm_cm(x, "ln3_g", "ln3_b").astype(bf16)
    qa_scr[...] = (jnp.dot(wg1_ref[0], h3, preferred_element_type=f32)
                   + colv_ref[:, _FF_A:_FF_A + 1]).astype(bf16)        # (4C, HW)
    gT = (jnp.dot(wg1_ref[1], h3, preferred_element_type=f32)
          + colv_ref[:, _FF_G:_FF_G + 1])
    act = qa_scr[...] * _gelu_exact(gT).astype(bf16)
    x = jnp.dot(wg2t_ref[...], act, preferred_element_type=f32) + col("bg2") + res

    # ---- conv_out (1x1) + long residual (re-read the resident input block)
    y = jnp.dot(wsq_ref[_WSQ["conv_out"]], x.astype(bf16),
                preferred_element_type=f32) + col("bco")
    out_ref[0] = y + x_ref[0]


# --------------------------------- wrapper ------------------------------------
def unet_attn_block(x_nchw, cond, packed, *, n_heads, num_groups,
                    eps_gn=1e-6, eps_ln=1e-5):
    B, C, H, W = x_nchw.shape
    HW = H * W
    S, Dc = cond.shape[1], cond.shape[2]
    x_chw = x_nchw.reshape(B, C, HW)       # free: NCHW is already channel-major
    cond_bf16 = cond.astype(jnp.bfloat16)  # only ever a bf16 MXU operand
    inv_gcnt = 1.0 / float((C // num_groups) * HW)
    exp_dtype = jnp.bfloat16 if _bf16_eup_ok() else jnp.float32

    slabs = [packed[k] for k in ("colv", "gath", "scat", "wsq",
                                 "wqkv1", "wkv2", "wg1s", "wg2t")]

    def full_spec(a):
        nd = a.ndim
        return pl.BlockSpec(a.shape, lambda b, _nd=nd: (0,) * _nd)

    in_specs = [pl.BlockSpec((1, C, HW), lambda b: (b, 0, 0)),
                pl.BlockSpec((1, S, Dc), lambda b: (b, 0, 0))] + \
               [full_spec(a) for a in slabs]

    out = pl.pallas_call(
        partial(unet_attn_kernel, n_heads=n_heads, inv_gcnt=inv_gcnt,
                eps_gn=eps_gn, eps_ln=eps_ln, exp_dtype=exp_dtype),
        out_shape=jax.ShapeDtypeStruct((B, C, HW), jnp.float32),
        grid=(B,),
        in_specs=in_specs,
        out_specs=pl.BlockSpec((1, C, HW), lambda b: (b, 0, 0)),
        scratch_shapes=[pltpu.VMEM((4 * C, HW), jnp.bfloat16),   # qkv / q / FF-a
                        pltpu.VMEM((C, HW), jnp.bfloat16)],      # head outputs
        compiler_params=pltpu.CompilerParams(dimension_semantics=("parallel",)),
    )(x_chw, cond_bf16, *slabs)

    return out.reshape(B, C, H, W)


# ------------------------- deterministic parameter init ------------------------
def init_params(key, C, Dc):
    ks = jax.random.split(key, 32)

    def w(k, shape, s):
        return (s * jax.random.normal(k, shape)).astype(jnp.float32)

    return dict(
        gn_g=1.0 + w(ks[0], (1, C), 0.1), gn_b=w(ks[1], (1, C), 0.1),
        wci=w(ks[2], (C, C), 0.05), bci=w(ks[3], (1, C), 0.05),
        ln1_g=1.0 + w(ks[4], (1, C), 0.1), ln1_b=w(ks[5], (1, C), 0.1),
        wq1=w(ks[6], (C, C), 0.05), wk1=w(ks[7], (C, C), 0.05),
        wv1=w(ks[8], (C, C), 0.05), wo1=w(ks[9], (C, C), 0.05),
        bo1=w(ks[10], (1, C), 0.05),
        ln2_g=1.0 + w(ks[11], (1, C), 0.1), ln2_b=w(ks[12], (1, C), 0.1),
        wq2=w(ks[13], (C, C), 0.05), wk2=w(ks[14], (Dc, C), 0.05),
        wv2=w(ks[15], (Dc, C), 0.05), wo2=w(ks[16], (C, C), 0.05),
        bo2=w(ks[17], (1, C), 0.05),
        ln3_g=1.0 + w(ks[18], (1, C), 0.1), ln3_b=w(ks[19], (1, C), 0.1),
        wg1=w(ks[20], (C, 8 * C), 0.05), bg1=w(ks[21], (1, 8 * C), 0.05),
        wg2=w(ks[22], (4 * C, C), 0.05), bg2=w(ks[23], (1, C), 0.05),
        wco=w(ks[24], (C, C), 0.05), bco=w(ks[25], (1, C), 0.05),
    )


def pack_params(p, C, num_groups, n_heads):
    """Pack logical (PyTorch-layout) params into the kernel's slabs:
    one (4C,16) f32 column slab (per-channel gains/biases + GEGLU biases),
    factored GroupNorm group-combine masks, all square weights pre-transposed
    into one bf16 slab (softmax scale folded into the Q weights), fused QKV /
    KV / split-GEGLU weights pre-transposed in bf16."""
    f32, bf16 = jnp.float32, jnp.bfloat16
    scale = 1.0 / math.sqrt(C // n_heads)

    names = sorted(_COL, key=_COL.get)
    cols = [jnp.pad(p[n].reshape(-1), (0, 3 * C)) for n in names]     # (4C,)
    cols += [p["bg1"][0, :4 * C], p["bg1"][0, 4 * C:]]                # FF biases
    colv = jnp.stack(cols, axis=1).astype(f32)                        # (4C, 15)
    colv = jnp.pad(colv, ((0, 0), (0, 16 - colv.shape[1])))           # (4C, 16)

    gid = jnp.arange(C) // (C // num_groups)
    onehot = (gid[None, :] == jnp.arange(num_groups)[:, None]).astype(f32)
    gath = onehot                                                     # (G, C)
    scat = onehot.T                                                   # (C, G)

    wsq = jnp.stack([p["wci"].T, p["wo1"].T, (scale * p["wq2"]).T,
                     p["wo2"].T, p["wco"].T]).astype(bf16)            # (5,C,C)
    wqkv1 = jnp.concatenate([scale * p["wq1"], p["wk1"], p["wv1"]],
                            axis=1).T.astype(bf16)                    # (3C,C)
    wkv2 = jnp.concatenate([p["wk2"], p["wv2"]], axis=1).T.astype(bf16)  # (2C,Dc)
    wg1s = jnp.stack([p["wg1"][:, :4 * C].T, p["wg1"][:, 4 * C:].T]).astype(bf16)
    wg2t = p["wg2"].T.astype(bf16)                                    # (C,4C)

    return dict(colv=colv, gath=gath, scat=scat, wsq=wsq,
                wqkv1=wqkv1, wkv2=wkv2, wg1s=wg1s, wg2t=wg2t)


# ------------------------------ pure-JAX reference -----------------------------
def _ln_ref(x, g, b, eps=1e-5):
    mu = x.mean(-1, keepdims=True)
    var = ((x - mu) ** 2).mean(-1, keepdims=True)
    return (x - mu) / jnp.sqrt(var + eps) * g + b


def _mha_ref(xq, xkv, wq, wk, wv, wo, bo, nh):
    B, Tq, C = xq.shape
    Tk = xkv.shape[1]
    dh = C // nh
    q = (xq @ wq).reshape(B, Tq, nh, dh).transpose(0, 2, 1, 3)
    k = (xkv @ wk).reshape(B, Tk, nh, dh).transpose(0, 2, 1, 3)
    v = (xkv @ wv).reshape(B, Tk, nh, dh).transpose(0, 2, 1, 3)
    s = jnp.einsum("bhqd,bhkd->bhqk", q, k) / math.sqrt(dh)
    p = jax.nn.softmax(s, axis=-1)
    o = jnp.einsum("bhqk,bhkd->bhqd", p, v).transpose(0, 2, 1, 3).reshape(B, Tq, C)
    return o @ wo + bo


def reference_forward(x_nchw, cond, p, n_heads, num_groups, eps_gn=1e-6):
    B, C, H, W = x_nchw.shape
    HW = H * W
    res_long = x_nchw
    xg = x_nchw.reshape(B, num_groups, (C // num_groups) * HW)
    mu = xg.mean(-1, keepdims=True)
    var = xg.var(-1, keepdims=True)
    xg = (xg - mu) / jnp.sqrt(var + eps_gn)
    x = xg.reshape(B, C, H, W) * p["gn_g"].reshape(1, C, 1, 1) + p["gn_b"].reshape(1, C, 1, 1)
    x = x.reshape(B, C, HW).transpose(0, 2, 1)
    x = x @ p["wci"] + p["bci"]
    res = x
    h = _ln_ref(x, p["ln1_g"], p["ln1_b"])
    h = _mha_ref(h, h, p["wq1"], p["wk1"], p["wv1"], p["wo1"], p["bo1"], n_heads)
    x = h + res
    res = x
    h = _ln_ref(x, p["ln2_g"], p["ln2_b"])
    h = _mha_ref(h, cond, p["wq2"], p["wk2"], p["wv2"], p["wo2"], p["bo2"], n_heads)
    x = h + res
    res = x
    h = _ln_ref(x, p["ln3_g"], p["ln3_b"])
    hh = h @ p["wg1"] + p["bg1"]
    a, gate = hh[..., :4 * C], hh[..., 4 * C:]
    h = a * jax.nn.gelu(gate, approximate=False)
    h = h @ p["wg2"] + p["bg2"]
    x = h + res
    x = x @ p["wco"] + p["bco"]
    x = x.transpose(0, 2, 1).reshape(B, C, H, W)
    return x + res_long


# ----------------------------------- main --------------------------------------
if __name__ == "__main__":
    n_heads, n_emb = 4, 16
    C = n_heads * n_emb                  # 64 channels
    num_groups = 32                      # module default
    B, H, W = 2, 16, 16                  # HW = 256 -> lane-dense; B=2 -> 2 TCs on v7x
    S, Dc = 16, 128                      # conditioner: seq 16, dim_conditioner 128

    key = jax.random.PRNGKey(0)
    kx, kc, kp = jax.random.split(key, 3)
    x = jax.random.normal(kx, (B, C, H, W), dtype=jnp.float32)
    cond = jax.random.normal(kc, (B, S, Dc), dtype=jnp.float32)
    params = init_params(kp, C, Dc)
    packed = pack_params(params, C, num_groups, n_heads)

    out = unet_attn_block(x, cond, packed, n_heads=n_heads, num_groups=num_groups)
    out = jax.block_until_ready(out)
    assert out.shape == (B, C, H, W)

    # high-precision pure-JAX reference (local context; no global state mutation)
    with jax.default_matmul_precision("float32"):
        ref = reference_forward(x, cond, params, n_heads, num_groups)

    np.testing.assert_allclose(np.asarray(out), np.asarray(ref), atol=2e-2, rtol=2e-2)
    print("KERNEL_OK")
</pallas_src>

<mosaic_0001>
module attributes {stable_mosaic.version = 11 : i64} {
  func.func @unet_attn_kernel(%arg0: i32, %arg1: memref<1x64x256xf32, #tpu.memory_space<vmem>>, %arg2: memref<1x16x128xbf16, #tpu.memory_space<vmem>>, %arg3: memref<256x16xf32, #tpu.memory_space<vmem>>, %arg4: memref<32x64xf32, #tpu.memory_space<vmem>>, %arg5: memref<64x32xf32, #tpu.memory_space<vmem>>, %arg6: memref<5x64x64xbf16, #tpu.memory_space<vmem>>, %arg7: memref<192x64xbf16, #tpu.memory_space<vmem>>, %arg8: memref<128x128xbf16, #tpu.memory_space<vmem>>, %arg9: memref<2x256x64xbf16, #tpu.memory_space<vmem>>, %arg10: memref<64x256xbf16, #tpu.memory_space<vmem>>, %arg11: memref<1x64x256xf32, #tpu.memory_space<vmem>>, %arg12: memref<256x256xbf16, #tpu.memory_space<vmem>>, %arg13: memref<64x256xbf16, #tpu.memory_space<vmem>>) attributes {dimension_semantics = [#tpu.dimension_semantics<parallel>], iteration_bounds = array<i64: 2>, scalar_prefetch = 0 : i64, scratch_operands = 2 : i64, tpu.core_type = #tpu.core_type<tc>, window_params = [{transform_indices = @transform_0, window_bounds = array<i64: 1, 64, 256>}, {transform_indices = @transform_1, window_bounds = array<i64: 1, 16, 128>}, {pipeline_mode = #tpu.pipeline_mode<synchronous>, transform_indices = @transform_2, window_bounds = array<i64: 256, 16>}, {pipeline_mode = #tpu.pipeline_mode<synchronous>, transform_indices = @transform_3, window_bounds = array<i64: 32, 64>}, {pipeline_mode = #tpu.pipeline_mode<synchronous>, transform_indices = @transform_4, window_bounds = array<i64: 64, 32>}, {pipeline_mode = #tpu.pipeline_mode<synchronous>, transform_indices = @transform_5, window_bounds = array<i64: 5, 64, 64>}, {pipeline_mode = #tpu.pipeline_mode<synchronous>, transform_indices = @transform_6, window_bounds = array<i64: 192, 64>}, {pipeline_mode = #tpu.pipeline_mode<synchronous>, transform_indices = @transform_7, window_bounds = array<i64: 128, 128>}, {pipeline_mode = #tpu.pipeline_mode<synchronous>, transform_indices = @transform_8, window_bounds = array<i64: 2, 256, 64>}, {pipeline_mode = #tpu.pipeline_mode<synchronous>, transform_indices = @transform_9, window_bounds = array<i64: 64, 256>}, {transform_indices = @transform_10, window_bounds = array<i64: 1, 64, 256>}]} {
    %c0 = arith.constant 0 : index
    %c0_0 = arith.constant 0 : index
    %c0_1 = arith.constant 0 : index
    %0 = vector.load %arg1[%c0, %c0_0, %c0_1] : memref<1x64x256xf32, #tpu.memory_space<vmem>>, vector<1x64x256xf32>
    %1 = vector.shape_cast %0 : vector<1x64x256xf32> to vector<64x256xf32>
    %cst = arith.constant dense<0.000000e+00> : vector<64xf32>
    %2 = vector.multi_reduction <add>, %1, %cst [1] : vector<64x256xf32> to vector<64xf32>
    %3 = vector.shape_cast %2 : vector<64xf32> to vector<64x1xf32>
    %c0_2 = arith.constant 0 : index
    %c0_3 = arith.constant 0 : index
    %4 = vector.load %arg5[%c0_2, %c0_3] : memref<64x32xf32, #tpu.memory_space<vmem>>, vector<64x32xf32>
    %c0_4 = arith.constant 0 : index
    %c0_5 = arith.constant 0 : index
    %5 = vector.load %arg4[%c0_4, %c0_5] : memref<32x64xf32, #tpu.memory_space<vmem>>, vector<32x64xf32>
    %cst_6 = arith.constant dense<0.000000e+00> : vector<32x1xf32>
    %6 = tpu.matmul %5, %3, %cst_6 {dimension_numbers = #tpu.dot_dimension_numbers<[1], [0], [0], [1], [0, 0, 1, 1], [], []>} : vector<32x64xf32>, vector<64x1xf32>, vector<32x1xf32> -> vector<32x1xf32>
    %cst_7 = arith.constant dense<0.000000e+00> : vector<64x1xf32>
    %7 = tpu.matmul %4, %6, %cst_7 {dimension_numbers = #tpu.dot_dimension_numbers<[1], [0], [0], [1], [0, 0, 1, 1], [], []>} : vector<64x32xf32>, vector<32x1xf32>, vector<64x1xf32> -> vector<64x1xf32>
    %cst_8 = arith.constant 0.001953125 : f32
    %8 = vector.broadcast %cst_8 : f32 to vector<64x1xf32>
    %9 = arith.mulf %7, %8 : vector<64x1xf32>
    %10 = vector.broadcast %9 : vector<64x1xf32> to vector<64x256xf32>
    %11 = arith.subf %1, %10 : vector<64x256xf32>
    %12 = arith.mulf %11, %11 : vector<64x256xf32>
    %cst_9 = arith.constant dense<0.000000e+00> : vector<64xf32>
    %13 = vector.multi_reduction <add>, %12, %cst_9 [1] : vector<64x256xf32> to vector<64xf32>
    %14 = vector.shape_cast %13 : vector<64xf32> to vector<64x1xf32>
    %c0_10 = arith.constant 0 : index
    %c0_11 = arith.constant 0 : index
    %15 = vector.load %arg5[%c0_10, %c0_11] : memref<64x32xf32, #tpu.memory_space<vmem>>, vector<64x32xf32>
    %c0_12 = arith.constant 0 : index
    %c0_13 = arith.constant 0 : index
    %16 = vector.load %arg4[%c0_12, %c0_13] : memref<32x64xf32, #tpu.memory_space<vmem>>, vector<32x64xf32>
    %cst_14 = arith.constant dense<0.000000e+00> : vector<32x1xf32>
    %17 = tpu.matmul %16, %14, %cst_14 {dimension_numbers = #tpu.dot_dimension_numbers<[1], [0], [0], [1], [0, 0, 1, 1], [], []>} : vector<32x64xf32>, vector<64x1xf32>, vector<32x1xf32> -> vector<32x1xf32>
    %cst_15 = arith.constant dense<0.000000e+00> : vector<64x1xf32>
    %18 = tpu.matmul %15, %17, %cst_15 {dimension_numbers = #tpu.dot_dimension_numbers<[1], [0], [0], [1], [0, 0, 1, 1], [], []>} : vector<64x32xf32>, vector<32x1xf32>, vector<64x1xf32> -> vector<64x1xf32>
    %cst_16 = arith.constant 0.001953125 : f32
    %19 = vector.broadcast %cst_16 : f32 to vector<64x1xf32>
    %20 = arith.mulf %18, %19 : vector<64x1xf32>
    %c0_17 = arith.constant 0 : index
    %c0_18 = arith.constant 0 : index
    %21 = vector.load %arg3[%c0_17, %c0_18] : memref<256x16xf32, #tpu.memory_space<vmem>>, vector<64x1xf32>
    %cst_19 = arith.constant 9.99999997E-7 : f32
    %22 = vector.broadcast %cst_19 : f32 to vector<64x1xf32>
    %23 = arith.addf %20, %22 : vector<64x1xf32>
    %24 = math.rsqrt %23 : vector<64x1xf32>
    %25 = arith.mulf %21, %24 : vector<64x1xf32>
    %26 = vector.broadcast %25 : vector<64x1xf32> to vector<64x256xf32>
    %27 = arith.mulf %1, %26 : vector<64x256xf32>
    %c0_20 = arith.constant 0 : index
    %c1 = arith.constant 1 : index
    %28 = vector.load %arg3[%c0_20, %c1] : memref<256x16xf32, #tpu.memory_space<vmem>>, vector<64x1xf32>
    %29 = arith.mulf %9, %25 : vector<64x1xf32>
    %30 = arith.subf %28, %29 : vector<64x1xf32>
    %31 = vector.broadcast %30 : vector<64x1xf32> to vector<64x256xf32>
    %32 = arith.addf %27, %31 : vector<64x256xf32>
    %c0_21 = arith.constant 0 : index
    %c0_22 = arith.constant 0 : index
    %c0_23 = arith.constant 0 : index
    %33 = vector.load %arg6[%c0_21, %c0_22, %c0_23] : memref<5x64x64xbf16, #tpu.memory_space<vmem>>, vector<1x64x64xbf16>
    %34 = vector.shape_cast %33 : vector<1x64x64xbf16> to vector<64x64xbf16>
    %35 = arith.truncf %32 : vector<64x256xf32> to vector<64x256xbf16>
    %cst_24 = arith.constant dense<0.000000e+00> : vector<64x256xf32>
    %36 = tpu.matmul %34, %35, %cst_24 {dimension_numbers = #tpu.dot_dimension_numbers<[1], [0], [0], [1], [0, 0, 1, 1], [], []>} : vector<64x64xbf16>, vector<64x256xbf16>, vector<64x256xf32> -> vector<64x256xf32>
    %c0_25 = arith.constant 0 : index
    %c2 = arith.constant 2 : index
    %37 = vector.load %arg3[%c0_25, %c2] : memref<256x16xf32, #tpu.memory_space<vmem>>, vector<64x1xf32>
    %38 = vector.broadcast %37 : vector<64x1xf32> to vector<64x256xf32>
    %39 = arith.addf %36, %38 : vector<64x256xf32>
    %cst_26 = arith.constant dense<0.000000e+00> : vector<256xf32>
    %40 = vector.multi_reduction <add>, %39, %cst_26 [0] : vector<64x256xf32> to vector<256xf32>
    %41 = vector.shape_cast %40 : vector<256xf32> to vector<1x256xf32>
    %cst_27 = arith.constant 6.400000e+01 : f32
    %42 = vector.broadcast %cst_27 : f32 to vector<1x256xf32>
    %43 = arith.divf %41, %42 : vector<1x256xf32>
    %44 = vector.broadcast %43 : vector<1x256xf32> to vector<64x256xf32>
    %45 = arith.subf %39, %44 : vector<64x256xf32>
    %46 = arith.mulf %45, %45 : vector<64x256xf32>
    %cst_28 = arith.constant dense<0.000000e+00> : vector<256xf32>
    %47 = vector.multi_reduction <add>, %46, %cst_28 [0] : vector<64x256xf32> to vector<256xf32>
    %48 = vector.shape_cast %47 : vector<256xf32> to vector<1x256xf32>
    %cst_29 = arith.constant 6.400000e+01 : f32
    %49 = vector.broadcast %cst_29 : f32 to vector<1x256xf32>
    %50 = arith.divf %48, %49 : vector<1x256xf32>
    %cst_30 = arith.constant 9.99999974E-6 : f32
    %51 = vector.broadcast %cst_30 : f32 to vector<1x256xf32>
    %52 = arith.addf %50, %51 : vector<1x256xf32>
    %53 = math.rsqrt %52 : vector<1x256xf32>
    %54 = vector.broadcast %53 : vector<1x256xf32> to vector<64x256xf32>
    %55 = arith.mulf %45, %54 : vector<64x256xf32>
    %c0_31 = arith.constant 0 : index
    %c3 = arith.constant 3 : index
    %56 = vector.load %arg3[%c0_31, %c3] : memref<256x16xf32, #tpu.memory_space<vmem>>, vector<64x1xf32>
    %57 = vector.broadcast %56 : vector<64x1xf32> to vector<64x256xf32>
    %58 = arith.mulf %55, %57 : vector<64x256xf32>
    %c0_32 = arith.constant 0 : index
    %c4 = arith.constant 4 : index
    %59 = vector.load %arg3[%c0_32, %c4] : memref<256x16xf32, #tpu.memory_space<vmem>>, vector<64x1xf32>
    %60 = vector.broadcast %59 : vector<64x1xf32> to vector<64x256xf32>
    %61 = arith.addf %58, %60 : vector<64x256xf32>
    %62 = arith.truncf %61 : vector<64x256xf32> to vector<64x256xbf16>
    %c0_33 = arith.constant 0 : index
    %c0_34 = arith.constant 0 : index
    %63 = vector.load %arg7[%c0_33, %c0_34] : memref<192x64xbf16, #tpu.memory_space<vmem>>, vector<192x64xbf16>
    %cst_35 = arith.constant dense<0.000000e+00> : vector<192x256xf32>
    %64 = tpu.matmul %63, %62, %cst_35 {dimension_numbers = #tpu.dot_dimension_numbers<[1], [0], [0], [1], [0, 0, 1, 1], [], []>} : vector<192x64xbf16>, vector<64x256xbf16>, vector<192x256xf32> -> vector<192x256xf32>
    %65 = arith.truncf %64 : vector<192x256xf32> to vector<192x256xbf16>
    %c0_36 = arith.constant 0 : index
    %c0_37 = arith.constant 0 : index
    %66 = vector.load %arg12[%c0_36, %c0_37] : memref<256x256xbf16, #tpu.memory_space<vmem>>, vector<192x256xbf16>
    tpu.vector_store %arg12[%c0_36, %c0_37], %65 {strides = array<i32>} : memref<256x256xbf16, #tpu.memory_space<vmem>>, vector<192x256xbf16>,
    %c0_38 = arith.constant 0 : index
    %c0_39 = arith.constant 0 : index
    %67 = vector.load %arg12[%c0_38, %c0_39] : memref<256x256xbf16, #tpu.memory_space<vmem>>, vector<16x256xbf16>
    %c64 = arith.constant 64 : index
    %c0_40 = arith.constant 0 : index
    %68 = vector.load %arg12[%c64, %c0_40] : memref<256x256xbf16, #tpu.memory_space<vmem>>, vector<16x256xbf16>
    %c128 = arith.constant 128 : index
    %c0_41 = arith.constant 0 : index
    %69 = vector.load %arg12[%c128, %c0_41] : memref<256x256xbf16, #tpu.memory_space<vmem>>, vector<16x256xbf16>
    %cst_42 = arith.constant dense<0.000000e+00> : vector<256x256xf32>
    %70 = tpu.matmul %68, %67, %cst_42 {dimension_numbers = #tpu.dot_dimension_numbers<[0], [0], [1], [1], [0, 1, 1, 1], [], []>} : vector<16x256xbf16>, vector<16x256xbf16>, vector<256x256xf32> -> vector<256x256xf32>
    %cst_43 = arith.constant dense<0xFF800000> : vector<256xf32>
    %71 = vector.multi_reduction <maximumf>, %70, %cst_43 [0] : vector<256x256xf32> to vector<256xf32>
    %72 = vector.shape_cast %71 : vector<256xf32> to vector<1x256xf32>
    %73 = vector.broadcast %72 : vector<1x256xf32> to vector<256x256xf32>
    %74 = arith.subf %70, %73 : vector<256x256xf32>
    %75 = math.exp %74 : vector<256x256xf32>
    %cst_44 = arith.constant dense<0.000000e+00> : vector<256xf32>
    %76 = vector.multi_reduction <add>, %75, %cst_44 [0] : vector<256x256xf32> to vector<256xf32>
    %77 = vector.shape_cast %76 : vector<256xf32> to vector<1x256xf32>
    %78 = tpu.reciprocal %77 {approx = true} : vector<1x256xf32> -> vector<1x256xf32>
    %79 = vector.broadcast %78 : vector<1x256xf32> to vector<256x256xf32>
    %80 = arith.mulf %75, %79 : vector<256x256xf32>
    %81 = arith.truncf %80 : vector<256x256xf32> to vector<256x256xbf16>
    %cst_45 = arith.constant dense<0.000000e+00> : vector<16x256xf32>
    %82 = tpu.matmul %69, %81, %cst_45 {dimension_numbers = #tpu.dot_dimension_numbers<[1], [0], [0], [1], [0, 0, 1, 1], [], []>} : vector<16x256xbf16>, vector<256x256xbf16>, vector<16x256xf32> -> vector<16x256xf32>
    %83 = arith.truncf %82 : vector<16x256xf32> to vector<16x256xbf16>
    %c0_46 = arith.constant 0 : index
    %c0_47 = arith.constant 0 : index
    %84 = vector.load %arg13[%c0_46, %c0_47] : memref<64x256xbf16, #tpu.memory_space<vmem>>, vector<16x256xbf16>
    tpu.vector_store %arg13[%c0_46, %c0_47], %83 {strides = array<i32>} : memref<64x256xbf16, #tpu.memory_space<vmem>>, vector<16x256xbf16>,
    %c16 = arith.constant 16 : index
    %c0_48 = arith.constant 0 : index
    %85 = vector.load %arg12[%c16, %c0_48] : memref<256x256xbf16, #tpu.memory_space<vmem>>, vector<16x256xbf16>
    %c80 = arith.constant 80 : index
    %c0_49 = arith.constant 0 : index
    %86 = vector.load %arg12[%c80, %c0_49] : memref<256x256xbf16, #tpu.memory_space<vmem>>, vector<16x256xbf16>
    %c144 = arith.constant 144 : index
    %c0_50 = arith.constant 0 : index
    %87 = vector.load %arg12[%c144, %c0_50] : memref<256x256xbf16, #tpu.memory_space<vmem>>, vector<16x256xbf16>
    %cst_51 = arith.constant dense<0.000000e+00> : vector<256x256xf32>
    %88 = tpu.matmul %86, %85, %cst_51 {dimension_numbers = #tpu.dot_dimension_numbers<[0], [0], [1], [1], [0, 1, 1, 1], [], []>} : vector<16x256xbf16>, vector<16x256xbf16>, vector<256x256xf32> -> vector<256x256xf32>
    %cst_52 = arith.constant dense<0xFF800000> : vector<256xf32>
    %89 = vector.multi_reduction <maximumf>, %88, %cst_52 [0] : vector<256x256xf32> to vector<256xf32>
    %90 = vector.shape_cast %89 : vector<256xf32> to vector<1x256xf32>
    %91 = vector.broadcast %90 : vector<1x256xf32> to vector<256x256xf32>
    %92 = arith.subf %88, %91 : vector<256x256xf32>
    %93 = math.exp %92 : vector<256x256xf32>
    %cst_53 = arith.constant dense<0.000000e+00> : vector<256xf32>
    %94 = vector.multi_reduction <add>, %93, %cst_53 [0] : vector<256x256xf32> to vector<256xf32>
    %95 = vector.shape_cast %94 : vector<256xf32> to vector<1x256xf32>
    %96 = tpu.reciprocal %95 {approx = true} : vector<1x256xf32> -> vector<1x256xf32>
    %97 = vector.broadcast %96 : vector<1x256xf32> to vector<256x256xf32>
    %98 = arith.mulf %93, %97 : vector<256x256xf32>
    %99 = arith.truncf %98 : vector<256x256xf32> to vector<256x256xbf16>
    %cst_54 = arith.constant dense<0.000000e+00> : vector<16x256xf32>
    %100 = tpu.matmul %87, %99, %cst_54 {dimension_numbers = #tpu.dot_dimension_numbers<[1], [0], [0], [1], [0, 0, 1, 1], [], []>} : vector<16x256xbf16>, vector<256x256xbf16>, vector<16x256xf32> -> vector<16x256xf32>
    %101 = arith.truncf %100 : vector<16x256xf32> to vector<16x256xbf16>
    %c16_55 = arith.constant 16 : index
    %c0_56 = arith.constant 0 : index
    %102 = vector.load %arg13[%c16_55, %c0_56] : memref<64x256xbf16, #tpu.memory_space<vmem>>, vector<16x256xbf16>
    tpu.vector_store %arg13[%c16_55, %c0_56], %101 {strides = array<i32>} : memref<64x256xbf16, #tpu.memory_space<vmem>>, vector<16x256xbf16>,
    %c32 = arith.constant 32 : index
    %c0_57 = arith.constant 0 : index
    %103 = vector.load %arg12[%c32, %c0_57] : memref<256x256xbf16, #tpu.memory_space<vmem>>, vector<16x256xbf16>
    %c96 = arith.constant 96 : index
    %c0_58 = arith.constant 0 : index
    %104 = vector.load %arg12[%c96, %c0_58] : memref<256x256xbf16, #tpu.memory_space<vmem>>, vector<16x256xbf16>
    %c160 = arith.constant 160 : index
    %c0_59 = arith.constant 0 : index
    %105 = vector.load %arg12[%c160, %c0_59] : memref<256x256xbf16, #tpu.memory_space<vmem>>, vector<16x256xbf16>
    %cst_60 = arith.constant dense<0.000000e+00> : vector<256x256xf32>
    %106 = tpu.matmul %104, %103, %cst_60 {dimension_numbers = #tpu.dot_dimension_numbers<[0], [0], [1], [1], [0, 1, 1, 1], [], []>} : vector<16x256xbf16>, vector<16x256xbf16>, vector<256x256xf32> -> vector<256x256xf32>
    %cst_61 = arith.constant dense<0xFF800000> : vector<256xf32>
    %107 = vector.multi_reduction <maximumf>, %106, %cst_61 [0] : vector<256x256xf32> to vector<256xf32>
    %108 = vector.shape_cast %107 : vector<256xf32> to vector<1x256xf32>
    %109 = vector.broadcast %108 : vector<1x256xf32> to vector<256x256xf32>
    %110 = arith.subf %106, %109 : vector<256x256xf32>
    %111 = math.exp %110 : vector<256x256xf32>
    %cst_62 = arith.constant dense<0.000000e+00> : vector<256xf32>
    %112 = vector.multi_reduction <add>, %111, %cst_62 [0] : vector<256x256xf32> to vector<256xf32>
    %113 = vector.shape_cast %112 : vector<256xf32> to vector<1x256xf32>
    %114 = tpu.reciprocal %113 {approx = true} : vector<1x256xf32> -> vector<1x256xf32>
    %115 = vector.broadcast %114 : vector<1x256xf32> to vector<256x256xf32>
    %116 = arith.mulf %111, %115 : vector<256x256xf32>
    %117 = arith.truncf %116 : vector<256x256xf32> to vector<256x256xbf16>
    %cst_63 = arith.constant dense<0.000000e+00> : vector<16x256xf32>
    %118 = tpu.matmul %105, %117, %cst_63 {dimension_numbers = #tpu.dot_dimension_numbers<[1], [0], [0], [1], [0, 0, 1, 1], [], []>} : vector<16x256xbf16>, vector<256x256xbf16>, vector<16x256xf32> -> vector<16x256xf32>
    %119 = arith.truncf %118 : vector<16x256xf32> to vector<16x256xbf16>
    %c32_64 = arith.constant 32 : index
    %c0_65 = arith.constant 0 : index
    %120 = vector.load %arg13[%c32_64, %c0_65] : memref<64x256xbf16, #tpu.memory_space<vmem>>, vector<16x256xbf16>
    tpu.vector_store %arg13[%c32_64, %c0_65], %119 {strides = array<i32>} : memref<64x256xbf16, #tpu.memory_space<vmem>>, vector<16x256xbf16>,
    %c48 = arith.constant 48 : index
    %c0_66 = arith.constant 0 : index
    %121 = vector.load %arg12[%c48, %c0_66] : memref<256x256xbf16, #tpu.memory_space<vmem>>, vector<16x256xbf16>
    %c112 = arith.constant 112 : index
    %c0_67 = arith.constant 0 : index
    %122 = vector.load %arg12[%c112, %c0_67] : memref<256x256xbf16, #tpu.memory_space<vmem>>, vector<16x256xbf16>
    %c176 = arith.constant 176 : index
    %c0_68 = arith.constant 0 : index
    %123 = vector.load %arg12[%c176, %c0_68] : memref<256x256xbf16, #tpu.memory_space<vmem>>, vector<16x256xbf16>
    %cst_69 = arith.constant dense<0.000000e+00> : vector<256x256xf32>
    %124 = tpu.matmul %122, %121, %cst_69 {dimension_numbers = #tpu.dot_dimension_numbers<[0], [0], [1], [1], [0, 1, 1, 1], [], []>} : vector<16x256xbf16>, vector<16x256xbf16>, vector<256x256xf32> -> vector<256x256xf32>
    %cst_70 = arith.constant dense<0xFF800000> : vector<256xf32>
    %125 = vector.multi_reduction <maximumf>, %124, %cst_70 [0] : vector<256x256xf32> to vector<256xf32>
    %126 = vector.shape_cast %125 : vector<256xf32> to vector<1x256xf32>
    %127 = vector.broadcast %126 : vector<1x256xf32> to vector<256x256xf32>
    %128 = arith.subf %124, %127 : vector<256x256xf32>
    %129 = math.exp %128 : vector<256x256xf32>
    %cst_71 = arith.constant dense<0.000000e+00> : vector<256xf32>
    %130 = vector.multi_reduction <add>, %129, %cst_71 [0] : vector<256x256xf32> to vector<256xf32>
    %131 = vector.shape_cast %130 : vector<256xf32> to vector<1x256xf32>
    %132 = tpu.reciprocal %131 {approx = true} : vector<1x256xf32> -> vector<1x256xf32>
    %133 = vector.broadcast %132 : vector<1x256xf32> to vector<256x256xf32>
    %134 = arith.mulf %129, %133 : vector<256x256xf32>
    %135 = arith.truncf %134 : vector<256x256xf32> to vector<256x256xbf16>
    %cst_72 = arith.constant dense<0.000000e+00> : vector<16x256xf32>
    %136 = tpu.matmul %123, %135, %cst_72 {dimension_numbers = #tpu.dot_dimension_numbers<[1], [0], [0], [1], [0, 0, 1, 1], [], []>} : vector<16x256xbf16>, vector<256x256xbf16>, vector<16x256xf32> -> vector<16x256xf32>
    %137 = arith.truncf %136 : vector<16x256xf32> to vector<16x256xbf16>
    %c48_73 = arith.constant 48 : index
    %c0_74 = arith.constant 0 : index
    %138 = vector.load %arg13[%c48_73, %c0_74] : memref<64x256xbf16, #tpu.memory_space<vmem>>, vector<16x256xbf16>
    tpu.vector_store %arg13[%c48_73, %c0_74], %137 {strides = array<i32>} : memref<64x256xbf16, #tpu.memory_space<vmem>>, vector<16x256xbf16>,
    %c1_75 = arith.constant 1 : index
    %c0_76 = arith.constant 0 : index
    %c0_77 = arith.constant 0 : index
    %139 = vector.load %arg6[%c1_75, %c0_76, %c0_77] : memref<5x64x64xbf16, #tpu.memory_space<vmem>>, vector<1x64x64xbf16>
    %140 = vector.shape_cast %139 : vector<1x64x64xbf16> to vector<64x64xbf16>
    %c0_78 = arith.constant 0 : index
    %c0_79 = arith.constant 0 : index
    %141 = vector.load %arg13[%c0_78, %c0_79] : memref<64x256xbf16, #tpu.memory_space<vmem>>, vector<64x256xbf16>
    %cst_80 = arith.constant dense<0.000000e+00> : vector<64x256xf32>
    %142 = tpu.matmul %140, %141, %cst_80 {dimension_numbers = #tpu.dot_dimension_numbers<[1], [0], [0], [1], [0, 0, 1, 1], [], []>} : vector<64x64xbf16>, vector<64x256xbf16>, vector<64x256xf32> -> vector<64x256xf32>
    %c0_81 = arith.constant 0 : index
    %c5 = arith.constant 5 : index
    %143 = vector.load %arg3[%c0_81, %c5] : memref<256x16xf32, #tpu.memory_space<vmem>>, vector<64x1xf32>
    %144 = vector.broadcast %143 : vector<64x1xf32> to vector<64x256xf32>
    %145 = arith.addf %142, %144 : vector<64x256xf32>
    %146 = arith.addf %145, %39 : vector<64x256xf32>
    %cst_82 = arith.constant dense<0.000000e+00> : vector<256xf32>
    %147 = vector.multi_reduction <add>, %146, %cst_82 [0] : vector<64x256xf32> to vector<256xf32>
    %148 = vector.shape_cast %147 : vector<256xf32> to vector<1x256xf32>
    %cst_83 = arith.constant 6.400000e+01 : f32
    %149 = vector.broadcast %cst_83 : f32 to vector<1x256xf32>
    %150 = arith.divf %148, %149 : vector<1x256xf32>
    %151 = vector.broadcast %150 : vector<1x256xf32> to vector<64x256xf32>
    %152 = arith.subf %146, %151 : vector<64x256xf32>
    %153 = arith.mulf %152, %152 : vector<64x256xf32>
    %cst_84 = arith.constant dense<0.000000e+00> : vector<256xf32>
    %154 = vector.multi_reduction <add>, %153, %cst_84 [0] : vector<64x256xf32> to vector<256xf32>
    %155 = vector.shape_cast %154 : vector<256xf32> to vector<1x256xf32>
    %cst_85 = arith.constant 6.400000e+01 : f32
    %156 = vector.broadcast %cst_85 : f32 to vector<1x256xf32>
    %157 = arith.divf %155, %156 : vector<1x256xf32>
    %cst_86 = arith.constant 9.99999974E-6 : f32
    %158 = vector.broadcast %cst_86 : f32 to vector<1x256xf32>
    %159 = arith.addf %157, %158 : vector<1x256xf32>
    %160 = math.rsqrt %159 : vector<1x256xf32>
    %161 = vector.broadcast %160 : vector<1x256xf32> to vector<64x256xf32>
    %162 = arith.mulf %152, %161 : vector<64x256xf32>
    %c0_87 = arith.constant 0 : index
    %c6 = arith.constant 6 : index
    %163 = vector.load %arg3[%c0_87, %c6] : memref<256x16xf32, #tpu.memory_space<vmem>>, vector<64x1xf32>
    %164 = vector.broadcast %163 : vector<64x1xf32> to vector<64x256xf32>
    %165 = arith.mulf %162, %164 : vector<64x256xf32>
    %c0_88 = arith.constant 0 : index
    %c7 = arith.constant 7 : index
    %166 = vector.load %arg3[%c0_88, %c7] : memref<256x16xf32, #tpu.memory_space<vmem>>, vector<64x1xf32>
    %167 = vector.broadcast %166 : vector<64x1xf32> to vector<64x256xf32>
    %168 = arith.addf %165, %167 : vector<64x256xf32>
    %169 = arith.truncf %168 : vector<64x256xf32> to vector<64x256xbf16>
    %c2_89 = arith.constant 2 : index
    %c0_90 = arith.constant 0 : index
    %c0_91 = arith.constant 0 : index
    %170 = vector.load %arg6[%c2_89, %c0_90, %c0_91] : memref<5x64x64xbf16, #tpu.memory_space<vmem>>, vector<1x64x64xbf16>
    %171 = vector.shape_cast %170 : vector<1x64x64xbf16> to vector<64x64xbf16>
    %cst_92 = arith.constant dense<0.000000e+00> : vector<64x256xf32>
    %172 = tpu.matmul %171, %169, %cst_92 {dimension_numbers = #tpu.dot_dimension_numbers<[1], [0], [0], [1], [0, 0, 1, 1], [], []>} : vector<64x64xbf16>, vector<64x256xbf16>, vector<64x256xf32> -> vector<64x256xf32>
    %173 = arith.truncf %172 : vector<64x256xf32> to vector<64x256xbf16>
    %c0_93 = arith.constant 0 : index
    %c0_94 = arith.constant 0 : index
    %174 = vector.load %arg12[%c0_93, %c0_94] : memref<256x256xbf16, #tpu.memory_space<vmem>>, vector<64x256xbf16>
    tpu.vector_store %arg12[%c0_93, %c0_94], %173 {strides = array<i32>} : memref<256x256xbf16, #tpu.memory_space<vmem>>, vector<64x256xbf16>,
    %c0_95 = arith.constant 0 : index
    %c0_96 = arith.constant 0 : index
    %175 = vector.load %arg8[%c0_95, %c0_96] : memref<128x128xbf16, #tpu.memory_space<vmem>>, vector<128x128xbf16>
    %c0_97 = arith.constant 0 : index
    %c0_98 = arith.constant 0 : index
    %c0_99 = arith.constant 0 : index
    %176 = vector.load %arg2[%c0_97, %c0_98, %c0_99] : memref<1x16x128xbf16, #tpu.memory_space<vmem>>, vector<1x16x128xbf16>
    %177 = vector.shape_cast %176 : vector<1x16x128xbf16> to vector<16x128xbf16>
    %cst_100 = arith.constant dense<0.000000e+00> : vector<128x16xf32>
    %178 = tpu.matmul %175, %177, %cst_100 {dimension_numbers = #tpu.dot_dimension_numbers<[1], [1], [0], [0], [0, 0, 1, 0], [], []>} : vector<128x128xbf16>, vector<16x128xbf16>, vector<128x16xf32> -> vector<128x16xf32>
    %179 = arith.truncf %178 : vector<128x16xf32> to vector<128x16xbf16>
    %c0_101 = arith.constant 0 : index
    %c0_102 = arith.constant 0 : index
    %180 = vector.load %arg12[%c0_101, %c0_102] : memref<256x256xbf16, #tpu.memory_space<vmem>>, vector<16x256xbf16>
    %181 = vector.extract_strided_slice %179 {offsets = [0, 0], sizes = [16, 16], strides = [1, 1]} : vector<128x16xbf16> to vector<16x16xbf16>
    %182 = vector.extract_strided_slice %179 {offsets = [64, 0], sizes = [16, 16], strides = [1, 1]} : vector<128x16xbf16> to vector<16x16xbf16>
    %cst_103 = arith.constant dense<0.000000e+00> : vector<16x256xf32>
    %183 = tpu.matmul %181, %180, %cst_103 {dimension_numbers = #tpu.dot_dimension_numbers<[0], [0], [1], [1], [0, 1, 1, 1], [], []>} : vector<16x16xbf16>, vector<16x256xbf16>, vector<16x256xf32> -> vector<16x256xf32>
    %cst_104 = arith.constant dense<0xFF800000> : vector<256xf32>
    %184 = vector.multi_reduction <maximumf>, %183, %cst_104 [0] : vector<16x256xf32> to vector<256xf32>
    %185 = vector.shape_cast %184 : vector<256xf32> to vector<1x256xf32>
    %186 = vector.broadcast %185 : vector<1x256xf32> to vector<16x256xf32>
    %187 = arith.subf %183, %186 : vector<16x256xf32>
    %188 = math.exp %187 : vector<16x256xf32>
    %cst_105 = arith.constant dense<0.000000e+00> : vector<256xf32>
    %189 = vector.multi_reduction <add>, %188, %cst_105 [0] : vector<16x256xf32> to vector<256xf32>
    %190 = vector.shape_cast %189 : vector<256xf32> to vector<1x256xf32>
    %191 = tpu.reciprocal %190 {approx = true} : vector<1x256xf32> -> vector<1x256xf32>
    %192 = vector.broadcast %191 : vector<1x256xf32> to vector<16x256xf32>
    %193 = arith.mulf %188, %192 : vector<16x256xf32>
    %194 = arith.truncf %193 : vector<16x256xf32> to vector<16x256xbf16>
    %cst_106 = arith.constant dense<0.000000e+00> : vector<16x256xf32>
    %195 = tpu.matmul %182, %194, %cst_106 {dimension_numbers = #tpu.dot_dimension_numbers<[1], [0], [0], [1], [0, 0, 1, 1], [], []>} : vector<16x16xbf16>, vector<16x256xbf16>, vector<16x256xf32> -> vector<16x256xf32>
    %196 = arith.truncf %195 : vector<16x256xf32> to vector<16x256xbf16>
    %c0_107 = arith.constant 0 : index
    %c0_108 = arith.constant 0 : index
    %197 = vector.load %arg13[%c0_107, %c0_108] : memref<64x256xbf16, #tpu.memory_space<vmem>>, vector<16x256xbf16>
    tpu.vector_store %arg13[%c0_107, %c0_108], %196 {strides = array<i32>} : memref<64x256xbf16, #tpu.memory_space<vmem>>, vector<16x256xbf16>,
    %c16_109 = arith.constant 16 : index
    %c0_110 = arith.constant 0 : index
    %198 = vector.load %arg12[%c16_109, %c0_110] : memref<256x256xbf16, #tpu.memory_space<vmem>>, vector<16x256xbf16>
    %199 = vector.extract_strided_slice %179 {offsets = [16, 0], sizes = [16, 16], strides = [1, 1]} : vector<128x16xbf16> to vector<16x16xbf16>
    %200 = vector.extract_strided_slice %179 {offsets = [80, 0], sizes = [16, 16], strides = [1, 1]} : vector<128x16xbf16> to vector<16x16xbf16>
    %cst_111 = arith.constant dense<0.000000e+00> : vector<16x256xf32>
    %201 = tpu.matmul %199, %198, %cst_111 {dimension_numbers = #tpu.dot_dimension_numbers<[0], [0], [1], [1], [0, 1, 1, 1], [], []>} : vector<16x16xbf16>, vector<16x256xbf16>, vector<16x256xf32> -> vector<16x256xf32>
    %cst_112 = arith.constant dense<0xFF800000> : vector<256xf32>
    %202 = vector.multi_reduction <maximumf>, %201, %cst_112 [0] : vector<16x256xf32> to vector<256xf32>
    %203 = vector.shape_cast %202 : vector<256xf32> to vector<1x256xf32>
    %204 = vector.broadcast %203 : vector<1x256xf32> to vector<16x256xf32>
    %205 = arith.subf %201, %204 : vector<16x256xf32>
    %206 = math.exp %205 : vector<16x256xf32>
    %cst_113 = arith.constant dense<0.000000e+00> : vector<256xf32>
    %207 = vector.multi_reduction <add>, %206, %cst_113 [0] : vector<16x256xf32> to vector<256xf32>
    %208 = vector.shape_cast %207 : vector<256xf32> to vector<1x256xf32>
    %209 = tpu.reciprocal %208 {approx = true} : vector<1x256xf32> -> vector<1x256xf32>
    %210 = vector.broadcast %209 : vector<1x256xf32> to vector<16x256xf32>
    %211 = arith.mulf %206, %210 : vector<16x256xf32>
    %212 = arith.truncf %211 : vector<16x256xf32> to vector<16x256xbf16>
    %cst_114 = arith.constant dense<0.000000e+00> : vector<16x256xf32>
    %213 = tpu.matmul %200, %212, %cst_114 {dimension_numbers = #tpu.dot_dimension_numbers<[1], [0], [0], [1], [0, 0, 1, 1], [], []>} : vector<16x16xbf16>, vector<16x256xbf16>, vector<16x256xf32> -> vector<16x256xf32>
    %214 = arith.truncf %213 : vector<16x256xf32> to vector<16x256xbf16>
    %c16_115 = arith.constant 16 : index
    %c0_116 = arith.constant 0 : index
    %215 = vector.load %arg13[%c16_115, %c0_116] : memref<64x256xbf16, #tpu.memory_space<vmem>>, vector<16x256xbf16>
    tpu.vector_store %arg13[%c16_115, %c0_116], %214 {strides = array<i32>} : memref<64x256xbf16, #tpu.memory_space<vmem>>, vector<16x256xbf16>,
    %c32_117 = arith.constant 32 : index
    %c0_118 = arith.constant 0 : index
    %216 = vector.load %arg12[%c32_117, %c0_118] : memref<256x256xbf16, #tpu.memory_space<vmem>>, vector<16x256xbf16>
    %217 = vector.extract_strided_slice %179 {offsets = [32, 0], sizes = [16, 16], strides = [1, 1]} : vector<128x16xbf16> to vector<16x16xbf16>
    %218 = vector.extract_strided_slice %179 {offsets = [96, 0], sizes = [16, 16], strides = [1, 1]} : vector<128x16xbf16> to vector<16x16xbf16>
    %cst_119 = arith.constant dense<0.000000e+00> : vector<16x256xf32>
    %219 = tpu.matmul %217, %216, %cst_119 {dimension_numbers = #tpu.dot_dimension_numbers<[0], [0], [1], [1], [0, 1, 1, 1], [], []>} : vector<16x16xbf16>, vector<16x256xbf16>, vector<16x256xf32> -> vector<16x256xf32>
    %cst_120 = arith.constant dense<0xFF800000> : vector<256xf32>
    %220 = vector.multi_reduction <maximumf>, %219, %cst_120 [0] : vector<16x256xf32> to vector<256xf32>
    %221 = vector.shape_cast %220 : vector<256xf32> to vector<1x256xf32>
    %222 = vector.broadcast %221 : vector<1x256xf32> to vector<16x256xf32>
    %223 = arith.subf %219, %222 : vector<16x256xf32>
    %224 = math.exp %223 : vector<16x256xf32>
    %cst_121 = arith.constant dense<0.000000e+00> : vector<256xf32>
    %225 = vector.multi_reduction <add>, %224, %cst_121 [0] : vector<16x256xf32> to vector<256xf32>
    %226 = vector.shape_cast %225 : vector<256xf32> to vector<1x256xf32>
    %227 = tpu.reciprocal %226 {approx = true} : vector<1x256xf32> -> vector<1x256xf32>
    %228 = vector.broadcast %227 : vector<1x256xf32> to vector<16x256xf32>
    %229 = arith.mulf %224, %228 : vector<16x256xf32>
    %230 = arith.truncf %229 : vector<16x256xf32> to vector<16x256xbf16>
    %cst_122 = arith.constant dense<0.000000e+00> : vector<16x256xf32>
    %231 = tpu.matmul %218, %230, %cst_122 {dimension_numbers = #tpu.dot_dimension_numbers<[1], [0], [0], [1], [0, 0, 1, 1], [], []>} : vector<16x16xbf16>, vector<16x256xbf16>, vector<16x256xf32> -> vector<16x256xf32>
    %232 = arith.truncf %231 : vector<16x256xf32> to vector<16x256xbf16>
    %c32_123 = arith.constant 32 : index
    %c0_124 = arith.constant 0 : index
    %233 = vector.load %arg13[%c32_123, %c0_124] : memref<64x256xbf16, #tpu.memory_space<vmem>>, vector<16x256xbf16>
    tpu.vector_store %arg13[%c32_123, %c0_124], %232 {strides = array<i32>} : memref<64x256xbf16, #tpu.memory_space<vmem>>, vector<16x256xbf16>,
    %c48_125 = arith.constant 48 : index
    %c0_126 = arith.constant 0 : index
    %234 = vector.load %arg12[%c48_125, %c0_126] : memref<256x256xbf16, #tpu.memory_space<vmem>>, vector<16x256xbf16>
    %235 = vector.extract_strided_slice %179 {offsets = [48, 0], sizes = [16, 16], strides = [1, 1]} : vector<128x16xbf16> to vector<16x16xbf16>
    %236 = vector.extract_strided_slice %179 {offsets = [112, 0], sizes = [16, 16], strides = [1, 1]} : vector<128x16xbf16> to vector<16x16xbf16>
    %cst_127 = arith.constant dense<0.000000e+00> : vector<16x256xf32>
    %237 = tpu.matmul %235, %234, %cst_127 {dimension_numbers = #tpu.dot_dimension_numbers<[0], [0], [1], [1], [0, 1, 1, 1], [], []>} : vector<16x16xbf16>, vector<16x256xbf16>, vector<16x256xf32> -> vector<16x256xf32>
    %cst_128 = arith.constant dense<0xFF800000> : vector<256xf32>
    %238 = vector.multi_reduction <maximumf>, %237, %cst_128 [0] : vector<16x256xf32> to vector<256xf32>
    %239 = vector.shape_cast %238 : vector<256xf32> to vector<1x256xf32>
    %240 = vector.broadcast %239 : vector<1x256xf32> to vector<16x256xf32>
    %241 = arith.subf %237, %240 : vector<16x256xf32>
    %242 = math.exp %241 : vector<16x256xf32>
    %cst_129 = arith.constant dense<0.000000e+00> : vector<256xf32>
    %243 = vector.multi_reduction <add>, %242, %cst_129 [0] : vector<16x256xf32> to vector<256xf32>
    %244 = vector.shape_cast %243 : vector<256xf32> to vector<1x256xf32>
    %245 = tpu.reciprocal %244 {approx = true} : vector<1x256xf32> -> vector<1x256xf32>
    %246 = vector.broadcast %245 : vector<1x256xf32> to vector<16x256xf32>
    %247 = arith.mulf %242, %246 : vector<16x256xf32>
    %248 = arith.truncf %247 : vector<16x256xf32> to vector<16x256xbf16>
    %cst_130 = arith.constant dense<0.000000e+00> : vector<16x256xf32>
    %249 = tpu.matmul %236, %248, %cst_130 {dimension_numbers = #tpu.dot_dimension_numbers<[1], [0], [0], [1], [0, 0, 1, 1], [], []>} : vector<16x16xbf16>, vector<16x256xbf16>, vector<16x256xf32> -> vector<16x256xf32>
    %250 = arith.truncf %249 : vector<16x256xf32> to vector<16x256xbf16>
    %c48_131 = arith.constant 48 : index
    %c0_132 = arith.constant 0 : index
    %251 = vector.load %arg13[%c48_131, %c0_132] : memref<64x256xbf16, #tpu.memory_space<vmem>>, vector<16x256xbf16>
    tpu.vector_store %arg13[%c48_131, %c0_132], %250 {strides = array<i32>} : memref<64x256xbf16, #tpu.memory_space<vmem>>, vector<16x256xbf16>,
    %c3_133 = arith.constant 3 : index
    %c0_134 = arith.constant 0 : index
    %c0_135 = arith.constant 0 : index
    %252 = vector.load %arg6[%c3_133, %c0_134, %c0_135] : memref<5x64x64xbf16, #tpu.memory_space<vmem>>, vector<1x64x64xbf16>
    %253 = vector.shape_cast %252 : vector<1x64x64xbf16> to vector<64x64xbf16>
    %c0_136 = arith.constant 0 : index
    %c0_137 = arith.constant 0 : index
    %254 = vector.load %arg13[%c0_136, %c0_137] : memref<64x256xbf16, #tpu.memory_space<vmem>>, vector<64x256xbf16>
    %cst_138 = arith.constant dense<0.000000e+00> : vector<64x256xf32>
    %255 = tpu.matmul %253, %254, %cst_138 {dimension_numbers = #tpu.dot_dimension_numbers<[1], [0], [0], [1], [0, 0, 1, 1], [], []>} : vector<64x64xbf16>, vector<64x256xbf16>, vector<64x256xf32> -> vector<64x256xf32>
    %c0_139 = arith.constant 0 : index
    %c8 = arith.constant 8 : index
    %256 = vector.load %arg3[%c0_139, %c8] : memref<256x16xf32, #tpu.memory_space<vmem>>, vector<64x1xf32>
    %257 = vector.broadcast %256 : vector<64x1xf32> to vector<64x256xf32>
    %258 = arith.addf %255, %257 : vector<64x256xf32>
    %259 = arith.addf %258, %146 : vector<64x256xf32>
    %cst_140 = arith.constant dense<0.000000e+00> : vector<256xf32>
    %260 = vector.multi_reduction <add>, %259, %cst_140 [0] : vector<64x256xf32> to vector<256xf32>
    %261 = vector.shape_cast %260 : vector<256xf32> to vector<1x256xf32>
    %cst_141 = arith.constant 6.400000e+01 : f32
    %262 = vector.broadcast %cst_141 : f32 to vector<1x256xf32>
    %263 = arith.divf %261, %262 : vector<1x256xf32>
    %264 = vector.broadcast %263 : vector<1x256xf32> to vector<64x256xf32>
    %265 = arith.subf %259, %264 : vector<64x256xf32>
    %266 = arith.mulf %265, %265 : vector<64x256xf32>
    %cst_142 = arith.constant dense<0.000000e+00> : vector<256xf32>
    %267 = vector.multi_reduction <add>, %266, %cst_142 [0] : vector<64x256xf32> to vector<256xf32>
    %268 = vector.shape_cast %267 : vector<256xf32> to vector<1x256xf32>
    %cst_143 = arith.constant 6.400000e+01 : f32
    %269 = vector.broadcast %cst_143 : f32 to vector<1x256xf32>
    %270 = arith.divf %268, %269 : vector<1x256xf32>
    %cst_144 = arith.constant 9.99999974E-6 : f32
    %271 = vector.broadcast %cst_144 : f32 to vector<1x256xf32>
    %272 = arith.addf %270, %271 : vector<1x256xf32>
    %273 = math.rsqrt %272 : vector<1x256xf32>
    %274 = vector.broadcast %273 : vector<1x256xf32> to vector<64x256xf32>
    %275 = arith.mulf %265, %274 : vector<64x256xf32>
    %c0_145 = arith.constant 0 : index
    %c9 = arith.constant 9 : index
    %276 = vector.load %arg3[%c0_145, %c9] : memref<256x16xf32, #tpu.memory_space<vmem>>, vector<64x1xf32>
    %277 = vector.broadcast %276 : vector<64x1xf32> to vector<64x256xf32>
    %278 = arith.mulf %275, %277 : vector<64x256xf32>
    %c0_146 = arith.constant 0 : index
    %c10 = arith.constant 10 : index
    %279 = vector.load %arg3[%c0_146, %c10] : memref<256x16xf32, #tpu.memory_space<vmem>>, vector<64x1xf32>
    %280 = vector.broadcast %279 : vector<64x1xf32> to vector<64x256xf32>
    %281 = arith.addf %278, %280 : vector<64x256xf32>
    %282 = arith.truncf %281 : vector<64x256xf32> to vector<64x256xbf16>
    %c0_147 = arith.constant 0 : index
    %c0_148 = arith.constant 0 : index
    %c0_149 = arith.constant 0 : index
    %283 = vector.load %arg9[%c0_147, %c0_148, %c0_149] : memref<2x256x64xbf16, #tpu.memory_space<vmem>>, vector<1x256x64xbf16>
    %284 = vector.shape_cast %283 : vector<1x256x64xbf16> to vector<256x64xbf16>
    %cst_150 = arith.constant dense<0.000000e+00> : vector<256x256xf32>
    %285 = tpu.matmul %284, %282, %cst_150 {dimension_numbers = #tpu.dot_dimension_numbers<[1], [0], [0], [1], [0, 0, 1, 1], [], []>} : vector<256x64xbf16>, vector<64x256xbf16>, vector<256x256xf32> -> vector<256x256xf32>
    %c0_151 = arith.constant 0 : index
    %c13 = arith.constant 13 : index
    %286 = vector.load %arg3[%c0_151, %c13] : memref<256x16xf32, #tpu.memory_space<vmem>>, vector<256x1xf32>
    %287 = vector.broadcast %286 : vector<256x1xf32> to vector<256x256xf32>
    %288 = arith.addf %285, %287 : vector<256x256xf32>
    %289 = arith.truncf %288 : vector<256x256xf32> to vector<256x256xbf16>
    %c0_152 = arith.constant 0 : index
    %c0_153 = arith.constant 0 : index
    %290 = vector.load %arg12[%c0_152, %c0_153] : memref<256x256xbf16, #tpu.memory_space<vmem>>, vector<256x256xbf16>
    tpu.vector_store %arg12[%c0_152, %c0_153], %289 {strides = array<i32>} : memref<256x256xbf16, #tpu.memory_space<vmem>>, vector<256x256xbf16>,
    %c1_154 = arith.constant 1 : index
    %c0_155 = arith.constant 0 : index
    %c0_156 = arith.constant 0 : index
    %291 = vector.load %arg9[%c1_154, %c0_155, %c0_156] : memref<2x256x64xbf16, #tpu.memory_space<vmem>>, vector<1x256x64xbf16>
    %292 = vector.shape_cast %291 : vector<1x256x64xbf16> to vector<256x64xbf16>
    %cst_157 = arith.constant dense<0.000000e+00> : vector<256x256xf32>
    %293 = tpu.matmul %292, %282, %cst_157 {dimension_numbers = #tpu.dot_dimension_numbers<[1], [0], [0], [1], [0, 0, 1, 1], [], []>} : vector<256x64xbf16>, vector<64x256xbf16>, vector<256x256xf32> -> vector<256x256xf32>
    %c0_158 = arith.constant 0 : index
    %c14 = arith.constant 14 : index
    %294 = vector.load %arg3[%c0_158, %c14] : memref<256x16xf32, #tpu.memory_space<vmem>>, vector<256x1xf32>
    %295 = vector.broadcast %294 : vector<256x1xf32> to vector<256x256xf32>
    %296 = arith.addf %293, %295 : vector<256x256xf32>
    %c0_159 = arith.constant 0 : index
    %c0_160 = arith.constant 0 : index
    %297 = vector.load %arg12[%c0_159, %c0_160] : memref<256x256xbf16, #tpu.memory_space<vmem>>, vector<256x256xbf16>
    %cst_161 = arith.constant 5.000000e-01 : f32
    %298 = vector.broadcast %cst_161 : f32 to vector<256x256xf32>
    %299 = arith.mulf %298, %296 : vector<256x256xf32>
    %cst_162 = arith.constant 0.707106769 : f32
    %300 = vector.broadcast %cst_162 : f32 to vector<256x256xf32>
    %301 = arith.mulf %296, %300 : vector<256x256xf32>
    %cst_163 = arith.constant 0.000000e+00 : f32
    %302 = vector.broadcast %cst_163 : f32 to vector<256x256xf32>
    %303 = arith.cmpf oge, %301, %302 : vector<256x256xf32>
    %cst_164 = arith.constant 1.000000e+00 : f32
    %cst_165 = arith.constant -1.000000e+00 : f32
    %304 = vector.broadcast %cst_164 : f32 to vector<256x256xf32>
    %305 = vector.broadcast %cst_165 : f32 to vector<256x256xf32>
    %306 = arith.select %303, %304, %305 : vector<256x256xi1>, vector<256x256xf32>
    %307 = math.absf %301 : vector<256x256xf32>
    %cst_166 = arith.constant 0.327591091 : f32
    %308 = vector.broadcast %cst_166 : f32 to vector<256x256xf32>
    %309 = arith.mulf %308, %307 : vector<256x256xf32>
    %cst_167 = arith.constant 1.000000e+00 : f32
    %310 = vector.broadcast %cst_167 : f32 to vector<256x256xf32>
    %311 = arith.addf %310, %309 : vector<256x256xf32>
    %cst_168 = arith.constant 1.000000e+00 : f32
    %312 = vector.broadcast %cst_168 : f32 to vector<256x256xf32>
    %313 = arith.divf %312, %311 : vector<256x256xf32>
    %cst_169 = arith.constant 1.06140542 : f32
    %314 = vector.broadcast %cst_169 : f32 to vector<256x256xf32>
    %315 = arith.mulf %313, %314 : vector<256x256xf32>
    %cst_170 = arith.constant -1.45315206 : f32
    %316 = vector.broadcast %cst_170 : f32 to vector<256x256xf32>
    %317 = arith.addf %316, %315 : vector<256x256xf32>
    %318 = arith.mulf %313, %317 : vector<256x256xf32>
    %cst_171 = arith.constant 1.42141378 : f32
    %319 = vector.broadcast %cst_171 : f32 to vector<256x256xf32>
    %320 = arith.addf %319, %318 : vector<256x256xf32>
    %321 = arith.mulf %313, %320 : vector<256x256xf32>
    %cst_172 = arith.constant -0.284496725 : f32
    %322 = vector.broadcast %cst_172 : f32 to vector<256x256xf32>
    %323 = arith.addf %322, %321 : vector<256x256xf32>
    %324 = arith.mulf %313, %323 : vector<256x256xf32>
    %cst_173 = arith.constant 0.254829586 : f32
    %325 = vector.broadcast %cst_173 : f32 to vector<256x256xf32>
    %326 = arith.addf %325, %324 : vector<256x256xf32>
    %327 = arith.mulf %313, %326 : vector<256x256xf32>
    %cst_174 = arith.constant 0.000000e+00 : f32
    %328 = vector.broadcast %cst_174 : f32 to vector<256x256xf32>
    %329 = arith.subf %328, %307 : vector<256x256xf32>
    %330 = arith.mulf %329, %307 : vector<256x256xf32>
    %331 = math.exp %330 : vector<256x256xf32>
    %332 = arith.mulf %327, %331 : vector<256x256xf32>
    %cst_175 = arith.constant 1.000000e+00 : f32
    %333 = vector.broadcast %cst_175 : f32 to vector<256x256xf32>
    %334 = arith.subf %333, %332 : vector<256x256xf32>
    %335 = arith.mulf %306, %334 : vector<256x256xf32>
    %cst_176 = arith.constant 1.000000e+00 : f32
    %336 = vector.broadcast %cst_176 : f32 to vector<256x256xf32>
    %337 = arith.addf %336, %335 : vector<256x256xf32>
    %338 = arith.mulf %299, %337 : vector<256x256xf32>
    %339 = arith.truncf %338 : vector<256x256xf32> to vector<256x256xbf16>
    %340 = arith.mulf %297, %339 : vector<256x256xbf16>
    %c0_177 = arith.constant 0 : index
    %c0_178 = arith.constant 0 : index
    %341 = vector.load %arg10[%c0_177, %c0_178] : memref<64x256xbf16, #tpu.memory_space<vmem>>, vector<64x256xbf16>
    %cst_179 = arith.constant dense<0.000000e+00> : vector<64x256xf32>
    %342 = tpu.matmul %341, %340, %cst_179 {dimension_numbers = #tpu.dot_dimension_numbers<[1], [0], [0], [1], [0, 0, 1, 1], [], []>} : vector<64x256xbf16>, vector<256x256xbf16>, vector<64x256xf32> -> vector<64x256xf32>
    %c0_180 = arith.constant 0 : index
    %c11 = arith.constant 11 : index
    %343 = vector.load %arg3[%c0_180, %c11] : memref<256x16xf32, #tpu.memory_space<vmem>>, vector<64x1xf32>
    %344 = vector.broadcast %343 : vector<64x1xf32> to vector<64x256xf32>
    %345 = arith.addf %342, %344 : vector<64x256xf32>
    %346 = arith.addf %345, %259 : vector<64x256xf32>
    %c4_181 = arith.constant 4 : index
    %c0_182 = arith.constant 0 : index
    %c0_183 = arith.constant 0 : index
    %347 = vector.load %arg6[%c4_181, %c0_182, %c0_183] : memref<5x64x64xbf16, #tpu.memory_space<vmem>>, vector<1x64x64xbf16>
    %348 = vector.shape_cast %347 : vector<1x64x64xbf16> to vector<64x64xbf16>
    %349 = arith.truncf %346 : vector<64x256xf32> to vector<64x256xbf16>
    %cst_184 = arith.constant dense<0.000000e+00> : vector<64x256xf32>
    %350 = tpu.matmul %348, %349, %cst_184 {dimension_numbers = #tpu.dot_dimension_numbers<[1], [0], [0], [1], [0, 0, 1, 1], [], []>} : vector<64x64xbf16>, vector<64x256xbf16>, vector<64x256xf32> -> vector<64x256xf32>
    %c0_185 = arith.constant 0 : index
    %c12 = arith.constant 12 : index
    %351 = vector.load %arg3[%c0_185, %c12] : memref<256x16xf32, #tpu.memory_space<vmem>>, vector<64x1xf32>
    %352 = vector.broadcast %351 : vector<64x1xf32> to vector<64x256xf32>
    %353 = arith.addf %350, %352 : vector<64x256xf32>
    %c0_186 = arith.constant 0 : index
    %c0_187 = arith.constant 0 : index
    %c0_188 = arith.constant 0 : index
    %354 = vector.load %arg1[%c0_186, %c0_187, %c0_188] : memref<1x64x256xf32, #tpu.memory_space<vmem>>, vector<1x64x256xf32>
    %355 = vector.shape_cast %354 : vector<1x64x256xf32> to vector<64x256xf32>
    %356 = arith.addf %353, %355 : vector<64x256xf32>
    %c0_189 = arith.constant 0 : index
    %c0_190 = arith.constant 0 : index
    %c0_191 = arith.constant 0 : index
    %357 = vector.load %arg11[%c0_189, %c0_190, %c0_191] : memref<1x64x256xf32, #tpu.memory_space<vmem>>, vector<1x64x256xf32>
    %358 = vector.shape_cast %357 : vector<1x64x256xf32> to vector<64x256xf32>
    %359 = vector.shape_cast %356 : vector<64x256xf32> to vector<1x64x256xf32>
    tpu.vector_store %arg11[%c0_189, %c0_190, %c0_191], %359 {strides = array<i32>} : memref<1x64x256xf32, #tpu.memory_space<vmem>>, vector<1x64x256xf32>,
    return
  }
  func.func @transform_0(%arg0: i32) -> (i32, i32, i32) {
    %c0_i32 = arith.constant 0 : i32
    %c0_i32_0 = arith.constant 0 : i32
    %c0_i32_1 = arith.constant 0 : i32
    return %arg0, %c0_i32, %c0_i32_0 : i32, i32, i32
  }
  func.func @transform_1(%arg0: i32) -> (i32, i32, i32) {
    %c0_i32 = arith.constant 0 : i32
    %c0_i32_0 = arith.constant 0 : i32
    %c0_i32_1 = arith.constant 0 : i32
    return %arg0, %c0_i32, %c0_i32_0 : i32, i32, i32
  }
  func.func @transform_2(%arg0: i32) -> (i32, i32) {
    %c0_i32 = arith.constant 0 : i32
    %c0_i32_0 = arith.constant 0 : i32
    %c0_i32_1 = arith.constant 0 : i32
    return %c0_i32, %c0_i32_0 : i32, i32
  }
  func.func @transform_3(%arg0: i32) -> (i32, i32) {
    %c0_i32 = arith.constant 0 : i32
    %c0_i32_0 = arith.constant 0 : i32
    %c0_i32_1 = arith.constant 0 : i32
    return %c0_i32, %c0_i32_0 : i32, i32
  }
  func.func @transform_4(%arg0: i32) -> (i32, i32) {
    %c0_i32 = arith.constant 0 : i32
    %c0_i32_0 = arith.constant 0 : i32
    %c0_i32_1 = arith.constant 0 : i32
    return %c0_i32, %c0_i32_0 : i32, i32
  }
  func.func @transform_5(%arg0: i32) -> (i32, i32, i32) {
    %c0_i32 = arith.constant 0 : i32
    %c0_i32_0 = arith.constant 0 : i32
    %c0_i32_1 = arith.constant 0 : i32
    %c0_i32_2 = arith.constant 0 : i32
    return %c0_i32, %c0_i32_0, %c0_i32_1 : i32, i32, i32
  }
  func.func @transform_6(%arg0: i32) -> (i32, i32) {
    %c0_i32 = arith.constant 0 : i32
    %c0_i32_0 = arith.constant 0 : i32
    %c0_i32_1 = arith.constant 0 : i32
    return %c0_i32, %c0_i32_0 : i32, i32
  }
  func.func @transform_7(%arg0: i32) -> (i32, i32) {
    %c0_i32 = arith.constant 0 : i32
    %c0_i32_0 = arith.constant 0 : i32
    %c0_i32_1 = arith.constant 0 : i32
    return %c0_i32, %c0_i32_0 : i32, i32
  }
  func.func @transform_8(%arg0: i32) -> (i32, i32, i32) {
    %c0_i32 = arith.constant 0 : i32
    %c0_i32_0 = arith.constant 0 : i32
    %c0_i32_1 = arith.constant 0 : i32
    %c0_i32_2 = arith.constant 0 : i32
    return %c0_i32, %c0_i32_0, %c0_i32_1 : i32, i32, i32
  }
  func.func @transform_9(%arg0: i32) -> (i32, i32) {
    %c0_i32 = arith.constant 0 : i32
    %c0_i32_0 = arith.constant 0 : i32
    %c0_i32_1 = arith.constant 0 : i32
    return %c0_i32, %c0_i32_0 : i32, i32
  }
  func.func @transform_10(%arg0: i32) -> (i32, i32, i32) {
    %c0_i32 = arith.constant 0 : i32
    %c0_i32_0 = arith.constant 0 : i32
    %c0_i32_1 = arith.constant 0 : i32
    return %arg0, %c0_i32, %c0_i32_0 : i32, i32, i32
  }
}

</mosaic_0001>

<llo_original>
// kernel: tpu_custom_call.1
$region0: #{tpu_custom_call.1}
  #allocation0 [shape = 'u32[]', space=smem, size = 0x4, offset = 0x4, fixed_abs, tag = 'smem constant byte address 0x4 - core index']
  #allocation1 [shape = 'u32[144,128]{1,0:T(1,128)}', space=vmem, size = 0x12000, scoped, tag = 'internal scratch']
  #allocation2 [shape = 'bf16[256,256]{1,0:T(16,128)(2,1)}', space=vmem, size = 0x20000, scoped, tag = 'scratch operand']
  #allocation3 [shape = 'bf16[64,256]{1,0:T(16,128)(2,1)}', space=vmem, size = 0x8000, scoped, tag = 'scratch operand']
  %s0 = inlined_call_operand.vmem [shape: f32[2,64,256], index: 0, kind: input, shape index: {}]
  %s1 = inlined_call_operand.vmem [shape: bf16[2,16,128], index: 1, kind: input, shape index: {}]
  %s2 = inlined_call_operand.vmem [shape: f32[256,16], index: 2, kind: input, shape index: {}]
  %s3 = inlined_call_operand.vmem [shape: f32[32,64], index: 3, kind: input, shape index: {}]
  %s4 = inlined_call_operand.vmem [shape: f32[64,32], index: 4, kind: input, shape index: {}]
  %s5 = inlined_call_operand.vmem [shape: bf16[5,64,64], index: 5, kind: input, shape index: {}]
  %s6 = inlined_call_operand.vmem [shape: bf16[192,64], index: 6, kind: input, shape index: {}]
  %s7 = inlined_call_operand.vmem [shape: bf16[128,128], index: 7, kind: input, shape index: {}]
  %s8 = inlined_call_operand.vmem [shape: bf16[2,256,64], index: 8, kind: input, shape index: {}]
  %s9 = inlined_call_operand.vmem [shape: bf16[64,256], index: 9, kind: input, shape index: {}]
  %s10 = inlined_call_operand.hbm [shape: f32[2,64,256], index: 10, kind: output, shape index: {}]
  %s11 = sld [smem:[#allocation0]]
  $region73: #{tpu_custom_call.1} parent=0
    _
  %s13 = ssub.s32 1, %s11
  %s14 = scalar_select 0, %s13, %s11
  $region1: #{tpu_custom_call.1} parent=0
    #allocation4 [shape = 'u8[131072]{0}', space=vmem, size = 0x20000, scoped, tag = 'output window, operand 0']
    #allocation5 [shape = 's32[2]{0}', space=sflag, size = 0x8, scoped, tag = 'scoped memory for tpu_custom_call.1']
    %15 = vsyncpa [#allocation5], 0
    %s16 = scalar_lea.sflag [#allocation5], 1
    %17 = vsyncpa %s16, 0
    loop: start=0, step=1, limit=4
    $region2: #{tpu_custom_call.1} parent=1 // loop_pre_header
      _
    $region3: #{tpu_custom_call.1} parent=1 // loop_header
      %s19 = sphi 0, %s23
      %p20 = scmp.ge.s32.totalorder %s19, 4
      %s29 = sphi 0, %s31
      %s32 = sphi 0, %s29
      %s33 = sphi 0, %s32
      %s49 = sphi 0, %s33
      %s55 = sphi 0, %s57
      %s58 = sphi 0, %s55
      %s59 = sphi 0, %s58
      %s75 = sphi 0, %s59
      %s79 = sphi 0, %s79
      %s81 = sphi 0, %s79
      %s82 = sphi 0, %s81
      %s96 = sphi 0, %s82
      %s100 = sphi 0, %s100
      %s102 = sphi 0, %s100
      %s103 = sphi 0, %s102
      %s117 = sphi 0, %s103
      %s121 = sphi 0, %s121
      %s123 = sphi 0, %s121
      %s124 = sphi 0, %s123
      %s138 = sphi 0, %s124
      %s142 = sphi 0, %s142
      %s144 = sphi 0, %s142
      %s145 = sphi 0, %s144
      %s159 = sphi 0, %s145
      %s163 = sphi 0, %s163
      %s165 = sphi 0, %s163
      %s166 = sphi 0, %s165
      %s180 = sphi 0, %s166
      %s184 = sphi 0, %s184
      %s186 = sphi 0, %s184
      %s187 = sphi 0, %s186
      %s201 = sphi 0, %s187
      %s205 = sphi 0, %s205
      %s207 = sphi 0, %s205
      %s208 = sphi 0, %s207
      %s222 = sphi 0, %s208
      %s226 = sphi 0, %s226
      %s228 = sphi 0, %s226
      %s229 = sphi 0, %s228
      %s243 = sphi 0, %s229
      %s249 = sphi 0, %s251
      %s252 = sphi 0, %s249
      %s253 = sphi 0, %s252
      %s269 = sphi 0, %s253
    $region4: #{tpu_custom_call.1} parent=1 // loop_header_branch
      %22 = sbr.rel (%p20) target = $region8
    $region5: #{tpu_custom_call.1} parent=1 // loop_body
      %s24 = ssub.s32 %s19, 1
      %s25 = ssub.s32 %s19, 2
      %s26 = sadd.s32 %s19, 1
      %s27 = ssub.s32 %s19, %s26
      %p28 = scmp.eq.s32.totalorder %s27, 0
      %s30 = sadd.s32 %s29, 1
      %s31 = scalar_select %p28, %s29, %s30
      %p34 = pneg %p28
      %p35 = scmp.eq.s32.totalorder %s19, 1
      %p36 = por %p34, %p35
      %p37 = scmp.ne.s32.totalorder %s29, %s32
      %p38 = scmp.eq.s32.totalorder %s19, 0
      %p39 = por %p37, %p38
      %p40 = scmp.ne.s32.totalorder %s29, %s32
      %p41 = scmp.eq.s32.totalorder %s24, 1
      %p42 = por %p40, %p41
      %p43 = scmp.ne.s32.totalorder %s32, %s33
      %p44 = scmp.eq.s32.totalorder %s24, 0
      %p45 = por %p43, %p44
      %p46 = scmp.ne.s32.totalorder %s32, %s33
      %p47 = scmp.eq.s32.totalorder %s25, 1
      %p48 = por %p46, %p47
      %p50 = scmp.ne.s32.totalorder %s33, %s49
      %p51 = scmp.eq.s32.totalorder %s25, 0
      %p52 = por %p50, %p51
      %s53 = ssub.s32 %s19, %s26
      %p54 = scmp.eq.s32.totalorder %s53, 0
      %s56 = sadd.s32 %s55, 1
      %s57 = scalar_select %p54, %s55, %s56
      %p60 = pneg %p54
      %p61 = scmp.eq.s32.totalorder %s19, 1
      %p62 = por %p60, %p61
      %p63 = scmp.ne.s32.totalorder %s55, %s58
      %p64 = scmp.eq.s32.totalorder %s19, 0
      %p65 = por %p63, %p64
      %p66 = scmp.ne.s32.totalorder %s55, %s58
      %p67 = scmp.eq.s32.totalorder %s24, 1
      %p68 = por %p66, %p67
      %p69 = scmp.ne.s32.totalorder %s58, %s59
      %p70 = scmp.eq.s32.totalorder %s24, 0
      %p71 = por %p69, %p70
      %p72 = scmp.ne.s32.totalorder %s58, %s59
      %p73 = scmp.eq.s32.totalorder %s25, 1
      %p74 = por %p72, %p73
      %p76 = scmp.ne.s32.totalorder %s59, %s75
      %p77 = scmp.eq.s32.totalorder %s25, 0
      %p78 = por %p76, %p77
      %s80 = sadd.s32 %s79, 1
      %p83 = scmp.eq.s32.totalorder %s19, 1
      %p84 = scmp.ne.s32.totalorder %s79, %s81
      %p85 = scmp.eq.s32.totalorder %s19, 0
      %p86 = por %p84, %p85
      %p87 = scmp.ne.s32.totalorder %s79, %s81
      %p88 = scmp.eq.s32.totalorder %s24, 1
      %p89 = por %p87, %p88
      %p90 = scmp.ne.s32.totalorder %s81, %s82
      %p91 = scmp.eq.s32.totalorder %s24, 0
      %p92 = por %p90, %p91
      %p93 = scmp.ne.s32.totalorder %s81, %s82
      %p94 = scmp.eq.s32.totalorder %s25, 1
      %p95 = por %p93, %p94
      %p97 = scmp.ne.s32.totalorder %s82, %s96
      %p98 = scmp.eq.s32.totalorder %s25, 0
      %p99 = por %p97, %p98
      %s101 = sadd.s32 %s100, 1
      %p104 = scmp.eq.s32.totalorder %s19, 1
      %p105 = scmp.ne.s32.totalorder %s100, %s102
      %p106 = scmp.eq.s32.totalorder %s19, 0
      %p107 = por %p105, %p106
      %p108 = scmp.ne.s32.totalorder %s100, %s102
      %p109 = scmp.eq.s32.totalorder %s24, 1
      %p110 = por %p108, %p109
      %p111 = scmp.ne.s32.totalorder %s102, %s103
      %p112 = scmp.eq.s32.totalorder %s24, 0
      %p113 = por %p111, %p112
      %p114 = scmp.ne.s32.totalorder %s102, %s103
      %p115 = scmp.eq.s32.totalorder %s25, 1
      %p116 = por %p114, %p115
      %p118 = scmp.ne.s32.totalorder %s103, %s117
      %p119 = scmp.eq.s32.totalorder %s25, 0
      %p120 = por %p118, %p119
      %s122 = sadd.s32 %s121, 1
      %p125 = scmp.eq.s32.totalorder %s19, 1
      %p126 = scmp.ne.s32.totalorder %s121, %s123
      %p127 = scmp.eq.s32.totalorder %s19, 0
      %p128 = por %p126, %p127
      %p129 = scmp.ne.s32.totalorder %s121, %s123
      %p130 = scmp.eq.s32.totalorder %s24, 1
      %p131 = por %p129, %p130
      %p132 = scmp.ne.s32.totalorder %s123, %s124
      %p133 = scmp.eq.s32.totalorder %s24, 0
      %p134 = por %p132, %p133
      %p135 = scmp.ne.s32.totalorder %s123, %s124
      %p136 = scmp.eq.s32.totalorder %s25, 1
      %p137 = por %p135, %p136
      %p139 = scmp.ne.s32.totalorder %s124, %s138
      %p140 = scmp.eq.s32.totalorder %s25, 0
      %p141 = por %p139, %p140
      %s143 = sadd.s32 %s142, 1
      %p146 = scmp.eq.s32.totalorder %s19, 1
      %p147 = scmp.ne.s32.totalorder %s142, %s144
      %p148 = scmp.eq.s32.totalorder %s19, 0
      %p149 = por %p147, %p148
      %p150 = scmp.ne.s32.totalorder %s142, %s144
      %p151 = scmp.eq.s32.totalorder %s24, 1
      %p152 = por %p150, %p151
      %p153 = scmp.ne.s32.totalorder %s144, %s145
      %p154 = scmp.eq.s32.totalorder %s24, 0
      %p155 = por %p153, %p154
      %p156 = scmp.ne.s32.totalorder %s144, %s145
      %p157 = scmp.eq.s32.totalorder %s25, 1
      %p158 = por %p156, %p157
      %p160 = scmp.ne.s32.totalorder %s145, %s159
      %p161 = scmp.eq.s32.totalorder %s25, 0
      %p162 = por %p160, %p161
      %s164 = sadd.s32 %s163, 1
      %p167 = scmp.eq.s32.totalorder %s19, 1
      %p168 = scmp.ne.s32.totalorder %s163, %s165
      %p169 = scmp.eq.s32.totalorder %s19, 0
      %p170 = por %p168, %p169
      %p171 = scmp.ne.s32.totalorder %s163, %s165
      %p172 = scmp.eq.s32.totalorder %s24, 1
      %p173 = por %p171, %p172
      %p174 = scmp.ne.s32.totalorder %s165, %s166
      %p175 = scmp.eq.s32.totalorder %s24, 0
      %p176 = por %p174, %p175
      %p177 = scmp.ne.s32.totalorder %s165, %s166
      %p178 = scmp.eq.s32.totalorder %s25, 1
      %p179 = por %p177, %p178
      %p181 = scmp.ne.s32.totalorder %s166, %s180
      %p182 = scmp.eq.s32.totalorder %s25, 0
      %p183 = por %p181, %p182
      %s185 = sadd.s32 %s184, 1
      %p188 = scmp.eq.s32.totalorder %s19, 1
      %p189 = scmp.ne.s32.totalorder %s184, %s186
      %p190 = scmp.eq.s32.totalorder %s19, 0
      %p191 = por %p189, %p190
      %p192 = scmp.ne.s32.totalorder %s184, %s186
      %p193 = scmp.eq.s32.totalorder %s24, 1
      %p194 = por %p192, %p193
      %p195 = scmp.ne.s32.totalorder %s186, %s187
      %p196 = scmp.eq.s32.totalorder %s24, 0
      %p197 = por %p195, %p196
      %p198 = scmp.ne.s32.totalorder %s186, %s187
      %p199 = scmp.eq.s32.totalorder %s25, 1
      %p200 = por %p198, %p199
      %p202 = scmp.ne.s32.totalorder %s187, %s201
      %p203 = scmp.eq.s32.totalorder %s25, 0
      %p204 = por %p202, %p203
      %s206 = sadd.s32 %s205, 1
      %p209 = scmp.eq.s32.totalorder %s19, 1
      %p210 = scmp.ne.s32.totalorder %s205, %s207
      %p211 = scmp.eq.s32.totalorder %s19, 0
      %p212 = por %p210, %p211
      %p213 = scmp.ne.s32.totalorder %s205, %s207
      %p214 = scmp.eq.s32.totalorder %s24, 1
      %p215 = por %p213, %p214
      %p216 = scmp.ne.s32.totalorder %s207, %s208
      %p217 = scmp.eq.s32.totalorder %s24, 0
      %p218 = por %p216, %p217
      %p219 = scmp.ne.s32.totalorder %s207, %s208
      %p220 = scmp.eq.s32.totalorder %s25, 1
      %p221 = por %p219, %p220
      %p223 = scmp.ne.s32.totalorder %s208, %s222
      %p224 = scmp.eq.s32.totalorder %s25, 0
      %p225 = por %p223, %p224
      %s227 = sadd.s32 %s226, 1
      %p230 = scmp.eq.s32.totalorder %s19, 1
      %p231 = scmp.ne.s32.totalorder %s226, %s228
      %p232 = scmp.eq.s32.totalorder %s19, 0
      %p233 = por %p231, %p232
      %p234 = scmp.ne.s32.totalorder %s226, %s228
      %p235 = scmp.eq.s32.totalorder %s24, 1
      %p236 = por %p234, %p235
      %p237 = scmp.ne.s32.totalorder %s228, %s229
      %p238 = scmp.eq.s32.totalorder %s24, 0
      %p239 = por %p237, %p238
      %p240 = scmp.ne.s32.totalorder %s228, %s229
      %p241 = scmp.eq.s32.totalorder %s25, 1
      %p242 = por %p240, %p241
      %p244 = scmp.ne.s32.totalorder %s229, %s243
      %p245 = scmp.eq.s32.totalorder %s25, 0
      %p246 = por %p244, %p245
      %s247 = ssub.s32 %s19, %s26
      %p248 = scmp.eq.s32.totalorder %s247, 0
      %s250 = sadd.s32 %s249, 1
      %s251 = scalar_select %p248, %s249, %s250
      %p254 = pneg %p248
      %p255 = scmp.eq.s32.totalorder %s19, 1
      %p256 = por %p254, %p255
      %p257 = scmp.ne.s32.totalorder %s249, %s252
      %p258 = scmp.eq.s32.totalorder %s19, 0
      %p259 = por %p257, %p258
      %p260 = scmp.ne.s32.totalorder %s249, %s252
      %p261 = scmp.eq.s32.totalorder %s24, 1
      %p262 = por %p260, %p261
      %p263 = scmp.ne.s32.totalorder %s252, %s253
      %p264 = scmp.eq.s32.totalorder %s24, 0
      %p265 = por %p263, %p264
      %p266 = scmp.ne.s32.totalorder %s252, %s253
      %p267 = scmp.eq.s32.totalorder %s25, 1
      %p268 = por %p266, %p267
      %p270 = scmp.ne.s32.totalorder %s253, %s269
      %p271 = scmp.eq.s32.totalorder %s25, 0
      %p272 = por %p270, %p271
      %p273 = scmp.le.s32.totalorder 1, %s19
      %p274 = scmp.lt.s32.totalorder %s19, 3
      %p275 = pnand %p273, %p274
      %p276 = pneg %p275
      // Predicated region
      $region9: #{tpu_custom_call.1} parent=5 // pred_check
        _
      $region10: #{tpu_custom_call.1} parent=5 // pred_check_branch
        %278 = sbr.rel (%p275) target = $region12
      $region11: #{tpu_custom_call.1} parent=5 // pred_region
        %s279 = ssub.s32 %s19, 1
        // Predicated region
        $region13: #{tpu_custom_call.1} parent=11 // pred_check
          %p280 = pneg %p92
        $region14: #{tpu_custom_call.1} parent=11 // pred_check_branch
          %282 = sbr.rel (%p280) target = $region16
        $region15: #{tpu_custom_call.1} parent=11 // pred_region
          _
        $region16: #{tpu_custom_call.1} parent=11 // pred_fallthru
          _
        // Predicated region
        $region17: #{tpu_custom_call.1} parent=11 // pred_check
          %p283 = pneg %p113
        $region18: #{tpu_custom_call.1} parent=11 // pred_check_branch
          %285 = sbr.rel (%p283) target = $region20
        $region19: #{tpu_custom_call.1} parent=11 // pred_region
          _
        $region20: #{tpu_custom_call.1} parent=11 // pred_fallthru
          _
        // Predicated region
        $region21: #{tpu_custom_call.1} parent=11 // pred_check
          %p286 = pneg %p134
        $region22: #{tpu_custom_call.1} parent=11 // pred_check_branch
          %288 = sbr.rel (%p286) target = $region24
        $region23: #{tpu_custom_call.1} parent=11 // pred_region
          _
        $region24: #{tpu_custom_call.1} parent=11 // pred_fallthru
          _
        // Predicated region
        $region25: #{tpu_custom_call.1} parent=11 // pred_check
          %p289 = pneg %p155
        $region26: #{tpu_custom_call.1} parent=11 // pred_check_branch
          %291 = sbr.rel (%p289) target = $region28
        $region27: #{tpu_custom_call.1} parent=11 // pred_region
          _
        $region28: #{tpu_custom_call.1} parent=11 // pred_fallthru
          _
        // Predicated region
        $region29: #{tpu_custom_call.1} parent=11 // pred_check
          %p292 = pneg %p176
        $region30: #{tpu_custom_call.1} parent=11 // pred_check_branch
          %294 = sbr.rel (%p292) target = $region32
        $region31: #{tpu_custom_call.1} parent=11 // pred_region
          _
        $region32: #{tpu_custom_call.1} parent=11 // pred_fallthru
          _
        // Predicated region
        $region33: #{tpu_custom_call.1} parent=11 // pred_check
          %p295 = pneg %p197
        $region34: #{tpu_custom_call.1} parent=11 // pred_check_branch
          %297 = sbr.rel (%p295) target = $region36
        $region35: #{tpu_custom_call.1} parent=11 // pred_region
          _
        $region36: #{tpu_custom_call.1} parent=11 // pred_fallthru
          _
        // Predicated region
        $region37: #{tpu_custom_call.1} parent=11 // pred_check
          %p298 = pneg %p218
        $region38: #{tpu_custom_call.1} parent=11 // pred_check_branch
          %300 = sbr.rel (%p298) target = $region40
        $region39: #{tpu_custom_call.1} parent=11 // pred_region
          _
        $region40: #{tpu_custom_call.1} parent=11 // pred_fallthru
          _
        // Predicated region
        $region41: #{tpu_custom_call.1} parent=11 // pred_check
          %p301 = pneg %p239
        $region42: #{tpu_custom_call.1} parent=11 // pred_check_branch
          %303 = sbr.rel (%p301) target = $region44
        $region43: #{tpu_custom_call.1} parent=11 // pred_region
          _
        $region44: #{tpu_custom_call.1} parent=11 // pred_fallthru
          _
      $region12: #{tpu_custom_call.1} parent=5 // pred_fallthru
        _
      %p304 = scmp.lt.s32.totalorder %s19, 2
      // Predicated region
      $region45: #{tpu_custom_call.1} parent=5 // pred_check
        %p305 = pneg %p304
      $region46: #{tpu_custom_call.1} parent=5 // pred_check_branch
        %307 = sbr.rel (%p305) target = $region48
      $region47: #{tpu_custom_call.1} parent=5 // pred_region
        // Predicated region
        $region49: #{tpu_custom_call.1} parent=47 // pred_check
          %p308 = pneg %p39
        $region50: #{tpu_custom_call.1} parent=47 // pred_check_branch
          %310 = sbr.rel (%p308) target = $region52
        $region51: #{tpu_custom_call.1} parent=47 // pred_region
          %p311 = scmp.lt.s32.totalorder %s19, 1
          %s312 = scalar_select %p311, %s19, 1
          %s313 = smul.addr %s312, 16
          %s314 = smul.addr %s313, 8
          %s315 = scalar_lea.vmem %s0, %s314
        $region52: #{tpu_custom_call.1} parent=47 // pred_fallthru
          _
        // Predicated region
        $region53: #{tpu_custom_call.1} parent=47 // pred_check
          %p316 = pneg %p65
        $region54: #{tpu_custom_call.1} parent=47 // pred_check_branch
          %318 = sbr.rel (%p316) target = $region56
        $region55: #{tpu_custom_call.1} parent=47 // pred_region
          %p319 = scmp.lt.s32.totalorder %s19, 1
          %s320 = scalar_select %p319, %s19, 1
          %s321 = smul.addr %s320, 2
          %s322 = smul.addr %s321, 4
          %s323 = scalar_lea.vmem %s1, %s322
        $region56: #{tpu_custom_call.1} parent=47 // pred_fallthru
          _
      $region48: #{tpu_custom_call.1} parent=5 // pred_fallthru
        _
      %p324 = scmp.le.s32.totalorder 1, %s19
      %p325 = scmp.lt.s32.totalorder %s19, 3
      %p326 = pnand %p324, %p325
      %p327 = pneg %p326
      // Predicated region
      $region57: #{tpu_custom_call.1} parent=5 // pred_check
        _
      $region58: #{tpu_custom_call.1} parent=5 // pred_check_branch
        %329 = sbr.rel (%p326) target = $region60
      $region59: #{tpu_custom_call.1} parent=5 // pred_region
        %s330 = ssub.s32 %s19, 1
        %p331 = scmp.lt.s32.totalorder %s24, 1
        %s332 = scalar_select %p331, %s24, 1
        %s333 = smul.addr %s332, 16
        %s334 = smul.addr %s333, 8
        %s335 = scalar_lea.vmem %s0, %s334
        %p336 = pneg %p45
        %p337 = pneg %p42
        %p338 = scmp.lt.s32.totalorder %s24, 1
        %s339 = scalar_select %p338, %s24, 1
        %s340 = smul.addr %s339, 2
        %s341 = smul.addr %s340, 4
        %s342 = scalar_lea.vmem %s1, %s341
        %p343 = pneg %p71
        %p344 = pneg %p68
        %p345 = pneg %p92
        %p346 = pneg %p89
        %p347 = pneg %p113
        %p348 = pneg %p110
        %p349 = pneg %p134
        %p350 = pneg %p131
        %p351 = pneg %p155
        %p352 = pneg %p152
        %p353 = pneg %p176
        %p354 = pneg %p173
        %p355 = pneg %p197
        %p356 = pneg %p194
        %p357 = pneg %p218
        %p358 = pneg %p215
        %p359 = pneg %p239
        %p360 = pneg %p236
        %p361 = pneg %p265
        %p362 = pneg %p262
        %s363 = sand.u32 %s252, 1
        %s364 = scalar_lea.sflag [#allocation5], %s363
        %s365 = sand.u32 %s252, 1
        %s366 = smul.addr %s365, 128
        %s367 = scalar_lea.vmem [#allocation4], %s366
        %p368 = scmp.lt.s32.totalorder %s24, 1
        %s369 = scalar_select %p368, %s24, 1
        %s370 = smul.addr %s369, 16
        %s371 = smul.addr %s370, 8
        %s372 = scalar_lea.vmem %s0, %s371
        %p373 = scmp.lt.s32.totalorder %s24, 1
        %s374 = scalar_select %p373, %s24, 1
        %s375 = smul.addr %s374, 2
        %s376 = smul.addr %s375, 4
        %s377 = scalar_lea.vmem %s1, %s376
        %v379 = vld [vmem:[%s372] sm:$0xff]
        %v380 = vld [vmem:[%s372 + $0x8] sm:$0xff]
        %v381 = vld [vmem:[%s372 + $0x10] sm:$0xff]
        %v382 = vld [vmem:[%s372 + $0x18] sm:$0xff]
        %v383 = vld [vmem:[%s372 + $0x20] sm:$0xff]
        %v384 = vld [vmem:[%s372 + $0x28] sm:$0xff]
        %v385 = vld [vmem:[%s372 + $0x30] sm:$0xff]
        %v386 = vld [vmem:[%s372 + $0x38] sm:$0xff]
        %v387 = vld [vmem:[%s372 + $0x40] sm:$0xff]
        %v388 = vld [vmem:[%s372 + $0x48] sm:$0xff]
        %v389 = vld [vmem:[%s372 + $0x50] sm:$0xff]
        %v390 = vld [vmem:[%s372 + $0x58] sm:$0xff]
        %v391 = vld [vmem:[%s372 + $0x60] sm:$0xff]
        %v392 = vld [vmem:[%s372 + $0x68] sm:$0xff]
        %v393 = vld [vmem:[%s372 + $0x70] sm:$0xff]
        %v394 = vld [vmem:[%s372 + $0x78] sm:$0xff]
        %v395 = vadd.f32 %v379, %v380
        %396 = vadd.xlane.f32.xlu0 %v395
        %v397 = vpop.xlane.xlu0 %396
        %v398 = vadd.f32 %v381, %v382
        %399 = vadd.xlane.f32.xlu0 %v398
        %v400 = vpop.xlane.xlu0 %399
        %v401 = vadd.f32 %v383, %v384
        %402 = vadd.xlane.f32.xlu0 %v401
        %v403 = vpop.xlane.xlu0 %402
        %v404 = vadd.f32 %v385, %v386
        %405 = vadd.xlane.f32.xlu0 %v404
        %v406 = vpop.xlane.xlu0 %405
        %v407 = vadd.f32 %v387, %v388
        %408 = vadd.xlane.f32.xlu0 %v407
        %v409 = vpop.xlane.xlu0 %408
        %v410 = vadd.f32 %v389, %v390
        %411 = vadd.xlane.f32.xlu0 %v410
        %v412 = vpop.xlane.xlu0 %411
        %v413 = vadd.f32 %v391, %v392
        %414 = vadd.xlane.f32.xlu0 %v413
        %v415 = vpop.xlane.xlu0 %414
        %v416 = vadd.f32 %v393, %v394
        %417 = vadd.xlane.f32.xlu0 %v416
        %v418 = vpop.xlane.xlu0 %417
        %v419 = vld [vmem:[%s4] sm:$0xff]
        %v420 = vld [vmem:[%s4 + $0x8] sm:$0xff]
        %v421 = vld [vmem:[%s4 + $0x10] sm:$0xff]
        %v422 = vld [vmem:[%s4 + $0x18] sm:$0xff]
        %v423 = vld [vmem:[%s4 + $0x20] sm:$0xff]
        %v424 = vld [vmem:[%s4 + $0x28] sm:$0xff]
        %v425 = vld [vmem:[%s4 + $0x30] sm:$0xff]
        %v426 = vld [vmem:[%s4 + $0x38] sm:$0xff]
        %v427 = vld [vmem:[%s3] sm:$0xff]
        %v428 = vld [vmem:[%s3 + $0x8] sm:$0xff]
        %v429 = vld [vmem:[%s3 + $0x10] sm:$0xff]
        %v430 = vld [vmem:[%s3 + $0x18] sm:$0xff]
        %vm431 = vcmask 523264
        %v433 = vsel %vm431, %v427, 0
        %v436 = vsel %vm431, %v428, 0
        %v439 = vsel %vm431, %v429, 0
        %v442 = vsel %vm431, %v430, 0
        %444 = vmatprep.subr.mxu0 0.0
        %445 = vmatpush1.msra.mxu0 %v397
        %446 = vmatprep.subr.mxu0 0.0
        %447 = vmatpush1.msra.mxu0 %v400
        %448 = vmatprep.subr.mxu0 0.0
        %449 = vmatpush1.msra.mxu0 %v403
        %450 = vmatprep.subr.mxu0 0.0
        %451 = vmatpush1.msra.mxu0 %v406
        %452 = vmatprep.subr.mxu0 0.0
        %453 = vmatpush1.msra.mxu0 %v409
        %454 = vmatprep.subr.mxu0 0.0
        %455 = vmatpush1.msra.mxu0 %v412
        %456 = vmatprep.subr.mxu0 0.0
        %457 = vmatpush1.msra.mxu0 %v415
        %458 = vmatprep.subr.mxu0 0.0
        %459 = vmatpush1.msra.mxu0 %v418
        %460 = vmatprep.subr.mxu0 0.0
        %461 = vmatpush1.msra.mxu0 0.0
        %462 = vmatprep.subr.mxu0 0.0
        %463 = vmatpush1.msra.mxu0 0.0
        %464 = vmatprep.subr.mxu0 0.0
        %465 = vmatpush1.msra.mxu0 0.0
        %466 = vmatprep.subr.mxu0 0.0
        %467 = vmatpush1.msra.mxu0 0.0
        %468 = vmatprep.subr.mxu0 0.0
        %469 = vmatpush1.msra.mxu0 0.0
        %470 = vmatprep.subr.mxu0 0.0
        %471 = vmatpush1.msra.mxu0 0.0
        %472 = vmatprep.subr.mxu0 0.0
        %473 = vmatpush1.msra.mxu0 0.0
        %474 = vmatprep.subr.mxu0 0.0
        %475 = vmatpush1.msra.mxu0 0.0
        %476 = vmatprep.subr.mxu0 0.0
        %477 = vmatpush1.msra.mxu0 0.0
        %478 = vmatprep.subr.mxu0 0.0
        %479 = vmatpush1.msra.mxu0 0.0
        %480 = vmatprep.subr.mxu0 0.0
        %481 = vmatpush1.msra.mxu0 0.0
        %482 = vmatprep.subr.mxu0 0.0
        %483 = vmatpush1.msra.mxu0 0.0
        %484 = vmatprep.subr.mxu0 0.0
        %485 = vmatpush1.msra.mxu0 0.0
        %486 = vmatprep.subr.mxu0 0.0
        %487 = vmatpush1.msra.mxu0 0.0
        %488 = vmatprep.subr.mxu0 0.0
        %489 = vmatpush1.msra.mxu0 0.0
        %490 = vmatprep.subr.mxu0 0.0
        %491 = vmatpush1.msra.mxu0 0.0
        %492 = vmatprep.subr.mxu0 0.0
        %493 = vmatpush1.msra.mxu0 0.0
        %494 = vmatprep.subr.mxu0 0.0
        %495 = vmatpush1.msra.mxu0 0.0
        %496 = vmatprep.subr.mxu0 0.0
        %497 = vmatpush1.msra.mxu0 0.0
        %498 = vmatprep.subr.mxu0 0.0
        %499 = vmatpush1.msra.mxu0 0.0
        %500 = vmatprep.subr.mxu0 0.0
        %501 = vmatpush1.msra.mxu0 0.0
        %502 = vmatprep.subr.mxu0 0.0
        %503 = vmatpush1.msra.mxu0 0.0
        %504 = vmatprep.subr.mxu0 0.0
        %505 = vmatpush1.msra.mxu0 0.0
        %506 = vmatprep.subr.mxu0 0.0
        %507 = vmatpush1.msra.mxu0 0.0
        %508 = vmatprep.mubr.f32.mxu0 0.0
        %509 = vmatmul.mubr.f32.gmra.mrb[0].mxu0 %v433
        %v510 = vpop.f32.mrb[0].mxu0
        %v511 = vadd.f32 0.0, %v510
        %v512 = vpop.f32.mrb[0].mxu0
        %513 = vmatprep.mubr.f32.mxu0 0.0
        %514 = vmatmul.mubr.f32.gmra.mrb[0].mxu0 %v436
        %v515 = vpop.f32.mrb[0].mxu0
        %v516 = vadd.f32 0.0, %v515
        %v517 = vpop.f32.mrb[0].mxu0
        %518 = vmatprep.mubr.f32.mxu0 0.0
        %519 = vmatmul.mubr.f32.gmra.mrb[0].mxu0 %v439
        %v520 = vpop.f32.mrb[0].mxu0
        %v521 = vadd.f32 0.0, %v520
        %v522 = vpop.f32.mrb[0].mxu0
        %523 = vmatprep.mubr.f32.mxu0 0.0
        %524 = vmatmul.mubr.f32.gmra.mrb[0].mxu0 %v442
        %v525 = vpop.f32.mrb[0].mxu0
        %v526 = vadd.f32 0.0, %v525
        %v527 = vpop.f32.mrb[0].mxu0
        %528 = vdwg.mxu0
        %vm529 = vcmask 261120
        %v531 = vsel %vm529, %v419, 0
        %v534 = vsel %vm529, %v420, 0
        %v537 = vsel %vm529, %v421, 0
        %v540 = vsel %vm529, %v422, 0
        %v543 = vsel %vm529, %v423, 0
        %v546 = vsel %vm529, %v424, 0
        %v549 = vsel %vm529, %v425, 0
        %v552 = vsel %vm529, %v426, 0
        %554 = vmatprep.subr.mxu0 0.0
        %555 = vmatpush1.msra.mxu0 %v511
        %556 = vmatprep.subr.mxu0 0.0
        %557 = vmatpush1.msra.mxu0 %v516
        %558 = vmatprep.subr.mxu0 0.0
        %559 = vmatpush1.msra.mxu0 %v521
        %560 = vmatprep.subr.mxu0 0.0
        %561 = vmatpush1.msra.mxu0 %v526
        %562 = vmatprep.subr.mxu0 0.0
        %563 = vmatpush1.msra.mxu0 0.0
        %564 = vmatprep.subr.mxu0 0.0
        %565 = vmatpush1.msra.mxu0 0.0
        %566 = vmatprep.subr.mxu0 0.0
        %567 = vmatpush1.msra.mxu0 0.0
        %568 = vmatprep.subr.mxu0 0.0
        %569 = vmatpush1.msra.mxu0 0.0
        %570 = vmatprep.subr.mxu0 0.0
        %571 = vmatpush1.msra.mxu0 0.0
        %572 = vmatprep.subr.mxu0 0.0
        %573 = vmatpush1.msra.mxu0 0.0
        %574 = vmatprep.subr.mxu0 0.0
        %575 = vmatpush1.msra.mxu0 0.0
        %576 = vmatprep.subr.mxu0 0.0
        %577 = vmatpush1.msra.mxu0 0.0
        %578 = vmatprep.subr.mxu0 0.0
        %579 = vmatpush1.msra.mxu0 0.0
        %580 = vmatprep.subr.mxu0 0.0
        %581 = vmatpush1.msra.mxu0 0.0
        %582 = vmatprep.subr.mxu0 0.0
        %583 = vmatpush1.msra.mxu0 0.0
        %584 = vmatprep.subr.mxu0 0.0
        %585 = vmatpush1.msra.mxu0 0.0
        %586 = vmatprep.subr.mxu0 0.0
        %587 = vmatpush1.msra.mxu0 0.0
        %588 = vmatprep.subr.mxu0 0.0
        %589 = vmatpush1.msra.mxu0 0.0
        %590 = vmatprep.subr.mxu0 0.0
        %591 = vmatpush1.msra.mxu0 0.0
        %592 = vmatprep.subr.mxu0 0.0
        %593 = vmatpush1.msra.mxu0 0.0
        %594 = vmatprep.subr.mxu0 0.0
        %595 = vmatpush1.msra.mxu0 0.0
        %596 = vmatprep.subr.mxu0 0.0
        %597 = vmatpush1.msra.mxu0 0.0
        %598 = vmatprep.subr.mxu0 0.0
        %599 = vmatpush1.msra.mxu0 0.0
        %600 = vmatprep.subr.mxu0 0.0
        %601 = vmatpush1.msra.mxu0 0.0
        %602 = vmatprep.subr.mxu0 0.0
        %603 = vmatpush1.msra.mxu0 0.0
        %604 = vmatprep.subr.mxu0 0.0
        %605 = vmatpush1.msra.mxu0 0.0
        %606 = vmatprep.subr.mxu0 0.0
        %607 = vmatpush1.msra.mxu0 0.0
        %608 = vmatprep.subr.mxu0 0.0
        %609 = vmatpush1.msra.mxu0 0.0
        %610 = vmatprep.subr.mxu0 0.0
        %611 = vmatpush1.msra.mxu0 0.0
        %612 = vmatprep.subr.mxu0 0.0
        %613 = vmatpush1.msra.mxu0 0.0
        %614 = vmatprep.subr.mxu0 0.0
        %615 = vmatpush1.msra.mxu0 0.0
        %616 = vmatprep.subr.mxu0 0.0
        %617 = vmatpush1.msra.mxu0 0.0
        %618 = vmatprep.mubr.f32.mxu0 0.0
        %619 = vmatmul.mubr.f32.gmra.mrb[0].mxu0 %v531
        %v620 = vpop.f32.mrb[0].mxu0
        %v621 = vadd.f32 0.0, %v620
        %v622 = vpop.f32.mrb[0].mxu0
        %623 = vmatprep.mubr.f32.mxu0 0.0
        %624 = vmatmul.mubr.f32.gmra.mrb[0].mxu0 %v534
        %v625 = vpop.f32.mrb[0].mxu0
        %v626 = vadd.f32 0.0, %v625
        %v627 = vpop.f32.mrb[0].mxu0
        %628 = vmatprep.mubr.f32.mxu0 0.0
        %629 = vmatmul.mubr.f32.gmra.mrb[0].mxu0 %v537
        %v630 = vpop.f32.mrb[0].mxu0
        %v631 = vadd.f32 0.0, %v630
        %v632 = vpop.f32.mrb[0].mxu0
        %633 = vmatprep.mubr.f32.mxu0 0.0
        %634 = vmatmul.mubr.f32.gmra.mrb[0].mxu0 %v540
        %v635 = vpop.f32.mrb[0].mxu0
        %v636 = vadd.f32 0.0, %v635
        %v637 = vpop.f32.mrb[0].mxu0
        %638 = vmatprep.mubr.f32.mxu0 0.0
        %639 = vmatmul.mubr.f32.gmra.mrb[0].mxu0 %v543
        %v640 = vpop.f32.mrb[0].mxu0
        %v641 = vadd.f32 0.0, %v640
        %v642 = vpop.f32.mrb[0].mxu0
        %643 = vmatprep.mubr.f32.mxu0 0.0
        %644 = vmatmul.mubr.f32.gmra.mrb[0].mxu0 %v546
        %v645 = vpop.f32.mrb[0].mxu0
        %v646 = vadd.f32 0.0, %v645
        %v647 = vpop.f32.mrb[0].mxu0
        %648 = vmatprep.mubr.f32.mxu0 0.0
        %649 = vmatmul.mubr.f32.gmra.mrb[0].mxu0 %v549
        %v650 = vpop.f32.mrb[0].mxu0
        %v651 = vadd.f32 0.0, %v650
        %v652 = vpop.f32.mrb[0].mxu0
        %653 = vmatprep.mubr.f32.mxu0 0.0
        %654 = vmatmul.mubr.f32.gmra.mrb[0].mxu0 %v552
        %v655 = vpop.f32.mrb[0].mxu0
        %v656 = vadd.f32 0.0, %v655
        %v657 = vpop.f32.mrb[0].mxu0
        %658 = vdwg.mxu0
        %v659 = vmul.f32 %v621, 0.001953125
        %v660 = vmul.f32 %v626, 0.001953125
        %v661 = vmul.f32 %v631, 0.001953125
        %v662 = vmul.f32 %v636, 0.001953125
        %v663 = vmul.f32 %v641, 0.001953125
        %v664 = vmul.f32 %v646, 0.001953125
        %v665 = vmul.f32 %v651, 0.001953125
        %v666 = vmul.f32 %v656, 0.001953125
        %668 = vset.pattern.permute.xlu0 0
        %669 = vperm.xlu0 %668, %v659
        %v670 = vpop.permute.xlu0 %669
        %673 = vset.pattern.permute.xlu0 0
        %674 = vperm.xlu0 %673, %v660
        %v675 = vpop.permute.xlu0 %674
        %678 = vset.pattern.permute.xlu0 0
        %679 = vperm.xlu0 %678, %v661
        %v680 = vpop.permute.xlu0 %679
        %683 = vset.pattern.permute.xlu0 0
        %684 = vperm.xlu0 %683, %v662
        %v685 = vpop.permute.xlu0 %684
        %688 = vset.pattern.permute.xlu0 0
        %689 = vperm.xlu0 %688, %v663
        %v690 = vpop.permute.xlu0 %689
        %693 = vset.pattern.permute.xlu0 0
        %694 = vperm.xlu0 %693, %v664
        %v695 = vpop.permute.xlu0 %694
        %698 = vset.pattern.permute.xlu0 0
        %699 = vperm.xlu0 %698, %v665
        %v700 = vpop.permute.xlu0 %699
        %703 = vset.pattern.permute.xlu0 0
        %704 = vperm.xlu0 %703, %v666
        %v705 = vpop.permute.xlu0 %704
        %v707 = vsub.f32 %v379, %v670
        %v708 = vsub.f32 %v380, %v670
        %v709 = vsub.f32 %v381, %v675
        %v710 = vsub.f32 %v382, %v675
        %v711 = vsub.f32 %v383, %v680
        %v712 = vsub.f32 %v384, %v680
        %v713 = vsub.f32 %v385, %v685
        %v714 = vsub.f32 %v386, %v685
        %v715 = vsub.f32 %v387, %v690
        %v716 = vsub.f32 %v388, %v690
        %v717 = vsub.f32 %v389, %v695
        %v718 = vsub.f32 %v390, %v695
        %v719 = vsub.f32 %v391, %v700
        %v720 = vsub.f32 %v392, %v700
        %v721 = vsub.f32 %v393, %v705
        %v722 = vsub.f32 %v394, %v705
        %v723 = vmul.f32 %v707, %v707
        %v724 = vmul.f32 %v708, %v708
        %v725 = vmul.f32 %v709, %v709
        %v726 = vmul.f32 %v710, %v710
        %v727 = vmul.f32 %v711, %v711
        %v728 = vmul.f32 %v712, %v712
        %v729 = vmul.f32 %v713, %v713
        %v730 = vmul.f32 %v714, %v714
        %v731 = vmul.f32 %v715, %v715
        %v732 = vmul.f32 %v716, %v716
        %v733 = vmul.f32 %v717, %v717
        %v734 = vmul.f32 %v718, %v718
        %v735 = vmul.f32 %v719, %v719
        %v736 = vmul.f32 %v720, %v720
        %v737 = vmul.f32 %v721, %v721
        %v738 = vmul.f32 %v722, %v722
        %v739 = vadd.f32 %v723, %v724
        %740 = vadd.xlane.f32.xlu0 %v739
        %v741 = vpop.xlane.xlu0 %740
        %v742 = vadd.f32 %v725, %v726
        %743 = vadd.xlane.f32.xlu0 %v742
        %v744 = vpop.xlane.xlu0 %743
        %v745 = vadd.f32 %v727, %v728
        %746 = vadd.xlane.f32.xlu0 %v745
        %v747 = vpop.xlane.xlu0 %746
        %v748 = vadd.f32 %v729, %v730
        %749 = vadd.xlane.f32.xlu0 %v748
        %v750 = vpop.xlane.xlu0 %749
        %v751 = vadd.f32 %v731, %v732
        %752 = vadd.xlane.f32.xlu0 %v751
        %v753 = vpop.xlane.xlu0 %752
        %v754 = vadd.f32 %v733, %v734
        %755 = vadd.xlane.f32.xlu0 %v754
        %v756 = vpop.xlane.xlu0 %755
        %v757 = vadd.f32 %v735, %v736
        %758 = vadd.xlane.f32.xlu0 %v757
        %v759 = vpop.xlane.xlu0 %758
        %v760 = vadd.f32 %v737, %v738
        %761 = vadd.xlane.f32.xlu0 %v760
        %v762 = vpop.xlane.xlu0 %761
        %763 = vmatprep.subr.mxu0 0.0
        %764 = vmatpush1.msra.mxu0 %v741
        %765 = vmatprep.subr.mxu0 0.0
        %766 = vmatpush1.msra.mxu0 %v744
        %767 = vmatprep.subr.mxu0 0.0
        %768 = vmatpush1.msra.mxu0 %v747
        %769 = vmatprep.subr.mxu0 0.0
        %770 = vmatpush1.msra.mxu0 %v750
        %771 = vmatprep.subr.mxu0 0.0
        %772 = vmatpush1.msra.mxu0 %v753
        %773 = vmatprep.subr.mxu0 0.0
        %774 = vmatpush1.msra.mxu0 %v756
        %775 = vmatprep.subr.mxu0 0.0
        %776 = vmatpush1.msra.mxu0 %v759
        %777 = vmatprep.subr.mxu0 0.0
        %778 = vmatpush1.msra.mxu0 %v762
        %779 = vmatprep.subr.mxu0 0.0
        %780 = vmatpush1.msra.mxu0 0.0
        %781 = vmatprep.subr.mxu0 0.0
        %782 = vmatpush1.msra.mxu0 0.0
        %783 = vmatprep.subr.mxu0 0.0
        %784 = vmatpush1.msra.mxu0 0.0
        %785 = vmatprep.subr.mxu0 0.0
        %786 = vmatpush1.msra.mxu0 0.0
        %787 = vmatprep.subr.mxu0 0.0
        %788 = vmatpush1.msra.mxu0 0.0
        %789 = vmatprep.subr.mxu0 0.0
        %790 = vmatpush1.msra.mxu0 0.0
        %791 = vmatprep.subr.mxu0 0.0
        %792 = vmatpush1.msra.mxu0 0.0
        %793 = vmatprep.subr.mxu0 0.0
        %794 = vmatpush1.msra.mxu0 0.0
        %795 = vmatprep.subr.mxu0 0.0
        %796 = vmatpush1.msra.mxu0 0.0
        %797 = vmatprep.subr.mxu0 0.0
        %798 = vmatpush1.msra.mxu0 0.0
        %799 = vmatprep.subr.mxu0 0.0
        %800 = vmatpush1.msra.mxu0 0.0
        %801 = vmatprep.subr.mxu0 0.0
        %802 = vmatpush1.msra.mxu0 0.0
        %803 = vmatprep.subr.mxu0 0.0
        %804 = vmatpush1.msra.mxu0 0.0
        %805 = vmatprep.subr.mxu0 0.0
        %806 = vmatpush1.msra.mxu0 0.0
        %807 = vmatprep.subr.mxu0 0.0
        %808 = vmatpush1.msra.mxu0 0.0
        %809 = vmatprep.subr.mxu0 0.0
        %810 = vmatpush1.msra.mxu0 0.0
        %811 = vmatprep.subr.mxu0 0.0
        %812 = vmatpush1.msra.mxu0 0.0
        %813 = vmatprep.subr.mxu0 0.0
        %814 = vmatpush1.msra.mxu0 0.0
        %815 = vmatprep.subr.mxu0 0.0
        %816 = vmatpush1.msra.mxu0 0.0
        %817 = vmatprep.subr.mxu0 0.0
        %818 = vmatpush1.msra.mxu0 0.0
        %819 = vmatprep.subr.mxu0 0.0
        %820 = vmatpush1.msra.mxu0 0.0
        %821 = vmatprep.subr.mxu0 0.0
        %822 = vmatpush1.msra.mxu0 0.0
        %823 = vmatprep.subr.mxu0 0.0
        %824 = vmatpush1.msra.mxu0 0.0
        %825 = vmatprep.subr.mxu0 0.0
        %826 = vmatpush1.msra.mxu0 0.0
        %827 = vmatprep.mubr.f32.mxu0 0.0
        %828 = vmatmul.mubr.f32.gmra.mrb[0].mxu0 %v433
        %v829 = vpop.f32.mrb[0].mxu0
        %v830 = vadd.f32 0.0, %v829
        %v831 = vpop.f32.mrb[0].mxu0
        %832 = vmatprep.mubr.f32.mxu0 0.0
        %833 = vmatmul.mubr.f32.gmra.mrb[0].mxu0 %v436
        %v834 = vpop.f32.mrb[0].mxu0
        %v835 = vadd.f32 0.0, %v834
        %v836 = vpop.f32.mrb[0].mxu0
        %837 = vmatprep.mubr.f32.mxu0 0.0
        %838 = vmatmul.mubr.f32.gmra.mrb[0].mxu0 %v439
        %v839 = vpop.f32.mrb[0].mxu0
        %v840 = vadd.f32 0.0, %v839
        %v841 = vpop.f32.mrb[0].mxu0
        %842 = vmatprep.mubr.f32.mxu0 0.0
        %843 = vmatmul.mubr.f32.gmra.mrb[0].mxu0 %v442
        %v844 = vpop.f32.mrb[0].mxu0
        %v845 = vadd.f32 0.0, %v844
        %v846 = vpop.f32.mrb[0].mxu0
        %847 = vdwg.mxu0
        %848 = vmatprep.subr.mxu0 0.0
        %849 = vmatpush1.msra.mxu0 %v830
        %850 = vmatprep.subr.mxu0 0.0
        %851 = vmatpush1.msra.mxu0 %v835
        %852 = vmatprep.subr.mxu0 0.0
        %853 = vmatpush1.msra.mxu0 %v840
        %854 = vmatprep.subr.mxu0 0.0
        %855 = vmatpush1.msra.mxu0 %v845
        %856 = vmatprep.subr.mxu0 0.0
        %857 = vmatpush1.msra.mxu0 0.0
        %858 = vmatprep.subr.mxu0 0.0
        %859 = vmatpush1.msra.mxu0 0.0
        %860 = vmatprep.subr.mxu0 0.0
        %861 = vmatpush1.msra.mxu0 0.0
        %862 = vmatprep.subr.mxu0 0.0
        %863 = vmatpush1.msra.mxu0 0.0
        %864 = vmatprep.subr.mxu0 0.0
        %865 = vmatpush1.msra.mxu0 0.0
        %866 = vmatprep.subr.mxu0 0.0
        %867 = vmatpush1.msra.mxu0 0.0
        %868 = vmatprep.subr.mxu0 0.0
        %869 = vmatpush1.msra.mxu0 0.0
        %870 = vmatprep.subr.mxu0 0.0
        %871 = vmatpush1.msra.mxu0 0.0
        %872 = vmatprep.subr.mxu0 0.0
        %873 = vmatpush1.msra.mxu0 0.0
        %874 = vmatprep.subr.mxu0 0.0
        %875 = vmatpush1.msra.mxu0 0.0
        %876 = vmatprep.subr.mxu0 0.0
        %877 = vmatpush1.msra.mxu0 0.0
        %878 = vmatprep.subr.mxu0 0.0
        %879 = vmatpush1.msra.mxu0 0.0
        %880 = vmatprep.subr.mxu0 0.0
        %881 = vmatpush1.msra.mxu0 0.0
        %882 = vmatprep.subr.mxu0 0.0
        %883 = vmatpush1.msra.mxu0 0.0
        %884 = vmatprep.subr.mxu0 0.0
        %885 = vmatpush1.msra.mxu0 0.0
        %886 = vmatprep.subr.mxu0 0.0
        %887 = vmatpush1.msra.mxu0 0.0
        %888 = vmatprep.subr.mxu0 0.0
        %889 = vmatpush1.msra.mxu0 0.0
        %890 = vmatprep.subr.mxu0 0.0
        %891 = vmatpush1.msra.mxu0 0.0
        %892 = vmatprep.subr.mxu0 0.0
        %893 = vmatpush1.msra.mxu0 0.0
        %894 = vmatprep.subr.mxu0 0.0
        %895 = vmatpush1.msra.mxu0 0.0
        %896 = vmatprep.subr.mxu0 0.0
        %897 = vmatpush1.msra.mxu0 0.0
        %898 = vmatprep.subr.mxu0 0.0
        %899 = vmatpush1.msra.mxu0 0.0
        %900 = vmatprep.subr.mxu0 0.0
        %901 = vmatpush1.msra.mxu0 0.0
        %902 = vmatprep.subr.mxu0 0.0
        %903 = vmatpush1.msra.mxu0 0.0
        %904 = vmatprep.subr.mxu0 0.0
        %905 = vmatpush1.msra.mxu0 0.0
        %906 = vmatprep.subr.mxu0 0.0
        %907 = vmatpush1.msra.mxu0 0.0
        %908 = vmatprep.subr.mxu0 0.0
        %909 = vmatpush1.msra.mxu0 0.0
        %910 = vmatprep.subr.mxu0 0.0
        %911 = vmatpush1.msra.mxu0 0.0
        %912 = vmatprep.mubr.f32.mxu0 0.0
        %913 = vmatmul.mubr.f32.gmra.mrb[0].mxu0 %v531
        %v914 = vpop.f32.mrb[0].mxu0
        %v915 = vadd.f32 0.0, %v914
        %v916 = vpop.f32.mrb[0].mxu0
        %917 = vmatprep.mubr.f32.mxu0 0.0
        %918 = vmatmul.mubr.f32.gmra.mrb[0].mxu0 %v534
        %v919 = vpop.f32.mrb[0].mxu0
        %v920 = vadd.f32 0.0, %v919
        %v921 = vpop.f32.mrb[0].mxu0
        %922 = vmatprep.mubr.f32.mxu0 0.0
        %923 = vmatmul.mubr.f32.gmra.mrb[0].mxu0 %v537
        %v924 = vpop.f32.mrb[0].mxu0
        %v925 = vadd.f32 0.0, %v924
        %v926 = vpop.f32.mrb[0].mxu0
        %927 = vmatprep.mubr.f32.mxu0 0.0
        %928 = vmatmul.mubr.f32.gmra.mrb[0].mxu0 %v540
        %v929 = vpop.f32.mrb[0].mxu0
        %v930 = vadd.f32 0.0, %v929
        %v931 = vpop.f32.mrb[0].mxu0
        %932 = vmatprep.mubr.f32.mxu0 0.0
        %933 = vmatmul.mubr.f32.gmra.mrb[0].mxu0 %v543
        %v934 = vpop.f32.mrb[0].mxu0
        %v935 = vadd.f32 0.0, %v934
        %v936 = vpop.f32.mrb[0].mxu0
        %937 = vmatprep.mubr.f32.mxu0 0.0
        %938 = vmatmul.mubr.f32.gmra.mrb[0].mxu0 %v546
        %v939 = vpop.f32.mrb[0].mxu0
        %v940 = vadd.f32 0.0, %v939
        %v941 = vpop.f32.mrb[0].mxu0
        %942 = vmatprep.mubr.f32.mxu0 0.0
        %943 = vmatmul.mubr.f32.gmra.mrb[0].mxu0 %v549
        %v944 = vpop.f32.mrb[0].mxu0
        %v945 = vadd.f32 0.0, %v944
        %v946 = vpop.f32.mrb[0].mxu0
        %947 = vmatprep.mubr.f32.mxu0 0.0
        %948 = vmatmul.mubr.f32.gmra.mrb[0].mxu0 %v552
        %v949 = vpop.f32.mrb[0].mxu0
        %v950 = vadd.f32 0.0, %v949
        %v951 = vpop.f32.mrb[0].mxu0
        %952 = vdwg.mxu0
        %v953 = vmul.f32 %v915, 0.001953125
        %v954 = vmul.f32 %v920, 0.001953125
        %v955 = vmul.f32 %v925, 0.001953125
        %v956 = vmul.f32 %v930, 0.001953125
        %v957 = vmul.f32 %v935, 0.001953125
        %v958 = vmul.f32 %v940, 0.001953125
        %v959 = vmul.f32 %v945, 0.001953125
        %v960 = vmul.f32 %v950, 0.001953125
        %v961 = vld [vmem:[%s2] sm:$0xff]
        %v962 = vld [vmem:[%s2 + $0x8] sm:$0xff]
        %v963 = vld [vmem:[%s2 + $0x10] sm:$0xff]
        %v964 = vld [vmem:[%s2 + $0x18] sm:$0xff]
        %v965 = vld [vmem:[%s2 + $0x20] sm:$0xff]
        %v966 = vld [vmem:[%s2 + $0x28] sm:$0xff]
        %v967 = vld [vmem:[%s2 + $0x30] sm:$0xff]
        %v968 = vld [vmem:[%s2 + $0x38] sm:$0xff]
        %v969 = vadd.f32 %v953, 1e-06
        %v970 = vadd.f32 %v954, 1e-06
        %v971 = vadd.f32 %v955, 1e-06
        %v972 = vadd.f32 %v956, 1e-06
        %v973 = vadd.f32 %v957, 1e-06
        %v974 = vadd.f32 %v958, 1e-06
        %v975 = vadd.f32 %v959, 1e-06
        %v976 = vadd.f32 %v960, 1e-06
        %v977 = vrsqrt.pop %v969
        %v978 = vrsqrt.pop %v970
        %v979 = vrsqrt.pop %v971
        %v980 = vrsqrt.pop %v972
        %v981 = vrsqrt.pop %v973
        %v982 = vrsqrt.pop %v974
        %v983 = vrsqrt.pop %v975
        %v984 = vrsqrt.pop %v976
        %v985 = vmul.f32 %v961, %v977
        %v986 = vmul.f32 %v962, %v978
        %v987 = vmul.f32 %v963, %v979
        %v988 = vmul.f32 %v964, %v980
        %v989 = vmul.f32 %v965, %v981
        %v990 = vmul.f32 %v966, %v982
        %v991 = vmul.f32 %v967, %v983
        %v992 = vmul.f32 %v968, %v984
        %994 = vset.pattern.permute.xlu0 0
        %995 = vperm.xlu0 %994, %v985
        %v996 = vpop.permute.xlu0 %995
        %999 = vset.pattern.permute.xlu0 0
        %1000 = vperm.xlu0 %999, %v986
        %v1001 = vpop.permute.xlu0 %1000
        %1004 = vset.pattern.permute.xlu0 0
        %1005 = vperm.xlu0 %1004, %v987
        %v1006 = vpop.permute.xlu0 %1005
        %1009 = vset.pattern.permute.xlu0 0
        %1010 = vperm.xlu0 %1009, %v988
        %v1011 = vpop.permute.xlu0 %1010
        %1014 = vset.pattern.permute.xlu0 0
        %1015 = vperm.xlu0 %1014, %v989
        %v1016 = vpop.permute.xlu0 %1015
        %1019 = vset.pattern.permute.xlu0 0
        %1020 = vperm.xlu0 %1019, %v990
        %v1021 = vpop.permute.xlu0 %1020
        %1024 = vset.pattern.permute.xlu0 0
        %1025 = vperm.xlu0 %1024, %v991
        %v1026 = vpop.permute.xlu0 %1025
        %1029 = vset.pattern.permute.xlu0 0
        %1030 = vperm.xlu0 %1029, %v992
        %v1031 = vpop.permute.xlu0 %1030
        %v1033 = vmul.f32 %v379, %v996
        %v1034 = vmul.f32 %v380, %v996
        %v1035 = vmul.f32 %v381, %v1001
        %v1036 = vmul.f32 %v382, %v1001
        %v1037 = vmul.f32 %v383, %v1006
        %v1038 = vmul.f32 %v384, %v1006
        %v1039 = vmul.f32 %v385, %v1011
        %v1040 = vmul.f32 %v386, %v1011
        %v1041 = vmul.f32 %v387, %v1016
        %v1042 = vmul.f32 %v388, %v1016
        %v1043 = vmul.f32 %v389, %v1021
        %v1044 = vmul.f32 %v390, %v1021
        %v1045 = vmul.f32 %v391, %v1026
        %v1046 = vmul.f32 %v392, %v1026
        %v1047 = vmul.f32 %v393, %v1031
        %v1048 = vmul.f32 %v394, %v1031
        %v1049 = vmul.f32 %v659, %v985
        %v1050 = vmul.f32 %v660, %v986
        %v1051 = vmul.f32 %v661, %v987
        %v1052 = vmul.f32 %v662, %v988
        %v1053 = vmul.f32 %v663, %v989
        %v1054 = vmul.f32 %v664, %v990
        %v1055 = vmul.f32 %v665, %v991
        %v1056 = vmul.f32 %v666, %v992
        %1065 = vrot.lane.b32.xlu0 %v1049, 1
        %v1066 = vpop.permute.xlu0 %1065
        %1067 = vrot.lane.b32.xlu0 %v1050, 1
        %v1068 = vpop.permute.xlu0 %1067
        %1069 = vrot.lane.b32.xlu0 %v1051, 1
        %v1070 = vpop.permute.xlu0 %1069
        %1071 = vrot.lane.b32.xlu0 %v1052, 1
        %v1072 = vpop.permute.xlu0 %1071
        %1073 = vrot.lane.b32.xlu0 %v1053, 1
        %v1074 = vpop.permute.xlu0 %1073
        %1075 = vrot.lane.b32.xlu0 %v1054, 1
        %v1076 = vpop.permute.xlu0 %1075
        %1077 = vrot.lane.b32.xlu0 %v1055, 1
        %v1078 = vpop.permute.xlu0 %1077
        %1079 = vrot.lane.b32.xlu0 %v1056, 1
        %v1080 = vpop.permute.xlu0 %1079
        %v1089 = vsub.f32 %v961, %v1066
        %v1090 = vsub.f32 %v962, %v1068
        %v1091 = vsub.f32 %v963, %v1070
        %v1092 = vsub.f32 %v964, %v1072
        %v1093 = vsub.f32 %v965, %v1074
        %v1094 = vsub.f32 %v966, %v1076
        %v1095 = vsub.f32 %v967, %v1078
        %v1096 = vsub.f32 %v968, %v1080
        %1098 = vset.pattern.permute.xlu0 1
        %1099 = vperm.xlu0 %1098, %v1089
        %v1100 = vpop.permute.xlu0 %1099
        %1103 = vset.pattern.permute.xlu0 1
        %1104 = vperm.xlu0 %1103, %v1090
        %v1105 = vpop.permute.xlu0 %1104
        %1108 = vset.pattern.permute.xlu0 1
        %1109 = vperm.xlu0 %1108, %v1091
        %v1110 = vpop.permute.xlu0 %1109
        %1113 = vset.pattern.permute.xlu0 1
        %1114 = vperm.xlu0 %1113, %v1092
        %v1115 = vpop.permute.xlu0 %1114
        %1118 = vset.pattern.permute.xlu0 1
        %1119 = vperm.xlu0 %1118, %v1093
        %v1120 = vpop.permute.xlu0 %1119
        %1123 = vset.pattern.permute.xlu0 1
        %1124 = vperm.xlu0 %1123, %v1094
        %v1125 = vpop.permute.xlu0 %1124
        %1128 = vset.pattern.permute.xlu0 1
        %1129 = vperm.xlu0 %1128, %v1095
        %v1130 = vpop.permute.xlu0 %1129
        %1133 = vset.pattern.permute.xlu0 1
        %1134 = vperm.xlu0 %1133, %v1096
        %v1135 = vpop.permute.xlu0 %1134
        %v1137 = vadd.f32 %v1033, %v1100
        %v1138 = vadd.f32 %v1034, %v1100
        %v1139 = vadd.f32 %v1035, %v1105
        %v1140 = vadd.f32 %v1036, %v1105
        %v1141 = vadd.f32 %v1037, %v1110
        %v1142 = vadd.f32 %v1038, %v1110
        %v1143 = vadd.f32 %v1039, %v1115
        %v1144 = vadd.f32 %v1040, %v1115
        %v1145 = vadd.f32 %v1041, %v1120
        %v1146 = vadd.f32 %v1042, %v1120
        %v1147 = vadd.f32 %v1043, %v1125
        %v1148 = vadd.f32 %v1044, %v1125
        %v1149 = vadd.f32 %v1045, %v1130
        %v1150 = vadd.f32 %v1046, %v1130
        %v1151 = vadd.f32 %v1047, %v1135
        %v1152 = vadd.f32 %v1048, %v1135
        %v1153 = vld [vmem:[%s5] sm:$0xf]
        %v1154 = vld [vmem:[%s5 + $0x4] sm:$0xf]
        %v1155 = vld [vmem:[%s5 + $0x8] sm:$0xf]
        %v1156 = vld [vmem:[%s5 + $0xc] sm:$0xf]
        %v1157 = vld [vmem:[%s5 + $0x10] sm:$0xf]
        %v1158 = vld [vmem:[%s5 + $0x14] sm:$0xf]
        %v1159 = vld [vmem:[%s5 + $0x18] sm:$0xf]
        %v1160 = vld [vmem:[%s5 + $0x1c] sm:$0xf]
        %v1161 = vpack.c.bf16 %v1139, %v1137
        %v1162 = vpack.c.bf16 %v1140, %v1138
        %v1163 = vpack.c.bf16 %v1143, %v1141
        %v1164 = vpack.c.bf16 %v1144, %v1142
        %v1165 = vpack.c.bf16 %v1147, %v1145
        %v1166 = vpack.c.bf16 %v1148, %v1146
        %v1167 = vpack.c.bf16 %v1151, %v1149
        %v1168 = vpack.c.bf16 %v1152, %v1150
        %1170 = vset.pattern.permute.xlu0 2
        %1171 = vperm.xlu0 %1170, %v961
        %v1172 = vpop.permute.xlu0 %1171
        %1175 = vset.pattern.permute.xlu0 2
        %1176 = vperm.xlu0 %1175, %v962
        %v1177 = vpop.permute.xlu0 %1176
        %1180 = vset.pattern.permute.xlu0 2
        %1181 = vperm.xlu0 %1180, %v963
        %v1182 = vpop.permute.xlu0 %1181
        %1185 = vset.pattern.permute.xlu0 2
        %1186 = vperm.xlu0 %1185, %v964
        %v1187 = vpop.permute.xlu0 %1186
        %1190 = vset.pattern.permute.xlu0 2
        %1191 = vperm.xlu0 %1190, %v965
        %v1192 = vpop.permute.xlu0 %1191
        %1195 = vset.pattern.permute.xlu0 2
        %1196 = vperm.xlu0 %1195, %v966
        %v1197 = vpop.permute.xlu0 %1196
        %1200 = vset.pattern.permute.xlu0 2
        %1201 = vperm.xlu0 %1200, %v967
        %v1202 = vpop.permute.xlu0 %1201
        %1205 = vset.pattern.permute.xlu0 2
        %1206 = vperm.xlu0 %1205, %v968
        %v1207 = vpop.permute.xlu0 %1206
        %v1217 = vunpack.c.l.b16 %v1153
        %v1218 = vunpack.c.l.b16 %v1154
        %v1219 = vunpack.c.l.b16 %v1155
        %v1220 = vunpack.c.l.b16 %v1156
        %v1221 = vunpack.c.l.b16 %v1157
        %v1222 = vunpack.c.l.b16 %v1158
        %v1223 = vunpack.c.l.b16 %v1159
        %v1224 = vunpack.c.l.b16 %v1160
        %v1225 = vpack.c.b16 %v1218, %v1217
        %v1226 = vpack.c.b16 %v1220, %v1219
        %v1227 = vpack.c.b16 %v1222, %v1221
        %v1228 = vpack.c.b16 %v1224, %v1223
        %v1230 = vsel %vm431, %v1225, 0
        %v1233 = vsel %vm431, %v1226, 0
        %v1236 = vsel %vm431, %v1227, 0
        %v1239 = vsel %vm431, %v1228, 0
        %1241 = vmatprep.subr.bf16.mxu0 %v1162
        %1242 = vmatpush1.bf16.msra.mxu0 %v1161
        %1243 = vmatprep.subr.bf16.mxu0 %v1164
        %1244 = vmatpush1.bf16.msra.mxu0 %v1163
        %1245 = vmatprep.subr.bf16.mxu0 %v1166
        %1246 = vmatpush1.bf16.msra.mxu0 %v1165
        %1247 = vmatprep.subr.bf16.mxu0 %v1168
        %1248 = vmatpush1.bf16.msra.mxu0 %v1167
        %1249 = vmatprep.subr.bf16.mxu0 0
        %1250 = vmatpush1.bf16.msra.mxu0 0
        %1251 = vmatprep.subr.bf16.mxu0 0
        %1252 = vmatpush1.bf16.msra.mxu0 0
        %1253 = vmatprep.subr.bf16.mxu0 0
        %1254 = vmatpush1.bf16.msra.mxu0 0
        %1255 = vmatprep.subr.bf16.mxu0 0
        %1256 = vmatpush1.bf16.msra.mxu0 0
        %1257 = vmatprep.subr.bf16.mxu0 0
        %1258 = vmatpush1.bf16.msra.mxu0 0
        %1259 = vmatprep.subr.bf16.mxu0 0
        %1260 = vmatpush1.bf16.msra.mxu0 0
        %1261 = vmatprep.subr.bf16.mxu0 0
        %1262 = vmatpush1.bf16.msra.mxu0 0
        %1263 = vmatprep.subr.bf16.mxu0 0
        %1264 = vmatpush1.bf16.msra.mxu0 0
        %1265 = vmatprep.subr.bf16.mxu0 0
        %1266 = vmatpush1.bf16.msra.mxu0 0
        %1267 = vmatprep.subr.bf16.mxu0 0
        %1268 = vmatpush1.bf16.msra.mxu0 0
        %1269 = vmatprep.subr.bf16.mxu0 0
        %1270 = vmatpush1.bf16.msra.mxu0 0
        %1271 = vmatprep.subr.bf16.mxu0 0
        %1272 = vmatpush1.bf16.msra.mxu0 0
        %1273 = vmatprep.mubr.bf16.mxu0 0
        %1274 = vmatmul.mubr.bf16.gmra.mrb[0].mxu0 %v1230
        %v1275 = vpop.f32.mrb[0].mxu0
        %v1276 = vadd.f32 %v1172, %v1275
        %v1277 = vpop.f32.mrb[0].mxu0
        %v1278 = vadd.f32 %v1172, %v1277
        %v1279 = vpop.f32.mrb[0].mxu0
        %v1280 = vadd.f32 %v1177, %v1279
        %v1281 = vpop.f32.mrb[0].mxu0
        %v1282 = vadd.f32 %v1177, %v1281
        %1283 = vmatprep.mubr.bf16.mxu0 0
        %1284 = vmatmul.mubr.bf16.gmra.mrb[0].mxu0 %v1233
        %v1285 = vpop.f32.mrb[0].mxu0
        %v1286 = vadd.f32 %v1182, %v1285
        %v1287 = vpop.f32.mrb[0].mxu0
        %v1288 = vadd.f32 %v1182, %v1287
        %v1289 = vpop.f32.mrb[0].mxu0
        %v1290 = vadd.f32 %v1187, %v1289
        %v1291 = vpop.f32.mrb[0].mxu0
        %v1292 = vadd.f32 %v1187, %v1291
        %1293 = vmatprep.mubr.bf16.mxu0 0
        %1294 = vmatmul.mubr.bf16.gmra.mrb[0].mxu0 %v1236
        %v1295 = vpop.f32.mrb[0].mxu0
        %v1296 = vadd.f32 %v1192, %v1295
        %v1297 = vpop.f32.mrb[0].mxu0
        %v1298 = vadd.f32 %v1192, %v1297
        %v1299 = vpop.f32.mrb[0].mxu0
        %v1300 = vadd.f32 %v1197, %v1299
        %v1301 = vpop.f32.mrb[0].mxu0
        %v1302 = vadd.f32 %v1197, %v1301
        %1303 = vmatprep.mubr.bf16.mxu0 0
        %1304 = vmatmul.mubr.bf16.gmra.mrb[0].mxu0 %v1239
        %v1305 = vpop.f32.mrb[0].mxu0
        %v1306 = vadd.f32 %v1202, %v1305
        %v1307 = vpop.f32.mrb[0].mxu0
        %v1308 = vadd.f32 %v1202, %v1307
        %v1309 = vpop.f32.mrb[0].mxu0
        %v1310 = vadd.f32 %v1207, %v1309
        %v1311 = vpop.f32.mrb[0].mxu0
        %v1312 = vadd.f32 %v1207, %v1311
        %1313 = vdwg.mxu0
        %v1314 = vadd.f32 %v1276, %v1280
        %v1315 = vadd.f32 %v1314, %v1286
        %v1316 = vadd.f32 %v1315, %v1290
        %v1317 = vadd.f32 %v1316, %v1296
        %v1318 = vadd.f32 %v1317, %v1300
        %v1319 = vadd.f32 %v1318, %v1306
        %v1320 = vadd.f32 %v1319, %v1310
        %v1321 = vrot.slane %v1320, 4
        %v1322 = vadd.f32 %v1320, %v1321
        %v1323 = vrot.slane %v1322, 2
        %v1324 = vadd.f32 %v1322, %v1323
        %v1325 = vrot.slane %v1324, 1
        %v1326 = vadd.f32 %v1324, %v1325
        %v1327 = vadd.f32 %v1278, %v1282
        %v1328 = vadd.f32 %v1327, %v1288
        %v1329 = vadd.f32 %v1328, %v1292
        %v1330 = vadd.f32 %v1329, %v1298
        %v1331 = vadd.f32 %v1330, %v1302
        %v1332 = vadd.f32 %v1331, %v1308
        %v1333 = vadd.f32 %v1332, %v1312
        %v1334 = vrot.slane %v1333, 4
        %v1335 = vadd.f32 %v1333, %v1334
        %v1336 = vrot.slane %v1335, 2
        %v1337 = vadd.f32 %v1335, %v1336
        %v1338 = vrot.slane %v1337, 1
        %v1339 = vadd.f32 %v1337, %v1338
        %v1340 = vrcp.pop 64.0
        %v1341 = vmul.f32 %v1326, %v1340
        %v1342 = vmul.f32 %v1339, %v1340
        %v1343 = vsub.f32 %v1276, %v1341
        %v1344 = vsub.f32 %v1278, %v1342
        %v1345 = vsub.f32 %v1280, %v1341
        %v1346 = vsub.f32 %v1282, %v1342
        %v1347 = vsub.f32 %v1286, %v1341
        %v1348 = vsub.f32 %v1288, %v1342
        %v1349 = vsub.f32 %v1290, %v1341
        %v1350 = vsub.f32 %v1292, %v1342
        %v1351 = vsub.f32 %v1296, %v1341
        %v1352 = vsub.f32 %v1298, %v1342
        %v1353 = vsub.f32 %v1300, %v1341
        %v1354 = vsub.f32 %v1302, %v1342
        %v1355 = vsub.f32 %v1306, %v1341
        %v1356 = vsub.f32 %v1308, %v1342
        %v1357 = vsub.f32 %v1310, %v1341
        %v1358 = vsub.f32 %v1312, %v1342
        %v1359 = vmul.f32 %v1343, %v1343
        %v1360 = vmul.f32 %v1344, %v1344
        %v1361 = vmul.f32 %v1345, %v1345
        %v1362 = vmul.f32 %v1346, %v1346
        %v1363 = vmul.f32 %v1347, %v1347
        %v1364 = vmul.f32 %v1348, %v1348
        %v1365 = vmul.f32 %v1349, %v1349
        %v1366 = vmul.f32 %v1350, %v1350
        %v1367 = vmul.f32 %v1351, %v1351
        %v1368 = vmul.f32 %v1352, %v1352
        %v1369 = vmul.f32 %v1353, %v1353
        %v1370 = vmul.f32 %v1354, %v1354
        %v1371 = vmul.f32 %v1355, %v1355
        %v1372 = vmul.f32 %v1356, %v1356
        %v1373 = vmul.f32 %v1357, %v1357
        %v1374 = vmul.f32 %v1358, %v1358
        %v1375 = vadd.f32 %v1359, %v1361
        %v1376 = vadd.f32 %v1375, %v1363
        %v1377 = vadd.f32 %v1376, %v1365
        %v1378 = vadd.f32 %v1377, %v1367
        %v1379 = vadd.f32 %v1378, %v1369
        %v1380 = vadd.f32 %v1379, %v1371
        %v1381 = vadd.f32 %v1380, %v1373
        %v1382 = vrot.slane %v1381, 4
        %v1383 = vadd.f32 %v1381, %v1382
        %v1384 = vrot.slane %v1383, 2
        %v1385 = vadd.f32 %v1383, %v1384
        %v1386 = vrot.slane %v1385, 1
        %v1387 = vadd.f32 %v1385, %v1386
        %v1388 = vadd.f32 %v1360, %v1362
        %v1389 = vadd.f32 %v1388, %v1364
        %v1390 = vadd.f32 %v1389, %v1366
        %v1391 = vadd.f32 %v1390, %v1368
        %v1392 = vadd.f32 %v1391, %v1370
        %v1393 = vadd.f32 %v1392, %v1372
        %v1394 = vadd.f32 %v1393, %v1374
        %v1395 = vrot.slane %v1394, 4
        %v1396 = vadd.f32 %v1394, %v1395
        %v1397 = vrot.slane %v1396, 2
        %v1398 = vadd.f32 %v1396, %v1397
        %v1399 = vrot.slane %v1398, 1
        %v1400 = vadd.f32 %v1398, %v1399
        %v1401 = vmul.f32 %v1387, %v1340
        %v1402 = vmul.f32 %v1400, %v1340
        %v1403 = vadd.f32 %v1401, 1e-05
        %v1404 = vadd.f32 %v1402, 1e-05
        %v1405 = vrsqrt.pop %v1403
        %v1406 = vrsqrt.pop %v1404
        %v1407 = vmul.f32 %v1343, %v1405
        %v1408 = vmul.f32 %v1344, %v1406
        %v1409 = vmul.f32 %v1345, %v1405
        %v1410 = vmul.f32 %v1346, %v1406
        %v1411 = vmul.f32 %v1347, %v1405
        %v1412 = vmul.f32 %v1348, %v1406
        %v1413 = vmul.f32 %v1349, %v1405
        %v1414 = vmul.f32 %v1350, %v1406
        %v1415 = vmul.f32 %v1351, %v1405
        %v1416 = vmul.f32 %v1352, %v1406
        %v1417 = vmul.f32 %v1353, %v1405
        %v1418 = vmul.f32 %v1354, %v1406
        %v1419 = vmul.f32 %v1355, %v1405
        %v1420 = vmul.f32 %v1356, %v1406
        %v1421 = vmul.f32 %v1357, %v1405
        %v1422 = vmul.f32 %v1358, %v1406
        %1423 = vset.pattern.permute.xlu0 3
        %1424 = vperm.xlu0 %1423, %v961
        %v1425 = vpop.permute.xlu0 %1424
        %1427 = vset.pattern.permute.xlu0 3
        %1428 = vperm.xlu0 %1427, %v962
        %v1429 = vpop.permute.xlu0 %1428
        %1431 = vset.pattern.permute.xlu0 3
        %1432 = vperm.xlu0 %1431, %v963
        %v1433 = vpop.permute.xlu0 %1432
        %1435 = vset.pattern.permute.xlu0 3
        %1436 = vperm.xlu0 %1435, %v964
        %v1437 = vpop.permute.xlu0 %1436
        %1439 = vset.pattern.permute.xlu0 3
        %1440 = vperm.xlu0 %1439, %v965
        %v1441 = vpop.permute.xlu0 %1440
        %1443 = vset.pattern.permute.xlu0 3
        %1444 = vperm.xlu0 %1443, %v966
        %v1445 = vpop.permute.xlu0 %1444
        %1447 = vset.pattern.permute.xlu0 3
        %1448 = vperm.xlu0 %1447, %v967
        %v1449 = vpop.permute.xlu0 %1448
        %1451 = vset.pattern.permute.xlu0 3
        %1452 = vperm.xlu0 %1451, %v968
        %v1453 = vpop.permute.xlu0 %1452
        %v1455 = vmul.f32 %v1407, %v1425
        %v1456 = vmul.f32 %v1408, %v1425
        %v1457 = vmul.f32 %v1409, %v1429
        %v1458 = vmul.f32 %v1410, %v1429
        %v1459 = vmul.f32 %v1411, %v1433
        %v1460 = vmul.f32 %v1412, %v1433
        %v1461 = vmul.f32 %v1413, %v1437
        %v1462 = vmul.f32 %v1414, %v1437
        %v1463 = vmul.f32 %v1415, %v1441
        %v1464 = vmul.f32 %v1416, %v1441
        %v1465 = vmul.f32 %v1417, %v1445
        %v1466 = vmul.f32 %v1418, %v1445
        %v1467 = vmul.f32 %v1419, %v1449
        %v1468 = vmul.f32 %v1420, %v1449
        %v1469 = vmul.f32 %v1421, %v1453
        %v1470 = vmul.f32 %v1422, %v1453
        %1471 = vset.pattern.permute.xlu0 4
        %1472 = vperm.xlu0 %1471, %v961
        %v1473 = vpop.permute.xlu0 %1472
        %1475 = vset.pattern.permute.xlu0 4
        %1476 = vperm.xlu0 %1475, %v962
        %v1477 = vpop.permute.xlu0 %1476
        %1479 = vset.pattern.permute.xlu0 4
        %1480 = vperm.xlu0 %1479, %v963
        %v1481 = vpop.permute.xlu0 %1480
        %1483 = vset.pattern.permute.xlu0 4
        %1484 = vperm.xlu0 %1483, %v964
        %v1485 = vpop.permute.xlu0 %1484
        %1487 = vset.pattern.permute.xlu0 4
        %1488 = vperm.xlu0 %1487, %v965
        %v1489 = vpop.permute.xlu0 %1488
        %1491 = vset.pattern.permute.xlu0 4
        %1492 = vperm.xlu0 %1491, %v966
        %v1493 = vpop.permute.xlu0 %1492
        %1495 = vset.pattern.permute.xlu0 4
        %1496 = vperm.xlu0 %1495, %v967
        %v1497 = vpop.permute.xlu0 %1496
        %1499 = vset.pattern.permute.xlu0 4
        %1500 = vperm.xlu0 %1499, %v968
        %v1501 = vpop.permute.xlu0 %1500
        %v1503 = vadd.f32 %v1455, %v1473
        %v1504 = vadd.f32 %v1456, %v1473
        %v1505 = vadd.f32 %v1457, %v1477
        %v1506 = vadd.f32 %v1458, %v1477
        %v1507 = vadd.f32 %v1459, %v1481
        %v1508 = vadd.f32 %v1460, %v1481
        %v1509 = vadd.f32 %v1461, %v1485
        %v1510 = vadd.f32 %v1462, %v1485
        %v1511 = vadd.f32 %v1463, %v1489
        %v1512 = vadd.f32 %v1464, %v1489
        %v1513 = vadd.f32 %v1465, %v1493
        %v1514 = vadd.f32 %v1466, %v1493
        %v1515 = vadd.f32 %v1467, %v1497
        %v1516 = vadd.f32 %v1468, %v1497
        %v1517 = vadd.f32 %v1469, %v1501
        %v1518 = vadd.f32 %v1470, %v1501
        %v1519 = vpack.c.bf16 %v1505, %v1503
        %v1520 = vpack.c.bf16 %v1506, %v1504
        %v1521 = vpack.c.bf16 %v1509, %v1507
        %v1522 = vpack.c.bf16 %v1510, %v1508
        %v1523 = vpack.c.bf16 %v1513, %v1511
        %v1524 = vpack.c.bf16 %v1514, %v1512
        %v1525 = vpack.c.bf16 %v1517, %v1515
        %v1526 = vpack.c.bf16 %v1518, %v1516
        %v1527 = vld [vmem:[%s6] sm:$0xf]
        %v1528 = vld [vmem:[%s6 + $0x4] sm:$0xf]
        %v1529 = vld [vmem:[%s6 + $0x8] sm:$0xf]
        %v1530 = vld [vmem:[%s6 + $0xc] sm:$0xf]
        %v1531 = vld [vmem:[%s6 + $0x10] sm:$0xf]
        %v1532 = vld [vmem:[%s6 + $0x14] sm:$0xf]
        %v1533 = vld [vmem:[%s6 + $0x18] sm:$0xf]
        %v1534 = vld [vmem:[%s6 + $0x1c] sm:$0xf]
        %v1535 = vld [vmem:[%s6 + $0x20] sm:$0xf]
        %v1536 = vld [vmem:[%s6 + $0x24] sm:$0xf]
        %v1537 = vld [vmem:[%s6 + $0x28] sm:$0xf]
        %v1538 = vld [vmem:[%s6 + $0x2c] sm:$0xf]
        %v1539 = vld [vmem:[%s6 + $0x30] sm:$0xf]
        %v1540 = vld [vmem:[%s6 + $0x34] sm:$0xf]
        %v1541 = vld [vmem:[%s6 + $0x38] sm:$0xf]
        %v1542 = vld [vmem:[%s6 + $0x3c] sm:$0xf]
        %v1543 = vld [vmem:[%s6 + $0x40] sm:$0xf]
        %v1544 = vld [vmem:[%s6 + $0x44] sm:$0xf]
        %v1545 = vld [vmem:[%s6 + $0x48] sm:$0xf]
        %v1546 = vld [vmem:[%s6 + $0x4c] sm:$0xf]
        %v1547 = vld [vmem:[%s6 + $0x50] sm:$0xf]
        %v1548 = vld [vmem:[%s6 + $0x54] sm:$0xf]
        %v1549 = vld [vmem:[%s6 + $0x58] sm:$0xf]
        %v1550 = vld [vmem:[%s6 + $0x5c] sm:$0xf]
        %v1575 = vunpack.c.l.b16 %v1527
        %v1576 = vunpack.c.l.b16 %v1528
        %v1577 = vunpack.c.l.b16 %v1529
        %v1578 = vunpack.c.l.b16 %v1530
        %v1579 = vunpack.c.l.b16 %v1531
        %v1580 = vunpack.c.l.b16 %v1532
        %v1581 = vunpack.c.l.b16 %v1533
        %v1582 = vunpack.c.l.b16 %v1534
        %v1583 = vunpack.c.l.b16 %v1535
        %v1584 = vunpack.c.l.b16 %v1536
        %v1585 = vunpack.c.l.b16 %v1537
        %v1586 = vunpack.c.l.b16 %v1538
        %v1587 = vunpack.c.l.b16 %v1539
        %v1588 = vunpack.c.l.b16 %v1540
        %v1589 = vunpack.c.l.b16 %v1541
        %v1590 = vunpack.c.l.b16 %v1542
        %v1591 = vunpack.c.l.b16 %v1543
        %v1592 = vunpack.c.l.b16 %v1544
        %v1593 = vunpack.c.l.b16 %v1545
        %v1594 = vunpack.c.l.b16 %v1546
        %v1595 = vunpack.c.l.b16 %v1547
        %v1596 = vunpack.c.l.b16 %v1548
        %v1597 = vunpack.c.l.b16 %v1549
        %v1598 = vunpack.c.l.b16 %v1550
        %v1599 = vpack.c.b16 %v1576, %v1575
        %v1600 = vpack.c.b16 %v1578, %v1577
        %v1601 = vpack.c.b16 %v1580, %v1579
        %v1602 = vpack.c.b16 %v1582, %v1581
        %v1603 = vpack.c.b16 %v1584, %v1583
        %v1604 = vpack.c.b16 %v1586, %v1585
        %v1605 = vpack.c.b16 %v1588, %v1587
        %v1606 = vpack.c.b16 %v1590, %v1589
        %v1607 = vpack.c.b16 %v1592, %v1591
        %v1608 = vpack.c.b16 %v1594, %v1593
        %v1609 = vpack.c.b16 %v1596, %v1595
        %v1610 = vpack.c.b16 %v1598, %v1597
        %v1612 = vsel %vm431, %v1599, 0
        %v1615 = vsel %vm431, %v1600, 0
        %v1618 = vsel %vm431, %v1601, 0
        %v1621 = vsel %vm431, %v1602, 0
        %v1624 = vsel %vm431, %v1603, 0
        %v1627 = vsel %vm431, %v1604, 0
        %v1630 = vsel %vm431, %v1605, 0
        %v1633 = vsel %vm431, %v1606, 0
        %v1636 = vsel %vm431, %v1607, 0
        %v1639 = vsel %vm431, %v1608, 0
        %v1642 = vsel %vm431, %v1609, 0
        %v1645 = vsel %vm431, %v1610, 0
        %1647 = vmatprep.subr.bf16.mxu0 %v1520
        %1648 = vmatpush1.bf16.msra.mxu0 %v1519
        %1649 = vmatprep.subr.bf16.mxu0 %v1522
        %1650 = vmatpush1.bf16.msra.mxu0 %v1521
        %1651 = vmatprep.subr.bf16.mxu0 %v1524
        %1652 = vmatpush1.bf16.msra.mxu0 %v1523
        %1653 = vmatprep.subr.bf16.mxu0 %v1526
        %1654 = vmatpush1.bf16.msra.mxu0 %v1525
        %1655 = vmatprep.subr.bf16.mxu0 0
        %1656 = vmatpush1.bf16.msra.mxu0 0
        %1657 = vmatprep.subr.bf16.mxu0 0
        %1658 = vmatpush1.bf16.msra.mxu0 0
        %1659 = vmatprep.subr.bf16.mxu0 0
        %1660 = vmatpush1.bf16.msra.mxu0 0
        %1661 = vmatprep.subr.bf16.mxu0 0
        %1662 = vmatpush1.bf16.msra.mxu0 0
        %1663 = vmatprep.subr.bf16.mxu0 0
        %1664 = vmatpush1.bf16.msra.mxu0 0
        %1665 = vmatprep.subr.bf16.mxu0 0
        %1666 = vmatpush1.bf16.msra.mxu0 0
        %1667 = vmatprep.subr.bf16.mxu0 0
        %1668 = vmatpush1.bf16.msra.mxu0 0
        %1669 = vmatprep.subr.bf16.mxu0 0
        %1670 = vmatpush1.bf16.msra.mxu0 0
        %1671 = vmatprep.subr.bf16.mxu0 0
        %1672 = vmatpush1.bf16.msra.mxu0 0
        %1673 = vmatprep.subr.bf16.mxu0 0
        %1674 = vmatpush1.bf16.msra.mxu0 0
        %1675 = vmatprep.subr.bf16.mxu0 0
        %1676 = vmatpush1.bf16.msra.mxu0 0
        %1677 = vmatprep.subr.bf16.mxu0 0
        %1678 = vmatpush1.bf16.msra.mxu0 0
        %1679 = vmatprep.mubr.bf16.mxu0 0
        %1680 = vmatmul.mubr.bf16.gmra.mrb[0].mxu0 %v1612
        %v1681 = vpop.f32.mrb[0].mxu0
        %v1682 = vadd.f32 0.0, %v1681
        %v1683 = vpop.f32.mrb[0].mxu0
        %v1684 = vadd.f32 0.0, %v1683
        %v1685 = vpop.f32.mrb[0].mxu0
        %v1686 = vadd.f32 0.0, %v1685
        %v1687 = vpop.f32.mrb[0].mxu0
        %v1688 = vadd.f32 0.0, %v1687
        %1689 = vmatprep.mubr.bf16.mxu0 0
        %1690 = vmatmul.mubr.bf16.gmra.mrb[0].mxu0 %v1615
        %v1691 = vpop.f32.mrb[0].mxu0
        %v1692 = vadd.f32 0.0, %v1691
        %v1693 = vpop.f32.mrb[0].mxu0
        %v1694 = vadd.f32 0.0, %v1693
        %v1695 = vpop.f32.mrb[0].mxu0
        %v1696 = vadd.f32 0.0, %v1695
        %v1697 = vpop.f32.mrb[0].mxu0
        %v1698 = vadd.f32 0.0, %v1697
        %1699 = vmatprep.mubr.bf16.mxu0 0
        %1700 = vmatmul.mubr.bf16.gmra.mrb[0].mxu0 %v1618
        %v1701 = vpop.f32.mrb[0].mxu0
        %v1702 = vadd.f32 0.0, %v1701
        %v1703 = vpop.f32.mrb[0].mxu0
        %v1704 = vadd.f32 0.0, %v1703
        %v1705 = vpop.f32.mrb[0].mxu0
        %v1706 = vadd.f32 0.0, %v1705
        %v1707 = vpop.f32.mrb[0].mxu0
        %v1708 = vadd.f32 0.0, %v1707
        %1709 = vmatprep.mubr.bf16.mxu0 0
        %1710 = vmatmul.mubr.bf16.gmra.mrb[0].mxu0 %v1621
        %v1711 = vpop.f32.mrb[0].mxu0
        %v1712 = vadd.f32 0.0, %v1711
        %v1713 = vpop.f32.mrb[0].mxu0
        %v1714 = vadd.f32 0.0, %v1713
        %v1715 = vpop.f32.mrb[0].mxu0
        %v1716 = vadd.f32 0.0, %v1715
        %v1717 = vpop.f32.mrb[0].mxu0
        %v1718 = vadd.f32 0.0, %v1717
        %1719 = vmatprep.mubr.bf16.mxu0 0
        %1720 = vmatmul.mubr.bf16.gmra.mrb[0].mxu0 %v1624
        %v1721 = vpop.f32.mrb[0].mxu0
        %v1722 = vadd.f32 0.0, %v1721
        %v1723 = vpop.f32.mrb[0].mxu0
        %v1724 = vadd.f32 0.0, %v1723
        %v1725 = vpop.f32.mrb[0].mxu0
        %v1726 = vadd.f32 0.0, %v1725
        %v1727 = vpop.f32.mrb[0].mxu0
        %v1728 = vadd.f32 0.0, %v1727
        %1729 = vmatprep.mubr.bf16.mxu0 0
        %1730 = vmatmul.mubr.bf16.gmra.mrb[0].mxu0 %v1627
        %v1731 = vpop.f32.mrb[0].mxu0
        %v1732 = vadd.f32 0.0, %v1731
        %v1733 = vpop.f32.mrb[0].mxu0
        %v1734 = vadd.f32 0.0, %v1733
        %v1735 = vpop.f32.mrb[0].mxu0
        %v1736 = vadd.f32 0.0, %v1735
        %v1737 = vpop.f32.mrb[0].mxu0
        %v1738 = vadd.f32 0.0, %v1737
        %1739 = vmatprep.mubr.bf16.mxu0 0
        %1740 = vmatmul.mubr.bf16.gmra.mrb[0].mxu0 %v1630
        %v1741 = vpop.f32.mrb[0].mxu0
        %v1742 = vadd.f32 0.0, %v1741
        %v1743 = vpop.f32.mrb[0].mxu0
        %v1744 = vadd.f32 0.0, %v1743
        %v1745 = vpop.f32.mrb[0].mxu0
        %v1746 = vadd.f32 0.0, %v1745
        %v1747 = vpop.f32.mrb[0].mxu0
        %v1748 = vadd.f32 0.0, %v1747
        %1749 = vmatprep.mubr.bf16.mxu0 0
        %1750 = vmatmul.mubr.bf16.gmra.mrb[0].mxu0 %v1633
        %v1751 = vpop.f32.mrb[0].mxu0
        %v1752 = vadd.f32 0.0, %v1751
        %v1753 = vpop.f32.mrb[0].mxu0
        %v1754 = vadd.f32 0.0, %v1753
        %v1755 = vpop.f32.mrb[0].mxu0
        %v1756 = vadd.f32 0.0, %v1755
        %v1757 = vpop.f32.mrb[0].mxu0
        %v1758 = vadd.f32 0.0, %v1757
        %1759 = vmatprep.mubr.bf16.mxu0 0
        %1760 = vmatmul.mubr.bf16.gmra.mrb[0].mxu0 %v1636
        %v1761 = vpop.f32.mrb[0].mxu0
        %v1762 = vadd.f32 0.0, %v1761
        %v1763 = vpop.f32.mrb[0].mxu0
        %v1764 = vadd.f32 0.0, %v1763
        %v1765 = vpop.f32.mrb[0].mxu0
        %v1766 = vadd.f32 0.0, %v1765
        %v1767 = vpop.f32.mrb[0].mxu0
        %v1768 = vadd.f32 0.0, %v1767
        %1769 = vmatprep.mubr.bf16.mxu0 0
        %1770 = vmatmul.mubr.bf16.gmra.mrb[0].mxu0 %v1639
        %v1771 = vpop.f32.mrb[0].mxu0
        %v1772 = vadd.f32 0.0, %v1771
        %v1773 = vpop.f32.mrb[0].mxu0
        %v1774 = vadd.f32 0.0, %v1773
        %v1775 = vpop.f32.mrb[0].mxu0
        %v1776 = vadd.f32 0.0, %v1775
        %v1777 = vpop.f32.mrb[0].mxu0
        %v1778 = vadd.f32 0.0, %v1777
        %1779 = vmatprep.mubr.bf16.mxu0 0
        %1780 = vmatmul.mubr.bf16.gmra.mrb[0].mxu0 %v1642
        %v1781 = vpop.f32.mrb[0].mxu0
        %v1782 = vadd.f32 0.0, %v1781
        %v1783 = vpop.f32.mrb[0].mxu0
        %v1784 = vadd.f32 0.0, %v1783
        %v1785 = vpop.f32.mrb[0].mxu0
        %v1786 = vadd.f32 0.0, %v1785
        %v1787 = vpop.f32.mrb[0].mxu0
        %v1788 = vadd.f32 0.0, %v1787
        %1789 = vmatprep.mubr.bf16.mxu0 0
        %1790 = vmatmul.mubr.bf16.gmra.mrb[0].mxu0 %v1645
        %v1791 = vpop.f32.mrb[0].mxu0
        %v1792 = vadd.f32 0.0, %v1791
        %v1793 = vpop.f32.mrb[0].mxu0
        %v1794 = vadd.f32 0.0, %v1793
        %v1795 = vpop.f32.mrb[0].mxu0
        %v1796 = vadd.f32 0.0, %v1795
        %v1797 = vpop.f32.mrb[0].mxu0
        %v1798 = vadd.f32 0.0, %v1797
        %1799 = vdwg.mxu0
        %v1800 = vpack.c.bf16 %v1686, %v1682
        %v1801 = vpack.c.bf16 %v1688, %v1684
        %v1802 = vpack.c.bf16 %v1696, %v1692
        %v1803 = vpack.c.bf16 %v1698, %v1694
        %v1804 = vpack.c.bf16 %v1706, %v1702
        %v1805 = vpack.c.bf16 %v1708, %v1704
        %v1806 = vpack.c.bf16 %v1716, %v1712
        %v1807 = vpack.c.bf16 %v1718, %v1714
        %v1808 = vpack.c.bf16 %v1726, %v1722
        %v1809 = vpack.c.bf16 %v1728, %v1724
        %v1810 = vpack.c.bf16 %v1736, %v1732
        %v1811 = vpack.c.bf16 %v1738, %v1734
        %v1812 = vpack.c.bf16 %v1746, %v1742
        %v1813 = vpack.c.bf16 %v1748, %v1744
        %v1814 = vpack.c.bf16 %v1756, %v1752
        %v1815 = vpack.c.bf16 %v1758, %v1754
        %v1816 = vpack.c.bf16 %v1766, %v1762
        %v1817 = vpack.c.bf16 %v1768, %v1764
        %v1818 = vpack.c.bf16 %v1776, %v1772
        %v1819 = vpack.c.bf16 %v1778, %v1774
        %v1820 = vpack.c.bf16 %v1786, %v1782
        %v1821 = vpack.c.bf16 %v1788, %v1784
        %v1822 = vpack.c.bf16 %v1796, %v1792
        %v1823 = vpack.c.bf16 %v1798, %v1794
        %1824 = vst [vmem:[#allocation2] sm:$0xff] %v1800
        %1825 = vst [vmem:[#allocation2 + $0x8] sm:$0xff] %v1801
        %1826 = vst [vmem:[#allocation2 + $0x10] sm:$0xff] %v1802
        %1827 = vst [vmem:[#allocation2 + $0x18] sm:$0xff] %v1803
        %1828 = vst [vmem:[#allocation2 + $0x20] sm:$0xff] %v1804
        %1829 = vst [vmem:[#allocation2 + $0x28] sm:$0xff] %v1805
        %1830 = vst [vmem:[#allocation2 + $0x30] sm:$0xff] %v1806
        %1831 = vst [vmem:[#allocation2 + $0x38] sm:$0xff] %v1807
        %1832 = vst [vmem:[#allocation2 + $0x40] sm:$0xff] %v1808
        %1833 = vst [vmem:[#allocation2 + $0x48] sm:$0xff] %v1809
        %1834 = vst [vmem:[#allocation2 + $0x50] sm:$0xff] %v1810
        %1835 = vst [vmem:[#allocation2 + $0x58] sm:$0xff] %v1811
        %1836 = vst [vmem:[#allocation2 + $0x60] sm:$0xff] %v1812
        %1837 = vst [vmem:[#allocation2 + $0x68] sm:$0xff] %v1813
        %1838 = vst [vmem:[#allocation2 + $0x70] sm:$0xff] %v1814
        %1839 = vst [vmem:[#allocation2 + $0x78] sm:$0xff] %v1815
        %1840 = vst [vmem:[#allocation2 + $0x80] sm:$0xff] %v1816
        %1841 = vst [vmem:[#allocation2 + $0x88] sm:$0xff] %v1817
        %1842 = vst [vmem:[#allocation2 + $0x90] sm:$0xff] %v1818
        %1843 = vst [vmem:[#allocation2 + $0x98] sm:$0xff] %v1819
        %1844 = vst [vmem:[#allocation2 + $0xa0] sm:$0xff] %v1820
        %1845 = vst [vmem:[#allocation2 + $0xa8] sm:$0xff] %v1821
        %1846 = vst [vmem:[#allocation2 + $0xb0] sm:$0xff] %v1822
        %1847 = vst [vmem:[#allocation2 + $0xb8] sm:$0xff] %v1823
        %v1848 = vld [vmem:[#allocation2] sm:$0xff]
        %v1849 = vld [vmem:[#allocation2 + $0x8] sm:$0xff]
        %v1850 = vld [vmem:[#allocation2 + $0x40] sm:$0xff]
        %v1851 = vld [vmem:[#allocation2 + $0x48] sm:$0xff]
        %v1852 = vld [vmem:[#allocation2 + $0x80] sm:$0xff]
        %v1853 = vld [vmem:[#allocation2 + $0x88] sm:$0xff]
        %1854 = vxpose.xlu0.c.b16.start [1/8] %v1850, 128
        %1855 = vxpose.xlu0.c.b16.cont [2/8] 0, 128
        %1856 = vxpose.xlu0.c.b16.cont [3/8] 0, 128
        %1857 = vxpose.xlu0.c.b16.cont [4/8] 0, 128
        %1858 = vxpose.xlu0.c.b16.cont [5/8] 0, 128
        %1859 = vxpose.xlu0.c.b16.cont [6/8] 0, 128
        %1860 = vxpose.xlu0.c.b16.cont [7/8] 0, 128
        %1861 = vxpose.xlu0.c.b16.end [8/8] 0, 128
        %v1862 = vpop.trf.xlu0
        %v1863 = vpop.trf.xlu0
        %v1864 = vpop.trf.xlu0
        %v1865 = vpop.trf.xlu0
        %v1866 = vpop.trf.xlu0
        %v1867 = vpop.trf.xlu0
        %v1868 = vpop.trf.xlu0
        %v1869 = vpop.trf.xlu0
        %1870 = vxpose.xlu0.c.b16.start [1/8] %v1851, 128
        %1871 = vxpose.xlu0.c.b16.cont [2/8] 0, 128
        %1872 = vxpose.xlu0.c.b16.cont [3/8] 0, 128
        %1873 = vxpose.xlu0.c.b16.cont [4/8] 0, 128
        %1874 = vxpose.xlu0.c.b16.cont [5/8] 0, 128
        %1875 = vxpose.xlu0.c.b16.cont [6/8] 0, 128
        %1876 = vxpose.xlu0.c.b16.cont [7/8] 0, 128
        %1877 = vxpose.xlu0.c.b16.end [8/8] 0, 128
        %v1878 = vpop.trf.xlu0
        %v1879 = vpop.trf.xlu0
        %v1880 = vpop.trf.xlu0
        %v1881 = vpop.trf.xlu0
        %v1882 = vpop.trf.xlu0
        %v1883 = vpop.trf.xlu0
        %v1884 = vpop.trf.xlu0
        %v1885 = vpop.trf.xlu0
        %vm1886 = vcmask 130048
        %v1888 = vsel %vm1886, %v1862, 0
        %v1891 = vsel %vm1886, %v1863, 0
        %v1894 = vsel %vm1886, %v1864, 0
        %v1897 = vsel %vm1886, %v1865, 0
        %v1900 = vsel %vm1886, %v1866, 0
        %v1903 = vsel %vm1886, %v1867, 0
        %v1906 = vsel %vm1886, %v1868, 0
        %v1909 = vsel %vm1886, %v1869, 0
        %v1912 = vsel %vm1886, %v1878, 0
        %v1915 = vsel %vm1886, %v1879, 0
        %v1918 = vsel %vm1886, %v1880, 0
        %v1921 = vsel %vm1886, %v1881, 0
        %v1924 = vsel %vm1886, %v1882, 0
        %v1927 = vsel %vm1886, %v1883, 0
        %v1930 = vsel %vm1886, %v1884, 0
        %v1933 = vsel %vm1886, %v1885, 0
        %1935 = vmatprep.subr.bf16.mxu0 %v1849
        %1936 = vmatpush1.bf16.msra.mxu0 %v1848
        %1937 = vmatprep.subr.bf16.mxu0 0
        %1938 = vmatpush1.bf16.msra.mxu0 0
        %1939 = vmatprep.subr.bf16.mxu0 0
        %1940 = vmatpush1.bf16.msra.mxu0 0
        %1941 = vmatprep.subr.bf16.mxu0 0
        %1942 = vmatpush1.bf16.msra.mxu0 0
        %1943 = vmatprep.subr.bf16.mxu0 0
        %1944 = vmatpush1.bf16.msra.mxu0 0
        %1945 = vmatprep.subr.bf16.mxu0 0
        %1946 = vmatpush1.bf16.msra.mxu0 0
        %1947 = vmatprep.subr.bf16.mxu0 0
        %1948 = vmatpush1.bf16.msra.mxu0 0
        %1949 = vmatprep.subr.bf16.mxu0 0
        %1950 = vmatpush1.bf16.msra.mxu0 0
        %1951 = vmatprep.subr.bf16.mxu0 0
        %1952 = vmatpush1.bf16.msra.mxu0 0
        %1953 = vmatprep.subr.bf16.mxu0 0
        %1954 = vmatpush1.bf16.msra.mxu0 0
        %1955 = vmatprep.subr.bf16.mxu0 0
        %1956 = vmatpush1.bf16.msra.mxu0 0
        %1957 = vmatprep.subr.bf16.mxu0 0
        %1958 = vmatpush1.bf16.msra.mxu0 0
        %1959 = vmatprep.subr.bf16.mxu0 0
        %1960 = vmatpush1.bf16.msra.mxu0 0
        %1961 = vmatprep.subr.bf16.mxu0 0
        %1962 = vmatpush1.bf16.msra.mxu0 0
        %1963 = vmatprep.subr.bf16.mxu0 0
        %1964 = vmatpush1.bf16.msra.mxu0 0
        %1965 = vmatprep.subr.bf16.mxu0 0
        %1966 = vmatpush1.bf16.msra.mxu0 0
        %1967 = vmatprep.mubr.bf16.mxu0 0
        %1968 = vmatmul.mubr.bf16.gmra.mrb[0].mxu0 %v1888
        %v1969 = vpop.f32.mrb[0].mxu0
        %v1970 = vadd.f32 0.0, %v1969
        %v1971 = vpop.f32.mrb[0].mxu0
        %v1972 = vadd.f32 0.0, %v1971
        %v1973 = vpop.f32.mrb[0].mxu0
        %v1974 = vadd.f32 0.0, %v1973
        %v1975 = vpop.f32.mrb[0].mxu0
        %v1976 = vadd.f32 0.0, %v1975
        %1977 = vmatprep.mubr.bf16.mxu0 0
        %1978 = vmatmul.mubr.bf16.gmra.mrb[0].mxu0 %v1891
        %v1979 = vpop.f32.mrb[0].mxu0
        %v1980 = vadd.f32 0.0, %v1979
        %v1981 = vpop.f32.mrb[0].mxu0
        %v1982 = vadd.f32 0.0, %v1981
        %v1983 = vpop.f32.mrb[0].mxu0
        %v1984 = vadd.f32 0.0, %v1983
        %v1985 = vpop.f32.mrb[0].mxu0
        %v1986 = vadd.f32 0.0, %v1985
        %1987 = vmatprep.mubr.bf16.mxu0 0
        %1988 = vmatmul.mubr.bf16.gmra.mrb[0].mxu0 %v1894
        %v1989 = vpop.f32.mrb[0].mxu0
        %v1990 = vadd.f32 0.0, %v1989
        %v1991 = vpop.f32.mrb[0].mxu0
        %v1992 = vadd.f32 0.0, %v1991
        %v1993 = vpop.f32.mrb[0].mxu0
        %v1994 = vadd.f32 0.0, %v1993
        %v1995 = vpop.f32.mrb[0].mxu0
        %v1996 = vadd.f32 0.0, %v1995
        %1997 = vmatprep.mubr.bf16.mxu0 0
        %1998 = vmatmul.mubr.bf16.gmra.mrb[0].mxu0 %v1897
        %v1999 = vpop.f32.mrb[0].mxu0
        %v2000 = vadd.f32 0.0, %v1999
        %v2001 = vpop.f32.mrb[0].mxu0
        %v2002 = vadd.f32 0.0, %v2001
        %v2003 = vpop.f32.mrb[0].mxu0
        %v2004 = vadd.f32 0.0, %v2003
        %v2005 = vpop.f32.mrb[0].mxu0
        %v2006 = vadd.f32 0.0, %v2005
        %2007 = vmatprep.mubr.bf16.mxu0 0
        %2008 = vmatmul.mubr.bf16.gmra.mrb[0].mxu0 %v1900
        %v2009 = vpop.f32.mrb[0].mxu0
        %v2010 = vadd.f32 0.0, %v2009
        %v2011 = vpop.f32.mrb[0].mxu0
        %v2012 = vadd.f32 0.0, %v2011
        %v2013 = vpop.f32.mrb[0].mxu0
        %v2014 = vadd.f32 0.0, %v2013
        %v2015 = vpop.f32.mrb[0].mxu0
        %v2016 = vadd.f32 0.0, %v2015
        %2017 = vmatprep.mubr.bf16.mxu0 0
        %2018 = vmatmul.mubr.bf16.gmra.mrb[0].mxu0 %v1903
        %v2019 = vpop.f32.mrb[0].mxu0
        %v2020 = vadd.f32 0.0, %v2019
        %v2021 = vpop.f32.mrb[0].mxu0
        %v2022 = vadd.f32 0.0, %v2021
        %v2023 = vpop.f32.mrb[0].mxu0
        %v2024 = vadd.f32 0.0, %v2023
        %v2025 = vpop.f32.mrb[0].mxu0
        %v2026 = vadd.f32 0.0, %v2025
        %2027 = vmatprep.mubr.bf16.mxu0 0
        %2028 = vmatmul.mubr.bf16.gmra.mrb[0].mxu0 %v1906
        %v2029 = vpop.f32.mrb[0].mxu0
        %v2030 = vadd.f32 0.0, %v2029
        %v2031 = vpop.f32.mrb[0].mxu0
        %v2032 = vadd.f32 0.0, %v2031
        %v2033 = vpop.f32.mrb[0].mxu0
        %v2034 = vadd.f32 0.0, %v2033
        %v2035 = vpop.f32.mrb[0].mxu0
        %v2036 = vadd.f32 0.0, %v2035
        %2037 = vmatprep.mubr.bf16.mxu0 0
        %2038 = vmatmul.mubr.bf16.gmra.mrb[0].mxu0 %v1909
        %v2039 = vpop.f32.mrb[0].mxu0
        %v2040 = vadd.f32 0.0, %v2039
        %v2041 = vpop.f32.mrb[0].mxu0
        %v2042 = vadd.f32 0.0, %v2041
        %v2043 = vpop.f32.mrb[0].mxu0
        %v2044 = vadd.f32 0.0, %v2043
        %v2045 = vpop.f32.mrb[0].mxu0
        %v2046 = vadd.f32 0.0, %v2045
        %2047 = vmatprep.mubr.bf16.mxu0 0
        %2048 = vmatmul.mubr.bf16.gmra.mrb[0].mxu0 %v1912
        %v2049 = vpop.f32.mrb[0].mxu0
        %v2050 = vadd.f32 0.0, %v2049
        %v2051 = vpop.f32.mrb[0].mxu0
        %v2052 = vadd.f32 0.0, %v2051
        %v2053 = vpop.f32.mrb[0].mxu0
        %v2054 = vadd.f32 0.0, %v2053
        %v2055 = vpop.f32.mrb[0].mxu0
        %v2056 = vadd.f32 0.0, %v2055
        %2057 = vmatprep.mubr.bf16.mxu0 0
        %2058 = vmatmul.mubr.bf16.gmra.mrb[0].mxu0 %v1915
        %v2059 = vpop.f32.mrb[0].mxu0
        %v2060 = vadd.f32 0.0, %v2059
        %v2061 = vpop.f32.mrb[0].mxu0
        %v2062 = vadd.f32 0.0, %v2061
        %v2063 = vpop.f32.mrb[0].mxu0
        %v2064 = vadd.f32 0.0, %v2063
        %v2065 = vpop.f32.mrb[0].mxu0
        %v2066 = vadd.f32 0.0, %v2065
        %2067 = vmatprep.mubr.bf16.mxu0 0
        %2068 = vmatmul.mubr.bf16.gmra.mrb[0].mxu0 %v1918
        %v2069 = vpop.f32.mrb[0].mxu0
        %v2070 = vadd.f32 0.0, %v2069
        %v2071 = vpop.f32.mrb[0].mxu0
        %v2072 = vadd.f32 0.0, %v2071
        %v2073 = vpop.f32.mrb[0].mxu0
        %v2074 = vadd.f32 0.0, %v2073
        %v2075 = vpop.f32.mrb[0].mxu0
        %v2076 = vadd.f32 0.0, %v2075
        %2077 = vmatprep.mubr.bf16.mxu0 0
        %2078 = vmatmul.mubr.bf16.gmra.mrb[0].mxu0 %v1921
        %v2079 = vpop.f32.mrb[0].mxu0
        %v2080 = vadd.f32 0.0, %v2079
        %v2081 = vpop.f32.mrb[0].mxu0
        %v2082 = vadd.f32 0.0, %v2081
        %v2083 = vpop.f32.mrb[0].mxu0
        %v2084 = vadd.f32 0.0, %v2083
        %v2085 = vpop.f32.mrb[0].mxu0
        %v2086 = vadd.f32 0.0, %v2085
        %2087 = vmatprep.mubr.bf16.mxu0 0
        %2088 = vmatmul.mubr.bf16.gmra.mrb[0].mxu0 %v1924
        %v2089 = vpop.f32.mrb[0].mxu0
        %v2090 = vadd.f32 0.0, %v2089
        %v2091 = vpop.f32.mrb[0].mxu0
        %v2092 = vadd.f32 0.0, %v2091
        %v2093 = vpop.f32.mrb[0].mxu0
        %v2094 = vadd.f32 0.0, %v2093
        %v2095 = vpop.f32.mrb[0].mxu0
        %v2096 = vadd.f32 0.0, %v2095
        %2097 = vmatprep.mubr.bf16.mxu0 0
        %2098 = vmatmul.mubr.bf16.gmra.mrb[0].mxu0 %v1927
        %v2099 = vpop.f32.mrb[0].mxu0
        %v2100 = vadd.f32 0.0, %v2099
        %v2101 = vpop.f32.mrb[0].mxu0
        %v2102 = vadd.f32 0.0, %v2101
        %v2103 = vpop.f32.mrb[0].mxu0
        %v2104 = vadd.f32 0.0, %v2103
        %v2105 = vpop.f32.mrb[0].mxu0
        %v2106 = vadd.f32 0.0, %v2105
        %2107 = vmatprep.mubr.bf16.mxu0 0
        %2108 = vmatmul.mubr.bf16.gmra.mrb[0].mxu0 %v1930
        %v2109 = vpop.f32.mrb[0].mxu0
        %v2110 = vadd.f32 0.0, %v2109
        %v2111 = vpop.f32.mrb[0].mxu0
        %v2112 = vadd.f32 0.0, %v2111
        %v2113 = vpop.f32.mrb[0].mxu0
        %v2114 = vadd.f32 0.0, %v2113
        %v2115 = vpop.f32.mrb[0].mxu0
        %v2116 = vadd.f32 0.0, %v2115
        %2117 = vmatprep.mubr.bf16.mxu0 0
        %2118 = vmatmul.mubr.bf16.gmra.mrb[0].mxu0 %v1933
        %v2119 = vpop.f32.mrb[0].mxu0
        %v2120 = vadd.f32 0.0, %v2119
        %v2121 = vpop.f32.mrb[0].mxu0
        %v2122 = vadd.f32 0.0, %v2121
        %v2123 = vpop.f32.mrb[0].mxu0
        %v2124 = vadd.f32 0.0, %v2123
        %v2125 = vpop.f32.mrb[0].mxu0
        %v2126 = vadd.f32 0.0, %v2125
        %2127 = vdwg.mxu0
        %v2128 = vmax.f32 %v1970, %v1980
        %v2129 = vmax.f32 %v1974, %v1984
        %v2130 = vmax.f32 %v2128, %v1990
        %v2131 = vmax.f32 %v2129, %v1994
        %v2132 = vmax.f32 %v2130, %v2000
        %v2133 = vmax.f32 %v2131, %v2004
        %v2134 = vmax.f32 %v2132, %v2010
        %v2135 = vmax.f32 %v2133, %v2014
        %v2136 = vmax.f32 %v2134, %v2020
        %v2137 = vmax.f32 %v2135, %v2024
        %v2138 = vmax.f32 %v2136, %v2030
        %v2139 = vmax.f32 %v2137, %v2034
        %v2140 = vmax.f32 %v2138, %v2040
        %v2141 = vmax.f32 %v2139, %v2044
        %v2142 = vmax.f32 %v2140, %v2050
        %v2143 = vmax.f32 %v2141, %v2054
        %v2144 = vmax.f32 %v2142, %v2060
        %v2145 = vmax.f32 %v2143, %v2064
        %v2146 = vmax.f32 %v2144, %v2070
        %v2147 = vmax.f32 %v2145, %v2074
        %v2148 = vmax.f32 %v2146, %v2080
        %v2149 = vmax.f32 %v2147, %v2084
        %v2150 = vmax.f32 %v2148, %v2090
        %v2151 = vmax.f32 %v2149, %v2094
        %v2152 = vmax.f32 %v2150, %v2100
        %v2153 = vmax.f32 %v2151, %v2104
        %v2154 = vmax.f32 %v2152, %v2110
        %v2155 = vmax.f32 %v2153, %v2114
        %v2156 = vmax.f32 %v2154, %v2120
        %v2157 = vmax.f32 %v2155, %v2124
        %v2158 = vmax.f32 %v2156, %v2157
        %v2159 = vrot.slane %v2158, 4
        %v2160 = vmax.f32 %v2158, %v2159
        %v2161 = vrot.slane %v2160, 2
        %v2162 = vmax.f32 %v2160, %v2161
        %v2163 = vrot.slane %v2162, 1
        %v2164 = vmax.f32 %v2162, %v2163
        %v2165 = vmax.f32 %v1972, %v1982
        %v2166 = vmax.f32 %v1976, %v1986
        %v2167 = vmax.f32 %v2165, %v1992
        %v2168 = vmax.f32 %v2166, %v1996
        %v2169 = vmax.f32 %v2167, %v2002
        %v2170 = vmax.f32 %v2168, %v2006
        %v2171 = vmax.f32 %v2169, %v2012
        %v2172 = vmax.f32 %v2170, %v2016
        %v2173 = vmax.f32 %v2171, %v2022
        %v2174 = vmax.f32 %v2172, %v2026
        %v2175 = vmax.f32 %v2173, %v2032
        %v2176 = vmax.f32 %v2174, %v2036
        %v2177 = vmax.f32 %v2175, %v2042
        %v2178 = vmax.f32 %v2176, %v2046
        %v2179 = vmax.f32 %v2177, %v2052
        %v2180 = vmax.f32 %v2178, %v2056
        %v2181 = vmax.f32 %v2179, %v2062
        %v2182 = vmax.f32 %v2180, %v2066
        %v2183 = vmax.f32 %v2181, %v2072
        %v2184 = vmax.f32 %v2182, %v2076
        %v2185 = vmax.f32 %v2183, %v2082
        %v2186 = vmax.f32 %v2184, %v2086
        %v2187 = vmax.f32 %v2185, %v2092
        %v2188 = vmax.f32 %v2186, %v2096
        %v2189 = vmax.f32 %v2187, %v2102
        %v2190 = vmax.f32 %v2188, %v2106
        %v2191 = vmax.f32 %v2189, %v2112
        %v2192 = vmax.f32 %v2190, %v2116
        %v2193 = vmax.f32 %v2191, %v2122
        %v2194 = vmax.f32 %v2192, %v2126
        %v2195 = vmax.f32 %v2193, %v2194
        %v2196 = vrot.slane %v2195, 4
        %v2197 = vmax.f32 %v2195, %v2196
        %v2198 = vrot.slane %v2197, 2
        %v2199 = vmax.f32 %v2197, %v2198
        %v2200 = vrot.slane %v2199, 1
        %v2201 = vmax.f32 %v2199, %v2200
        %v2202 = vsub.f32 %v1970, %v2164
        %v2203 = vsub.f32 %v1972, %v2201
        %v2204 = vsub.f32 %v1974, %v2164
        %v2205 = vsub.f32 %v1976, %v2201
        %v2206 = vsub.f32 %v1980, %v2164
        %v2207 = vsub.f32 %v1982, %v2201
        %v2208 = vsub.f32 %v1984, %v2164
        %v2209 = vsub.f32 %v1986, %v2201
        %v2210 = vsub.f32 %v1990, %v2164
        %v2211 = vsub.f32 %v1992, %v2201
        %v2212 = vsub.f32 %v1994, %v2164
        %v2213 = vsub.f32 %v1996, %v2201
        %v2214 = vsub.f32 %v2000, %v2164
        %v2215 = vsub.f32 %v2002, %v2201
        %v2216 = vsub.f32 %v2004, %v2164
        %v2217 = vsub.f32 %v2006, %v2201
        %v2218 = vsub.f32 %v2010, %v2164
        %v2219 = vsub.f32 %v2012, %v2201
        %v2220 = vsub.f32 %v2014, %v2164
        %v2221 = vsub.f32 %v2016, %v2201
        %v2222 = vsub.f32 %v2020, %v2164
        %v2223 = vsub.f32 %v2022, %v2201
        %v2224 = vsub.f32 %v2024, %v2164
        %v2225 = vsub.f32 %v2026, %v2201
        %v2226 = vsub.f32 %v2030, %v2164
        %v2227 = vsub.f32 %v2032, %v2201
        %v2228 = vsub.f32 %v2034, %v2164
        %v2229 = vsub.f32 %v2036, %v2201
        %v2230 = vsub.f32 %v2040, %v2164
        %v2231 = vsub.f32 %v2042, %v2201
        %v2232 = vsub.f32 %v2044, %v2164
        %v2233 = vsub.f32 %v2046, %v2201
        %v2234 = vsub.f32 %v2050, %v2164
        %v2235 = vsub.f32 %v2052, %v2201
        %v2236 = vsub.f32 %v2054, %v2164
        %v2237 = vsub.f32 %v2056, %v2201
        %v2238 = vsub.f32 %v2060, %v2164
        %v2239 = vsub.f32 %v2062, %v2201
        %v2240 = vsub.f32 %v2064, %v2164
        %v2241 = vsub.f32 %v2066, %v2201
        %v2242 = vsub.f32 %v2070, %v2164
        %v2243 = vsub.f32 %v2072, %v2201
        %v2244 = vsub.f32 %v2074, %v2164
        %v2245 = vsub.f32 %v2076, %v2201
        %v2246 = vsub.f32 %v2080, %v2164
        %v2247 = vsub.f32 %v2082, %v2201
        %v2248 = vsub.f32 %v2084, %v2164
        %v2249 = vsub.f32 %v2086, %v2201
        %v2250 = vsub.f32 %v2090, %v2164
        %v2251 = vsub.f32 %v2092, %v2201
        %v2252 = vsub.f32 %v2094, %v2164
        %v2253 = vsub.f32 %v2096, %v2201
        %v2254 = vsub.f32 %v2100, %v2164
        %v2255 = vsub.f32 %v2102, %v2201
        %v2256 = vsub.f32 %v2104, %v2164
        %v2257 = vsub.f32 %v2106, %v2201
        %v2258 = vsub.f32 %v2110, %v2164
        %v2259 = vsub.f32 %v2112, %v2201
        %v2260 = vsub.f32 %v2114, %v2164
        %v2261 = vsub.f32 %v2116, %v2201
        %v2262 = vsub.f32 %v2120, %v2164
        %v2263 = vsub.f32 %v2122, %v2201
        %v2264 = vsub.f32 %v2124, %v2164
        %v2265 = vsub.f32 %v2126, %v2201
        %v2266 = vmul.f32 %v2202, 1.442695
        %v2267 = vpow.pop %v2266
        %v2268 = vmul.f32 %v2203, 1.442695
        %v2269 = vpow.pop %v2268
        %v2270 = vmul.f32 %v2204, 1.442695
        %v2271 = vpow.pop %v2270
        %v2272 = vmul.f32 %v2205, 1.442695
        %v2273 = vpow.pop %v2272
        %v2274 = vmul.f32 %v2206, 1.442695
        %v2275 = vpow.pop %v2274
        %v2276 = vmul.f32 %v2207, 1.442695
        %v2277 = vpow.pop %v2276
        %v2278 = vmul.f32 %v2208, 1.442695
        %v2279 = vpow.pop %v2278
        %v2280 = vmul.f32 %v2209, 1.442695
        %v2281 = vpow.pop %v2280
        %v2282 = vmul.f32 %v2210, 1.442695
        %v2283 = vpow.pop %v2282
        %v2284 = vmul.f32 %v2211, 1.442695
        %v2285 = vpow.pop %v2284
        %v2286 = vmul.f32 %v2212, 1.442695
        %v2287 = vpow.pop %v2286
        %v2288 = vmul.f32 %v2213, 1.442695
        %v2289 = vpow.pop %v2288
        %v2290 = vmul.f32 %v2214, 1.442695
        %v2291 = vpow.pop %v2290
        %v2292 = vmul.f32 %v2215, 1.442695
        %v2293 = vpow.pop %v2292
        %v2294 = vmul.f32 %v2216, 1.442695
        %v2295 = vpow.pop %v2294
        %v2296 = vmul.f32 %v2217, 1.442695
        %v2297 = vpow.pop %v2296
        %v2298 = vmul.f32 %v2218, 1.442695
        %v2299 = vpow.pop %v2298
        %v2300 = vmul.f32 %v2219, 1.442695
        %v2301 = vpow.pop %v2300
        %v2302 = vmul.f32 %v2220, 1.442695
        %v2303 = vpow.pop %v2302
        %v2304 = vmul.f32 %v2221, 1.442695
        %v2305 = vpow.pop %v2304
        %v2306 = vmul.f32 %v2222, 1.442695
        %v2307 = vpow.pop %v2306
        %v2308 = vmul.f32 %v2223, 1.442695
        %v2309 = vpow.pop %v2308
        %v2310 = vmul.f32 %v2224, 1.442695
        %v2311 = vpow.pop %v2310
        %v2312 = vmul.f32 %v2225, 1.442695
        %v2313 = vpow.pop %v2312
        %v2314 = vmul.f32 %v2226, 1.442695
        %v2315 = vpow.pop %v2314
        %v2316 = vmul.f32 %v2227, 1.442695
        %v2317 = vpow.pop %v2316
        %v2318 = vmul.f32 %v2228, 1.442695
        %v2319 = vpow.pop %v2318
        %v2320 = vmul.f32 %v2229, 1.442695
        %v2321 = vpow.pop %v2320
        %v2322 = vmul.f32 %v2230, 1.442695
        %v2323 = vpow.pop %v2322
        %v2324 = vmul.f32 %v2231, 1.442695
        %v2325 = vpow.pop %v2324
        %v2326 = vmul.f32 %v2232, 1.442695
        %v2327 = vpow.pop %v2326
        %v2328 = vmul.f32 %v2233, 1.442695
        %v2329 = vpow.pop %v2328
        %v2330 = vmul.f32 %v2234, 1.442695
        %v2331 = vpow.pop %v2330
        %v2332 = vmul.f32 %v2235, 1.442695
        %v2333 = vpow.pop %v2332
        %v2334 = vmul.f32 %v2236, 1.442695
        %v2335 = vpow.pop %v2334
        %v2336 = vmul.f32 %v2237, 1.442695
        %v2337 = vpow.pop %v2336
        %v2338 = vmul.f32 %v2238, 1.442695
        %v2339 = vpow.pop %v2338
        %v2340 = vmul.f32 %v2239, 1.442695
        %v2341 = vpow.pop %v2340
        %v2342 = vmul.f32 %v2240, 1.442695
        %v2343 = vpow.pop %v2342
        %v2344 = vmul.f32 %v2241, 1.442695
        %v2345 = vpow.pop %v2344
        %v2346 = vmul.f32 %v2242, 1.442695
        %v2347 = vpow.pop %v2346
        %v2348 = vmul.f32 %v2243, 1.442695
        %v2349 = vpow.pop %v2348
        %v2350 = vmul.f32 %v2244, 1.442695
        %v2351 = vpow.pop %v2350
        %v2352 = vmul.f32 %v2245, 1.442695
        %v2353 = vpow.pop %v2352
        %v2354 = vmul.f32 %v2246, 1.442695
        %v2355 = vpow.pop %v2354
        %v2356 = vmul.f32 %v2247, 1.442695
        %v2357 = vpow.pop %v2356
        %v2358 = vmul.f32 %v2248, 1.442695
        %v2359 = vpow.pop %v2358
        %v2360 = vmul.f32 %v2249, 1.442695
        %v2361 = vpow.pop %v2360
        %v2362 = vmul.f32 %v2250, 1.442695
        %v2363 = vpow.pop %v2362
        %v2364 = vmul.f32 %v2251, 1.442695
        %v2365 = vpow.pop %v2364
        %v2366 = vmul.f32 %v2252, 1.442695
        %v2367 = vpow.pop %v2366
        %v2368 = vmul.f32 %v2253, 1.442695
        %v2369 = vpow.pop %v2368
        %v2370 = vmul.f32 %v2254, 1.442695
        %v2371 = vpow.pop %v2370
        %v2372 = vmul.f32 %v2255, 1.442695
        %v2373 = vpow.pop %v2372
        %v2374 = vmul.f32 %v2256, 1.442695
        %v2375 = vpow.pop %v2374
        %v2376 = vmul.f32 %v2257, 1.442695
        %v2377 = vpow.pop %v2376
        %v2378 = vmul.f32 %v2258, 1.442695
        %v2379 = vpow.pop %v2378
        %v2380 = vmul.f32 %v2259, 1.442695
        %v2381 = vpow.pop %v2380
        %v2382 = vmul.f32 %v2260, 1.442695
        %v2383 = vpow.pop %v2382
        %v2384 = vmul.f32 %v2261, 1.442695
        %v2385 = vpow.pop %v2384
        %v2386 = vmul.f32 %v2262, 1.442695
        %v2387 = vpow.pop %v2386
        %v2388 = vmul.f32 %v2263, 1.442695
        %v2389 = vpow.pop %v2388
        %v2390 = vmul.f32 %v2264, 1.442695
        %v2391 = vpow.pop %v2390
        %v2392 = vmul.f32 %v2265, 1.442695
        %v2393 = vpow.pop %v2392
        %v2394 = vadd.f32 %v2267, %v2271
        %v2395 = vadd.f32 %v2394, %v2275
        %v2396 = vadd.f32 %v2395, %v2279
        %v2397 = vadd.f32 %v2396, %v2283
        %v2398 = vadd.f32 %v2397, %v2287
        %v2399 = vadd.f32 %v2398, %v2291
        %v2400 = vadd.f32 %v2399, %v2295
        %v2401 = vadd.f32 %v2400, %v2299
        %v2402 = vadd.f32 %v2401, %v2303
        %v2403 = vadd.f32 %v2402, %v2307
        %v2404 = vadd.f32 %v2403, %v2311
        %v2405 = vadd.f32 %v2404, %v2315
        %v2406 = vadd.f32 %v2405, %v2319
        %v2407 = vadd.f32 %v2406, %v2323
        %v2408 = vadd.f32 %v2407, %v2327
        %v2409 = vadd.f32 %v2408, %v2331
        %v2410 = vadd.f32 %v2409, %v2335
        %v2411 = vadd.f32 %v2410, %v2339
        %v2412 = vadd.f32 %v2411, %v2343
        %v2413 = vadd.f32 %v2412, %v2347
        %v2414 = vadd.f32 %v2413, %v2351
        %v2415 = vadd.f32 %v2414, %v2355
        %v2416 = vadd.f32 %v2415, %v2359
        %v2417 = vadd.f32 %v2416, %v2363
        %v2418 = vadd.f32 %v2417, %v2367
        %v2419 = vadd.f32 %v2418, %v2371
        %v2420 = vadd.f32 %v2419, %v2375
        %v2421 = vadd.f32 %v2420, %v2379
        %v2422 = vadd.f32 %v2421, %v2383
        %v2423 = vadd.f32 %v2422, %v2387
        %v2424 = vadd.f32 %v2423, %v2391
        %v2425 = vrot.slane %v2424, 4
        %v2426 = vadd.f32 %v2424, %v2425
        %v2427 = vrot.slane %v2426, 2
        %v2428 = vadd.f32 %v2426, %v2427
        %v2429 = vrot.slane %v2428, 1
        %v2430 = vadd.f32 %v2428, %v2429
        %v2431 = vadd.f32 %v2269, %v2273
        %v2432 = vadd.f32 %v2431, %v2277
        %v2433 = vadd.f32 %v2432, %v2281
        %v2434 = vadd.f32 %v2433, %v2285
        %v2435 = vadd.f32 %v2434, %v2289
        %v2436 = vadd.f32 %v2435, %v2293
        %v2437 = vadd.f32 %v2436, %v2297
        %v2438 = vadd.f32 %v2437, %v2301
        %v2439 = vadd.f32 %v2438, %v2305
        %v2440 = vadd.f32 %v2439, %v2309
        %v2441 = vadd.f32 %v2440, %v2313
        %v2442 = vadd.f32 %v2441, %v2317
        %v2443 = vadd.f32 %v2442, %v2321
        %v2444 = vadd.f32 %v2443, %v2325
        %v2445 = vadd.f32 %v2444, %v2329
        %v2446 = vadd.f32 %v2445, %v2333
        %v2447 = vadd.f32 %v2446, %v2337
        %v2448 = vadd.f32 %v2447, %v2341
        %v2449 = vadd.f32 %v2448, %v2345
        %v2450 = vadd.f32 %v2449, %v2349
        %v2451 = vadd.f32 %v2450, %v2353
        %v2452 = vadd.f32 %v2451, %v2357
        %v2453 = vadd.f32 %v2452, %v2361
        %v2454 = vadd.f32 %v2453, %v2365
        %v2455 = vadd.f32 %v2454, %v2369
        %v2456 = vadd.f32 %v2455, %v2373
        %v2457 = vadd.f32 %v2456, %v2377
        %v2458 = vadd.f32 %v2457, %v2381
        %v2459 = vadd.f32 %v2458, %v2385
        %v2460 = vadd.f32 %v2459, %v2389
        %v2461 = vadd.f32 %v2460, %v2393
        %v2462 = vrot.slane %v2461, 4
        %v2463 = vadd.f32 %v2461, %v2462
        %v2464 = vrot.slane %v2463, 2
        %v2465 = vadd.f32 %v2463, %v2464
        %v2466 = vrot.slane %v2465, 1
        %v2467 = vadd.f32 %v2465, %v2466
        %v2468 = vrcp.pop %v2430
        %v2469 = vrcp.pop %v2467
        %v2470 = vmul.f32 %v2267, %v2468
        %v2471 = vmul.f32 %v2269, %v2469
        %v2472 = vmul.f32 %v2271, %v2468
        %v2473 = vmul.f32 %v2273, %v2469
        %v2474 = vmul.f32 %v2275, %v2468
        %v2475 = vmul.f32 %v2277, %v2469
        %v2476 = vmul.f32 %v2279, %v2468
        %v2477 = vmul.f32 %v2281, %v2469
        %v2478 = vmul.f32 %v2283, %v2468
        %v2479 = vmul.f32 %v2285, %v2469
        %v2480 = vmul.f32 %v2287, %v2468
        %v2481 = vmul.f32 %v2289, %v2469
        %v2482 = vmul.f32 %v2291, %v2468
        %v2483 = vmul.f32 %v2293, %v2469
        %v2484 = vmul.f32 %v2295, %v2468
        %v2485 = vmul.f32 %v2297, %v2469
        %v2486 = vmul.f32 %v2299, %v2468
        %v2487 = vmul.f32 %v2301, %v2469
        %v2488 = vmul.f32 %v2303, %v2468
        %v2489 = vmul.f32 %v2305, %v2469
        %v2490 = vmul.f32 %v2307, %v2468
        %v2491 = vmul.f32 %v2309, %v2469
        %v2492 = vmul.f32 %v2311, %v2468
        %v2493 = vmul.f32 %v2313, %v2469
        %v2494 = vmul.f32 %v2315, %v2468
        %v2495 = vmul.f32 %v2317, %v2469
        %v2496 = vmul.f32 %v2319, %v2468
        %v2497 = vmul.f32 %v2321, %v2469
        %v2498 = vmul.f32 %v2323, %v2468
        %v2499 = vmul.f32 %v2325, %v2469
        %v2500 = vmul.f32 %v2327, %v2468
        %v2501 = vmul.f32 %v2329, %v2469
        %v2502 = vmul.f32 %v2331, %v2468
        %v2503 = vmul.f32 %v2333, %v2469
        %v2504 = vmul.f32 %v2335, %v2468
        %v2505 = vmul.f32 %v2337, %v2469
        %v2506 = vmul.f32 %v2339, %v2468
        %v2507 = vmul.f32 %v2341, %v2469
        %v2508 = vmul.f32 %v2343, %v2468
        %v2509 = vmul.f32 %v2345, %v2469
        %v2510 = vmul.f32 %v2347, %v2468
        %v2511 = vmul.f32 %v2349, %v2469
        %v2512 = vmul.f32 %v2351, %v2468
        %v2513 = vmul.f32 %v2353, %v2469
        %v2514 = vmul.f32 %v2355, %v2468
        %v2515 = vmul.f32 %v2357, %v2469
        %v2516 = vmul.f32 %v2359, %v2468
        %v2517 = vmul.f32 %v2361, %v2469
        %v2518 = vmul.f32 %v2363, %v2468
        %v2519 = vmul.f32 %v2365, %v2469
        %v2520 = vmul.f32 %v2367, %v2468
        %v2521 = vmul.f32 %v2369, %v2469
        %v2522 = vmul.f32 %v2371, %v2468
        %v2523 = vmul.f32 %v2373, %v2469
        %v2524 = vmul.f32 %v2375, %v2468
        %v2525 = vmul.f32 %v2377, %v2469
        %v2526 = vmul.f32 %v2379, %v2468
        %v2527 = vmul.f32 %v2381, %v2469
        %v2528 = vmul.f32 %v2383, %v2468
        %v2529 = vmul.f32 %v2385, %v2469
        %v2530 = vmul.f32 %v2387, %v2468
        %v2531 = vmul.f32 %v2389, %v2469
        %v2532 = vmul.f32 %v2391, %v2468
        %v2533 = vmul.f32 %v2393, %v2469
        %v2534 = vpack.c.bf16 %v2472, %v2470
        %v2535 = vpack.c.bf16 %v2473, %v2471
        %v2536 = vpack.c.bf16 %v2476, %v2474
        %v2537 = vpack.c.bf16 %v2477, %v2475
        %v2538 = vpack.c.bf16 %v2480, %v2478
        %v2539 = vpack.c.bf16 %v2481, %v2479
        %v2540 = vpack.c.bf16 %v2484, %v2482
        %v2541 = vpack.c.bf16 %v2485, %v2483
        %v2542 = vpack.c.bf16 %v2488, %v2486
        %v2543 = vpack.c.bf16 %v2489, %v2487
        %v2544 = vpack.c.bf16 %v2492, %v2490
        %v2545 = vpack.c.bf16 %v2493, %v2491
        %v2546 = vpack.c.bf16 %v2496, %v2494
        %v2547 = vpack.c.bf16 %v2497, %v2495
        %v2548 = vpack.c.bf16 %v2500, %v2498
        %v2549 = vpack.c.bf16 %v2501, %v2499
        %v2550 = vpack.c.bf16 %v2504, %v2502
        %v2551 = vpack.c.bf16 %v2505, %v2503
        %v2552 = vpack.c.bf16 %v2508, %v2506
        %v2553 = vpack.c.bf16 %v2509, %v2507
        %v2554 = vpack.c.bf16 %v2512, %v2510
        %v2555 = vpack.c.bf16 %v2513, %v2511
        %v2556 = vpack.c.bf16 %v2516, %v2514
        %v2557 = vpack.c.bf16 %v2517, %v2515
        %v2558 = vpack.c.bf16 %v2520, %v2518
        %v2559 = vpack.c.bf16 %v2521, %v2519
        %v2560 = vpack.c.bf16 %v2524, %v2522
        %v2561 = vpack.c.bf16 %v2525, %v2523
        %v2562 = vpack.c.bf16 %v2528, %v2526
        %v2563 = vpack.c.bf16 %v2529, %v2527
        %v2564 = vpack.c.bf16 %v2532, %v2530
        %v2565 = vpack.c.bf16 %v2533, %v2531
        %2566 = vmatprep.subr.bf16.mxu0 %v2535
        %2567 = vmatpush1.bf16.msra.mxu0 %v2534
        %2568 = vmatprep.subr.bf16.mxu0 %v2537
        %2569 = vmatpush1.bf16.msra.mxu0 %v2536
        %2570 = vmatprep.subr.bf16.mxu0 %v2539
        %2571 = vmatpush1.bf16.msra.mxu0 %v2538
        %2572 = vmatprep.subr.bf16.mxu0 %v2541
        %2573 = vmatpush1.bf16.msra.mxu0 %v2540
        %2574 = vmatprep.subr.bf16.mxu0 %v2543
        %2575 = vmatpush1.bf16.msra.mxu0 %v2542
        %2576 = vmatprep.subr.bf16.mxu0 %v2545
        %2577 = vmatpush1.bf16.msra.mxu0 %v2544
        %2578 = vmatprep.subr.bf16.mxu0 %v2547
        %2579 = vmatpush1.bf16.msra.mxu0 %v2546
        %2580 = vmatprep.subr.bf16.mxu0 %v2549
        %2581 = vmatpush1.bf16.msra.mxu0 %v2548
        %2582 = vmatprep.subr.bf16.mxu0 %v2551
        %2583 = vmatpush1.bf16.msra.mxu0 %v2550
        %2584 = vmatprep.subr.bf16.mxu0 %v2553
        %2585 = vmatpush1.bf16.msra.mxu0 %v2552
        %2586 = vmatprep.subr.bf16.mxu0 %v2555
        %2587 = vmatpush1.bf16.msra.mxu0 %v2554
        %2588 = vmatprep.subr.bf16.mxu0 %v2557
        %2589 = vmatpush1.bf16.msra.mxu0 %v2556
        %2590 = vmatprep.subr.bf16.mxu0 %v2559
        %2591 = vmatpush1.bf16.msra.mxu0 %v2558
        %2592 = vmatprep.subr.bf16.mxu0 %v2561
        %2593 = vmatpush1.bf16.msra.mxu0 %v2560
        %2594 = vmatprep.subr.bf16.mxu0 %v2563
        %2595 = vmatpush1.bf16.msra.mxu0 %v2562
        %2596 = vmatprep.subr.bf16.mxu0 %v2565
        %2597 = vmatpush1.bf16.msra.mxu0 %v2564
        %2598 = vmatprep.mubr.bf16.mxu0 %v1853
        %2599 = vmatmul.mubr.bf16.gmra.mrb[0].mxu0 %v1852
        %v2600 = vpop.f32.mrb[0].mxu0
        %v2601 = vadd.f32 0.0, %v2600
        %v2602 = vpop.f32.mrb[0].mxu0
        %v2603 = vadd.f32 0.0, %v2602
        %v2604 = vpop.f32.mrb[0].mxu0
        %v2605 = vadd.f32 0.0, %v2604
        %v2606 = vpop.f32.mrb[0].mxu0
        %v2607 = vadd.f32 0.0, %v2606
        %2608 = vdwg.mxu0
        %v2609 = vpack.c.bf16 %v2605, %v2601
        %v2610 = vpack.c.bf16 %v2607, %v2603
        %2611 = vst [vmem:[#allocation3] sm:$0xff] %v2609
        %2612 = vst [vmem:[#allocation3 + $0x8] sm:$0xff] %v2610
        %v2613 = vld [vmem:[#allocation2 + $0x10] sm:$0xff]
        %v2614 = vld [vmem:[#allocation2 + $0x18] sm:$0xff]
        %v2615 = vld [vmem:[#allocation2 + $0x50] sm:$0xff]
        %v2616 = vld [vmem:[#allocation2 + $0x58] sm:$0xff]
        %v2617 = vld [vmem:[#allocation2 + $0x90] sm:$0xff]
        %v2618 = vld [vmem:[#allocation2 + $0x98] sm:$0xff]
        %2619 = vxpose.xlu0.c.b16.start [1/8] %v2615, 128
        %2620 = vxpose.xlu0.c.b16.cont [2/8] 0, 128
        %2621 = vxpose.xlu0.c.b16.cont [3/8] 0, 128
        %2622 = vxpose.xlu0.c.b16.cont [4/8] 0, 128
        %2623 = vxpose.xlu0.c.b16.cont [5/8] 0, 128
        %2624 = vxpose.xlu0.c.b16.cont [6/8] 0, 128
        %2625 = vxpose.xlu0.c.b16.cont [7/8] 0, 128
        %2626 = vxpose.xlu0.c.b16.end [8/8] 0, 128
        %v2627 = vpop.trf.xlu0
        %v2628 = vpop.trf.xlu0
        %v2629 = vpop.trf.xlu0
        %v2630 = vpop.trf.xlu0
        %v2631 = vpop.trf.xlu0
        %v2632 = vpop.trf.xlu0
        %v2633 = vpop.trf.xlu0
        %v2634 = vpop.trf.xlu0
        %2635 = vxpose.xlu0.c.b16.start [1/8] %v2616, 128
        %2636 = vxpose.xlu0.c.b16.cont [2/8] 0, 128
        %2637 = vxpose.xlu0.c.b16.cont [3/8] 0, 128
        %2638 = vxpose.xlu0.c.b16.cont [4/8] 0, 128
        %2639 = vxpose.xlu0.c.b16.cont [5/8] 0, 128
        %2640 = vxpose.xlu0.c.b16.cont [6/8] 0, 128
        %2641 = vxpose.xlu0.c.b16.cont [7/8] 0, 128
        %2642 = vxpose.xlu0.c.b16.end [8/8] 0, 128
        %v2643 = vpop.trf.xlu0
        %v2644 = vpop.trf.xlu0
        %v2645 = vpop.trf.xlu0
        %v2646 = vpop.trf.xlu0
        %v2647 = vpop.trf.xlu0
        %v2648 = vpop.trf.xlu0
        %v2649 = vpop.trf.xlu0
        %v2650 = vpop.trf.xlu0
        %v2652 = vsel %vm1886, %v2627, 0
        %v2655 = vsel %vm1886, %v2628, 0
        %v2658 = vsel %vm1886, %v2629, 0
        %v2661 = vsel %vm1886, %v2630, 0
        %v2664 = vsel %vm1886, %v2631, 0
        %v2667 = vsel %vm1886, %v2632, 0
        %v2670 = vsel %vm1886, %v2633, 0
        %v2673 = vsel %vm1886, %v2634, 0
        %v2676 = vsel %vm1886, %v2643, 0
        %v2679 = vsel %vm1886, %v2644, 0
        %v2682 = vsel %vm1886, %v2645, 0
        %v2685 = vsel %vm1886, %v2646, 0
        %v2688 = vsel %vm1886, %v2647, 0
        %v2691 = vsel %vm1886, %v2648, 0
        %v2694 = vsel %vm1886, %v2649, 0
        %v2697 = vsel %vm1886, %v2650, 0
        %2699 = vmatprep.subr.bf16.mxu0 %v2614
        %2700 = vmatpush1.bf16.msra.mxu0 %v2613
        %2701 = vmatprep.subr.bf16.mxu0 0
        %2702 = vmatpush1.bf16.msra.mxu0 0
        %2703 = vmatprep.subr.bf16.mxu0 0
        %2704 = vmatpush1.bf16.msra.mxu0 0
        %2705 = vmatprep.subr.bf16.mxu0 0
        %2706 = vmatpush1.bf16.msra.mxu0 0
        %2707 = vmatprep.subr.bf16.mxu0 0
        %2708 = vmatpush1.bf16.msra.mxu0 0
        %2709 = vmatprep.subr.bf16.mxu0 0
        %2710 = vmatpush1.bf16.msra.mxu0 0
        %2711 = vmatprep.subr.bf16.mxu0 0
        %2712 = vmatpush1.bf16.msra.mxu0 0
        %2713 = vmatprep.subr.bf16.mxu0 0
        %2714 = vmatpush1.bf16.msra.mxu0 0
        %2715 = vmatprep.subr.bf16.mxu0 0
        %2716 = vmatpush1.bf16.msra.mxu0 0
        %2717 = vmatprep.subr.bf16.mxu0 0
        %2718 = vmatpush1.bf16.msra.mxu0 0
        %2719 = vmatprep.subr.bf16.mxu0 0
        %2720 = vmatpush1.bf16.msra.mxu0 0
        %2721 = vmatprep.subr.bf16.mxu0 0
        %2722 = vmatpush1.bf16.msra.mxu0 0
        %2723 = vmatprep.subr.bf16.mxu0 0
        %2724 = vmatpush1.bf16.msra.mxu0 0
        %2725 = vmatprep.subr.bf16.mxu0 0
        %2726 = vmatpush1.bf16.msra.mxu0 0
        %2727 = vmatprep.subr.bf16.mxu0 0
        %2728 = vmatpush1.bf16.msra.mxu0 0
        %2729 = vmatprep.subr.bf16.mxu0 0
        %2730 = vmatpush1.bf16.msra.mxu0 0
        %2731 = vmatprep.mubr.bf16.mxu0 0
        %2732 = vmatmul.mubr.bf16.gmra.mrb[0].mxu0 %v2652
        %v2733 = vpop.f32.mrb[0].mxu0
        %v2734 = vadd.f32 0.0, %v2733
        %v2735 = vpop.f32.mrb[0].mxu0
        %v2736 = vadd.f32 0.0, %v2735
        %v2737 = vpop.f32.mrb[0].mxu0
        %v2738 = vadd.f32 0.0, %v2737
        %v2739 = vpop.f32.mrb[0].mxu0
        %v2740 = vadd.f32 0.0, %v2739
        %2741 = vmatprep.mubr.bf16.mxu0 0
        %2742 = vmatmul.mubr.bf16.gmra.mrb[0].mxu0 %v2655
        %v2743 = vpop.f32.mrb[0].mxu0
        %v2744 = vadd.f32 0.0, %v2743
        %v2745 = vpop.f32.mrb[0].mxu0
        %v2746 = vadd.f32 0.0, %v2745
        %v2747 = vpop.f32.mrb[0].mxu0
        %v2748 = vadd.f32 0.0, %v2747
        %v2749 = vpop.f32.mrb[0].mxu0
        %v2750 = vadd.f32 0.0, %v2749
        %2751 = vmatprep.mubr.bf16.mxu0 0
        %2752 = vmatmul.mubr.bf16.gmra.mrb[0].mxu0 %v2658
        %v2753 = vpop.f32.mrb[0].mxu0
        %v2754 = vadd.f32 0.0, %v2753
        %v2755 = vpop.f32.mrb[0].mxu0
        %v2756 = vadd.f32 0.0, %v2755
        %v2757 = vpop.f32.mrb[0].mxu0
        %v2758 = vadd.f32 0.0, %v2757
        %v2759 = vpop.f32.mrb[0].mxu0
        %v2760 = vadd.f32 0.0, %v2759
        %2761 = vmatprep.mubr.bf16.mxu0 0
        %2762 = vmatmul.mubr.bf16.gmra.mrb[0].mxu0 %v2661
        %v2763 = vpop.f32.mrb[0].mxu0
        %v2764 = vadd.f32 0.0, %v2763
        %v2765 = vpop.f32.mrb[0].mxu0
        %v2766 = vadd.f32 0.0, %v2765
        %v2767 = vpop.f32.mrb[0].mxu0
        %v2768 = vadd.f32 0.0, %v2767
        %v2769 = vpop.f32.mrb[0].mxu0
        %v2770 = vadd.f32 0.0, %v2769
        %2771 = vmatprep.mubr.bf16.mxu0 0
        %2772 = vmatmul.mubr.bf16.gmra.mrb[0].mxu0 %v2664
        %v2773 = vpop.f32.mrb[0].mxu0
        %v2774 = vadd.f32 0.0, %v2773
        %v2775 = vpop.f32.mrb[0].mxu0
        %v2776 = vadd.f32 0.0, %v2775
        %v2777 = vpop.f32.mrb[0].mxu0
        %v2778 = vadd.f32 0.0, %v2777
        %v2779 = vpop.f32.mrb[0].mxu0
        %v2780 = vadd.f32 0.0, %v2779
        %2781 = vmatprep.mubr.bf16.mxu0 0
        %2782 = vmatmul.mubr.bf16.gmra.mrb[0].mxu0 %v2667
        %v2783 = vpop.f32.mrb[0].mxu0
        %v2784 = vadd.f32 0.0, %v2783
        %v2785 = vpop.f32.mrb[0].mxu0
        %v2786 = vadd.f32 0.0, %v2785
        %v2787 = vpop.f32.mrb[0].mxu0
        %v2788 = vadd.f32 0.0, %v2787
        %v2789 = vpop.f32.mrb[0].mxu0
        %v2790 = vadd.f32 0.0, %v2789
        %2791 = vmatprep.mubr.bf16.mxu0 0
        %2792 = vmatmul.mubr.bf16.gmra.mrb[0].mxu0 %v2670
        %v2793 = vpop.f32.mrb[0].mxu0
        %v2794 = vadd.f32 0.0, %v2793
        %v2795 = vpop.f32.mrb[0].mxu0
        %v2796 = vadd.f32 0.0, %v2795
        %v2797 = vpop.f32.mrb[0].mxu0
        %v2798 = vadd.f32 0.0, %v2797
        %v2799 = vpop.f32.mrb[0].mxu0
        %v2800 = vadd.f32 0.0, %v2799
        %2801 = vmatprep.mubr.bf16.mxu0 0
        %2802 = vmatmul.mubr.bf16.gmra.mrb[0].mxu0 %v2673
        %v2803 = vpop.f32.mrb[0].mxu0
        %v2804 = vadd.f32 0.0, %v2803
        %v2805 = vpop.f32.mrb[0].mxu0
        %v2806 = vadd.f32 0.0, %v2805
        %v2807 = vpop.f32.mrb[0].mxu0
        %v2808 = vadd.f32 0.0, %v2807
        %v2809 = vpop.f32.mrb[0].mxu0
        %v2810 = vadd.f32 0.0, %v2809
        %2811 = vmatprep.mubr.bf16.mxu0 0
        %2812 = vmatmul.mubr.bf16.gmra.mrb[0].mxu0 %v2676
        %v2813 = vpop.f32.mrb[0].mxu0
        %v2814 = vadd.f32 0.0, %v2813
        %v2815 = vpop.f32.mrb[0].mxu0
        %v2816 = vadd.f32 0.0, %v2815
        %v2817 = vpop.f32.mrb[0].mxu0
        %v2818 = vadd.f32 0.0, %v2817
        %v2819 = vpop.f32.mrb[0].mxu0
        %v2820 = vadd.f32 0.0, %v2819
        %2821 = vmatprep.mubr.bf16.mxu0 0
        %2822 = vmatmul.mubr.bf16.gmra.mrb[0].mxu0 %v2679
        %v2823 = vpop.f32.mrb[0].mxu0
        %v2824 = vadd.f32 0.0, %v2823
        %v2825 = vpop.f32.mrb[0].mxu0
        %v2826 = vadd.f32 0.0, %v2825
        %v2827 = vpop.f32.mrb[0].mxu0
        %v2828 = vadd.f32 0.0, %v2827
        %v2829 = vpop.f32.mrb[0].mxu0
        %v2830 = vadd.f32 0.0, %v2829
        %2831 = vmatprep.mubr.bf16.mxu0 0
        %2832 = vmatmul.mubr.bf16.gmra.mrb[0].mxu0 %v2682
        %v2833 = vpop.f32.mrb[0].mxu0
        %v2834 = vadd.f32 0.0, %v2833
        %v2835 = vpop.f32.mrb[0].mxu0
        %v2836 = vadd.f32 0.0, %v2835
        %v2837 = vpop.f32.mrb[0].mxu0
        %v2838 = vadd.f32 0.0, %v2837
        %v2839 = vpop.f32.mrb[0].mxu0
        %v2840 = vadd.f32 0.0, %v2839
        %2841 = vmatprep.mubr.bf16.mxu0 0
        %2842 = vmatmul.mubr.bf16.gmra.mrb[0].mxu0 %v2685
        %v2843 = vpop.f32.mrb[0].mxu0
        %v2844 = vadd.f32 0.0, %v2843
        %v2845 = vpop.f32.mrb[0].mxu0
        %v2846 = vadd.f32 0.0, %v2845
        %v2847 = vpop.f32.mrb[0].mxu0
        %v2848 = vadd.f32 0.0, %v2847
        %v2849 = vpop.f32.mrb[0].mxu0
        %v2850 = vadd.f32 0.0, %v2849
        %2851 = vmatprep.mubr.bf16.mxu0 0
        %2852 = vmatmul.mubr.bf16.gmra.mrb[0].mxu0 %v2688
        %v2853 = vpop.f32.mrb[0].mxu0
        %v2854 = vadd.f32 0.0, %v2853
        %v2855 = vpop.f32.mrb[0].mxu0
        %v2856 = vadd.f32 0.0, %v2855
        %v2857 = vpop.f32.mrb[0].mxu0
        %v2858 = vadd.f32 0.0, %v2857
        %v2859 = vpop.f32.mrb[0].mxu0
        %v2860 = vadd.f32 0.0, %v2859
        %2861 = vmatprep.mubr.bf16.mxu0 0
        %2862 = vmatmul.mubr.bf16.gmra.mrb[0].mxu0 %v2691
        %v2863 = vpop.f32.mrb[0].mxu0
        %v2864 = vadd.f32 0.0, %v2863
        %v2865 = vpop.f32.mrb[0].mxu0
        %v2866 = vadd.f32 0.0, %v2865
        %v2867 = vpop.f32.mrb[0].mxu0
        %v2868 = vadd.f32 0.0, %v2867
        %v2869 = vpop.f32.mrb[0].mxu0
        %v2870 = vadd.f32 0.0, %v2869
        %2871 = vmatprep.mubr.bf16.mxu0 0
        %2872 = vmatmul.mubr.bf16.gmra.mrb[0].mxu0 %v2694
        %v2873 = vpop.f32.mrb[0].mxu0
        %v2874 = vadd.f32 0.0, %v2873
        %v2875 = vpop.f32.mrb[0].mxu0
        %v2876 = vadd.f32 0.0, %v2875
        %v2877 = vpop.f32.mrb[0].mxu0
        %v2878 = vadd.f32 0.0, %v2877
        %v2879 = vpop.f32.mrb[0].mxu0
        %v2880 = vadd.f32 0.0, %v2879
        %2881 = vmatprep.mubr.bf16.mxu0 0
        %2882 = vmatmul.mubr.bf16.gmra.mrb[0].mxu0 %v2697
        %v2883 = vpop.f32.mrb[0].mxu0
        %v2884 = vadd.f32 0.0, %v2883
        %v2885 = vpop.f32.mrb[0].mxu0
        %v2886 = vadd.f32 0.0, %v2885
        %v2887 = vpop.f32.mrb[0].mxu0
        %v2888 = vadd.f32 0.0, %v2887
        %v2889 = vpop.f32.mrb[0].mxu0
        %v2890 = vadd.f32 0.0, %v2889
        %2891 = vdwg.mxu0
        %v2892 = vmax.f32 %v2734, %v2744
        %v2893 = vmax.f32 %v2738, %v2748
        %v2894 = vmax.f32 %v2892, %v2754
        %v2895 = vmax.f32 %v2893, %v2758
        %v2896 = vmax.f32 %v2894, %v2764
        %v2897 = vmax.f32 %v2895, %v2768
        %v2898 = vmax.f32 %v2896, %v2774
        %v2899 = vmax.f32 %v2897, %v2778
        %v2900 = vmax.f32 %v2898, %v2784
        %v2901 = vmax.f32 %v2899, %v2788
        %v2902 = vmax.f32 %v2900, %v2794
        %v2903 = vmax.f32 %v2901, %v2798
        %v2904 = vmax.f32 %v2902, %v2804
        %v2905 = vmax.f32 %v2903, %v2808
        %v2906 = vmax.f32 %v2904, %v2814
        %v2907 = vmax.f32 %v2905, %v2818
        %v2908 = vmax.f32 %v2906, %v2824
        %v2909 = vmax.f32 %v2907, %v2828
        %v2910 = vmax.f32 %v2908, %v2834
        %v2911 = vmax.f32 %v2909, %v2838
        %v2912 = vmax.f32 %v2910, %v2844
        %v2913 = vmax.f32 %v2911, %v2848
        %v2914 = vmax.f32 %v2912, %v2854
        %v2915 = vmax.f32 %v2913, %v2858
        %v2916 = vmax.f32 %v2914, %v2864
        %v2917 = vmax.f32 %v2915, %v2868
        %v2918 = vmax.f32 %v2916, %v2874
        %v2919 = vmax.f32 %v2917, %v2878
        %v2920 = vmax.f32 %v2918, %v2884
        %v2921 = vmax.f32 %v2919, %v2888
        %v2922 = vmax.f32 %v2920, %v2921
        %v2923 = vrot.slane %v2922, 4
        %v2924 = vmax.f32 %v2922, %v2923
        %v2925 = vrot.slane %v2924, 2
        %v2926 = vmax.f32 %v2924, %v2925
        %v2927 = vrot.slane %v2926, 1
        %v2928 = vmax.f32 %v2926, %v2927
        %v2929 = vmax.f32 %v2736, %v2746
        %v2930 = vmax.f32 %v2740, %v2750
        %v2931 = vmax.f32 %v2929, %v2756
        %v2932 = vmax.f32 %v2930, %v2760
        %v2933 = vmax.f32 %v2931, %v2766
        %v2934 = vmax.f32 %v2932, %v2770
        %v2935 = vmax.f32 %v2933, %v2776
        %v2936 = vmax.f32 %v2934, %v2780
        %v2937 = vmax.f32 %v2935, %v2786
        %v2938 = vmax.f32 %v2936, %v2790
        %v2939 = vmax.f32 %v2937, %v2796
        %v2940 = vmax.f32 %v2938, %v2800
        %v2941 = vmax.f32 %v2939, %v2806
        %v2942 = vmax.f32 %v2940, %v2810
        %v2943 = vmax.f32 %v2941, %v2816
        %v2944 = vmax.f32 %v2942, %v2820
        %v2945 = vmax.f32 %v2943, %v2826
        %v2946 = vmax.f32 %v2944, %v2830
        %v2947 = vmax.f32 %v2945, %v2836
        %v2948 = vmax.f32 %v2946, %v2840
        %v2949 = vmax.f32 %v2947, %v2846
        %v2950 = vmax.f32 %v2948, %v2850
        %v2951 = vmax.f32 %v2949, %v2856
        %v2952 = vmax.f32 %v2950, %v2860
        %v2953 = vmax.f32 %v2951, %v2866
        %v2954 = vmax.f32 %v2952, %v2870
        %v2955 = vmax.f32 %v2953, %v2876
        %v2956 = vmax.f32 %v2954, %v2880
        %v2957 = vmax.f32 %v2955, %v2886
        %v2958 = vmax.f32 %v2956, %v2890
        %v2959 = vmax.f32 %v2957, %v2958
        %v2960 = vrot.slane %v2959, 4
        %v2961 = vmax.f32 %v2959, %v2960
        %v2962 = vrot.slane %v2961, 2
        %v2963 = vmax.f32 %v2961, %v2962
        %v2964 = vrot.slane %v2963, 1
        %v2965 = vmax.f32 %v2963, %v2964
        %v2966 = vsub.f32 %v2734, %v2928
        %v2967 = vsub.f32 %v2736, %v2965
        %v2968 = vsub.f32 %v2738, %v2928
        %v2969 = vsub.f32 %v2740, %v2965
        %v2970 = vsub.f32 %v2744, %v2928
        %v2971 = vsub.f32 %v2746, %v2965
        %v2972 = vsub.f32 %v2748, %v2928
        %v2973 = vsub.f32 %v2750, %v2965
        %v2974 = vsub.f32 %v2754, %v2928
        %v2975 = vsub.f32 %v2756, %v2965
        %v2976 = vsub.f32 %v2758, %v2928
        %v2977 = vsub.f32 %v2760, %v2965
        %v2978 = vsub.f32 %v2764, %v2928
        %v2979 = vsub.f32 %v2766, %v2965
        %v2980 = vsub.f32 %v2768, %v2928
        %v2981 = vsub.f32 %v2770, %v2965
        %v2982 = vsub.f32 %v2774, %v2928
        %v2983 = vsub.f32 %v2776, %v2965
        %v2984 = vsub.f32 %v2778, %v2928
        %v2985 = vsub.f32 %v2780, %v2965
        %v2986 = vsub.f32 %v2784, %v2928
        %v2987 = vsub.f32 %v2786, %v2965
        %v2988 = vsub.f32 %v2788, %v2928
        %v2989 = vsub.f32 %v2790, %v2965
        %v2990 = vsub.f32 %v2794, %v2928
        %v2991 = vsub.f32 %v2796, %v2965
        %v2992 = vsub.f32 %v2798, %v2928
        %v2993 = vsub.f32 %v2800, %v2965
        %v2994 = vsub.f32 %v2804, %v2928
        %v2995 = vsub.f32 %v2806, %v2965
        %v2996 = vsub.f32 %v2808, %v2928
        %v2997 = vsub.f32 %v2810, %v2965
        %v2998 = vsub.f32 %v2814, %v2928
        %v2999 = vsub.f32 %v2816, %v2965
        %v3000 = vsub.f32 %v2818, %v2928
        %v3001 = vsub.f32 %v2820, %v2965
        %v3002 = vsub.f32 %v2824, %v2928
        %v3003 = vsub.f32 %v2826, %v2965
        %v3004 = vsub.f32 %v2828, %v2928
        %v3005 = vsub.f32 %v2830, %v2965
        %v3006 = vsub.f32 %v2834, %v2928
        %v3007 = vsub.f32 %v2836, %v2965
        %v3008 = vsub.f32 %v2838, %v2928
        %v3009 = vsub.f32 %v2840, %v2965
        %v3010 = vsub.f32 %v2844, %v2928
        %v3011 = vsub.f32 %v2846, %v2965
        %v3012 = vsub.f32 %v2848, %v2928
        %v3013 = vsub.f32 %v2850, %v2965
        %v3014 = vsub.f32 %v2854, %v2928
        %v3015 = vsub.f32 %v2856, %v2965
        %v3016 = vsub.f32 %v2858, %v2928
        %v3017 = vsub.f32 %v2860, %v2965
        %v3018 = vsub.f32 %v2864, %v2928
        %v3019 = vsub.f32 %v2866, %v2965
        %v3020 = vsub.f32 %v2868, %v2928
        %v3021 = vsub.f32 %v2870, %v2965
        %v3022 = vsub.f32 %v2874, %v2928
        %v3023 = vsub.f32 %v2876, %v2965
        %v3024 = vsub.f32 %v2878, %v2928
        %v3025 = vsub.f32 %v2880, %v2965
        %v3026 = vsub.f32 %v2884, %v2928
        %v3027 = vsub.f32 %v2886, %v2965
        %v3028 = vsub.f32 %v2888, %v2928
        %v3029 = vsub.f32 %v2890, %v2965
        %v3030 = vmul.f32 %v2966, 1.442695
        %v3031 = vpow.pop %v3030
        %v3032 = vmul.f32 %v2967, 1.442695
        %v3033 = vpow.pop %v3032
        %v3034 = vmul.f32 %v2968, 1.442695
        %v3035 = vpow.pop %v3034
        %v3036 = vmul.f32 %v2969, 1.442695
        %v3037 = vpow.pop %v3036
        %v3038 = vmul.f32 %v2970, 1.442695
        %v3039 = vpow.pop %v3038
        %v3040 = vmul.f32 %v2971, 1.442695
        %v3041 = vpow.pop %v3040
        %v3042 = vmul.f32 %v2972, 1.442695
        %v3043 = vpow.pop %v3042
        %v3044 = vmul.f32 %v2973, 1.442695
        %v3045 = vpow.pop %v3044
        %v3046 = vmul.f32 %v2974, 1.442695
        %v3047 = vpow.pop %v3046
        %v3048 = vmul.f32 %v2975, 1.442695
        %v3049 = vpow.pop %v3048
        %v3050 = vmul.f32 %v2976, 1.442695
        %v3051 = vpow.pop %v3050
        %v3052 = vmul.f32 %v2977, 1.442695
        %v3053 = vpow.pop %v3052
        %v3054 = vmul.f32 %v2978, 1.442695
        %v3055 = vpow.pop %v3054
        %v3056 = vmul.f32 %v2979, 1.442695
        %v3057 = vpow.pop %v3056
        %v3058 = vmul.f32 %v2980, 1.442695
        %v3059 = vpow.pop %v3058
        %v3060 = vmul.f32 %v2981, 1.442695
        %v3061 = vpow.pop %v3060
        %v3062 = vmul.f32 %v2982, 1.442695
        %v3063 = vpow.pop %v3062
        %v3064 = vmul.f32 %v2983, 1.442695
        %v3065 = vpow.pop %v3064
        %v3066 = vmul.f32 %v2984, 1.442695
        %v3067 = vpow.pop %v3066
        %v3068 = vmul.f32 %v2985, 1.442695
        %v3069 = vpow.pop %v3068
        %v3070 = vmul.f32 %v2986, 1.442695
        %v3071 = vpow.pop %v3070
        %v3072 = vmul.f32 %v2987, 1.442695
        %v3073 = vpow.pop %v3072
        %v3074 = vmul.f32 %v2988, 1.442695
        %v3075 = vpow.pop %v3074
        %v3076 = vmul.f32 %v2989, 1.442695
        %v3077 = vpow.pop %v3076
        %v3078 = vmul.f32 %v2990, 1.442695
        %v3079 = vpow.pop %v3078
        %v3080 = vmul.f32 %v2991, 1.442695
        %v3081 = vpow.pop %v3080
        %v3082 = vmul.f32 %v2992, 1.442695
        %v3083 = vpow.pop %v3082
        %v3084 = vmul.f32 %v2993, 1.442695
        %v3085 = vpow.pop %v3084
        %v3086 = vmul.f32 %v2994, 1.442695
        %v3087 = vpow.pop %v3086
        %v3088 = vmul.f32 %v2995, 1.442695
        %v3089 = vpow.pop %v3088
        %v3090 = vmul.f32 %v2996, 1.442695
        %v3091 = vpow.pop %v3090
        %v3092 = vmul.f32 %v2997, 1.442695
        %v3093 = vpow.pop %v3092
        %v3094 = vmul.f32 %v2998, 1.442695
        %v3095 = vpow.pop %v3094
        %v3096 = vmul.f32 %v2999, 1.442695
        %v3097 = vpow.pop %v3096
        %v3098 = vmul.f32 %v3000, 1.442695
        %v3099 = vpow.pop %v3098
        %v3100 = vmul.f32 %v3001, 1.442695
        %v3101 = vpow.pop %v3100
        %v3102 = vmul.f32 %v3002, 1.442695
        %v3103 = vpow.pop %v3102
        %v3104 = vmul.f32 %v3003, 1.442695
        %v3105 = vpow.pop %v3104
        %v3106 = vmul.f32 %v3004, 1.442695
        %v3107 = vpow.pop %v3106
        %v3108 = vmul.f32 %v3005, 1.442695
        %v3109 = vpow.pop %v3108
        %v3110 = vmul.f32 %v3006, 1.442695
        %v3111 = vpow.pop %v3110
        %v3112 = vmul.f32 %v3007, 1.442695
        %v3113 = vpow.pop %v3112
        %v3114 = vmul.f32 %v3008, 1.442695
        %v3115 = vpow.pop %v3114
        %v3116 = vmul.f32 %v3009, 1.442695
        %v3117 = vpow.pop %v3116
        %v3118 = vmul.f32 %v3010, 1.442695
        %v3119 = vpow.pop %v3118
        %v3120 = vmul.f32 %v3011, 1.442695
        %v3121 = vpow.pop %v3120
        %v3122 = vmul.f32 %v3012, 1.442695
        %v3123 = vpow.pop %v3122
        %v3124 = vmul.f32 %v3013, 1.442695
        %v3125 = vpow.pop %v3124
        %v3126 = vmul.f32 %v3014, 1.442695
        %v3127 = vpow.pop %v3126
        %v3128 = vmul.f32 %v3015, 1.442695
        %v3129 = vpow.pop %v3128
        %v3130 = vmul.f32 %v3016, 1.442695
        %v3131 = vpow.pop %v3130
        %v3132 = vmul.f32 %v3017, 1.442695
        %v3133 = vpow.pop %v3132
        %v3134 = vmul.f32 %v3018, 1.442695
        %v3135 = vpow.pop %v3134
        %v3136 = vmul.f32 %v3019, 1.442695
        %v3137 = vpow.pop %v3136
        %v3138 = vmul.f32 %v3020, 1.442695
        %v3139 = vpow.pop %v3138
        %v3140 = vmul.f32 %v3021, 1.442695
        %v3141 = vpow.pop %v3140
        %v3142 = vmul.f32 %v3022, 1.442695
        %v3143 = vpow.pop %v3142
        %v3144 = vmul.f32 %v3023, 1.442695
        %v3145 = vpow.pop %v3144
        %v3146 = vmul.f32 %v3024, 1.442695
        %v3147 = vpow.pop %v3146
        %v3148 = vmul.f32 %v3025, 1.442695
        %v3149 = vpow.pop %v3148
        %v3150 = vmul.f32 %v3026, 1.442695
        %v3151 = vpow.pop %v3150
        %v3152 = vmul.f32 %v3027, 1.442695
        %v3153 = vpow.pop %v3152
        %v3154 = vmul.f32 %v3028, 1.442695
        %v3155 = vpow.pop %v3154
        %v3156 = vmul.f32 %v3029, 1.442695
        %v3157 = vpow.pop %v3156
        %v3158 = vadd.f32 %v3031, %v3035
        %v3159 = vadd.f32 %v3158, %v3039
        %v3160 = vadd.f32 %v3159, %v3043
        %v3161 = vadd.f32 %v3160, %v3047
        %v3162 = vadd.f32 %v3161, %v3051
        %v3163 = vadd.f32 %v3162, %v3055
        %v3164 = vadd.f32 %v3163, %v3059
        %v3165 = vadd.f32 %v3164, %v3063
        %v3166 = vadd.f32 %v3165, %v3067
        %v3167 = vadd.f32 %v3166, %v3071
        %v3168 = vadd.f32 %v3167, %v3075
        %v3169 = vadd.f32 %v3168, %v3079
        %v3170 = vadd.f32 %v3169, %v3083
        %v3171 = vadd.f32 %v3170, %v3087
        %v3172 = vadd.f32 %v3171, %v3091
        %v3173 = vadd.f32 %v3172, %v3095
        %v3174 = vadd.f32 %v3173, %v3099
        %v3175 = vadd.f32 %v3174, %v3103
        %v3176 = vadd.f32 %v3175, %v3107
        %v3177 = vadd.f32 %v3176, %v3111
        %v3178 = vadd.f32 %v3177, %v3115
        %v3179 = vadd.f32 %v3178, %v3119
        %v3180 = vadd.f32 %v3179, %v3123
        %v3181 = vadd.f32 %v3180, %v3127
        %v3182 = vadd.f32 %v3181, %v3131
        %v3183 = vadd.f32 %v3182, %v3135
        %v3184 = vadd.f32 %v3183, %v3139
        %v3185 = vadd.f32 %v3184, %v3143
        %v3186 = vadd.f32 %v3185, %v3147
        %v3187 = vadd.f32 %v3186, %v3151
        %v3188 = vadd.f32 %v3187, %v3155
        %v3189 = vrot.slane %v3188, 4
        %v3190 = vadd.f32 %v3188, %v3189
        %v3191 = vrot.slane %v3190, 2
        %v3192 = vadd.f32 %v3190, %v3191
        %v3193 = vrot.slane %v3192, 1
        %v3194 = vadd.f32 %v3192, %v3193
        %v3195 = vadd.f32 %v3033, %v3037
        %v3196 = vadd.f32 %v3195, %v3041
        %v3197 = vadd.f32 %v3196, %v3045
        %v3198 = vadd.f32 %v3197, %v3049
        %v3199 = vadd.f32 %v3198, %v3053
        %v3200 = vadd.f32 %v3199, %v3057
        %v3201 = vadd.f32 %v3200, %v3061
        %v3202 = vadd.f32 %v3201, %v3065
        %v3203 = vadd.f32 %v3202, %v3069
        %v3204 = vadd.f32 %v3203, %v3073
        %v3205 = vadd.f32 %v3204, %v3077
        %v3206 = vadd.f32 %v3205, %v3081
        %v3207 = vadd.f32 %v3206, %v3085
        %v3208 = vadd.f32 %v3207, %v3089
        %v3209 = vadd.f32 %v3208, %v3093
        %v3210 = vadd.f32 %v3209, %v3097
        %v3211 = vadd.f32 %v3210, %v3101
        %v3212 = vadd.f32 %v3211, %v3105
        %v3213 = vadd.f32 %v3212, %v3109
        %v3214 = vadd.f32 %v3213, %v3113
        %v3215 = vadd.f32 %v3214, %v3117
        %v3216 = vadd.f32 %v3215, %v3121
        %v3217 = vadd.f32 %v3216, %v3125
        %v3218 = vadd.f32 %v3217, %v3129
        %v3219 = vadd.f32 %v3218, %v3133
        %v3220 = vadd.f32 %v3219, %v3137
        %v3221 = vadd.f32 %v3220, %v3141
        %v3222 = vadd.f32 %v3221, %v3145
        %v3223 = vadd.f32 %v3222, %v3149
        %v3224 = vadd.f32 %v3223, %v3153
        %v3225 = vadd.f32 %v3224, %v3157
        %v3226 = vrot.slane %v3225, 4
        %v3227 = vadd.f32 %v3225, %v3226
        %v3228 = vrot.slane %v3227, 2
        %v3229 = vadd.f32 %v3227, %v3228
        %v3230 = vrot.slane %v3229, 1
        %v3231 = vadd.f32 %v3229, %v3230
        %v3232 = vrcp.pop %v3194
        %v3233 = vrcp.pop %v3231
        %v3234 = vmul.f32 %v3031, %v3232
        %v3235 = vmul.f32 %v3033, %v3233
        %v3236 = vmul.f32 %v3035, %v3232
        %v3237 = vmul.f32 %v3037, %v3233
        %v3238 = vmul.f32 %v3039, %v3232
        %v3239 = vmul.f32 %v3041, %v3233
        %v3240 = vmul.f32 %v3043, %v3232
        %v3241 = vmul.f32 %v3045, %v3233
        %v3242 = vmul.f32 %v3047, %v3232
        %v3243 = vmul.f32 %v3049, %v3233
        %v3244 = vmul.f32 %v3051, %v3232
        %v3245 = vmul.f32 %v3053, %v3233
        %v3246 = vmul.f32 %v3055, %v3232
        %v3247 = vmul.f32 %v3057, %v3233
        %v3248 = vmul.f32 %v3059, %v3232
        %v3249 = vmul.f32 %v3061, %v3233
        %v3250 = vmul.f32 %v3063, %v3232
        %v3251 = vmul.f32 %v3065, %v3233
        %v3252 = vmul.f32 %v3067, %v3232
        %v3253 = vmul.f32 %v3069, %v3233
        %v3254 = vmul.f32 %v3071, %v3232
        %v3255 = vmul.f32 %v3073, %v3233
        %v3256 = vmul.f32 %v3075, %v3232
        %v3257 = vmul.f32 %v3077, %v3233
        %v3258 = vmul.f32 %v3079, %v3232
        %v3259 = vmul.f32 %v3081, %v3233
        %v3260 = vmul.f32 %v3083, %v3232
        %v3261 = vmul.f32 %v3085, %v3233
        %v3262 = vmul.f32 %v3087, %v3232
        %v3263 = vmul.f32 %v3089, %v3233
        %v3264 = vmul.f32 %v3091, %v3232
        %v3265 = vmul.f32 %v3093, %v3233
        %v3266 = vmul.f32 %v3095, %v3232
        %v3267 = vmul.f32 %v3097, %v3233
        %v3268 = vmul.f32 %v3099, %v3232
        %v3269 = vmul.f32 %v3101, %v3233
        %v3270 = vmul.f32 %v3103, %v3232
        %v3271 = vmul.f32 %v3105, %v3233
        %v3272 = vmul.f32 %v3107, %v3232
        %v3273 = vmul.f32 %v3109, %v3233
        %v3274 = vmul.f32 %v3111, %v3232
        %v3275 = vmul.f32 %v3113, %v3233
        %v3276 = vmul.f32 %v3115, %v3232
        %v3277 = vmul.f32 %v3117, %v3233
        %v3278 = vmul.f32 %v3119, %v3232
        %v3279 = vmul.f32 %v3121, %v3233
        %v3280 = vmul.f32 %v3123, %v3232
        %v3281 = vmul.f32 %v3125, %v3233
        %v3282 = vmul.f32 %v3127, %v3232
        %v3283 = vmul.f32 %v3129, %v3233
        %v3284 = vmul.f32 %v3131, %v3232
        %v3285 = vmul.f32 %v3133, %v3233
        %v3286 = vmul.f32 %v3135, %v3232
        %v3287 = vmul.f32 %v3137, %v3233
        %v3288 = vmul.f32 %v3139, %v3232
        %v3289 = vmul.f32 %v3141, %v3233
        %v3290 = vmul.f32 %v3143, %v3232
        %v3291 = vmul.f32 %v3145, %v3233
        %v3292 = vmul.f32 %v3147, %v3232
        %v3293 = vmul.f32 %v3149, %v3233
        %v3294 = vmul.f32 %v3151, %v3232
        %v3295 = vmul.f32 %v3153, %v3233
        %v3296 = vmul.f32 %v3155, %v3232
        %v3297 = vmul.f32 %v3157, %v3233
        %v3298 = vpack.c.bf16 %v3236, %v3234
        %v3299 = vpack.c.bf16 %v3237, %v3235
        %v3300 = vpack.c.bf16 %v3240, %v3238
        %v3301 = vpack.c.bf16 %v3241, %v3239
        %v3302 = vpack.c.bf16 %v3244, %v3242
        %v3303 = vpack.c.bf16 %v3245, %v3243
        %v3304 = vpack.c.bf16 %v3248, %v3246
        %v3305 = vpack.c.bf16 %v3249, %v3247
        %v3306 = vpack.c.bf16 %v3252, %v3250
        %v3307 = vpack.c.bf16 %v3253, %v3251
        %v3308 = vpack.c.bf16 %v3256, %v3254
        %v3309 = vpack.c.bf16 %v3257, %v3255
        %v3310 = vpack.c.bf16 %v3260, %v3258
        %v3311 = vpack.c.bf16 %v3261, %v3259
        %v3312 = vpack.c.bf16 %v3264, %v3262
        %v3313 = vpack.c.bf16 %v3265, %v3263
        %v3314 = vpack.c.bf16 %v3268, %v3266
        %v3315 = vpack.c.bf16 %v3269, %v3267
        %v3316 = vpack.c.bf16 %v3272, %v3270
        %v3317 = vpack.c.bf16 %v3273, %v3271
        %v3318 = vpack.c.bf16 %v3276, %v3274
        %v3319 = vpack.c.bf16 %v3277, %v3275
        %v3320 = vpack.c.bf16 %v3280, %v3278
        %v3321 = vpack.c.bf16 %v3281, %v3279
        %v3322 = vpack.c.bf16 %v3284, %v3282
        %v3323 = vpack.c.bf16 %v3285, %v3283
        %v3324 = vpack.c.bf16 %v3288, %v3286
        %v3325 = vpack.c.bf16 %v3289, %v3287
        %v3326 = vpack.c.bf16 %v3292, %v3290
        %v3327 = vpack.c.bf16 %v3293, %v3291
        %v3328 = vpack.c.bf16 %v3296, %v3294
        %v3329 = vpack.c.bf16 %v3297, %v3295
        %3330 = vmatprep.subr.bf16.mxu0 %v3299
        %3331 = vmatpush1.bf16.msra.mxu0 %v3298
        %3332 = vmatprep.subr.bf16.mxu0 %v3301
        %3333 = vmatpush1.bf16.msra.mxu0 %v3300
        %3334 = vmatprep.subr.bf16.mxu0 %v3303
        %3335 = vmatpush1.bf16.msra.mxu0 %v3302
        %3336 = vmatprep.subr.bf16.mxu0 %v3305
        %3337 = vmatpush1.bf16.msra.mxu0 %v3304
        %3338 = vmatprep.subr.bf16.mxu0 %v3307
        %3339 = vmatpush1.bf16.msra.mxu0 %v3306
        %3340 = vmatprep.subr.bf16.mxu0 %v3309
        %3341 = vmatpush1.bf16.msra.mxu0 %v3308
        %3342 = vmatprep.subr.bf16.mxu0 %v3311
        %3343 = vmatpush1.bf16.msra.mxu0 %v3310
        %3344 = vmatprep.subr.bf16.mxu0 %v3313
        %3345 = vmatpush1.bf16.msra.mxu0 %v3312
        %3346 = vmatprep.subr.bf16.mxu0 %v3315
        %3347 = vmatpush1.bf16.msra.mxu0 %v3314
        %3348 = vmatprep.subr.bf16.mxu0 %v3317
        %3349 = vmatpush1.bf16.msra.mxu0 %v3316
        %3350 = vmatprep.subr.bf16.mxu0 %v3319
        %3351 = vmatpush1.bf16.msra.mxu0 %v3318
        %3352 = vmatprep.subr.bf16.mxu0 %v3321
        %3353 = vmatpush1.bf16.msra.mxu0 %v3320
        %3354 = vmatprep.subr.bf16.mxu0 %v3323
        %3355 = vmatpush1.bf16.msra.mxu0 %v3322
        %3356 = vmatprep.subr.bf16.mxu0 %v3325
        %3357 = vmatpush1.bf16.msra.mxu0 %v3324
        %3358 = vmatprep.subr.bf16.mxu0 %v3327
        %3359 = vmatpush1.bf16.msra.mxu0 %v3326
        %3360 = vmatprep.subr.bf16.mxu0 %v3329
        %3361 = vmatpush1.bf16.msra.mxu0 %v3328
        %3362 = vmatprep.mubr.bf16.mxu0 %v2618
        %3363 = vmatmul.mubr.bf16.gmra.mrb[0].mxu0 %v2617
        %v3364 = vpop.f32.mrb[0].mxu0
        %v3365 = vadd.f32 0.0, %v3364
        %v3366 = vpop.f32.mrb[0].mxu0
        %v3367 = vadd.f32 0.0, %v3366
        %v3368 = vpop.f32.mrb[0].mxu0
        %v3369 = vadd.f32 0.0, %v3368
        %v3370 = vpop.f32.mrb[0].mxu0
        %v3371 = vadd.f32 0.0, %v3370
        %3372 = vdwg.mxu0
        %v3373 = vpack.c.bf16 %v3369, %v3365
        %v3374 = vpack.c.bf16 %v3371, %v3367
        %3375 = vst [vmem:[#allocation3 + $0x10] sm:$0xff] %v3373
        %3376 = vst [vmem:[#allocation3 + $0x18] sm:$0xff] %v3374
        %v3377 = vld [vmem:[#allocation2 + $0x20] sm:$0xff]
        %v3378 = vld [vmem:[#allocation2 + $0x28] sm:$0xff]
        %v3379 = vld [vmem:[#allocation2 + $0x60] sm:$0xff]
        %v3380 = vld [vmem:[#allocation2 + $0x68] sm:$0xff]
        %v3381 = vld [vmem:[#allocation2 + $0xa0] sm:$0xff]
        %v3382 = vld [vmem:[#allocation2 + $0xa8] sm:$0xff]
        %3383 = vxpose.xlu0.c.b16.start [1/8] %v3379, 128
        %3384 = vxpose.xlu0.c.b16.cont [2/8] 0, 128
        %3385 = vxpose.xlu0.c.b16.cont [3/8] 0, 128
        %3386 = vxpose.xlu0.c.b16.cont [4/8] 0, 128
        %3387 = vxpose.xlu0.c.b16.cont [5/8] 0, 128
        %3388 = vxpose.xlu0.c.b16.cont [6/8] 0, 128
        %3389 = vxpose.xlu0.c.b16.cont [7/8] 0, 128
        %3390 = vxpose.xlu0.c.b16.end [8/8] 0, 128
        %v3391 = vpop.trf.xlu0
        %v3392 = vpop.trf.xlu0
        %v3393 = vpop.trf.xlu0
        %v3394 = vpop.trf.xlu0
        %v3395 = vpop.trf.xlu0
        %v3396 = vpop.trf.xlu0
        %v3397 = vpop.trf.xlu0
        %v3398 = vpop.trf.xlu0
        %3399 = vxpose.xlu0.c.b16.start [1/8] %v3380, 128
        %3400 = vxpose.xlu0.c.b16.cont [2/8] 0, 128
        %3401 = vxpose.xlu0.c.b16.cont [3/8] 0, 128
        %3402 = vxpose.xlu0.c.b16.cont [4/8] 0, 128
        %3403 = vxpose.xlu0.c.b16.cont [5/8] 0, 128
        %3404 = vxpose.xlu0.c.b16.cont [6/8] 0, 128
        %3405 = vxpose.xlu0.c.b16.cont [7/8] 0, 128
        %3406 = vxpose.xlu0.c.b16.end [8/8] 0, 128
        %v3407 = vpop.trf.xlu0
        %v3408 = vpop.trf.xlu0
        %v3409 = vpop.trf.xlu0
        %v3410 = vpop.trf.xlu0
        %v3411 = vpop.trf.xlu0
        %v3412 = vpop.trf.xlu0
        %v3413 = vpop.trf.xlu0
        %v3414 = vpop.trf.xlu0
        %v3416 = vsel %vm1886, %v3391, 0
        %v3419 = vsel %vm1886, %v3392, 0
        %v3422 = vsel %vm1886, %v3393, 0
        %v3425 = vsel %vm1886, %v3394, 0
        %v3428 = vsel %vm1886, %v3395, 0
        %v3431 = vsel %vm1886, %v3396, 0
        %v3434 = vsel %vm1886, %v3397, 0
        %v3437 = vsel %vm1886, %v3398, 0
        %v3440 = vsel %vm1886, %v3407, 0
        %v3443 = vsel %vm1886, %v3408, 0
        %v3446 = vsel %vm1886, %v3409, 0
        %v3449 = vsel %vm1886, %v3410, 0
        %v3452 = vsel %vm1886, %v3411, 0
        %v3455 = vsel %vm1886, %v3412, 0
        %v3458 = vsel %vm1886, %v3413, 0
        %v3461 = vsel %vm1886, %v3414, 0
        %3463 = vmatprep.subr.bf16.mxu0 %v3378
        %3464 = vmatpush1.bf16.msra.mxu0 %v3377
        %3465 = vmatprep.subr.bf16.mxu0 0
        %3466 = vmatpush1.bf16.msra.mxu0 0
        %3467 = vmatprep.subr.bf16.mxu0 0
        %3468 = vmatpush1.bf16.msra.mxu0 0
        %3469 = vmatprep.subr.bf16.mxu0 0
        %3470 = vmatpush1.bf16.msra.mxu0 0
        %3471 = vmatprep.subr.bf16.mxu0 0
        %3472 = vmatpush1.bf16.msra.mxu0 0
        %3473 = vmatprep.subr.bf16.mxu0 0
        %3474 = vmatpush1.bf16.msra.mxu0 0
        %3475 = vmatprep.subr.bf16.mxu0 0
        %3476 = vmatpush1.bf16.msra.mxu0 0
        %3477 = vmatprep.subr.bf16.mxu0 0
        %3478 = vmatpush1.bf16.msra.mxu0 0
        %3479 = vmatprep.subr.bf16.mxu0 0
        %3480 = vmatpush1.bf16.msra.mxu0 0
        %3481 = vmatprep.subr.bf16.mxu0 0
        %3482 = vmatpush1.bf16.msra.mxu0 0
        %3483 = vmatprep.subr.bf16.mxu0 0
        %3484 = vmatpush1.bf16.msra.mxu0 0
        %3485 = vmatprep.subr.bf16.mxu0 0
        %3486 = vmatpush1.bf16.msra.mxu0 0
        %3487 = vmatprep.subr.bf16.mxu0 0
        %3488 = vmatpush1.bf16.msra.mxu0 0
        %3489 = vmatprep.subr.bf16.mxu0 0
        %3490 = vmatpush1.bf16.msra.mxu0 0
        %3491 = vmatprep.subr.bf16.mxu0 0
        %3492 = vmatpush1.bf16.msra.mxu0 0
        %3493 = vmatprep.subr.bf16.mxu0 0
        %3494 = vmatpush1.bf16.msra.mxu0 0
        %3495 = vmatprep.mubr.bf16.mxu0 0
        %3496 = vmatmul.mubr.bf16.gmra.mrb[0].mxu0 %v3416
        %v3497 = vpop.f32.mrb[0].mxu0
        %v3498 = vadd.f32 0.0, %v3497
        %v3499 = vpop.f32.mrb[0].mxu0
        %v3500 = vadd.f32 0.0, %v3499
        %v3501 = vpop.f32.mrb[0].mxu0
        %v3502 = vadd.f32 0.0, %v3501
        %v3503 = vpop.f32.mrb[0].mxu0
        %v3504 = vadd.f32 0.0, %v3503
        %3505 = vmatprep.mubr.bf16.mxu0 0
        %3506 = vmatmul.mubr.bf16.gmra.mrb[0].mxu0 %v3419
        %v3507 = vpop.f32.mrb[0].mxu0
        %v3508 = vadd.f32 0.0, %v3507
        %v3509 = vpop.f32.mrb[0].mxu0
        %v3510 = vadd.f32 0.0, %v3509
        %v3511 = vpop.f32.mrb[0].mxu0
        %v3512 = vadd.f32 0.0, %v3511
        %v3513 = vpop.f32.mrb[0].mxu0
        %v3514 = vadd.f32 0.0, %v3513
        %3515 = vmatprep.mubr.bf16.mxu0 0
        %3516 = vmatmul.mubr.bf16.gmra.mrb[0].mxu0 %v3422
        %v3517 = vpop.f32.mrb[0].mxu0
        %v3518 = vadd.f32 0.0, %v3517
        %v3519 = vpop.f32.mrb[0].mxu0
        %v3520 = vadd.f32 0.0, %v3519
        %v3521 = vpop.f32.mrb[0].mxu0
        %v3522 = vadd.f32 0.0, %v3521
        %v3523 = vpop.f32.mrb[0].mxu0
        %v3524 = vadd.f32 0.0, %v3523
        %3525 = vmatprep.mubr.bf16.mxu0 0
        %3526 = vmatmul.mubr.bf16.gmra.mrb[0].mxu0 %v3425
        %v3527 = vpop.f32.mrb[0].mxu0
        %v3528 = vadd.f32 0.0, %v3527
        %v3529 = vpop.f32.mrb[0].mxu0
        %v3530 = vadd.f32 0.0, %v3529
        %v3531 = vpop.f32.mrb[0].mxu0
        %v3532 = vadd.f32 0.0, %v3531
        %v3533 = vpop.f32.mrb[0].mxu0
        %v3534 = vadd.f32 0.0, %v3533
        %3535 = vmatprep.mubr.bf16.mxu0 0
        %3536 = vmatmul.mubr.bf16.gmra.mrb[0].mxu0 %v3428
        %v3537 = vpop.f32.mrb[0].mxu0
        %v3538 = vadd.f32 0.0, %v3537
        %v3539 = vpop.f32.mrb[0].mxu0
        %v3540 = vadd.f32 0.0, %v3539
        %v3541 = vpop.f32.mrb[0].mxu0
        %v3542 = vadd.f32 0.0, %v3541
        %v3543 = vpop.f32.mrb[0].mxu0
        %v3544 = vadd.f32 0.0, %v3543
        %3545 = vmatprep.mubr.bf16.mxu0 0
        %3546 = vmatmul.mubr.bf16.gmra.mrb[0].mxu0 %v3431
        %v3547 = vpop.f32.mrb[0].mxu0
        %v3548 = vadd.f32 0.0, %v3547
        %v3549 = vpop.f32.mrb[0].mxu0
        %v3550 = vadd.f32 0.0, %v3549
        %v3551 = vpop.f32.mrb[0].mxu0
        %v3552 = vadd.f32 0.0, %v3551
        %v3553 = vpop.f32.mrb[0].mxu0
        %v3554 = vadd.f32 0.0, %v3553
        %3555 = vmatprep.mubr.bf16.mxu0 0
        %3556 = vmatmul.mubr.bf16.gmra.mrb[0].mxu0 %v3434
        %v3557 = vpop.f32.mrb[0].mxu0
        %v3558 = vadd.f32 0.0, %v3557
        %v3559 = vpop.f32.mrb[0].mxu0
        %v3560 = vadd.f32 0.0, %v3559
        %v3561 = vpop.f32.mrb[0].mxu0
        %v3562 = vadd.f32 0.0, %v3561
        %v3563 = vpop.f32.mrb[0].mxu0
        %v3564 = vadd.f32 0.0, %v3563
        %3565 = vmatprep.mubr.bf16.mxu0 0
        %3566 = vmatmul.mubr.bf16.gmra.mrb[0].mxu0 %v3437
        %v3567 = vpop.f32.mrb[0].mxu0
        %v3568 = vadd.f32 0.0, %v3567
        %v3569 = vpop.f32.mrb[0].mxu0
        %v3570 = vadd.f32 0.0, %v3569
        %v3571 = vpop.f32.mrb[0].mxu0
        %v3572 = vadd.f32 0.0, %v3571
        %v3573 = vpop.f32.mrb[0].mxu0
        %v3574 = vadd.f32 0.0, %v3573
        %3575 = vmatprep.mubr.bf16.mxu0 0
        %3576 = vmatmul.mubr.bf16.gmra.mrb[0].mxu0 %v3440
        %v3577 = vpop.f32.mrb[0].mxu0
        %v3578 = vadd.f32 0.0, %v3577
        %v3579 = vpop.f32.mrb[0].mxu0
        %v3580 = vadd.f32 0.0, %v3579
        %v3581 = vpop.f32.mrb[0].mxu0
        %v3582 = vadd.f32 0.0, %v3581
        %v3583 = vpop.f32.mrb[0].mxu0
        %v3584 = vadd.f32 0.0, %v3583
        %3585 = vmatprep.mubr.bf16.mxu0 0
        %3586 = vmatmul.mubr.bf16.gmra.mrb[0].mxu0 %v3443
        %v3587 = vpop.f32.mrb[0].mxu0
        %v3588 = vadd.f32 0.0, %v3587
        %v3589 = vpop.f32.mrb[0].mxu0
        %v3590 = vadd.f32 0.0, %v3589
        %v3591 = vpop.f32.mrb[0].mxu0
        %v3592 = vadd.f32 0.0, %v3591
        %v3593 = vpop.f32.mrb[0].mxu0
        %v3594 = vadd.f32 0.0, %v3593
        %3595 = vmatprep.mubr.bf16.mxu0 0
        %3596 = vmatmul.mubr.bf16.gmra.mrb[0].mxu0 %v3446
        %v3597 = vpop.f32.mrb[0].mxu0
        %v3598 = vadd.f32 0.0, %v3597
        %v3599 = vpop.f32.mrb[0].mxu0
        %v3600 = vadd.f32 0.0, %v3599
        %v3601 = vpop.f32.mrb[0].mxu0
        %v3602 = vadd.f32 0.0, %v3601
        %v3603 = vpop.f32.mrb[0].mxu0
        %v3604 = vadd.f32 0.0, %v3603
        %3605 = vmatprep.mubr.bf16.mxu0 0
        %3606 = vmatmul.mubr.bf16.gmra.mrb[0].mxu0 %v3449
        %v3607 = vpop.f32.mrb[0].mxu0
        %v3608 = vadd.f32 0.0, %v3607
        %v3609 = vpop.f32.mrb[0].mxu0
        %v3610 = vadd.f32 0.0, %v3609
        %v3611 = vpop.f32.mrb[0].mxu0
        %v3612 = vadd.f32 0.0, %v3611
        %v3613 = vpop.f32.mrb[0].mxu0
        %v3614 = vadd.f32 0.0, %v3613
        %3615 = vmatprep.mubr.bf16.mxu0 0
        %3616 = vmatmul.mubr.bf16.gmra.mrb[0].mxu0 %v3452
        %v3617 = vpop.f32.mrb[0].mxu0
        %v3618 = vadd.f32 0.0, %v3617
        %v3619 = vpop.f32.mrb[0].mxu0
        %v3620 = vadd.f32 0.0, %v3619
        %v3621 = vpop.f32.mrb[0].mxu0
        %v3622 = vadd.f32 0.0, %v3621
        %v3623 = vpop.f32.mrb[0].mxu0
        %v3624 = vadd.f32 0.0, %v3623
        %3625 = vmatprep.mubr.bf16.mxu0 0
        %3626 = vmatmul.mubr.bf16.gmra.mrb[0].mxu0 %v3455
        %v3627 = vpop.f32.mrb[0].mxu0
        %v3628 = vadd.f32 0.0, %v3627
        %v3629 = vpop.f32.mrb[0].mxu0
        %v3630 = vadd.f32 0.0, %v3629
        %v3631 = vpop.f32.mrb[0].mxu0
        %v3632 = vadd.f32 0.0, %v3631
        %v3633 = vpop.f32.mrb[0].mxu0
        %v3634 = vadd.f32 0.0, %v3633
        %3635 = vmatprep.mubr.bf16.mxu0 0
        %3636 = vmatmul.mubr.bf16.gmra.mrb[0].mxu0 %v3458
        %v3637 = vpop.f32.mrb[0].mxu0
        %v3638 = vadd.f32 0.0, %v3637
        %v3639 = vpop.f32.mrb[0].mxu0
        %v3640 = vadd.f32 0.0, %v3639
        %v3641 = vpop.f32.mrb[0].mxu0
        %v3642 = vadd.f32 0.0, %v3641
        %v3643 = vpop.f32.mrb[0].mxu0
        %v3644 = vadd.f32 0.0, %v3643
        %3645 = vmatprep.mubr.bf16.mxu0 0
        %3646 = vmatmul.mubr.bf16.gmra.mrb[0].mxu0 %v3461
        %v3647 = vpop.f32.mrb[0].mxu0
        %v3648 = vadd.f32 0.0, %v3647
        %v3649 = vpop.f32.mrb[0].mxu0
        %v3650 = vadd.f32 0.0, %v3649
        %v3651 = vpop.f32.mrb[0].mxu0
        %v3652 = vadd.f32 0.0, %v3651
        %v3653 = vpop.f32.mrb[0].mxu0
        %v3654 = vadd.f32 0.0, %v3653
        %3655 = vdwg.mxu0
        %v3656 = vmax.f32 %v3498, %v3508
        %v3657 = vmax.f32 %v3502, %v3512
        %v3658 = vmax.f32 %v3656, %v3518
        %v3659 = vmax.f32 %v3657, %v3522
        %v3660 = vmax.f32 %v3658, %v3528
        %v3661 = vmax.f32 %v3659, %v3532
        %v3662 = vmax.f32 %v3660, %v3538
        %v3663 = vmax.f32 %v3661, %v3542
        %v3664 = vmax.f32 %v3662, %v3548
        %v3665 = vmax.f32 %v3663, %v3552
        %v3666 = vmax.f32 %v3664, %v3558
        %v3667 = vmax.f32 %v3665, %v3562
        %v3668 = vmax.f32 %v3666, %v3568
        %v3669 = vmax.f32 %v3667, %v3572
        %v3670 = vmax.f32 %v3668, %v3578
        %v3671 = vmax.f32 %v3669, %v3582
        %v3672 = vmax.f32 %v3670, %v3588
        %v3673 = vmax.f32 %v3671, %v3592
        %v3674 = vmax.f32 %v3672, %v3598
        %v3675 = vmax.f32 %v3673, %v3602
        %v3676 = vmax.f32 %v3674, %v3608
        %v3677 = vmax.f32 %v3675, %v3612
        %v3678 = vmax.f32 %v3676, %v3618
        %v3679 = vmax.f32 %v3677, %v3622
        %v3680 = vmax.f32 %v3678, %v3628
        %v3681 = vmax.f32 %v3679, %v3632
        %v3682 = vmax.f32 %v3680, %v3638
        %v3683 = vmax.f32 %v3681, %v3642
        %v3684 = vmax.f32 %v3682, %v3648
        %v3685 = vmax.f32 %v3683, %v3652
        %v3686 = vmax.f32 %v3684, %v3685
        %v3687 = vrot.slane %v3686, 4
        %v3688 = vmax.f32 %v3686, %v3687
        %v3689 = vrot.slane %v3688, 2
        %v3690 = vmax.f32 %v3688, %v3689
        %v3691 = vrot.slane %v3690, 1
        %v3692 = vmax.f32 %v3690, %v3691
        %v3693 = vmax.f32 %v3500, %v3510
        %v3694 = vmax.f32 %v3504, %v3514
        %v3695 = vmax.f32 %v3693, %v3520
        %v3696 = vmax.f32 %v3694, %v3524
        %v3697 = vmax.f32 %v3695, %v3530
        %v3698 = vmax.f32 %v3696, %v3534
        %v3699 = vmax.f32 %v3697, %v3540
        %v3700 = vmax.f32 %v3698, %v3544
        %v3701 = vmax.f32 %v3699, %v3550
        %v3702 = vmax.f32 %v3700, %v3554
        %v3703 = vmax.f32 %v3701, %v3560
        %v3704 = vmax.f32 %v3702, %v3564
        %v3705 = vmax.f32 %v3703, %v3570
        %v3706 = vmax.f32 %v3704, %v3574
        %v3707 = vmax.f32 %v3705, %v3580
        %v3708 = vmax.f32 %v3706, %v3584
        %v3709 = vmax.f32 %v3707, %v3590
        %v3710 = vmax.f32 %v3708, %v3594
        %v3711 = vmax.f32 %v3709, %v3600
        %v3712 = vmax.f32 %v3710, %v3604
        %v3713 = vmax.f32 %v3711, %v3610
        %v3714 = vmax.f32 %v3712, %v3614
        %v3715 = vmax.f32 %v3713, %v3620
        %v3716 = vmax.f32 %v3714, %v3624
        %v3717 = vmax.f32 %v3715, %v3630
        %v3718 = vmax.f32 %v3716, %v3634
        %v3719 = vmax.f32 %v3717, %v3640
        %v3720 = vmax.f32 %v3718, %v3644
        %v3721 = vmax.f32 %v3719, %v3650
        %v3722 = vmax.f32 %v3720, %v3654
        %v3723 = vmax.f32 %v3721, %v3722
        %v3724 = vrot.slane %v3723, 4
        %v3725 = vmax.f32 %v3723, %v3724
        %v3726 = vrot.slane %v3725, 2
        %v3727 = vmax.f32 %v3725, %v3726
        %v3728 = vrot.slane %v3727, 1
        %v3729 = vmax.f32 %v3727, %v3728
        %v3730 = vsub.f32 %v3498, %v3692
        %v3731 = vsub.f32 %v3500, %v3729
        %v3732 = vsub.f32 %v3502, %v3692
        %v3733 = vsub.f32 %v3504, %v3729
        %v3734 = vsub.f32 %v3508, %v3692
        %v3735 = vsub.f32 %v3510, %v3729
        %v3736 = vsub.f32 %v3512, %v3692
        %v3737 = vsub.f32 %v3514, %v3729
        %v3738 = vsub.f32 %v3518, %v3692
        %v3739 = vsub.f32 %v3520, %v3729
        %v3740 = vsub.f32 %v3522, %v3692
        %v3741 = vsub.f32 %v3524, %v3729
        %v3742 = vsub.f32 %v3528, %v3692
        %v3743 = vsub.f32 %v3530, %v3729
        %v3744 = vsub.f32 %v3532, %v3692
        %v3745 = vsub.f32 %v3534, %v3729
        %v3746 = vsub.f32 %v3538, %v3692
        %v3747 = vsub.f32 %v3540, %v3729
        %v3748 = vsub.f32 %v3542, %v3692
        %v3749 = vsub.f32 %v3544, %v3729
        %v3750 = vsub.f32 %v3548, %v3692
        %v3751 = vsub.f32 %v3550, %v3729
        %v3752 = vsub.f32 %v3552, %v3692
        %v3753 = vsub.f32 %v3554, %v3729
        %v3754 = vsub.f32 %v3558, %v3692
        %v3755 = vsub.f32 %v3560, %v3729
        %v3756 = vsub.f32 %v3562, %v3692
        %v3757 = vsub.f32 %v3564, %v3729
        %v3758 = vsub.f32 %v3568, %v3692
        %v3759 = vsub.f32 %v3570, %v3729
        %v3760 = vsub.f32 %v3572, %v3692
        %v3761 = vsub.f32 %v3574, %v3729
        %v3762 = vsub.f32 %v3578, %v3692
        %v3763 = vsub.f32 %v3580, %v3729
        %v3764 = vsub.f32 %v3582, %v3692
        %v3765 = vsub.f32 %v3584, %v3729
        %v3766 = vsub.f32 %v3588, %v3692
        %v3767 = vsub.f32 %v3590, %v3729
        %v3768 = vsub.f32 %v3592, %v3692
        %v3769 = vsub.f32 %v3594, %v3729
        %v3770 = vsub.f32 %v3598, %v3692
        %v3771 = vsub.f32 %v3600, %v3729
        %v3772 = vsub.f32 %v3602, %v3692
        %v3773 = vsub.f32 %v3604, %v3729
        %v3774 = vsub.f32 %v3608, %v3692
        %v3775 = vsub.f32 %v3610, %v3729
        %v3776 = vsub.f32 %v3612, %v3692
        %v3777 = vsub.f32 %v3614, %v3729
        %v3778 = vsub.f32 %v3618, %v3692
        %v3779 = vsub.f32 %v3620, %v3729
        %v3780 = vsub.f32 %v3622, %v3692
        %v3781 = vsub.f32 %v3624, %v3729
        %v3782 = vsub.f32 %v3628, %v3692
        %v3783 = vsub.f32 %v3630, %v3729
        %v3784 = vsub.f32 %v3632, %v3692
        %v3785 = vsub.f32 %v3634, %v3729
        %v3786 = vsub.f32 %v3638, %v3692
        %v3787 = vsub.f32 %v3640, %v3729
        %v3788 = vsub.f32 %v3642, %v3692
        %v3789 = vsub.f32 %v3644, %v3729
        %v3790 = vsub.f32 %v3648, %v3692
        %v3791 = vsub.f32 %v3650, %v3729
        %v3792 = vsub.f32 %v3652, %v3692
        %v3793 = vsub.f32 %v3654, %v3729
        %v3794 = vmul.f32 %v3730, 1.442695
        %v3795 = vpow.pop %v3794
        %v3796 = vmul.f32 %v3731, 1.442695
        %v3797 = vpow.pop %v3796
        %v3798 = vmul.f32 %v3732, 1.442695
        %v3799 = vpow.pop %v3798
        %v3800 = vmul.f32 %v3733, 1.442695
        %v3801 = vpow.pop %v3800
        %v3802 = vmul.f32 %v3734, 1.442695
        %v3803 = vpow.pop %v3802
        %v3804 = vmul.f32 %v3735, 1.442695
        %v3805 = vpow.pop %v3804
        %v3806 = vmul.f32 %v3736, 1.442695
        %v3807 = vpow.pop %v3806
        %v3808 = vmul.f32 %v3737, 1.442695
        %v3809 = vpow.pop %v3808
        %v3810 = vmul.f32 %v3738, 1.442695
        %v3811 = vpow.pop %v3810
        %v3812 = vmul.f32 %v3739, 1.442695
        %v3813 = vpow.pop %v3812
        %v3814 = vmul.f32 %v3740, 1.442695
        %v3815 = vpow.pop %v3814
        %v3816 = vmul.f32 %v3741, 1.442695
        %v3817 = vpow.pop %v3816
        %v3818 = vmul.f32 %v3742, 1.442695
        %v3819 = vpow.pop %v3818
        %v3820 = vmul.f32 %v3743, 1.442695
        %v3821 = vpow.pop %v3820
        %v3822 = vmul.f32 %v3744, 1.442695
        %v3823 = vpow.pop %v3822
        %v3824 = vmul.f32 %v3745, 1.442695
        %v3825 = vpow.pop %v3824
        %v3826 = vmul.f32 %v3746, 1.442695
        %v3827 = vpow.pop %v3826
        %v3828 = vmul.f32 %v3747, 1.442695
        %v3829 = vpow.pop %v3828
        %v3830 = vmul.f32 %v3748, 1.442695
        %v3831 = vpow.pop %v3830
        %v3832 = vmul.f32 %v3749, 1.442695
        %v3833 = vpow.pop %v3832
        %v3834 = vmul.f32 %v3750, 1.442695
        %v3835 = vpow.pop %v3834
        %v3836 = vmul.f32 %v3751, 1.442695
        %v3837 = vpow.pop %v3836
        %v3838 = vmul.f32 %v3752, 1.442695
        %v3839 = vpow.pop %v3838
        %v3840 = vmul.f32 %v3753, 1.442695
        %v3841 = vpow.pop %v3840
        %v3842 = vmul.f32 %v3754, 1.442695
        %v3843 = vpow.pop %v3842
        %v3844 = vmul.f32 %v3755, 1.442695
        %v3845 = vpow.pop %v3844
        %v3846 = vmul.f32 %v3756, 1.442695
        %v3847 = vpow.pop %v3846
        %v3848 = vmul.f32 %v3757, 1.442695
        %v3849 = vpow.pop %v3848
        %v3850 = vmul.f32 %v3758, 1.442695
        %v3851 = vpow.pop %v3850
        %v3852 = vmul.f32 %v3759, 1.442695
        %v3853 = vpow.pop %v3852
        %v3854 = vmul.f32 %v3760, 1.442695
        %v3855 = vpow.pop %v3854
        %v3856 = vmul.f32 %v3761, 1.442695
        %v3857 = vpow.pop %v3856
        %v3858 = vmul.f32 %v3762, 1.442695
        %v3859 = vpow.pop %v3858
        %v3860 = vmul.f32 %v3763, 1.442695
        %v3861 = vpow.pop %v3860
        %v3862 = vmul.f32 %v3764, 1.442695
        %v3863 = vpow.pop %v3862
        %v3864 = vmul.f32 %v3765, 1.442695
        %v3865 = vpow.pop %v3864
        %v3866 = vmul.f32 %v3766, 1.442695
        %v3867 = vpow.pop %v3866
        %v3868 = vmul.f32 %v3767, 1.442695
        %v3869 = vpow.pop %v3868
        %v3870 = vmul.f32 %v3768, 1.442695
        %v3871 = vpow.pop %v3870
        %v3872 = vmul.f32 %v3769, 1.442695
        %v3873 = vpow.pop %v3872
        %v3874 = vmul.f32 %v3770, 1.442695
        %v3875 = vpow.pop %v3874
        %v3876 = vmul.f32 %v3771, 1.442695
        %v3877 = vpow.pop %v3876
        %v3878 = vmul.f32 %v3772, 1.442695
        %v3879 = vpow.pop %v3878
        %v3880 = vmul.f32 %v3773, 1.442695
        %v3881 = vpow.pop %v3880
        %v3882 = vmul.f32 %v3774, 1.442695
        %v3883 = vpow.pop %v3882
        %v3884 = vmul.f32 %v3775, 1.442695
        %v3885 = vpow.pop %v3884
        %v3886 = vmul.f32 %v3776, 1.442695
        %v3887 = vpow.pop %v3886
        %v3888 = vmul.f32 %v3777, 1.442695
        %v3889 = vpow.pop %v3888
        %v3890 = vmul.f32 %v3778, 1.442695
        %v3891 = vpow.pop %v3890
        %v3892 = vmul.f32 %v3779, 1.442695
        %v3893 = vpow.pop %v3892
        %v3894 = vmul.f32 %v3780, 1.442695
        %v3895 = vpow.pop %v3894
        %v3896 = vmul.f32 %v3781, 1.442695
        %v3897 = vpow.pop %v3896
        %v3898 = vmul.f32 %v3782, 1.442695
        %v3899 = vpow.pop %v3898
        %v3900 = vmul.f32 %v3783, 1.442695
        %v3901 = vpow.pop %v3900
        %v3902 = vmul.f32 %v3784, 1.442695
        %v3903 = vpow.pop %v3902
        %v3904 = vmul.f32 %v3785, 1.442695
        %v3905 = vpow.pop %v3904
        %v3906 = vmul.f32 %v3786, 1.442695
        %v3907 = vpow.pop %v3906
        %v3908 = vmul.f32 %v3787, 1.442695
        %v3909 = vpow.pop %v3908
        %v3910 = vmul.f32 %v3788, 1.442695
        %v3911 = vpow.pop %v3910
        %v3912 = vmul.f32 %v3789, 1.442695
        %v3913 = vpow.pop %v3912
        %v3914 = vmul.f32 %v3790, 1.442695
        %v3915 = vpow.pop %v3914
        %v3916 = vmul.f32 %v3791, 1.442695
        %v3917 = vpow.pop %v3916
        %v3918 = vmul.f32 %v3792, 1.442695
        %v3919 = vpow.pop %v3918
        %v3920 = vmul.f32 %v3793, 1.442695
        %v3921 = vpow.pop %v3920
        %v3922 = vadd.f32 %v3795, %v3799
        %v3923 = vadd.f32 %v3922, %v3803
        %v3924 = vadd.f32 %v3923, %v3807
        %v3925 = vadd.f32 %v3924, %v3811
        %v3926 = vadd.f32 %v3925, %v3815
        %v3927 = vadd.f32 %v3926, %v3819
        %v3928 = vadd.f32 %v3927, %v3823
        %v3929 = vadd.f32 %v3928, %v3827
        %v3930 = vadd.f32 %v3929, %v3831
        %v3931 = vadd.f32 %v3930, %v3835
        %v3932 = vadd.f32 %v3931, %v3839
        %v3933 = vadd.f32 %v3932, %v3843
        %v3934 = vadd.f32 %v3933, %v3847
        %v3935 = vadd.f32 %v3934, %v3851
        %v3936 = vadd.f32 %v3935, %v3855
        %v3937 = vadd.f32 %v3936, %v3859
        %v3938 = vadd.f32 %v3937, %v3863
        %v3939 = vadd.f32 %v3938, %v3867
        %v3940 = vadd.f32 %v3939, %v3871
        %v3941 = vadd.f32 %v3940, %v3875
        %v3942 = vadd.f32 %v3941, %v3879
        %v3943 = vadd.f32 %v3942, %v3883
        %v3944 = vadd.f32 %v3943, %v3887
        %v3945 = vadd.f32 %v3944, %v3891
        %v3946 = vadd.f32 %v3945, %v3895
        %v3947 = vadd.f32 %v3946, %v3899
        %v3948 = vadd.f32 %v3947, %v3903
        %v3949 = vadd.f32 %v3948, %v3907
        %v3950 = vadd.f32 %v3949, %v3911
        %v3951 = vadd.f32 %v3950, %v3915
        %v3952 = vadd.f32 %v3951, %v3919
        %v3953 = vrot.slane %v3952, 4
        %v3954 = vadd.f32 %v3952, %v3953
        %v3955 = vrot.slane %v3954, 2
        %v3956 = vadd.f32 %v3954, %v3955
        %v3957 = vrot.slane %v3956, 1
        %v3958 = vadd.f32 %v3956, %v3957
        %v3959 = vadd.f32 %v3797, %v3801
        %v3960 = vadd.f32 %v3959, %v3805
        %v3961 = vadd.f32 %v3960, %v3809
        %v3962 = vadd.f32 %v3961, %v3813
        %v3963 = vadd.f32 %v3962, %v3817
        %v3964 = vadd.f32 %v3963, %v3821
        %v3965 = vadd.f32 %v3964, %v3825
        %v3966 = vadd.f32 %v3965, %v3829
        %v3967 = vadd.f32 %v3966, %v3833
        %v3968 = vadd.f32 %v3967, %v3837
        %v3969 = vadd.f32 %v3968, %v3841
        %v3970 = vadd.f32 %v3969, %v3845
        %v3971 = vadd.f32 %v3970, %v3849
        %v3972 = vadd.f32 %v3971, %v3853
        %v3973 = vadd.f32 %v3972, %v3857
        %v3974 = vadd.f32 %v3973, %v3861
        %v3975 = vadd.f32 %v3974, %v3865
        %v3976 = vadd.f32 %v3975, %v3869
        %v3977 = vadd.f32 %v3976, %v3873
        %v3978 = vadd.f32 %v3977, %v3877
        %v3979 = vadd.f32 %v3978, %v3881
        %v3980 = vadd.f32 %v3979, %v3885
        %v3981 = vadd.f32 %v3980, %v3889
        %v3982 = vadd.f32 %v3981, %v3893
        %v3983 = vadd.f32 %v3982, %v3897
        %v3984 = vadd.f32 %v3983, %v3901
        %v3985 = vadd.f32 %v3984, %v3905
        %v3986 = vadd.f32 %v3985, %v3909
        %v3987 = vadd.f32 %v3986, %v3913
        %v3988 = vadd.f32 %v3987, %v3917
        %v3989 = vadd.f32 %v3988, %v3921
        %v3990 = vrot.slane %v3989, 4
        %v3991 = vadd.f32 %v3989, %v3990
        %v3992 = vrot.slane %v3991, 2
        %v3993 = vadd.f32 %v3991, %v3992
        %v3994 = vrot.slane %v3993, 1
        %v3995 = vadd.f32 %v3993, %v3994
        %v3996 = vrcp.pop %v3958
        %v3997 = vrcp.pop %v3995
        %v3998 = vmul.f32 %v3795, %v3996
        %v3999 = vmul.f32 %v3797, %v3997
        %v4000 = vmul.f32 %v3799, %v3996
        %v4001 = vmul.f32 %v3801, %v3997
        %v4002 = vmul.f32 %v3803, %v3996
        %v4003 = vmul.f32 %v3805, %v3997
        %v4004 = vmul.f32 %v3807, %v3996
        %v4005 = vmul.f32 %v3809, %v3997
        %v4006 = vmul.f32 %v3811, %v3996
        %v4007 = vmul.f32 %v3813, %v3997
        %v4008 = vmul.f32 %v3815, %v3996
        %v4009 = vmul.f32 %v3817, %v3997
        %v4010 = vmul.f32 %v3819, %v3996
        %v4011 = vmul.f32 %v3821, %v3997
        %v4012 = vmul.f32 %v3823, %v3996
        %v4013 = vmul.f32 %v3825, %v3997
        %v4014 = vmul.f32 %v3827, %v3996
        %v4015 = vmul.f32 %v3829, %v3997
        %v4016 = vmul.f32 %v3831, %v3996
        %v4017 = vmul.f32 %v3833, %v3997
        %v4018 = vmul.f32 %v3835, %v3996
        %v4019 = vmul.f32 %v3837, %v3997
        %v4020 = vmul.f32 %v3839, %v3996
        %v4021 = vmul.f32 %v3841, %v3997
        %v4022 = vmul.f32 %v3843, %v3996
        %v4023 = vmul.f32 %v3845, %v3997
        %v4024 = vmul.f32 %v3847, %v3996
        %v4025 = vmul.f32 %v3849, %v3997
        %v4026 = vmul.f32 %v3851, %v3996
        %v4027 = vmul.f32 %v3853, %v3997
        %v4028 = vmul.f32 %v3855, %v3996
        %v4029 = vmul.f32 %v3857, %v3997
        %v4030 = vmul.f32 %v3859, %v3996
        %v4031 = vmul.f32 %v3861, %v3997
        %v4032 = vmul.f32 %v3863, %v3996
        %v4033 = vmul.f32 %v3865, %v3997
        %v4034 = vmul.f32 %v3867, %v3996
        %v4035 = vmul.f32 %v3869, %v3997
        %v4036 = vmul.f32 %v3871, %v3996
        %v4037 = vmul.f32 %v3873, %v3997
        %v4038 = vmul.f32 %v3875, %v3996
        %v4039 = vmul.f32 %v3877, %v3997
        %v4040 = vmul.f32 %v3879, %v3996
        %v4041 = vmul.f32 %v3881, %v3997
        %v4042 = vmul.f32 %v3883, %v3996
        %v4043 = vmul.f32 %v3885, %v3997
        %v4044 = vmul.f32 %v3887, %v3996
        %v4045 = vmul.f32 %v3889, %v3997
        %v4046 = vmul.f32 %v3891, %v3996
        %v4047 = vmul.f32 %v3893, %v3997
        %v4048 = vmul.f32 %v3895, %v3996
        %v4049 = vmul.f32 %v3897, %v3997
        %v4050 = vmul.f32 %v3899, %v3996
        %v4051 = vmul.f32 %v3901, %v3997
        %v4052 = vmul.f32 %v3903, %v3996
        %v4053 = vmul.f32 %v3905, %v3997
        %v4054 = vmul.f32 %v3907, %v3996
        %v4055 = vmul.f32 %v3909, %v3997
        %v4056 = vmul.f32 %v3911, %v3996
        %v4057 = vmul.f32 %v3913, %v3997
        %v4058 = vmul.f32 %v3915, %v3996
        %v4059 = vmul.f32 %v3917, %v3997
        %v4060 = vmul.f32 %v3919, %v3996
        %v4061 = vmul.f32 %v3921, %v3997
        %v4062 = vpack.c.bf16 %v4000, %v3998
        %v4063 = vpack.c.bf16 %v4001, %v3999
        %v4064 = vpack.c.bf16 %v4004, %v4002
        %v4065 = vpack.c.bf16 %v4005, %v4003
        %v4066 = vpack.c.bf16 %v4008, %v4006
        %v4067 = vpack.c.bf16 %v4009, %v4007
        %v4068 = vpack.c.bf16 %v4012, %v4010
        %v4069 = vpack.c.bf16 %v4013, %v4011
        %v4070 = vpack.c.bf16 %v4016, %v4014
        %v4071 = vpack.c.bf16 %v4017, %v4015
        %v4072 = vpack.c.bf16 %v4020, %v4018
        %v4073 = vpack.c.bf16 %v4021, %v4019
        %v4074 = vpack.c.bf16 %v4024, %v4022
        %v4075 = vpack.c.bf16 %v4025, %v4023
        %v4076 = vpack.c.bf16 %v4028, %v4026
        %v4077 = vpack.c.bf16 %v4029, %v4027
        %v4078 = vpack.c.bf16 %v4032, %v4030
        %v4079 = vpack.c.bf16 %v4033, %v4031
        %v4080 = vpack.c.bf16 %v4036, %v4034
        %v4081 = vpack.c.bf16 %v4037, %v4035
        %v4082 = vpack.c.bf16 %v4040, %v4038
        %v4083 = vpack.c.bf16 %v4041, %v4039
        %v4084 = vpack.c.bf16 %v4044, %v4042
        %v4085 = vpack.c.bf16 %v4045, %v4043
        %v4086 = vpack.c.bf16 %v4048, %v4046
        %v4087 = vpack.c.bf16 %v4049, %v4047
        %v4088 = vpack.c.bf16 %v4052, %v4050
        %v4089 = vpack.c.bf16 %v4053, %v4051
        %v4090 = vpack.c.bf16 %v4056, %v4054
        %v4091 = vpack.c.bf16 %v4057, %v4055
        %v4092 = vpack.c.bf16 %v4060, %v4058
        %v4093 = vpack.c.bf16 %v4061, %v4059
        %4094 = vmatprep.subr.bf16.mxu0 %v4063
        %4095 = vmatpush1.bf16.msra.mxu0 %v4062
        %4096 = vmatprep.subr.bf16.mxu0 %v4065
        %4097 = vmatpush1.bf16.msra.mxu0 %v4064
        %4098 = vmatprep.subr.bf16.mxu0 %v4067
        %4099 = vmatpush1.bf16.msra.mxu0 %v4066
        %4100 = vmatprep.subr.bf16.mxu0 %v4069
        %4101 = vmatpush1.bf16.msra.mxu0 %v4068
        %4102 = vmatprep.subr.bf16.mxu0 %v4071
        %4103 = vmatpush1.bf16.msra.mxu0 %v4070
        %4104 = vmatprep.subr.bf16.mxu0 %v4073
        %4105 = vmatpush1.bf16.msra.mxu0 %v4072
        %4106 = vmatprep.subr.bf16.mxu0 %v4075
        %4107 = vmatpush1.bf16.msra.mxu0 %v4074
        %4108 = vmatprep.subr.bf16.mxu0 %v4077
        %4109 = vmatpush1.bf16.msra.mxu0 %v4076
        %4110 = vmatprep.subr.bf16.mxu0 %v4079
        %4111 = vmatpush1.bf16.msra.mxu0 %v4078
        %4112 = vmatprep.subr.bf16.mxu0 %v4081
        %4113 = vmatpush1.bf16.msra.mxu0 %v4080
        %4114 = vmatprep.subr.bf16.mxu0 %v4083
        %4115 = vmatpush1.bf16.msra.mxu0 %v4082
        %4116 = vmatprep.subr.bf16.mxu0 %v4085
        %4117 = vmatpush1.bf16.msra.mxu0 %v4084
        %4118 = vmatprep.subr.bf16.mxu0 %v4087
        %4119 = vmatpush1.bf16.msra.mxu0 %v4086
        %4120 = vmatprep.subr.bf16.mxu0 %v4089
        %4121 = vmatpush1.bf16.msra.mxu0 %v4088
        %4122 = vmatprep.subr.bf16.mxu0 %v4091
        %4123 = vmatpush1.bf16.msra.mxu0 %v4090
        %4124 = vmatprep.subr.bf16.mxu0 %v4093
        %4125 = vmatpush1.bf16.msra.mxu0 %v4092
        %4126 = vmatprep.mubr.bf16.mxu0 %v3382
        %4127 = vmatmul.mubr.bf16.gmra.mrb[0].mxu0 %v3381
        %v4128 = vpop.f32.mrb[0].mxu0
        %v4129 = vadd.f32 0.0, %v4128
        %v4130 = vpop.f32.mrb[0].mxu0
        %v4131 = vadd.f32 0.0, %v4130
        %v4132 = vpop.f32.mrb[0].mxu0
        %v4133 = vadd.f32 0.0, %v4132
        %v4134 = vpop.f32.mrb[0].mxu0
        %v4135 = vadd.f32 0.0, %v4134
        %4136 = vdwg.mxu0
        %v4137 = vpack.c.bf16 %v4133, %v4129
        %v4138 = vpack.c.bf16 %v4135, %v4131
        %4139 = vst [vmem:[#allocation3 + $0x20] sm:$0xff] %v4137
        %4140 = vst [vmem:[#allocation3 + $0x28] sm:$0xff] %v4138
        %v4141 = vld [vmem:[#allocation2 + $0x30] sm:$0xff]
        %v4142 = vld [vmem:[#allocation2 + $0x38] sm:$0xff]
        %v4143 = vld [vmem:[#allocation2 + $0x70] sm:$0xff]
        %v4144 = vld [vmem:[#allocation2 + $0x78] sm:$0xff]
        %v4145 = vld [vmem:[#allocation2 + $0xb0] sm:$0xff]
        %v4146 = vld [vmem:[#allocation2 + $0xb8] sm:$0xff]
        %4147 = vxpose.xlu0.c.b16.start [1/8] %v4143, 128
        %4148 = vxpose.xlu0.c.b16.cont [2/8] 0, 128
        %4149 = vxpose.xlu0.c.b16.cont [3/8] 0, 128
        %4150 = vxpose.xlu0.c.b16.cont [4/8] 0, 128
        %4151 = vxpose.xlu0.c.b16.cont [5/8] 0, 128
        %4152 = vxpose.xlu0.c.b16.cont [6/8] 0, 128
        %4153 = vxpose.xlu0.c.b16.cont [7/8] 0, 128
        %4154 = vxpose.xlu0.c.b16.end [8/8] 0, 128
        %v4155 = vpop.trf.xlu0
        %v4156 = vpop.trf.xlu0
        %v4157 = vpop.trf.xlu0
        %v4158 = vpop.trf.xlu0
        %v4159 = vpop.trf.xlu0
        %v4160 = vpop.trf.xlu0
        %v4161 = vpop.trf.xlu0
        %v4162 = vpop.trf.xlu0
        %4163 = vxpose.xlu0.c.b16.start [1/8] %v4144, 128
        %4164 = vxpose.xlu0.c.b16.cont [2/8] 0, 128
        %4165 = vxpose.xlu0.c.b16.cont [3/8] 0, 128
        %4166 = vxpose.xlu0.c.b16.cont [4/8] 0, 128
        %4167 = vxpose.xlu0.c.b16.cont [5/8] 0, 128
        %4168 = vxpose.xlu0.c.b16.cont [6/8] 0, 128
        %4169 = vxpose.xlu0.c.b16.cont [7/8] 0, 128
        %4170 = vxpose.xlu0.c.b16.end [8/8] 0, 128
        %v4171 = vpop.trf.xlu0
        %v4172 = vpop.trf.xlu0
        %v4173 = vpop.trf.xlu0
        %v4174 = vpop.trf.xlu0
        %v4175 = vpop.trf.xlu0
        %v4176 = vpop.trf.xlu0
        %v4177 = vpop.trf.xlu0
        %v4178 = vpop.trf.xlu0
        %v4180 = vsel %vm1886, %v4155, 0
        %v4183 = vsel %vm1886, %v4156, 0
        %v4186 = vsel %vm1886, %v4157, 0
        %v4189 = vsel %vm1886, %v4158, 0
        %v4192 = vsel %vm1886, %v4159, 0
        %v4195 = vsel %vm1886, %v4160, 0
        %v4198 = vsel %vm1886, %v4161, 0
        %v4201 = vsel %vm1886, %v4162, 0
        %v4204 = vsel %vm1886, %v4171, 0
        %v4207 = vsel %vm1886, %v4172, 0
        %v4210 = vsel %vm1886, %v4173, 0
        %v4213 = vsel %vm1886, %v4174, 0
        %v4216 = vsel %vm1886, %v4175, 0
        %v4219 = vsel %vm1886, %v4176, 0
        %v4222 = vsel %vm1886, %v4177, 0
        %v4225 = vsel %vm1886, %v4178, 0
        %4227 = vmatprep.subr.bf16.mxu0 %v4142
        %4228 = vmatpush1.bf16.msra.mxu0 %v4141
        %4229 = vmatprep.subr.bf16.mxu0 0
        %4230 = vmatpush1.bf16.msra.mxu0 0
        %4231 = vmatprep.subr.bf16.mxu0 0
        %4232 = vmatpush1.bf16.msra.mxu0 0
        %4233 = vmatprep.subr.bf16.mxu0 0
        %4234 = vmatpush1.bf16.msra.mxu0 0
        %4235 = vmatprep.subr.bf16.mxu0 0
        %4236 = vmatpush1.bf16.msra.mxu0 0
        %4237 = vmatprep.subr.bf16.mxu0 0
        %4238 = vmatpush1.bf16.msra.mxu0 0
        %4239 = vmatprep.subr.bf16.mxu0 0
        %4240 = vmatpush1.bf16.msra.mxu0 0
        %4241 = vmatprep.subr.bf16.mxu0 0
        %4242 = vmatpush1.bf16.msra.mxu0 0
        %4243 = vmatprep.subr.bf16.mxu0 0
        %4244 = vmatpush1.bf16.msra.mxu0 0
        %4245 = vmatprep.subr.bf16.mxu0 0
        %4246 = vmatpush1.bf16.msra.mxu0 0
        %4247 = vmatprep.subr.bf16.mxu0 0
        %4248 = vmatpush1.bf16.msra.mxu0 0
        %4249 = vmatprep.subr.bf16.mxu0 0
        %4250 = vmatpush1.bf16.msra.mxu0 0
        %4251 = vmatprep.subr.bf16.mxu0 0
        %4252 = vmatpush1.bf16.msra.mxu0 0
        %4253 = vmatprep.subr.bf16.mxu0 0
        %4254 = vmatpush1.bf16.msra.mxu0 0
        %4255 = vmatprep.subr.bf16.mxu0 0
        %4256 = vmatpush1.bf16.msra.mxu0 0
        %4257 = vmatprep.subr.bf16.mxu0 0
        %4258 = vmatpush1.bf16.msra.mxu0 0
        %4259 = vmatprep.mubr.bf16.mxu0 0
        %4260 = vmatmul.mubr.bf16.gmra.mrb[0].mxu0 %v4180
        %v4261 = vpop.f32.mrb[0].mxu0
        %v4262 = vadd.f32 0.0, %v4261
        %v4263 = vpop.f32.mrb[0].mxu0
        %v4264 = vadd.f32 0.0, %v4263
        %v4265 = vpop.f32.mrb[0].mxu0
        %v4266 = vadd.f32 0.0, %v4265
        %v4267 = vpop.f32.mrb[0].mxu0
        %v4268 = vadd.f32 0.0, %v4267
        %4269 = vmatprep.mubr.bf16.mxu0 0
        %4270 = vmatmul.mubr.bf16.gmra.mrb[0].mxu0 %v4183
        %v4271 = vpop.f32.mrb[0].mxu0
        %v4272 = vadd.f32 0.0, %v4271
        %v4273 = vpop.f32.mrb[0].mxu0
        %v4274 = vadd.f32 0.0, %v4273
        %v4275 = vpop.f32.mrb[0].mxu0
        %v4276 = vadd.f32 0.0, %v4275
        %v4277 = vpop.f32.mrb[0].mxu0
        %v4278 = vadd.f32 0.0, %v4277
        %4279 = vmatprep.mubr.bf16.mxu0 0
        %4280 = vmatmul.mubr.bf16.gmra.mrb[0].mxu0 %v4186
        %v4281 = vpop.f32.mrb[0].mxu0
        %v4282 = vadd.f32 0.0, %v4281
        %v4283 = vpop.f32.mrb[0].mxu0
        %v4284 = vadd.f32 0.0, %v4283
        %v4285 = vpop.f32.mrb[0].mxu0
        %v4286 = vadd.f32 0.0, %v4285
        %v4287 = vpop.f32.mrb[0].mxu0
        %v4288 = vadd.f32 0.0, %v4287
        %4289 = vmatprep.mubr.bf16.mxu0 0
        %4290 = vmatmul.mubr.bf16.gmra.mrb[0].mxu0 %v4189
        %v4291 = vpop.f32.mrb[0].mxu0
        %v4292 = vadd.f32 0.0, %v4291
        %v4293 = vpop.f32.mrb[0].mxu0
        %v4294 = vadd.f32 0.0, %v4293
        %v4295 = vpop.f32.mrb[0].mxu0
        %v4296 = vadd.f32 0.0, %v4295
        %v4297 = vpop.f32.mrb[0].mxu0
        %v4298 = vadd.f32 0.0, %v4297
        %4299 = vmatprep.mubr.bf16.mxu0 0
        %4300 = vmatmul.mubr.bf16.gmra.mrb[0].mxu0 %v4192
        %v4301 = vpop.f32.mrb[0].mxu0
        %v4302 = vadd.f32 0.0, %v4301
        %v4303 = vpop.f32.mrb[0].mxu0
        %v4304 = vadd.f32 0.0, %v4303
        %v4305 = vpop.f32.mrb[0].mxu0
        %v4306 = vadd.f32 0.0, %v4305
        %v4307 = vpop.f32.mrb[0].mxu0
        %v4308 = vadd.f32 0.0, %v4307
        %4309 = vmatprep.mubr.bf16.mxu0 0
        %4310 = vmatmul.mubr.bf16.gmra.mrb[0].mxu0 %v4195
        %v4311 = vpop.f32.mrb[0].mxu0
        %v4312 = vadd.f32 0.0, %v4311
        %v4313 = vpop.f32.mrb[0].mxu0
        %v4314 = vadd.f32 0.0, %v4313
        %v4315 = vpop.f32.mrb[0].mxu0
        %v4316 = vadd.f32 0.0, %v4315
        %v4317 = vpop.f32.mrb[0].mxu0
        %v4318 = vadd.f32 0.0, %v4317
        %4319 = vmatprep.mubr.bf16.mxu0 0
        %4320 = vmatmul.mubr.bf16.gmra.mrb[0].mxu0 %v4198
        %v4321 = vpop.f32.mrb[0].mxu0
        %v4322 = vadd.f32 0.0, %v4321
        %v4323 = vpop.f32.mrb[0].mxu0
        %v4324 = vadd.f32 0.0, %v4323
        %v4325 = vpop.f32.mrb[0].mxu0
        %v4326 = vadd.f32 0.0, %v4325
        %v4327 = vpop.f32.mrb[0].mxu0
        %v4328 = vadd.f32 0.0, %v4327
        %4329 = vmatprep.mubr.bf16.mxu0 0
        %4330 = vmatmul.mubr.bf16.gmra.mrb[0].mxu0 %v4201
        %v4331 = vpop.f32.mrb[0].mxu0
        %v4332 = vadd.f32 0.0, %v4331
        %v4333 = vpop.f32.mrb[0].mxu0
        %v4334 = vadd.f32 0.0, %v4333
        %v4335 = vpop.f32.mrb[0].mxu0
        %v4336 = vadd.f32 0.0, %v4335
        %v4337 = vpop.f32.mrb[0].mxu0
        %v4338 = vadd.f32 0.0, %v4337
        %4339 = vmatprep.mubr.bf16.mxu0 0
        %4340 = vmatmul.mubr.bf16.gmra.mrb[0].mxu0 %v4204
        %v4341 = vpop.f32.mrb[0].mxu0
        %v4342 = vadd.f32 0.0, %v4341
        %v4343 = vpop.f32.mrb[0].mxu0
        %v4344 = vadd.f32 0.0, %v4343
        %v4345 = vpop.f32.mrb[0].mxu0
        %v4346 = vadd.f32 0.0, %v4345
        %v4347 = vpop.f32.mrb[0].mxu0
        %v4348 = vadd.f32 0.0, %v4347
        %4349 = vmatprep.mubr.bf16.mxu0 0
        %4350 = vmatmul.mubr.bf16.gmra.mrb[0].mxu0 %v4207
        %v4351 = vpop.f32.mrb[0].mxu0
        %v4352 = vadd.f32 0.0, %v4351
        %v4353 = vpop.f32.mrb[0].mxu0
        %v4354 = vadd.f32 0.0, %v4353
        %v4355 = vpop.f32.mrb[0].mxu0
        %v4356 = vadd.f32 0.0, %v4355
        %v4357 = vpop.f32.mrb[0].mxu0
        %v4358 = vadd.f32 0.0, %v4357
        %4359 = vmatprep.mubr.bf16.mxu0 0
        %4360 = vmatmul.mubr.bf16.gmra.mrb[0].mxu0 %v4210
        %v4361 = vpop.f32.mrb[0].mxu0
        %v4362 = vadd.f32 0.0, %v4361
        %v4363 = vpop.f32.mrb[0].mxu0
        %v4364 = vadd.f32 0.0, %v4363
        %v4365 = vpop.f32.mrb[0].mxu0
        %v4366 = vadd.f32 0.0, %v4365
        %v4367 = vpop.f32.mrb[0].mxu0
        %v4368 = vadd.f32 0.0, %v4367
        %4369 = vmatprep.mubr.bf16.mxu0 0
        %4370 = vmatmul.mubr.bf16.gmra.mrb[0].mxu0 %v4213
        %v4371 = vpop.f32.mrb[0].mxu0
        %v4372 = vadd.f32 0.0, %v4371
        %v4373 = vpop.f32.mrb[0].mxu0
        %v4374 = vadd.f32 0.0, %v4373
        %v4375 = vpop.f32.mrb[0].mxu0
        %v4376 = vadd.f32 0.0, %v4375
        %v4377 = vpop.f32.mrb[0].mxu0
        %v4378 = vadd.f32 0.0, %v4377
        %4379 = vmatprep.mubr.bf16.mxu0 0
        %4380 = vmatmul.mubr.bf16.gmra.mrb[0].mxu0 %v4216
        %v4381 = vpop.f32.mrb[0].mxu0
        %v4382 = vadd.f32 0.0, %v4381
        %v4383 = vpop.f32.mrb[0].mxu0
        %v4384 = vadd.f32 0.0, %v4383
        %v4385 = vpop.f32.mrb[0].mxu0
        %v4386 = vadd.f32 0.0, %v4385
        %v4387 = vpop.f32.mrb[0].mxu0
        %v4388 = vadd.f32 0.0, %v4387
        %4389 = vmatprep.mubr.bf16.mxu0 0
        %4390 = vmatmul.mubr.bf16.gmra.mrb[0].mxu0 %v4219
        %v4391 = vpop.f32.mrb[0].mxu0
        %v4392 = vadd.f32 0.0, %v4391
        %v4393 = vpop.f32.mrb[0].mxu0
        %v4394 = vadd.f32 0.0, %v4393
        %v4395 = vpop.f32.mrb[0].mxu0
        %v4396 = vadd.f32 0.0, %v4395
        %v4397 = vpop.f32.mrb[0].mxu0
        %v4398 = vadd.f32 0.0, %v4397
        %4399 = vmatprep.mubr.bf16.mxu0 0
        %4400 = vmatmul.mubr.bf16.gmra.mrb[0].mxu0 %v4222
        %v4401 = vpop.f32.mrb[0].mxu0
        %v4402 = vadd.f32 0.0, %v4401
        %v4403 = vpop.f32.mrb[0].mxu0
        %v4404 = vadd.f32 0.0, %v4403
        %v4405 = vpop.f32.mrb[0].mxu0
        %v4406 = vadd.f32 0.0, %v4405
        %v4407 = vpop.f32.mrb[0].mxu0
        %v4408 = vadd.f32 0.0, %v4407
        %4409 = vmatprep.mubr.bf16.mxu0 0
        %4410 = vmatmul.mubr.bf16.gmra.mrb[0].mxu0 %v4225
        %v4411 = vpop.f32.mrb[0].mxu0
        %v4412 = vadd.f32 0.0, %v4411
        %v4413 = vpop.f32.mrb[0].mxu0
        %v4414 = vadd.f32 0.0, %v4413
        %v4415 = vpop.f32.mrb[0].mxu0
        %v4416 = vadd.f32 0.0, %v4415
        %v4417 = vpop.f32.mrb[0].mxu0
        %v4418 = vadd.f32 0.0, %v4417
        %4419 = vdwg.mxu0
        %v4420 = vmax.f32 %v4262, %v4272
        %v4421 = vmax.f32 %v4266, %v4276
        %v4422 = vmax.f32 %v4420, %v4282
        %v4423 = vmax.f32 %v4421, %v4286
        %v4424 = vmax.f32 %v4422, %v4292
        %v4425 = vmax.f32 %v4423, %v4296
        %v4426 = vmax.f32 %v4424, %v4302
        %v4427 = vmax.f32 %v4425, %v4306
        %v4428 = vmax.f32 %v4426, %v4312
        %v4429 = vmax.f32 %v4427, %v4316
        %v4430 = vmax.f32 %v4428, %v4322
        %v4431 = vmax.f32 %v4429, %v4326
        %v4432 = vmax.f32 %v4430, %v4332
        %v4433 = vmax.f32 %v4431, %v4336
        %v4434 = vmax.f32 %v4432, %v4342
        %v4435 = vmax.f32 %v4433, %v4346
        %v4436 = vmax.f32 %v4434, %v4352
        %v4437 = vmax.f32 %v4435, %v4356
        %v4438 = vmax.f32 %v4436, %v4362
        %v4439 = vmax.f32 %v4437, %v4366
        %v4440 = vmax.f32 %v4438, %v4372
        %v4441 = vmax.f32 %v4439, %v4376
        %v4442 = vmax.f32 %v4440, %v4382
        %v4443 = vmax.f32 %v4441, %v4386
        %v4444 = vmax.f32 %v4442, %v4392
        %v4445 = vmax.f32 %v4443, %v4396
        %v4446 = vmax.f32 %v4444, %v4402
        %v4447 = vmax.f32 %v4445, %v4406
        %v4448 = vmax.f32 %v4446, %v4412
        %v4449 = vmax.f32 %v4447, %v4416
        %v4450 = vmax.f32 %v4448, %v4449
        %v4451 = vrot.slane %v4450, 4
        %v4452 = vmax.f32 %v4450, %v4451
        %v4453 = vrot.slane %v4452, 2
        %v4454 = vmax.f32 %v4452, %v4453
        %v4455 = vrot.slane %v4454, 1
        %v4456 = vmax.f32 %v4454, %v4455
        %v4457 = vmax.f32 %v4264, %v4274
        %v4458 = vmax.f32 %v4268, %v4278
        %v4459 = vmax.f32 %v4457, %v4284
        %v4460 = vmax.f32 %v4458, %v4288
        %v4461 = vmax.f32 %v4459, %v4294
        %v4462 = vmax.f32 %v4460, %v4298
        %v4463 = vmax.f32 %v4461, %v4304
        %v4464 = vmax.f32 %v4462, %v4308
        %v4465 = vmax.f32 %v4463, %v4314
        %v4466 = vmax.f32 %v4464, %v4318
        %v4467 = vmax.f32 %v4465, %v4324
        %v4468 = vmax.f32 %v4466, %v4328
        %v4469 = vmax.f32 %v4467, %v4334
        %v4470 = vmax.f32 %v4468, %v4338
        %v4471 = vmax.f32 %v4469, %v4344
        %v4472 = vmax.f32 %v4470, %v4348
        %v4473 = vmax.f32 %v4471, %v4354
        %v4474 = vmax.f32 %v4472, %v4358
        %v4475 = vmax.f32 %v4473, %v4364
        %v4476 = vmax.f32 %v4474, %v4368
        %v4477 = vmax.f32 %v4475, %v4374
        %v4478 = vmax.f32 %v4476, %v4378
        %v4479 = vmax.f32 %v4477, %v4384
        %v4480 = vmax.f32 %v4478, %v4388
        %v4481 = vmax.f32 %v4479, %v4394
        %v4482 = vmax.f32 %v4480, %v4398
        %v4483 = vmax.f32 %v4481, %v4404
        %v4484 = vmax.f32 %v4482, %v4408
        %v4485 = vmax.f32 %v4483, %v4414
        %v4486 = vmax.f32 %v4484, %v4418
        %v4487 = vmax.f32 %v4485, %v4486
        %v4488 = vrot.slane %v4487, 4
        %v4489 = vmax.f32 %v4487, %v4488
        %v4490 = vrot.slane %v4489, 2
        %v4491 = vmax.f32 %v4489, %v4490
        %v4492 = vrot.slane %v4491, 1
        %v4493 = vmax.f32 %v4491, %v4492
        %v4494 = vsub.f32 %v4262, %v4456
        %v4495 = vsub.f32 %v4264, %v4493
        %v4496 = vsub.f32 %v4266, %v4456
        %v4497 = vsub.f32 %v4268, %v4493
        %v4498 = vsub.f32 %v4272, %v4456
        %v4499 = vsub.f32 %v4274, %v4493
        %v4500 = vsub.f32 %v4276, %v4456
        %v4501 = vsub.f32 %v4278, %v4493
        %v4502 = vsub.f32 %v4282, %v4456
        %v4503 = vsub.f32 %v4284, %v4493
        %v4504 = vsub.f32 %v4286, %v4456
        %v4505 = vsub.f32 %v4288, %v4493
        %v4506 = vsub.f32 %v4292, %v4456
        %v4507 = vsub.f32 %v4294, %v4493
        %v4508 = vsub.f32 %v4296, %v4456
        %v4509 = vsub.f32 %v4298, %v4493
        %v4510 = vsub.f32 %v4302, %v4456
        %v4511 = vsub.f32 %v4304, %v4493
        %v4512 = vsub.f32 %v4306, %v4456
        %v4513 = vsub.f32 %v4308, %v4493
        %v4514 = vsub.f32 %v4312, %v4456
        %v4515 = vsub.f32 %v4314, %v4493
        %v4516 = vsub.f32 %v4316, %v4456
        %v4517 = vsub.f32 %v4318, %v4493
        %v4518 = vsub.f32 %v4322, %v4456
        %v4519 = vsub.f32 %v4324, %v4493
        %v4520 = vsub.f32 %v4326, %v4456
        %v4521 = vsub.f32 %v4328, %v4493
        %v4522 = vsub.f32 %v4332, %v4456
        %v4523 = vsub.f32 %v4334, %v4493
        %v4524 = vsub.f32 %v4336, %v4456
        %v4525 = vsub.f32 %v4338, %v4493
        %v4526 = vsub.f32 %v4342, %v4456
        %v4527 = vsub.f32 %v4344, %v4493
        %v4528 = vsub.f32 %v4346, %v4456
        %v4529 = vsub.f32 %v4348, %v4493
        %v4530 = vsub.f32 %v4352, %v4456
        %v4531 = vsub.f32 %v4354, %v4493
        %v4532 = vsub.f32 %v4356, %v4456
        %v4533 = vsub.f32 %v4358, %v4493
        %v4534 = vsub.f32 %v4362, %v4456
        %v4535 = vsub.f32 %v4364, %v4493
        %v4536 = vsub.f32 %v4366, %v4456
        %v4537 = vsub.f32 %v4368, %v4493
        %v4538 = vsub.f32 %v4372, %v4456
        %v4539 = vsub.f32 %v4374, %v4493
        %v4540 = vsub.f32 %v4376, %v4456
        %v4541 = vsub.f32 %v4378, %v4493
        %v4542 = vsub.f32 %v4382, %v4456
        %v4543 = vsub.f32 %v4384, %v4493
        %v4544 = vsub.f32 %v4386, %v4456
        %v4545 = vsub.f32 %v4388, %v4493
        %v4546 = vsub.f32 %v4392, %v4456
        %v4547 = vsub.f32 %v4394, %v4493
        %v4548 = vsub.f32 %v4396, %v4456
        %v4549 = vsub.f32 %v4398, %v4493
        %v4550 = vsub.f32 %v4402, %v4456
        %v4551 = vsub.f32 %v4404, %v4493
        %v4552 = vsub.f32 %v4406, %v4456
        %v4553 = vsub.f32 %v4408, %v4493
        %v4554 = vsub.f32 %v4412, %v4456
        %v4555 = vsub.f32 %v4414, %v4493
        %v4556 = vsub.f32 %v4416, %v4456
        %v4557 = vsub.f32 %v4418, %v4493
        %v4558 = vmul.f32 %v4494, 1.442695
        %v4559 = vpow.pop %v4558
        %v4560 = vmul.f32 %v4495, 1.442695
        %v4561 = vpow.pop %v4560
        %v4562 = vmul.f32 %v4496, 1.442695
        %v4563 = vpow.pop %v4562
        %v4564 = vmul.f32 %v4497, 1.442695
        %v4565 = vpow.pop %v4564
        %v4566 = vmul.f32 %v4498, 1.442695
        %v4567 = vpow.pop %v4566
        %v4568 = vmul.f32 %v4499, 1.442695
        %v4569 = vpow.pop %v4568
        %v4570 = vmul.f32 %v4500, 1.442695
        %v4571 = vpow.pop %v4570
        %v4572 = vmul.f32 %v4501, 1.442695
        %v4573 = vpow.pop %v4572
        %v4574 = vmul.f32 %v4502, 1.442695
        %v4575 = vpow.pop %v4574
        %v4576 = vmul.f32 %v4503, 1.442695
        %v4577 = vpow.pop %v4576
        %v4578 = vmul.f32 %v4504, 1.442695
        %v4579 = vpow.pop %v4578
        %v4580 = vmul.f32 %v4505, 1.442695
        %v4581 = vpow.pop %v4580
        %v4582 = vmul.f32 %v4506, 1.442695
        %v4583 = vpow.pop %v4582
        %v4584 = vmul.f32 %v4507, 1.442695
        %v4585 = vpow.pop %v4584
        %v4586 = vmul.f32 %v4508, 1.442695
        %v4587 = vpow.pop %v4586
        %v4588 = vmul.f32 %v4509, 1.442695
        %v4589 = vpow.pop %v4588
        %v4590 = vmul.f32 %v4510, 1.442695
        %v4591 = vpow.pop %v4590
        %v4592 = vmul.f32 %v4511, 1.442695
        %v4593 = vpow.pop %v4592
        %v4594 = vmul.f32 %v4512, 1.442695
        %v4595 = vpow.pop %v4594
        %v4596 = vmul.f32 %v4513, 1.442695
        %v4597 = vpow.pop %v4596
        %v4598 = vmul.f32 %v4514, 1.442695
        %v4599 = vpow.pop %v4598
        %v4600 = vmul.f32 %v4515, 1.442695
        %v4601 = vpow.pop %v4600
        %v4602 = vmul.f32 %v4516, 1.442695
        %v4603 = vpow.pop %v4602
        %v4604 = vmul.f32 %v4517, 1.442695
        %v4605 = vpow.pop %v4604
        %v4606 = vmul.f32 %v4518, 1.442695
        %v4607 = vpow.pop %v4606
        %v4608 = vmul.f32 %v4519, 1.442695
        %v4609 = vpow.pop %v4608
        %v4610 = vmul.f32 %v4520, 1.442695
        %v4611 = vpow.pop %v4610
        %v4612 = vmul.f32 %v4521, 1.442695
        %v4613 = vpow.pop %v4612
        %v4614 = vmul.f32 %v4522, 1.442695
        %v4615 = vpow.pop %v4614
        %v4616 = vmul.f32 %v4523, 1.442695
        %v4617 = vpow.pop %v4616
        %v4618 = vmul.f32 %v4524, 1.442695
        %v4619 = vpow.pop %v4618
        %v4620 = vmul.f32 %v4525, 1.442695
        %v4621 = vpow.pop %v4620
        %v4622 = vmul.f32 %v4526, 1.442695
        %v4623 = vpow.pop %v4622
        %v4624 = vmul.f32 %v4527, 1.442695
        %v4625 = vpow.pop %v4624
        %v4626 = vmul.f32 %v4528, 1.442695
        %v4627 = vpow.pop %v4626
        %v4628 = vmul.f32 %v4529, 1.442695
        %v4629 = vpow.pop %v4628
        %v4630 = vmul.f32 %v4530, 1.442695
        %v4631 = vpow.pop %v4630
        %v4632 = vmul.f32 %v4531, 1.442695
        %v4633 = vpow.pop %v4632
        %v4634 = vmul.f32 %v4532, 1.442695
        %v4635 = vpow.pop %v4634
        %v4636 = vmul.f32 %v4533, 1.442695
        %v4637 = vpow.pop %v4636
        %v4638 = vmul.f32 %v4534, 1.442695
        %v4639 = vpow.pop %v4638
        %v4640 = vmul.f32 %v4535, 1.442695
        %v4641 = vpow.pop %v4640
        %v4642 = vmul.f32 %v4536, 1.442695
        %v4643 = vpow.pop %v4642
        %v4644 = vmul.f32 %v4537, 1.442695
        %v4645 = vpow.pop %v4644
        %v4646 = vmul.f32 %v4538, 1.442695
        %v4647 = vpow.pop %v4646
        %v4648 = vmul.f32 %v4539, 1.442695
        %v4649 = vpow.pop %v4648
        %v4650 = vmul.f32 %v4540, 1.442695
        %v4651 = vpow.pop %v4650
        %v4652 = vmul.f32 %v4541, 1.442695
        %v4653 = vpow.pop %v4652
        %v4654 = vmul.f32 %v4542, 1.442695
        %v4655 = vpow.pop %v4654
        %v4656 = vmul.f32 %v4543, 1.442695
        %v4657 = vpow.pop %v4656
        %v4658 = vmul.f32 %v4544, 1.442695
        %v4659 = vpow.pop %v4658
        %v4660 = vmul.f32 %v4545, 1.442695
        %v4661 = vpow.pop %v4660
        %v4662 = vmul.f32 %v4546, 1.442695
        %v4663 = vpow.pop %v4662
        %v4664 = vmul.f32 %v4547, 1.442695
        %v4665 = vpow.pop %v4664
        %v4666 = vmul.f32 %v4548, 1.442695
        %v4667 = vpow.pop %v4666
        %v4668 = vmul.f32 %v4549, 1.442695
        %v4669 = vpow.pop %v4668
        %v4670 = vmul.f32 %v4550, 1.442695
        %v4671 = vpow.pop %v4670
        %v4672 = vmul.f32 %v4551, 1.442695
        %v4673 = vpow.pop %v4672
        %v4674 = vmul.f32 %v4552, 1.442695
        %v4675 = vpow.pop %v4674
        %v4676 = vmul.f32 %v4553, 1.442695
        %v4677 = vpow.pop %v4676
        %v4678 = vmul.f32 %v4554, 1.442695
        %v4679 = vpow.pop %v4678
        %v4680 = vmul.f32 %v4555, 1.442695
        %v4681 = vpow.pop %v4680
        %v4682 = vmul.f32 %v4556, 1.442695
        %v4683 = vpow.pop %v4682
        %v4684 = vmul.f32 %v4557, 1.442695
        %v4685 = vpow.pop %v4684
        %v4686 = vadd.f32 %v4559, %v4563
        %v4687 = vadd.f32 %v4686, %v4567
        %v4688 = vadd.f32 %v4687, %v4571
        %v4689 = vadd.f32 %v4688, %v4575
        %v4690 = vadd.f32 %v4689, %v4579
        %v4691 = vadd.f32 %v4690, %v4583
        %v4692 = vadd.f32 %v4691, %v4587
        %v4693 = vadd.f32 %v4692, %v4591
        %v4694 = vadd.f32 %v4693, %v4595
        %v4695 = vadd.f32 %v4694, %v4599
        %v4696 = vadd.f32 %v4695, %v4603
        %v4697 = vadd.f32 %v4696, %v4607
        %v4698 = vadd.f32 %v4697, %v4611
        %v4699 = vadd.f32 %v4698, %v4615
        %v4700 = vadd.f32 %v4699, %v4619
        %v4701 = vadd.f32 %v4700, %v4623
        %v4702 = vadd.f32 %v4701, %v4627
        %v4703 = vadd.f32 %v4702, %v4631
        %v4704 = vadd.f32 %v4703, %v4635
        %v4705 = vadd.f32 %v4704, %v4639
        %v4706 = vadd.f32 %v4705, %v4643
        %v4707 = vadd.f32 %v4706, %v4647
        %v4708 = vadd.f32 %v4707, %v4651
        %v4709 = vadd.f32 %v4708, %v4655
        %v4710 = vadd.f32 %v4709, %v4659
        %v4711 = vadd.f32 %v4710, %v4663
        %v4712 = vadd.f32 %v4711, %v4667
        %v4713 = vadd.f32 %v4712, %v4671
        %v4714 = vadd.f32 %v4713, %v4675
        %v4715 = vadd.f32 %v4714, %v4679
        %v4716 = vadd.f32 %v4715, %v4683
        %v4717 = vrot.slane %v4716, 4
        %v4718 = vadd.f32 %v4716, %v4717
        %v4719 = vrot.slane %v4718, 2
        %v4720 = vadd.f32 %v4718, %v4719
        %v4721 = vrot.slane %v4720, 1
        %v4722 = vadd.f32 %v4720, %v4721
        %v4723 = vadd.f32 %v4561, %v4565
        %v4724 = vadd.f32 %v4723, %v4569
        %v4725 = vadd.f32 %v4724, %v4573
        %v4726 = vadd.f32 %v4725, %v4577
        %v4727 = vadd.f32 %v4726, %v4581
        %v4728 = vadd.f32 %v4727, %v4585
        %v4729 = vadd.f32 %v4728, %v4589
        %v4730 = vadd.f32 %v4729, %v4593
        %v4731 = vadd.f32 %v4730, %v4597
        %v4732 = vadd.f32 %v4731, %v4601
        %v4733 = vadd.f32 %v4732, %v4605
        %v4734 = vadd.f32 %v4733, %v4609
        %v4735 = vadd.f32 %v4734, %v4613
        %v4736 = vadd.f32 %v4735, %v4617
        %v4737 = vadd.f32 %v4736, %v4621
        %v4738 = vadd.f32 %v4737, %v4625
        %v4739 = vadd.f32 %v4738, %v4629
        %v4740 = vadd.f32 %v4739, %v4633
        %v4741 = vadd.f32 %v4740, %v4637
        %v4742 = vadd.f32 %v4741, %v4641
        %v4743 = vadd.f32 %v4742, %v4645
        %v4744 = vadd.f32 %v4743, %v4649
        %v4745 = vadd.f32 %v4744, %v4653
        %v4746 = vadd.f32 %v4745, %v4657
        %v4747 = vadd.f32 %v4746, %v4661
        %v4748 = vadd.f32 %v4747, %v4665
        %v4749 = vadd.f32 %v4748, %v4669
        %v4750 = vadd.f32 %v4749, %v4673
        %v4751 = vadd.f32 %v4750, %v4677
        %v4752 = vadd.f32 %v4751, %v4681
        %v4753 = vadd.f32 %v4752, %v4685
        %v4754 = vrot.slane %v4753, 4
        %v4755 = vadd.f32 %v4753, %v4754
        %v4756 = vrot.slane %v4755, 2
        %v4757 = vadd.f32 %v4755, %v4756
        %v4758 = vrot.slane %v4757, 1
        %v4759 = vadd.f32 %v4757, %v4758
        %v4760 = vrcp.pop %v4722
        %v4761 = vrcp.pop %v4759
        %v4762 = vmul.f32 %v4559, %v4760
        %v4763 = vmul.f32 %v4561, %v4761
        %v4764 = vmul.f32 %v4563, %v4760
        %v4765 = vmul.f32 %v4565, %v4761
        %v4766 = vmul.f32 %v4567, %v4760
        %v4767 = vmul.f32 %v4569, %v4761
        %v4768 = vmul.f32 %v4571, %v4760
        %v4769 = vmul.f32 %v4573, %v4761
        %v4770 = vmul.f32 %v4575, %v4760
        %v4771 = vmul.f32 %v4577, %v4761
        %v4772 = vmul.f32 %v4579, %v4760
        %v4773 = vmul.f32 %v4581, %v4761
        %v4774 = vmul.f32 %v4583, %v4760
        %v4775 = vmul.f32 %v4585, %v4761
        %v4776 = vmul.f32 %v4587, %v4760
        %v4777 = vmul.f32 %v4589, %v4761
        %v4778 = vmul.f32 %v4591, %v4760
        %v4779 = vmul.f32 %v4593, %v4761
        %v4780 = vmul.f32 %v4595, %v4760
        %v4781 = vmul.f32 %v4597, %v4761
        %v4782 = vmul.f32 %v4599, %v4760
        %v4783 = vmul.f32 %v4601, %v4761
        %v4784 = vmul.f32 %v4603, %v4760
        %v4785 = vmul.f32 %v4605, %v4761
        %v4786 = vmul.f32 %v4607, %v4760
        %v4787 = vmul.f32 %v4609, %v4761
        %v4788 = vmul.f32 %v4611, %v4760
        %v4789 = vmul.f32 %v4613, %v4761
        %v4790 = vmul.f32 %v4615, %v4760
        %v4791 = vmul.f32 %v4617, %v4761
        %v4792 = vmul.f32 %v4619, %v4760
        %v4793 = vmul.f32 %v4621, %v4761
        %v4794 = vmul.f32 %v4623, %v4760
        %v4795 = vmul.f32 %v4625, %v4761
        %v4796 = vmul.f32 %v4627, %v4760
        %v4797 = vmul.f32 %v4629, %v4761
        %v4798 = vmul.f32 %v4631, %v4760
        %v4799 = vmul.f32 %v4633, %v4761
        %v4800 = vmul.f32 %v4635, %v4760
        %v4801 = vmul.f32 %v4637, %v4761
        %v4802 = vmul.f32 %v4639, %v4760
        %v4803 = vmul.f32 %v4641, %v4761
        %v4804 = vmul.f32 %v4643, %v4760
        %v4805 = vmul.f32 %v4645, %v4761
        %v4806 = vmul.f32 %v4647, %v4760
        %v4807 = vmul.f32 %v4649, %v4761
        %v4808 = vmul.f32 %v4651, %v4760
        %v4809 = vmul.f32 %v4653, %v4761
        %v4810 = vmul.f32 %v4655, %v4760
        %v4811 = vmul.f32 %v4657, %v4761
        %v4812 = vmul.f32 %v4659, %v4760
        %v4813 = vmul.f32 %v4661, %v4761
        %v4814 = vmul.f32 %v4663, %v4760
        %v4815 = vmul.f32 %v4665, %v4761
        %v4816 = vmul.f32 %v4667, %v4760
        %v4817 = vmul.f32 %v4669, %v4761
        %v4818 = vmul.f32 %v4671, %v4760
        %v4819 = vmul.f32 %v4673, %v4761
        %v4820 = vmul.f32 %v4675, %v4760
        %v4821 = vmul.f32 %v4677, %v4761
        %v4822 = vmul.f32 %v4679, %v4760
        %v4823 = vmul.f32 %v4681, %v4761
        %v4824 = vmul.f32 %v4683, %v4760
        %v4825 = vmul.f32 %v4685, %v4761
        %v4826 = vpack.c.bf16 %v4764, %v4762
        %v4827 = vpack.c.bf16 %v4765, %v4763
        %v4828 = vpack.c.bf16 %v4768, %v4766
        %v4829 = vpack.c.bf16 %v4769, %v4767
        %v4830 = vpack.c.bf16 %v4772, %v4770
        %v4831 = vpack.c.bf16 %v4773, %v4771
        %v4832 = vpack.c.bf16 %v4776, %v4774
        %v4833 = vpack.c.bf16 %v4777, %v4775
        %v4834 = vpack.c.bf16 %v4780, %v4778
        %v4835 = vpack.c.bf16 %v4781, %v4779
        %v4836 = vpack.c.bf16 %v4784, %v4782
        %v4837 = vpack.c.bf16 %v4785, %v4783
        %v4838 = vpack.c.bf16 %v4788, %v4786
        %v4839 = vpack.c.bf16 %v4789, %v4787
        %v4840 = vpack.c.bf16 %v4792, %v4790
        %v4841 = vpack.c.bf16 %v4793, %v4791
        %v4842 = vpack.c.bf16 %v4796, %v4794
        %v4843 = vpack.c.bf16 %v4797, %v4795
        %v4844 = vpack.c.bf16 %v4800, %v4798
        %v4845 = vpack.c.bf16 %v4801, %v4799
        %v4846 = vpack.c.bf16 %v4804, %v4802
        %v4847 = vpack.c.bf16 %v4805, %v4803
        %v4848 = vpack.c.bf16 %v4808, %v4806
        %v4849 = vpack.c.bf16 %v4809, %v4807
        %v4850 = vpack.c.bf16 %v4812, %v4810
        %v4851 = vpack.c.bf16 %v4813, %v4811
        %v4852 = vpack.c.bf16 %v4816, %v4814
        %v4853 = vpack.c.bf16 %v4817, %v4815
        %v4854 = vpack.c.bf16 %v4820, %v4818
        %v4855 = vpack.c.bf16 %v4821, %v4819
        %v4856 = vpack.c.bf16 %v4824, %v4822
        %v4857 = vpack.c.bf16 %v4825, %v4823
        %4858 = vmatprep.subr.bf16.mxu0 %v4827
        %4859 = vmatpush1.bf16.msra.mxu0 %v4826
        %4860 = vmatprep.subr.bf16.mxu0 %v4829
        %4861 = vmatpush1.bf16.msra.mxu0 %v4828
        %4862 = vmatprep.subr.bf16.mxu0 %v4831
        %4863 = vmatpush1.bf16.msra.mxu0 %v4830
        %4864 = vmatprep.subr.bf16.mxu0 %v4833
        %4865 = vmatpush1.bf16.msra.mxu0 %v4832
        %4866 = vmatprep.subr.bf16.mxu0 %v4835
        %4867 = vmatpush1.bf16.msra.mxu0 %v4834
        %4868 = vmatprep.subr.bf16.mxu0 %v4837
        %4869 = vmatpush1.bf16.msra.mxu0 %v4836
        %4870 = vmatprep.subr.bf16.mxu0 %v4839
        %4871 = vmatpush1.bf16.msra.mxu0 %v4838
        %4872 = vmatprep.subr.bf16.mxu0 %v4841
        %4873 = vmatpush1.bf16.msra.mxu0 %v4840
        %4874 = vmatprep.subr.bf16.mxu0 %v4843
        %4875 = vmatpush1.bf16.msra.mxu0 %v4842
        %4876 = vmatprep.subr.bf16.mxu0 %v4845
        %4877 = vmatpush1.bf16.msra.mxu0 %v4844
        %4878 = vmatprep.subr.bf16.mxu0 %v4847
        %4879 = vmatpush1.bf16.msra.mxu0 %v4846
        %4880 = vmatprep.subr.bf16.mxu0 %v4849
        %4881 = vmatpush1.bf16.msra.mxu0 %v4848
        %4882 = vmatprep.subr.bf16.mxu0 %v4851
        %4883 = vmatpush1.bf16.msra.mxu0 %v4850
        %4884 = vmatprep.subr.bf16.mxu0 %v4853
        %4885 = vmatpush1.bf16.msra.mxu0 %v4852
        %4886 = vmatprep.subr.bf16.mxu0 %v4855
        %4887 = vmatpush1.bf16.msra.mxu0 %v4854
        %4888 = vmatprep.subr.bf16.mxu0 %v4857
        %4889 = vmatpush1.bf16.msra.mxu0 %v4856
        %4890 = vmatprep.mubr.bf16.mxu0 %v4146
        %4891 = vmatmul.mubr.bf16.gmra.mrb[0].mxu0 %v4145
        %v4892 = vpop.f32.mrb[0].mxu0
        %v4893 = vadd.f32 0.0, %v4892
        %v4894 = vpop.f32.mrb[0].mxu0
        %v4895 = vadd.f32 0.0, %v4894
        %v4896 = vpop.f32.mrb[0].mxu0
        %v4897 = vadd.f32 0.0, %v4896
        %v4898 = vpop.f32.mrb[0].mxu0
        %v4899 = vadd.f32 0.0, %v4898
        %4900 = vdwg.mxu0
        %v4901 = vpack.c.bf16 %v4897, %v4893
        %v4902 = vpack.c.bf16 %v4899, %v4895
        %4903 = vst [vmem:[#allocation3 + $0x30] sm:$0xff] %v4901
        %4904 = vst [vmem:[#allocation3 + $0x38] sm:$0xff] %v4902
        %s4905 = scalar_lea.vmem %s5, 32
        %v4906 = vld [vmem:[%s4905] sm:$0xf]
        %v4907 = vld [vmem:[%s4905 + $0x4] sm:$0xf]
        %v4908 = vld [vmem:[%s4905 + $0x8] sm:$0xf]
        %v4909 = vld [vmem:[%s4905 + $0xc] sm:$0xf]
        %v4910 = vld [vmem:[%s4905 + $0x10] sm:$0xf]
        %v4911 = vld [vmem:[%s4905 + $0x14] sm:$0xf]
        %v4912 = vld [vmem:[%s4905 + $0x18] sm:$0xf]
        %v4913 = vld [vmem:[%s4905 + $0x1c] sm:$0xf]
        %v4914 = vld [vmem:[#allocation3] sm:$0xff]
        %v4915 = vld [vmem:[#allocation3 + $0x8] sm:$0xff]
        %v4916 = vld [vmem:[#allocation3 + $0x10] sm:$0xff]
        %v4917 = vld [vmem:[#allocation3 + $0x18] sm:$0xff]
        %v4918 = vld [vmem:[#allocation3 + $0x20] sm:$0xff]
        %v4919 = vld [vmem:[#allocation3 + $0x28] sm:$0xff]
        %v4920 = vld [vmem:[#allocation3 + $0x30] sm:$0xff]
        %v4921 = vld [vmem:[#allocation3 + $0x38] sm:$0xff]
        %v4922 = vld [vmem:[%s2] sm:$0xff]
        %v4923 = vld [vmem:[%s2 + $0x8] sm:$0xff]
        %v4924 = vld [vmem:[%s2 + $0x10] sm:$0xff]
        %v4925 = vld [vmem:[%s2 + $0x18] sm:$0xff]
        %v4926 = vld [vmem:[%s2 + $0x20] sm:$0xff]
        %v4927 = vld [vmem:[%s2 + $0x28] sm:$0xff]
        %v4928 = vld [vmem:[%s2 + $0x30] sm:$0xff]
        %v4929 = vld [vmem:[%s2 + $0x38] sm:$0xff]
        %4931 = vset.pattern.permute.xlu0 5
        %4932 = vperm.xlu0 %4931, %v4922
        %v4933 = vpop.permute.xlu0 %4932
        %4936 = vset.pattern.permute.xlu0 5
        %4937 = vperm.xlu0 %4936, %v4923
        %v4938 = vpop.permute.xlu0 %4937
        %4941 = vset.pattern.permute.xlu0 5
        %4942 = vperm.xlu0 %4941, %v4924
        %v4943 = vpop.permute.xlu0 %4942
        %4946 = vset.pattern.permute.xlu0 5
        %4947 = vperm.xlu0 %4946, %v4925
        %v4948 = vpop.permute.xlu0 %4947
        %4951 = vset.pattern.permute.xlu0 5
        %4952 = vperm.xlu0 %4951, %v4926
        %v4953 = vpop.permute.xlu0 %4952
        %4956 = vset.pattern.permute.xlu0 5
        %4957 = vperm.xlu0 %4956, %v4927
        %v4958 = vpop.permute.xlu0 %4957
        %4961 = vset.pattern.permute.xlu0 5
        %4962 = vperm.xlu0 %4961, %v4928
        %v4963 = vpop.permute.xlu0 %4962
        %4966 = vset.pattern.permute.xlu0 5
        %4967 = vperm.xlu0 %4966, %v4929
        %v4968 = vpop.permute.xlu0 %4967
        %v4978 = vunpack.c.l.b16 %v4906
        %v4979 = vunpack.c.l.b16 %v4907
        %v4980 = vunpack.c.l.b16 %v4908
        %v4981 = vunpack.c.l.b16 %v4909
        %v4982 = vunpack.c.l.b16 %v4910
        %v4983 = vunpack.c.l.b16 %v4911
        %v4984 = vunpack.c.l.b16 %v4912
        %v4985 = vunpack.c.l.b16 %v4913
        %v4986 = vpack.c.b16 %v4979, %v4978
        %v4987 = vpack.c.b16 %v4981, %v4980
        %v4988 = vpack.c.b16 %v4983, %v4982
        %v4989 = vpack.c.b16 %v4985, %v4984
        %v4991 = vsel %vm431, %v4986, 0
        %v4994 = vsel %vm431, %v4987, 0
        %v4997 = vsel %vm431, %v4988, 0
        %v5000 = vsel %vm431, %v4989, 0
        %5002 = vmatprep.subr.bf16.mxu0 %v4915
        %5003 = vmatpush1.bf16.msra.mxu0 %v4914
        %5004 = vmatprep.subr.bf16.mxu0 %v4917
        %5005 = vmatpush1.bf16.msra.mxu0 %v4916
        %5006 = vmatprep.subr.bf16.mxu0 %v4919
        %5007 = vmatpush1.bf16.msra.mxu0 %v4918
        %5008 = vmatprep.subr.bf16.mxu0 %v4921
        %5009 = vmatpush1.bf16.msra.mxu0 %v4920
        %5010 = vmatprep.subr.bf16.mxu0 0
        %5011 = vmatpush1.bf16.msra.mxu0 0
        %5012 = vmatprep.subr.bf16.mxu0 0
        %5013 = vmatpush1.bf16.msra.mxu0 0
        %5014 = vmatprep.subr.bf16.mxu0 0
        %5015 = vmatpush1.bf16.msra.mxu0 0
        %5016 = vmatprep.subr.bf16.mxu0 0
        %5017 = vmatpush1.bf16.msra.mxu0 0
        %5018 = vmatprep.subr.bf16.mxu0 0
        %5019 = vmatpush1.bf16.msra.mxu0 0
        %5020 = vmatprep.subr.bf16.mxu0 0
        %5021 = vmatpush1.bf16.msra.mxu0 0
        %5022 = vmatprep.subr.bf16.mxu0 0
        %5023 = vmatpush1.bf16.msra.mxu0 0
        %5024 = vmatprep.subr.bf16.mxu0 0
        %5025 = vmatpush1.bf16.msra.mxu0 0
        %5026 = vmatprep.subr.bf16.mxu0 0
        %5027 = vmatpush1.bf16.msra.mxu0 0
        %5028 = vmatprep.subr.bf16.mxu0 0
        %5029 = vmatpush1.bf16.msra.mxu0 0
        %5030 = vmatprep.subr.bf16.mxu0 0
        %5031 = vmatpush1.bf16.msra.mxu0 0
        %5032 = vmatprep.subr.bf16.mxu0 0
        %5033 = vmatpush1.bf16.msra.mxu0 0
        %5034 = vmatprep.mubr.bf16.mxu0 0
        %5035 = vmatmul.mubr.bf16.gmra.mrb[0].mxu0 %v4991
        %v5036 = vpop.f32.mrb[0].mxu0
        %v5037 = vadd.f32 %v4933, %v5036
        %v5038 = vpop.f32.mrb[0].mxu0
        %v5039 = vadd.f32 %v4933, %v5038
        %v5040 = vpop.f32.mrb[0].mxu0
        %v5041 = vadd.f32 %v4938, %v5040
        %v5042 = vpop.f32.mrb[0].mxu0
        %v5043 = vadd.f32 %v4938, %v5042
        %5044 = vmatprep.mubr.bf16.mxu0 0
        %5045 = vmatmul.mubr.bf16.gmra.mrb[0].mxu0 %v4994
        %v5046 = vpop.f32.mrb[0].mxu0
        %v5047 = vadd.f32 %v4943, %v5046
        %v5048 = vpop.f32.mrb[0].mxu0
        %v5049 = vadd.f32 %v4943, %v5048
        %v5050 = vpop.f32.mrb[0].mxu0
        %v5051 = vadd.f32 %v4948, %v5050
        %v5052 = vpop.f32.mrb[0].mxu0
        %v5053 = vadd.f32 %v4948, %v5052
        %5054 = vmatprep.mubr.bf16.mxu0 0
        %5055 = vmatmul.mubr.bf16.gmra.mrb[0].mxu0 %v4997
        %v5056 = vpop.f32.mrb[0].mxu0
        %v5057 = vadd.f32 %v4953, %v5056
        %v5058 = vpop.f32.mrb[0].mxu0
        %v5059 = vadd.f32 %v4953, %v5058
        %v5060 = vpop.f32.mrb[0].mxu0
        %v5061 = vadd.f32 %v4958, %v5060
        %v5062 = vpop.f32.mrb[0].mxu0
        %v5063 = vadd.f32 %v4958, %v5062
        %5064 = vmatprep.mubr.bf16.mxu0 0
        %5065 = vmatmul.mubr.bf16.gmra.mrb[0].mxu0 %v5000
        %v5066 = vpop.f32.mrb[0].mxu0
        %v5067 = vadd.f32 %v4963, %v5066
        %v5068 = vpop.f32.mrb[0].mxu0
        %v5069 = vadd.f32 %v4963, %v5068
        %v5070 = vpop.f32.mrb[0].mxu0
        %v5071 = vadd.f32 %v4968, %v5070
        %v5072 = vpop.f32.mrb[0].mxu0
        %v5073 = vadd.f32 %v4968, %v5072
        %5074 = vdwg.mxu0
        %v5075 = vadd.f32 %v5037, %v1276
        %v5076 = vadd.f32 %v5039, %v1278
        %v5077 = vadd.f32 %v5041, %v1280
        %v5078 = vadd.f32 %v5043, %v1282
        %v5079 = vadd.f32 %v5047, %v1286
        %v5080 = vadd.f32 %v5049, %v1288
        %v5081 = vadd.f32 %v5051, %v1290
        %v5082 = vadd.f32 %v5053, %v1292
        %v5083 = vadd.f32 %v5057, %v1296
        %v5084 = vadd.f32 %v5059, %v1298
        %v5085 = vadd.f32 %v5061, %v1300
        %v5086 = vadd.f32 %v5063, %v1302
        %v5087 = vadd.f32 %v5067, %v1306
        %v5088 = vadd.f32 %v5069, %v1308
        %v5089 = vadd.f32 %v5071, %v1310
        %v5090 = vadd.f32 %v5073, %v1312
        %v5091 = vadd.f32 %v5075, %v5077
        %v5092 = vadd.f32 %v5091, %v5079
        %v5093 = vadd.f32 %v5092, %v5081
        %v5094 = vadd.f32 %v5093, %v5083
        %v5095 = vadd.f32 %v5094, %v5085
        %v5096 = vadd.f32 %v5095, %v5087
        %v5097 = vadd.f32 %v5096, %v5089
        %v5098 = vrot.slane %v5097, 4
        %v5099 = vadd.f32 %v5097, %v5098
        %v5100 = vrot.slane %v5099, 2
        %v5101 = vadd.f32 %v5099, %v5100
        %v5102 = vrot.slane %v5101, 1
        %v5103 = vadd.f32 %v5101, %v5102
        %v5104 = vadd.f32 %v5076, %v5078
        %v5105 = vadd.f32 %v5104, %v5080
        %v5106 = vadd.f32 %v5105, %v5082
        %v5107 = vadd.f32 %v5106, %v5084
        %v5108 = vadd.f32 %v5107, %v5086
        %v5109 = vadd.f32 %v5108, %v5088
        %v5110 = vadd.f32 %v5109, %v5090
        %v5111 = vrot.slane %v5110, 4
        %v5112 = vadd.f32 %v5110, %v5111
        %v5113 = vrot.slane %v5112, 2
        %v5114 = vadd.f32 %v5112, %v5113
        %v5115 = vrot.slane %v5114, 1
        %v5116 = vadd.f32 %v5114, %v5115
        %v5117 = vmul.f32 %v5103, %v1340
        %v5118 = vmul.f32 %v5116, %v1340
        %v5119 = vsub.f32 %v5075, %v5117
        %v5120 = vsub.f32 %v5076, %v5118
        %v5121 = vsub.f32 %v5077, %v5117
        %v5122 = vsub.f32 %v5078, %v5118
        %v5123 = vsub.f32 %v5079, %v5117
        %v5124 = vsub.f32 %v5080, %v5118
        %v5125 = vsub.f32 %v5081, %v5117
        %v5126 = vsub.f32 %v5082, %v5118
        %v5127 = vsub.f32 %v5083, %v5117
        %v5128 = vsub.f32 %v5084, %v5118
        %v5129 = vsub.f32 %v5085, %v5117
        %v5130 = vsub.f32 %v5086, %v5118
        %v5131 = vsub.f32 %v5087, %v5117
        %v5132 = vsub.f32 %v5088, %v5118
        %v5133 = vsub.f32 %v5089, %v5117
        %v5134 = vsub.f32 %v5090, %v5118
        %v5135 = vmul.f32 %v5119, %v5119
        %v5136 = vmul.f32 %v5120, %v5120
        %v5137 = vmul.f32 %v5121, %v5121
        %v5138 = vmul.f32 %v5122, %v5122
        %v5139 = vmul.f32 %v5123, %v5123
        %v5140 = vmul.f32 %v5124, %v5124
        %v5141 = vmul.f32 %v5125, %v5125
        %v5142 = vmul.f32 %v5126, %v5126
        %v5143 = vmul.f32 %v5127, %v5127
        %v5144 = vmul.f32 %v5128, %v5128
        %v5145 = vmul.f32 %v5129, %v5129
        %v5146 = vmul.f32 %v5130, %v5130
        %v5147 = vmul.f32 %v5131, %v5131
        %v5148 = vmul.f32 %v5132, %v5132
        %v5149 = vmul.f32 %v5133, %v5133
        %v5150 = vmul.f32 %v5134, %v5134
        %v5151 = vadd.f32 %v5135, %v5137
        %v5152 = vadd.f32 %v5151, %v5139
        %v5153 = vadd.f32 %v5152, %v5141
        %v5154 = vadd.f32 %v5153, %v5143
        %v5155 = vadd.f32 %v5154, %v5145
        %v5156 = vadd.f32 %v5155, %v5147
        %v5157 = vadd.f32 %v5156, %v5149
        %v5158 = vrot.slane %v5157, 4
        %v5159 = vadd.f32 %v5157, %v5158
        %v5160 = vrot.slane %v5159, 2
        %v5161 = vadd.f32 %v5159, %v5160
        %v5162 = vrot.slane %v5161, 1
        %v5163 = vadd.f32 %v5161, %v5162
        %v5164 = vadd.f32 %v5136, %v5138
        %v5165 = vadd.f32 %v5164, %v5140
        %v5166 = vadd.f32 %v5165, %v5142
        %v5167 = vadd.f32 %v5166, %v5144
        %v5168 = vadd.f32 %v5167, %v5146
        %v5169 = vadd.f32 %v5168, %v5148
        %v5170 = vadd.f32 %v5169, %v5150
        %v5171 = vrot.slane %v5170, 4
        %v5172 = vadd.f32 %v5170, %v5171
        %v5173 = vrot.slane %v5172, 2
        %v5174 = vadd.f32 %v5172, %v5173
        %v5175 = vrot.slane %v5174, 1
        %v5176 = vadd.f32 %v5174, %v5175
        %v5177 = vmul.f32 %v5163, %v1340
        %v5178 = vmul.f32 %v5176, %v1340
        %v5179 = vadd.f32 %v5177, 1e-05
        %v5180 = vadd.f32 %v5178, 1e-05
        %v5181 = vrsqrt.pop %v5179
        %v5182 = vrsqrt.pop %v5180
        %v5183 = vmul.f32 %v5119, %v5181
        %v5184 = vmul.f32 %v5120, %v5182
        %v5185 = vmul.f32 %v5121, %v5181
        %v5186 = vmul.f32 %v5122, %v5182
        %v5187 = vmul.f32 %v5123, %v5181
        %v5188 = vmul.f32 %v5124, %v5182
        %v5189 = vmul.f32 %v5125, %v5181
        %v5190 = vmul.f32 %v5126, %v5182
        %v5191 = vmul.f32 %v5127, %v5181
        %v5192 = vmul.f32 %v5128, %v5182
        %v5193 = vmul.f32 %v5129, %v5181
        %v5194 = vmul.f32 %v5130, %v5182
        %v5195 = vmul.f32 %v5131, %v5181
        %v5196 = vmul.f32 %v5132, %v5182
        %v5197 = vmul.f32 %v5133, %v5181
        %v5198 = vmul.f32 %v5134, %v5182
        %5199 = vset.pattern.permute.xlu0 6
        %5200 = vperm.xlu0 %5199, %v4922
        %v5201 = vpop.permute.xlu0 %5200
        %5203 = vset.pattern.permute.xlu0 6
        %5204 = vperm.xlu0 %5203, %v4923
        %v5205 = vpop.permute.xlu0 %5204
        %5207 = vset.pattern.permute.xlu0 6
        %5208 = vperm.xlu0 %5207, %v4924
        %v5209 = vpop.permute.xlu0 %5208
        %5211 = vset.pattern.permute.xlu0 6
        %5212 = vperm.xlu0 %5211, %v4925
        %v5213 = vpop.permute.xlu0 %5212
        %5215 = vset.pattern.permute.xlu0 6
        %5216 = vperm.xlu0 %5215, %v4926
        %v5217 = vpop.permute.xlu0 %5216
        %5219 = vset.pattern.permute.xlu0 6
        %5220 = vperm.xlu0 %5219, %v4927
        %v5221 = vpop.permute.xlu0 %5220
        %5223 = vset.pattern.permute.xlu0 6
        %5224 = vperm.xlu0 %5223, %v4928
        %v5225 = vpop.permute.xlu0 %5224
        %5227 = vset.pattern.permute.xlu0 6
        %5228 = vperm.xlu0 %5227, %v4929
        %v5229 = vpop.permute.xlu0 %5228
        %v5231 = vmul.f32 %v5183, %v5201
        %v5232 = vmul.f32 %v5184, %v5201
        %v5233 = vmul.f32 %v5185, %v5205
        %v5234 = vmul.f32 %v5186, %v5205
        %v5235 = vmul.f32 %v5187, %v5209
        %v5236 = vmul.f32 %v5188, %v5209
        %v5237 = vmul.f32 %v5189, %v5213
        %v5238 = vmul.f32 %v5190, %v5213
        %v5239 = vmul.f32 %v5191, %v5217
        %v5240 = vmul.f32 %v5192, %v5217
        %v5241 = vmul.f32 %v5193, %v5221
        %v5242 = vmul.f32 %v5194, %v5221
        %v5243 = vmul.f32 %v5195, %v5225
        %v5244 = vmul.f32 %v5196, %v5225
        %v5245 = vmul.f32 %v5197, %v5229
        %v5246 = vmul.f32 %v5198, %v5229
        %5247 = vset.pattern.permute.xlu0 7
        %5248 = vperm.xlu0 %5247, %v4922
        %v5249 = vpop.permute.xlu0 %5248
        %5251 = vset.pattern.permute.xlu0 7
        %5252 = vperm.xlu0 %5251, %v4923
        %v5253 = vpop.permute.xlu0 %5252
        %5255 = vset.pattern.permute.xlu0 7
        %5256 = vperm.xlu0 %5255, %v4924
        %v5257 = vpop.permute.xlu0 %5256
        %5259 = vset.pattern.permute.xlu0 7
        %5260 = vperm.xlu0 %5259, %v4925
        %v5261 = vpop.permute.xlu0 %5260
        %5263 = vset.pattern.permute.xlu0 7
        %5264 = vperm.xlu0 %5263, %v4926
        %v5265 = vpop.permute.xlu0 %5264
        %5267 = vset.pattern.permute.xlu0 7
        %5268 = vperm.xlu0 %5267, %v4927
        %v5269 = vpop.permute.xlu0 %5268
        %5271 = vset.pattern.permute.xlu0 7
        %5272 = vperm.xlu0 %5271, %v4928
        %v5273 = vpop.permute.xlu0 %5272
        %5275 = vset.pattern.permute.xlu0 7
        %5276 = vperm.xlu0 %5275, %v4929
        %v5277 = vpop.permute.xlu0 %5276
        %v5279 = vadd.f32 %v5231, %v5249
        %v5280 = vadd.f32 %v5232, %v5249
        %v5281 = vadd.f32 %v5233, %v5253
        %v5282 = vadd.f32 %v5234, %v5253
        %v5283 = vadd.f32 %v5235, %v5257
        %v5284 = vadd.f32 %v5236, %v5257
        %v5285 = vadd.f32 %v5237, %v5261
        %v5286 = vadd.f32 %v5238, %v5261
        %v5287 = vadd.f32 %v5239, %v5265
        %v5288 = vadd.f32 %v5240, %v5265
        %v5289 = vadd.f32 %v5241, %v5269
        %v5290 = vadd.f32 %v5242, %v5269
        %v5291 = vadd.f32 %v5243, %v5273
        %v5292 = vadd.f32 %v5244, %v5273
        %v5293 = vadd.f32 %v5245, %v5277
        %v5294 = vadd.f32 %v5246, %v5277
        %v5295 = vpack.c.bf16 %v5281, %v5279
        %v5296 = vpack.c.bf16 %v5282, %v5280
        %v5297 = vpack.c.bf16 %v5285, %v5283
        %v5298 = vpack.c.bf16 %v5286, %v5284
        %v5299 = vpack.c.bf16 %v5289, %v5287
        %v5300 = vpack.c.bf16 %v5290, %v5288
        %v5301 = vpack.c.bf16 %v5293, %v5291
        %v5302 = vpack.c.bf16 %v5294, %v5292
        %s5303 = scalar_lea.vmem %s5, 64
        %v5304 = vld [vmem:[%s5303] sm:$0xf]
        %v5305 = vld [vmem:[%s5303 + $0x4] sm:$0xf]
        %v5306 = vld [vmem:[%s5303 + $0x8] sm:$0xf]
        %v5307 = vld [vmem:[%s5303 + $0xc] sm:$0xf]
        %v5308 = vld [vmem:[%s5303 + $0x10] sm:$0xf]
        %v5309 = vld [vmem:[%s5303 + $0x14] sm:$0xf]
        %v5310 = vld [vmem:[%s5303 + $0x18] sm:$0xf]
        %v5311 = vld [vmem:[%s5303 + $0x1c] sm:$0xf]
        %v5320 = vunpack.c.l.b16 %v5304
        %v5321 = vunpack.c.l.b16 %v5305
        %v5322 = vunpack.c.l.b16 %v5306
        %v5323 = vunpack.c.l.b16 %v5307
        %v5324 = vunpack.c.l.b16 %v5308
        %v5325 = vunpack.c.l.b16 %v5309
        %v5326 = vunpack.c.l.b16 %v5310
        %v5327 = vunpack.c.l.b16 %v5311
        %v5328 = vpack.c.b16 %v5321, %v5320
        %v5329 = vpack.c.b16 %v5323, %v5322
        %v5330 = vpack.c.b16 %v5325, %v5324
        %v5331 = vpack.c.b16 %v5327, %v5326
        %v5333 = vsel %vm431, %v5328, 0
        %v5336 = vsel %vm431, %v5329, 0
        %v5339 = vsel %vm431, %v5330, 0
        %v5342 = vsel %vm431, %v5331, 0
        %5344 = vmatprep.subr.bf16.mxu0 %v5296
        %5345 = vmatpush1.bf16.msra.mxu0 %v5295
        %5346 = vmatprep.subr.bf16.mxu0 %v5298
        %5347 = vmatpush1.bf16.msra.mxu0 %v5297
        %5348 = vmatprep.subr.bf16.mxu0 %v5300
        %5349 = vmatpush1.bf16.msra.mxu0 %v5299
        %5350 = vmatprep.subr.bf16.mxu0 %v5302
        %5351 = vmatpush1.bf16.msra.mxu0 %v5301
        %5352 = vmatprep.subr.bf16.mxu0 0
        %5353 = vmatpush1.bf16.msra.mxu0 0
        %5354 = vmatprep.subr.bf16.mxu0 0
        %5355 = vmatpush1.bf16.msra.mxu0 0
        %5356 = vmatprep.subr.bf16.mxu0 0
        %5357 = vmatpush1.bf16.msra.mxu0 0
        %5358 = vmatprep.subr.bf16.mxu0 0
        %5359 = vmatpush1.bf16.msra.mxu0 0
        %5360 = vmatprep.subr.bf16.mxu0 0
        %5361 = vmatpush1.bf16.msra.mxu0 0
        %5362 = vmatprep.subr.bf16.mxu0 0
        %5363 = vmatpush1.bf16.msra.mxu0 0
        %5364 = vmatprep.subr.bf16.mxu0 0
        %5365 = vmatpush1.bf16.msra.mxu0 0
        %5366 = vmatprep.subr.bf16.mxu0 0
        %5367 = vmatpush1.bf16.msra.mxu0 0
        %5368 = vmatprep.subr.bf16.mxu0 0
        %5369 = vmatpush1.bf16.msra.mxu0 0
        %5370 = vmatprep.subr.bf16.mxu0 0
        %5371 = vmatpush1.bf16.msra.mxu0 0
        %5372 = vmatprep.subr.bf16.mxu0 0
        %5373 = vmatpush1.bf16.msra.mxu0 0
        %5374 = vmatprep.subr.bf16.mxu0 0
        %5375 = vmatpush1.bf16.msra.mxu0 0
        %5376 = vmatprep.mubr.bf16.mxu0 0
        %5377 = vmatmul.mubr.bf16.gmra.mrb[0].mxu0 %v5333
        %v5378 = vpop.f32.mrb[0].mxu0
        %v5379 = vadd.f32 0.0, %v5378
        %v5380 = vpop.f32.mrb[0].mxu0
        %v5381 = vadd.f32 0.0, %v5380
        %v5382 = vpop.f32.mrb[0].mxu0
        %v5383 = vadd.f32 0.0, %v5382
        %v5384 = vpop.f32.mrb[0].mxu0
        %v5385 = vadd.f32 0.0, %v5384
        %5386 = vmatprep.mubr.bf16.mxu0 0
        %5387 = vmatmul.mubr.bf16.gmra.mrb[0].mxu0 %v5336
        %v5388 = vpop.f32.mrb[0].mxu0
        %v5389 = vadd.f32 0.0, %v5388
        %v5390 = vpop.f32.mrb[0].mxu0
        %v5391 = vadd.f32 0.0, %v5390
        %v5392 = vpop.f32.mrb[0].mxu0
        %v5393 = vadd.f32 0.0, %v5392
        %v5394 = vpop.f32.mrb[0].mxu0
        %v5395 = vadd.f32 0.0, %v5394
        %5396 = vmatprep.mubr.bf16.mxu0 0
        %5397 = vmatmul.mubr.bf16.gmra.mrb[0].mxu0 %v5339
        %v5398 = vpop.f32.mrb[0].mxu0
        %v5399 = vadd.f32 0.0, %v5398
        %v5400 = vpop.f32.mrb[0].mxu0
        %v5401 = vadd.f32 0.0, %v5400
        %v5402 = vpop.f32.mrb[0].mxu0
        %v5403 = vadd.f32 0.0, %v5402
        %v5404 = vpop.f32.mrb[0].mxu0
        %v5405 = vadd.f32 0.0, %v5404
        %5406 = vmatprep.mubr.bf16.mxu0 0
        %5407 = vmatmul.mubr.bf16.gmra.mrb[0].mxu0 %v5342
        %v5408 = vpop.f32.mrb[0].mxu0
        %v5409 = vadd.f32 0.0, %v5408
        %v5410 = vpop.f32.mrb[0].mxu0
        %v5411 = vadd.f32 0.0, %v5410
        %v5412 = vpop.f32.mrb[0].mxu0
        %v5413 = vadd.f32 0.0, %v5412
        %v5414 = vpop.f32.mrb[0].mxu0
        %v5415 = vadd.f32 0.0, %v5414
        %5416 = vdwg.mxu0
        %v5417 = vpack.c.bf16 %v5383, %v5379
        %v5418 = vpack.c.bf16 %v5385, %v5381
        %v5419 = vpack.c.bf16 %v5393, %v5389
        %v5420 = vpack.c.bf16 %v5395, %v5391
        %v5421 = vpack.c.bf16 %v5403, %v5399
        %v5422 = vpack.c.bf16 %v5405, %v5401
        %v5423 = vpack.c.bf16 %v5413, %v5409
        %v5424 = vpack.c.bf16 %v5415, %v5411
        %5425 = vst [vmem:[#allocation2] sm:$0xff] %v5417
        %5426 = vst [vmem:[#allocation2 + $0x8] sm:$0xff] %v5418
        %5427 = vst [vmem:[#allocation2 + $0x10] sm:$0xff] %v5419
        %5428 = vst [vmem:[#allocation2 + $0x18] sm:$0xff] %v5420
        %5429 = vst [vmem:[#allocation2 + $0x20] sm:$0xff] %v5421
        %5430 = vst [vmem:[#allocation2 + $0x28] sm:$0xff] %v5422
        %5431 = vst [vmem:[#allocation2 + $0x30] sm:$0xff] %v5423
        %5432 = vst [vmem:[#allocation2 + $0x38] sm:$0xff] %v5424
        %v5433 = vld [vmem:[%s7] sm:$0xf]
        %v5434 = vld [vmem:[%s7 + $0x4] sm:$0xf]
        %v5435 = vld [vmem:[%s7 + $0x8] sm:$0xf]
        %v5436 = vld [vmem:[%s7 + $0xc] sm:$0xf]
        %v5437 = vld [vmem:[%s7 + $0x10] sm:$0xf]
        %v5438 = vld [vmem:[%s7 + $0x14] sm:$0xf]
        %v5439 = vld [vmem:[%s7 + $0x18] sm:$0xf]
        %v5440 = vld [vmem:[%s7 + $0x1c] sm:$0xf]
        %v5441 = vld [vmem:[%s7 + $0x20] sm:$0xf]
        %v5442 = vld [vmem:[%s7 + $0x24] sm:$0xf]
        %v5443 = vld [vmem:[%s7 + $0x28] sm:$0xf]
        %v5444 = vld [vmem:[%s7 + $0x2c] sm:$0xf]
        %v5445 = vld [vmem:[%s7 + $0x30] sm:$0xf]
        %v5446 = vld [vmem:[%s7 + $0x34] sm:$0xf]
        %v5447 = vld [vmem:[%s7 + $0x38] sm:$0xf]
        %v5448 = vld [vmem:[%s7 + $0x3c] sm:$0xf]
        %v5449 = vld [vmem:[%s377] sm:$0xf]
        %v5450 = vld [vmem:[%s377 + $0x4] sm:$0xf]
        %v5467 = vunpack.c.l.b16 %v5433
        %v5468 = vunpack.c.l.b16 %v5434
        %v5469 = vunpack.c.l.b16 %v5435
        %v5470 = vunpack.c.l.b16 %v5436
        %v5471 = vunpack.c.l.b16 %v5437
        %v5472 = vunpack.c.l.b16 %v5438
        %v5473 = vunpack.c.l.b16 %v5439
        %v5474 = vunpack.c.l.b16 %v5440
        %v5475 = vunpack.c.l.b16 %v5441
        %v5476 = vunpack.c.l.b16 %v5442
        %v5477 = vunpack.c.l.b16 %v5443
        %v5478 = vunpack.c.l.b16 %v5444
        %v5479 = vunpack.c.l.b16 %v5445
        %v5480 = vunpack.c.l.b16 %v5446
        %v5481 = vunpack.c.l.b16 %v5447
        %v5482 = vunpack.c.l.b16 %v5448
        %v5483 = vpack.c.b16 %v5468, %v5467
        %v5484 = vpack.c.b16 %v5470, %v5469
        %v5485 = vpack.c.b16 %v5472, %v5471
        %v5486 = vpack.c.b16 %v5474, %v5473
        %v5487 = vpack.c.b16 %v5476, %v5475
        %v5488 = vpack.c.b16 %v5478, %v5477
        %v5489 = vpack.c.b16 %v5480, %v5479
        %v5490 = vpack.c.b16 %v5482, %v5481
        %v5501 = vunpack.c.l.b16 %v5449
        %v5502 = vunpack.c.l.b16 %v5450
        %v5503 = vpack.c.b16 %v5502, %v5501
        %5505 = vmatprep.subr.bf16.mxu0 0
        %5506 = vmatpush1.bf16.xpose.msra.mxu0 %v5503
        %5507 = vmatprep.subr.bf16.mxu0 0
        %5508 = vmatpush1.bf16.xpose.msra.mxu0 0
        %5509 = vmatprep.subr.bf16.mxu0 0
        %5510 = vmatpush1.bf16.xpose.msra.mxu0 0
        %5511 = vmatprep.subr.bf16.mxu0 0
        %5512 = vmatpush1.bf16.xpose.msra.mxu0 0
        %5513 = vmatprep.subr.bf16.mxu0 0
        %5514 = vmatpush1.bf16.xpose.msra.mxu0 0
        %5515 = vmatprep.subr.bf16.mxu0 0
        %5516 = vmatpush1.bf16.xpose.msra.mxu0 0
        %5517 = vmatprep.subr.bf16.mxu0 0
        %5518 = vmatpush1.bf16.xpose.msra.mxu0 0
        %5519 = vmatprep.subr.bf16.mxu0 0
        %5520 = vmatpush1.bf16.xpose.msra.mxu0 0
        %5521 = vmatprep.subr.bf16.mxu0 0
        %5522 = vmatpush1.bf16.xpose.msra.mxu0 0
        %5523 = vmatprep.subr.bf16.mxu0 0
        %5524 = vmatpush1.bf16.xpose.msra.mxu0 0
        %5525 = vmatprep.subr.bf16.mxu0 0
        %5526 = vmatpush1.bf16.xpose.msra.mxu0 0
        %5527 = vmatprep.subr.bf16.mxu0 0
        %5528 = vmatpush1.bf16.xpose.msra.mxu0 0
        %5529 = vmatprep.subr.bf16.mxu0 0
        %5530 = vmatpush1.bf16.xpose.msra.mxu0 0
        %5531 = vmatprep.subr.bf16.mxu0 0
        %5532 = vmatpush1.bf16.xpose.msra.mxu0 0
        %5533 = vmatprep.subr.bf16.mxu0 0
        %5534 = vmatpush1.bf16.xpose.msra.mxu0 0
        %5535 = vmatprep.subr.bf16.mxu0 0
        %5536 = vmatpush1.bf16.xpose.msra.mxu0 0
        %5537 = vmatprep.mubr.bf16.mxu0 0
        %5538 = vmatmul.mubr.bf16.gmra.mrb[0].mxu0 %v5483
        %v5539 = vpop.f32.mrb[0].mxu0
        %v5540 = vadd.f32 0.0, %v5539
        %v5541 = vpop.f32.mrb[0].mxu0
        %v5542 = vpop.f32.mrb[0].mxu0
        %v5543 = vadd.f32 0.0, %v5542
        %v5544 = vpop.f32.mrb[0].mxu0
        %5545 = vmatprep.mubr.bf16.mxu0 0
        %5546 = vmatmul.mubr.bf16.gmra.mrb[0].mxu0 %v5484
        %v5547 = vpop.f32.mrb[0].mxu0
        %v5548 = vadd.f32 0.0, %v5547
        %v5549 = vpop.f32.mrb[0].mxu0
        %v5550 = vpop.f32.mrb[0].mxu0
        %v5551 = vadd.f32 0.0, %v5550
        %v5552 = vpop.f32.mrb[0].mxu0
        %5553 = vmatprep.mubr.bf16.mxu0 0
        %5554 = vmatmul.mubr.bf16.gmra.mrb[0].mxu0 %v5485
        %v5555 = vpop.f32.mrb[0].mxu0
        %v5556 = vadd.f32 0.0, %v5555
        %v5557 = vpop.f32.mrb[0].mxu0
        %v5558 = vpop.f32.mrb[0].mxu0
        %v5559 = vadd.f32 0.0, %v5558
        %v5560 = vpop.f32.mrb[0].mxu0
        %5561 = vmatprep.mubr.bf16.mxu0 0
        %5562 = vmatmul.mubr.bf16.gmra.mrb[0].mxu0 %v5486
        %v5563 = vpop.f32.mrb[0].mxu0
        %v5564 = vadd.f32 0.0, %v5563
        %v5565 = vpop.f32.mrb[0].mxu0
        %v5566 = vpop.f32.mrb[0].mxu0
        %v5567 = vadd.f32 0.0, %v5566
        %v5568 = vpop.f32.mrb[0].mxu0
        %5569 = vmatprep.mubr.bf16.mxu0 0
        %5570 = vmatmul.mubr.bf16.gmra.mrb[0].mxu0 %v5487
        %v5571 = vpop.f32.mrb[0].mxu0
        %v5572 = vadd.f32 0.0, %v5571
        %v5573 = vpop.f32.mrb[0].mxu0
        %v5574 = vpop.f32.mrb[0].mxu0
        %v5575 = vadd.f32 0.0, %v5574
        %v5576 = vpop.f32.mrb[0].mxu0
        %5577 = vmatprep.mubr.bf16.mxu0 0
        %5578 = vmatmul.mubr.bf16.gmra.mrb[0].mxu0 %v5488
        %v5579 = vpop.f32.mrb[0].mxu0
        %v5580 = vadd.f32 0.0, %v5579
        %v5581 = vpop.f32.mrb[0].mxu0
        %v5582 = vpop.f32.mrb[0].mxu0
        %v5583 = vadd.f32 0.0, %v5582
        %v5584 = vpop.f32.mrb[0].mxu0
        %5585 = vmatprep.mubr.bf16.mxu0 0
        %5586 = vmatmul.mubr.bf16.gmra.mrb[0].mxu0 %v5489
        %v5587 = vpop.f32.mrb[0].mxu0
        %v5588 = vadd.f32 0.0, %v5587
        %v5589 = vpop.f32.mrb[0].mxu0
        %v5590 = vpop.f32.mrb[0].mxu0
        %v5591 = vadd.f32 0.0, %v5590
        %v5592 = vpop.f32.mrb[0].mxu0
        %5593 = vmatprep.mubr.bf16.mxu0 0
        %5594 = vmatmul.mubr.bf16.gmra.mrb[0].mxu0 %v5490
        %v5595 = vpop.f32.mrb[0].mxu0
        %v5596 = vadd.f32 0.0, %v5595
        %v5597 = vpop.f32.mrb[0].mxu0
        %v5598 = vpop.f32.mrb[0].mxu0
        %v5599 = vadd.f32 0.0, %v5598
        %v5600 = vpop.f32.mrb[0].mxu0
        %5601 = vdwg.mxu0
        %v5602 = vpack.c.bf16 %v5543, %v5540
        %v5603 = vpack.c.bf16 %v5551, %v5548
        %v5604 = vpack.c.bf16 %v5559, %v5556
        %v5605 = vpack.c.bf16 %v5567, %v5564
        %v5606 = vpack.c.bf16 %v5575, %v5572
        %v5607 = vpack.c.bf16 %v5583, %v5580
        %v5608 = vpack.c.bf16 %v5591, %v5588
        %v5609 = vpack.c.bf16 %v5599, %v5596
        %v5610 = vld [vmem:[#allocation2] sm:$0xff]
        %v5611 = vld [vmem:[#allocation2 + $0x8] sm:$0xff]
        %5612 = vxpose.xlu0.c.b16.start [1/8] %v5602, 128
        %5613 = vxpose.xlu0.c.b16.cont [2/8] 0, 128
        %5614 = vxpose.xlu0.c.b16.cont [3/8] 0, 128
        %5615 = vxpose.xlu0.c.b16.cont [4/8] 0, 128
        %5616 = vxpose.xlu0.c.b16.cont [5/8] 0, 128
        %5617 = vxpose.xlu0.c.b16.cont [6/8] 0, 128
        %5618 = vxpose.xlu0.c.b16.cont [7/8] 0, 128
        %5619 = vxpose.xlu0.c.b16.end [8/8] 0, 128
        %v5620 = vpop.trf.xlu0
        %v5621 = vpop.trf.xlu0
        %v5622 = vpop.trf.xlu0
        %v5623 = vpop.trf.xlu0
        %v5624 = vpop.trf.xlu0
        %v5625 = vpop.trf.xlu0
        %v5626 = vpop.trf.xlu0
        %v5627 = vpop.trf.xlu0
        %v5629 = vsel %vm1886, %v5620, 0
        %5631 = vmatprep.subr.bf16.mxu0 %v5611
        %5632 = vmatpush1.bf16.msra.mxu0 %v5610
        %5633 = vmatprep.subr.bf16.mxu0 0
        %5634 = vmatpush1.bf16.msra.mxu0 0
        %5635 = vmatprep.subr.bf16.mxu0 0
        %5636 = vmatpush1.bf16.msra.mxu0 0
        %5637 = vmatprep.subr.bf16.mxu0 0
        %5638 = vmatpush1.bf16.msra.mxu0 0
        %5639 = vmatprep.subr.bf16.mxu0 0
        %5640 = vmatpush1.bf16.msra.mxu0 0
        %5641 = vmatprep.subr.bf16.mxu0 0
        %5642 = vmatpush1.bf16.msra.mxu0 0
        %5643 = vmatprep.subr.bf16.mxu0 0
        %5644 = vmatpush1.bf16.msra.mxu0 0
        %5645 = vmatprep.subr.bf16.mxu0 0
        %5646 = vmatpush1.bf16.msra.mxu0 0
        %5647 = vmatprep.subr.bf16.mxu0 0
        %5648 = vmatpush1.bf16.msra.mxu0 0
        %5649 = vmatprep.subr.bf16.mxu0 0
        %5650 = vmatpush1.bf16.msra.mxu0 0
        %5651 = vmatprep.subr.bf16.mxu0 0
        %5652 = vmatpush1.bf16.msra.mxu0 0
        %5653 = vmatprep.subr.bf16.mxu0 0
        %5654 = vmatpush1.bf16.msra.mxu0 0
        %5655 = vmatprep.subr.bf16.mxu0 0
        %5656 = vmatpush1.bf16.msra.mxu0 0
        %5657 = vmatprep.subr.bf16.mxu0 0
        %5658 = vmatpush1.bf16.msra.mxu0 0
        %5659 = vmatprep.subr.bf16.mxu0 0
        %5660 = vmatpush1.bf16.msra.mxu0 0
        %5661 = vmatprep.subr.bf16.mxu0 0
        %5662 = vmatpush1.bf16.msra.mxu0 0
        %5663 = vmatprep.mubr.bf16.mxu0 0
        %5664 = vmatmul.mubr.bf16.gmra.mrb[0].mxu0 %v5629
        %v5665 = vpop.f32.mrb[0].mxu0
        %v5666 = vadd.f32 0.0, %v5665
        %v5667 = vpop.f32.mrb[0].mxu0
        %v5668 = vadd.f32 0.0, %v5667
        %v5669 = vpop.f32.mrb[0].mxu0
        %v5670 = vadd.f32 0.0, %v5669
        %v5671 = vpop.f32.mrb[0].mxu0
        %v5672 = vadd.f32 0.0, %v5671
        %5673 = vdwg.mxu0
        %v5674 = vmax.f32 %v5666, %v5670
        %v5675 = vrot.slane %v5674, 4
        %v5676 = vmax.f32 %v5674, %v5675
        %v5677 = vrot.slane %v5676, 2
        %v5678 = vmax.f32 %v5676, %v5677
        %v5679 = vrot.slane %v5678, 1
        %v5680 = vmax.f32 %v5678, %v5679
        %v5681 = vmax.f32 %v5668, %v5672
        %v5682 = vrot.slane %v5681, 4
        %v5683 = vmax.f32 %v5681, %v5682
        %v5684 = vrot.slane %v5683, 2
        %v5685 = vmax.f32 %v5683, %v5684
        %v5686 = vrot.slane %v5685, 1
        %v5687 = vmax.f32 %v5685, %v5686
        %v5688 = vsub.f32 %v5666, %v5680
        %v5689 = vsub.f32 %v5668, %v5687
        %v5690 = vsub.f32 %v5670, %v5680
        %v5691 = vsub.f32 %v5672, %v5687
        %v5692 = vmul.f32 %v5688, 1.442695
        %v5693 = vpow.pop %v5692
        %v5694 = vmul.f32 %v5689, 1.442695
        %v5695 = vpow.pop %v5694
        %v5696 = vmul.f32 %v5690, 1.442695
        %v5697 = vpow.pop %v5696
        %v5698 = vmul.f32 %v5691, 1.442695
        %v5699 = vpow.pop %v5698
        %v5700 = vadd.f32 %v5693, %v5697
        %v5701 = vrot.slane %v5700, 4
        %v5702 = vadd.f32 %v5700, %v5701
        %v5703 = vrot.slane %v5702, 2
        %v5704 = vadd.f32 %v5702, %v5703
        %v5705 = vrot.slane %v5704, 1
        %v5706 = vadd.f32 %v5704, %v5705
        %v5707 = vadd.f32 %v5695, %v5699
        %v5708 = vrot.slane %v5707, 4
        %v5709 = vadd.f32 %v5707, %v5708
        %v5710 = vrot.slane %v5709, 2
        %v5711 = vadd.f32 %v5709, %v5710
        %v5712 = vrot.slane %v5711, 1
        %v5713 = vadd.f32 %v5711, %v5712
        %v5714 = vrcp.pop %v5706
        %v5715 = vrcp.pop %v5713
        %v5716 = vmul.f32 %v5693, %v5714
        %v5717 = vmul.f32 %v5695, %v5715
        %v5718 = vmul.f32 %v5697, %v5714
        %v5719 = vmul.f32 %v5699, %v5715
        %v5720 = vpack.c.bf16 %v5718, %v5716
        %v5721 = vpack.c.bf16 %v5719, %v5717
        %v5723 = vsel %vm1886, %v5606, 0
        %5725 = vmatprep.subr.bf16.mxu0 %v5721
        %5726 = vmatpush1.bf16.msra.mxu0 %v5720
        %5727 = vmatprep.subr.bf16.mxu0 0
        %5728 = vmatpush1.bf16.msra.mxu0 0
        %5729 = vmatprep.subr.bf16.mxu0 0
        %5730 = vmatpush1.bf16.msra.mxu0 0
        %5731 = vmatprep.subr.bf16.mxu0 0
        %5732 = vmatpush1.bf16.msra.mxu0 0
        %5733 = vmatprep.subr.bf16.mxu0 0
        %5734 = vmatpush1.bf16.msra.mxu0 0
        %5735 = vmatprep.subr.bf16.mxu0 0
        %5736 = vmatpush1.bf16.msra.mxu0 0
        %5737 = vmatprep.subr.bf16.mxu0 0
        %5738 = vmatpush1.bf16.msra.mxu0 0
        %5739 = vmatprep.subr.bf16.mxu0 0
        %5740 = vmatpush1.bf16.msra.mxu0 0
        %5741 = vmatprep.subr.bf16.mxu0 0
        %5742 = vmatpush1.bf16.msra.mxu0 0
        %5743 = vmatprep.subr.bf16.mxu0 0
        %5744 = vmatpush1.bf16.msra.mxu0 0
        %5745 = vmatprep.subr.bf16.mxu0 0
        %5746 = vmatpush1.bf16.msra.mxu0 0
        %5747 = vmatprep.subr.bf16.mxu0 0
        %5748 = vmatpush1.bf16.msra.mxu0 0
        %5749 = vmatprep.subr.bf16.mxu0 0
        %5750 = vmatpush1.bf16.msra.mxu0 0
        %5751 = vmatprep.subr.bf16.mxu0 0
        %5752 = vmatpush1.bf16.msra.mxu0 0
        %5753 = vmatprep.subr.bf16.mxu0 0
        %5754 = vmatpush1.bf16.msra.mxu0 0
        %5755 = vmatprep.subr.bf16.mxu0 0
        %5756 = vmatpush1.bf16.msra.mxu0 0
        %5757 = vmatprep.mubr.bf16.mxu0 0
        %5758 = vmatmul.mubr.bf16.gmra.mrb[0].mxu0 %v5723
        %v5759 = vpop.f32.mrb[0].mxu0
        %v5760 = vadd.f32 0.0, %v5759
        %v5761 = vpop.f32.mrb[0].mxu0
        %v5762 = vadd.f32 0.0, %v5761
        %v5763 = vpop.f32.mrb[0].mxu0
        %v5764 = vadd.f32 0.0, %v5763
        %v5765 = vpop.f32.mrb[0].mxu0
        %v5766 = vadd.f32 0.0, %v5765
        %5767 = vdwg.mxu0
        %v5768 = vpack.c.bf16 %v5764, %v5760
        %v5769 = vpack.c.bf16 %v5766, %v5762
        %5770 = vst [vmem:[#allocation3] sm:$0xff] %v5768
        %5771 = vst [vmem:[#allocation3 + $0x8] sm:$0xff] %v5769
        %v5772 = vld [vmem:[#allocation2 + $0x10] sm:$0xff]
        %v5773 = vld [vmem:[#allocation2 + $0x18] sm:$0xff]
        %5774 = vxpose.xlu0.c.b16.start [1/8] %v5603, 128
        %5775 = vxpose.xlu0.c.b16.cont [2/8] 0, 128
        %5776 = vxpose.xlu0.c.b16.cont [3/8] 0, 128
        %5777 = vxpose.xlu0.c.b16.cont [4/8] 0, 128
        %5778 = vxpose.xlu0.c.b16.cont [5/8] 0, 128
        %5779 = vxpose.xlu0.c.b16.cont [6/8] 0, 128
        %5780 = vxpose.xlu0.c.b16.cont [7/8] 0, 128
        %5781 = vxpose.xlu0.c.b16.end [8/8] 0, 128
        %v5782 = vpop.trf.xlu0
        %v5783 = vpop.trf.xlu0
        %v5784 = vpop.trf.xlu0
        %v5785 = vpop.trf.xlu0
        %v5786 = vpop.trf.xlu0
        %v5787 = vpop.trf.xlu0
        %v5788 = vpop.trf.xlu0
        %v5789 = vpop.trf.xlu0
        %v5791 = vsel %vm1886, %v5782, 0
        %5793 = vmatprep.subr.bf16.mxu0 %v5773
        %5794 = vmatpush1.bf16.msra.mxu0 %v5772
        %5795 = vmatprep.subr.bf16.mxu0 0
        %5796 = vmatpush1.bf16.msra.mxu0 0
        %5797 = vmatprep.subr.bf16.mxu0 0
        %5798 = vmatpush1.bf16.msra.mxu0 0
        %5799 = vmatprep.subr.bf16.mxu0 0
        %5800 = vmatpush1.bf16.msra.mxu0 0
        %5801 = vmatprep.subr.bf16.mxu0 0
        %5802 = vmatpush1.bf16.msra.mxu0 0
        %5803 = vmatprep.subr.bf16.mxu0 0
        %5804 = vmatpush1.bf16.msra.mxu0 0
        %5805 = vmatprep.subr.bf16.mxu0 0
        %5806 = vmatpush1.bf16.msra.mxu0 0
        %5807 = vmatprep.subr.bf16.mxu0 0
        %5808 = vmatpush1.bf16.msra.mxu0 0
        %5809 = vmatprep.subr.bf16.mxu0 0
        %5810 = vmatpush1.bf16.msra.mxu0 0
        %5811 = vmatprep.subr.bf16.mxu0 0
        %5812 = vmatpush1.bf16.msra.mxu0 0
        %5813 = vmatprep.subr.bf16.mxu0 0
        %5814 = vmatpush1.bf16.msra.mxu0 0
        %5815 = vmatprep.subr.bf16.mxu0 0
        %5816 = vmatpush1.bf16.msra.mxu0 0
        %5817 = vmatprep.subr.bf16.mxu0 0
        %5818 = vmatpush1.bf16.msra.mxu0 0
        %5819 = vmatprep.subr.bf16.mxu0 0
        %5820 = vmatpush1.bf16.msra.mxu0 0
        %5821 = vmatprep.subr.bf16.mxu0 0
        %5822 = vmatpush1.bf16.msra.mxu0 0
        %5823 = vmatprep.subr.bf16.mxu0 0
        %5824 = vmatpush1.bf16.msra.mxu0 0
        %5825 = vmatprep.mubr.bf16.mxu0 0
        %5826 = vmatmul.mubr.bf16.gmra.mrb[0].mxu0 %v5791
        %v5827 = vpop.f32.mrb[0].mxu0
        %v5828 = vadd.f32 0.0, %v5827
        %v5829 = vpop.f32.mrb[0].mxu0
        %v5830 = vadd.f32 0.0, %v5829
        %v5831 = vpop.f32.mrb[0].mxu0
        %v5832 = vadd.f32 0.0, %v5831
        %v5833 = vpop.f32.mrb[0].mxu0
        %v5834 = vadd.f32 0.0, %v5833
        %5835 = vdwg.mxu0
        %v5836 = vmax.f32 %v5828, %v5832
        %v5837 = vrot.slane %v5836, 4
        %v5838 = vmax.f32 %v5836, %v5837
        %v5839 = vrot.slane %v5838, 2
        %v5840 = vmax.f32 %v5838, %v5839
        %v5841 = vrot.slane %v5840, 1
        %v5842 = vmax.f32 %v5840, %v5841
        %v5843 = vmax.f32 %v5830, %v5834
        %v5844 = vrot.slane %v5843, 4
        %v5845 = vmax.f32 %v5843, %v5844
        %v5846 = vrot.slane %v5845, 2
        %v5847 = vmax.f32 %v5845, %v5846
        %v5848 = vrot.slane %v5847, 1
        %v5849 = vmax.f32 %v5847, %v5848
        %v5850 = vsub.f32 %v5828, %v5842
        %v5851 = vsub.f32 %v5830, %v5849
        %v5852 = vsub.f32 %v5832, %v5842
        %v5853 = vsub.f32 %v5834, %v5849
        %v5854 = vmul.f32 %v5850, 1.442695
        %v5855 = vpow.pop %v5854
        %v5856 = vmul.f32 %v5851, 1.442695
        %v5857 = vpow.pop %v5856
        %v5858 = vmul.f32 %v5852, 1.442695
        %v5859 = vpow.pop %v5858
        %v5860 = vmul.f32 %v5853, 1.442695
        %v5861 = vpow.pop %v5860
        %v5862 = vadd.f32 %v5855, %v5859
        %v5863 = vrot.slane %v5862, 4
        %v5864 = vadd.f32 %v5862, %v5863
        %v5865 = vrot.slane %v5864, 2
        %v5866 = vadd.f32 %v5864, %v5865
        %v5867 = vrot.slane %v5866, 1
        %v5868 = vadd.f32 %v5866, %v5867
        %v5869 = vadd.f32 %v5857, %v5861
        %v5870 = vrot.slane %v5869, 4
        %v5871 = vadd.f32 %v5869, %v5870
        %v5872 = vrot.slane %v5871, 2
        %v5873 = vadd.f32 %v5871, %v5872
        %v5874 = vrot.slane %v5873, 1
        %v5875 = vadd.f32 %v5873, %v5874
        %v5876 = vrcp.pop %v5868
        %v5877 = vrcp.pop %v5875
        %v5878 = vmul.f32 %v5855, %v5876
        %v5879 = vmul.f32 %v5857, %v5877
        %v5880 = vmul.f32 %v5859, %v5876
        %v5881 = vmul.f32 %v5861, %v5877
        %v5882 = vpack.c.bf16 %v5880, %v5878
        %v5883 = vpack.c.bf16 %v5881, %v5879
        %v5885 = vsel %vm1886, %v5607, 0
        %5887 = vmatprep.subr.bf16.mxu0 %v5883
        %5888 = vmatpush1.bf16.msra.mxu0 %v5882
        %5889 = vmatprep.subr.bf16.mxu0 0
        %5890 = vmatpush1.bf16.msra.mxu0 0
        %5891 = vmatprep.subr.bf16.mxu0 0
        %5892 = vmatpush1.bf16.msra.mxu0 0
        %5893 = vmatprep.subr.bf16.mxu0 0
        %5894 = vmatpush1.bf16.msra.mxu0 0
        %5895 = vmatprep.subr.bf16.mxu0 0
        %5896 = vmatpush1.bf16.msra.mxu0 0
        %5897 = vmatprep.subr.bf16.mxu0 0
        %5898 = vmatpush1.bf16.msra.mxu0 0
        %5899 = vmatprep.subr.bf16.mxu0 0
        %5900 = vmatpush1.bf16.msra.mxu0 0
        %5901 = vmatprep.subr.bf16.mxu0 0
        %5902 = vmatpush1.bf16.msra.mxu0 0
        %5903 = vmatprep.subr.bf16.mxu0 0
        %5904 = vmatpush1.bf16.msra.mxu0 0
        %5905 = vmatprep.subr.bf16.mxu0 0
        %5906 = vmatpush1.bf16.msra.mxu0 0
        %5907 = vmatprep.subr.bf16.mxu0 0
        %5908 = vmatpush1.bf16.msra.mxu0 0
        %5909 = vmatprep.subr.bf16.mxu0 0
        %5910 = vmatpush1.bf16.msra.mxu0 0
        %5911 = vmatprep.subr.bf16.mxu0 0
        %5912 = vmatpush1.bf16.msra.mxu0 0
        %5913 = vmatprep.subr.bf16.mxu0 0
        %5914 = vmatpush1.bf16.msra.mxu0 0
        %5915 = vmatprep.subr.bf16.mxu0 0
        %5916 = vmatpush1.bf16.msra.mxu0 0
        %5917 = vmatprep.subr.bf16.mxu0 0
        %5918 = vmatpush1.bf16.msra.mxu0 0
        %5919 = vmatprep.mubr.bf16.mxu0 0
        %5920 = vmatmul.mubr.bf16.gmra.mrb[0].mxu0 %v5885
        %v5921 = vpop.f32.mrb[0].mxu0
        %v5922 = vadd.f32 0.0, %v5921
        %v5923 = vpop.f32.mrb[0].mxu0
        %v5924 = vadd.f32 0.0, %v5923
        %v5925 = vpop.f32.mrb[0].mxu0
        %v5926 = vadd.f32 0.0, %v5925
        %v5927 = vpop.f32.mrb[0].mxu0
        %v5928 = vadd.f32 0.0, %v5927
        %5929 = vdwg.mxu0
        %v5930 = vpack.c.bf16 %v5926, %v5922
        %v5931 = vpack.c.bf16 %v5928, %v5924
        %5932 = vst [vmem:[#allocation3 + $0x10] sm:$0xff] %v5930
        %5933 = vst [vmem:[#allocation3 + $0x18] sm:$0xff] %v5931
        %v5934 = vld [vmem:[#allocation2 + $0x20] sm:$0xff]
        %v5935 = vld [vmem:[#allocation2 + $0x28] sm:$0xff]
        %5936 = vxpose.xlu0.c.b16.start [1/8] %v5604, 128
        %5937 = vxpose.xlu0.c.b16.cont [2/8] 0, 128
        %5938 = vxpose.xlu0.c.b16.cont [3/8] 0, 128
        %5939 = vxpose.xlu0.c.b16.cont [4/8] 0, 128
        %5940 = vxpose.xlu0.c.b16.cont [5/8] 0, 128
        %5941 = vxpose.xlu0.c.b16.cont [6/8] 0, 128
        %5942 = vxpose.xlu0.c.b16.cont [7/8] 0, 128
        %5943 = vxpose.xlu0.c.b16.end [8/8] 0, 128
        %v5944 = vpop.trf.xlu0
        %v5945 = vpop.trf.xlu0
        %v5946 = vpop.trf.xlu0
        %v5947 = vpop.trf.xlu0
        %v5948 = vpop.trf.xlu0
        %v5949 = vpop.trf.xlu0
        %v5950 = vpop.trf.xlu0
        %v5951 = vpop.trf.xlu0
        %v5953 = vsel %vm1886, %v5944, 0
        %5955 = vmatprep.subr.bf16.mxu0 %v5935
        %5956 = vmatpush1.bf16.msra.mxu0 %v5934
        %5957 = vmatprep.subr.bf16.mxu0 0
        %5958 = vmatpush1.bf16.msra.mxu0 0
        %5959 = vmatprep.subr.bf16.mxu0 0
        %5960 = vmatpush1.bf16.msra.mxu0 0
        %5961 = vmatprep.subr.bf16.mxu0 0
        %5962 = vmatpush1.bf16.msra.mxu0 0
        %5963 = vmatprep.subr.bf16.mxu0 0
        %5964 = vmatpush1.bf16.msra.mxu0 0
        %5965 = vmatprep.subr.bf16.mxu0 0
        %5966 = vmatpush1.bf16.msra.mxu0 0
        %5967 = vmatprep.subr.bf16.mxu0 0
        %5968 = vmatpush1.bf16.msra.mxu0 0
        %5969 = vmatprep.subr.bf16.mxu0 0
        %5970 = vmatpush1.bf16.msra.mxu0 0
        %5971 = vmatprep.subr.bf16.mxu0 0
        %5972 = vmatpush1.bf16.msra.mxu0 0
        %5973 = vmatprep.subr.bf16.mxu0 0
        %5974 = vmatpush1.bf16.msra.mxu0 0
        %5975 = vmatprep.subr.bf16.mxu0 0
        %5976 = vmatpush1.bf16.msra.mxu0 0
        %5977 = vmatprep.subr.bf16.mxu0 0
        %5978 = vmatpush1.bf16.msra.mxu0 0
        %5979 = vmatprep.subr.bf16.mxu0 0
        %5980 = vmatpush1.bf16.msra.mxu0 0
        %5981 = vmatprep.subr.bf16.mxu0 0
        %5982 = vmatpush1.bf16.msra.mxu0 0
        %5983 = vmatprep.subr.bf16.mxu0 0
        %5984 = vmatpush1.bf16.msra.mxu0 0
        %5985 = vmatprep.subr.bf16.mxu0 0
        %5986 = vmatpush1.bf16.msra.mxu0 0
        %5987 = vmatprep.mubr.bf16.mxu0 0
        %5988 = vmatmul.mubr.bf16.gmra.mrb[0].mxu0 %v5953
        %v5989 = vpop.f32.mrb[0].mxu0
        %v5990 = vadd.f32 0.0, %v5989
        %v5991 = vpop.f32.mrb[0].mxu0
        %v5992 = vadd.f32 0.0, %v5991
        %v5993 = vpop.f32.mrb[0].mxu0
        %v5994 = vadd.f32 0.0, %v5993
        %v5995 = vpop.f32.mrb[0].mxu0
        %v5996 = vadd.f32 0.0, %v5995
        %5997 = vdwg.mxu0
        %v5998 = vmax.f32 %v5990, %v5994
        %v5999 = vrot.slane %v5998, 4
        %v6000 = vmax.f32 %v5998, %v5999
        %v6001 = vrot.slane %v6000, 2
        %v6002 = vmax.f32 %v6000, %v6001
        %v6003 = vrot.slane %v6002, 1
        %v6004 = vmax.f32 %v6002, %v6003
        %v6005 = vmax.f32 %v5992, %v5996
        %v6006 = vrot.slane %v6005, 4
        %v6007 = vmax.f32 %v6005, %v6006
        %v6008 = vrot.slane %v6007, 2
        %v6009 = vmax.f32 %v6007, %v6008
        %v6010 = vrot.slane %v6009, 1
        %v6011 = vmax.f32 %v6009, %v6010
        %v6012 = vsub.f32 %v5990, %v6004
        %v6013 = vsub.f32 %v5992, %v6011
        %v6014 = vsub.f32 %v5994, %v6004
        %v6015 = vsub.f32 %v5996, %v6011
        %v6016 = vmul.f32 %v6012, 1.442695
        %v6017 = vpow.pop %v6016
        %v6018 = vmul.f32 %v6013, 1.442695
        %v6019 = vpow.pop %v6018
        %v6020 = vmul.f32 %v6014, 1.442695
        %v6021 = vpow.pop %v6020
        %v6022 = vmul.f32 %v6015, 1.442695
        %v6023 = vpow.pop %v6022
        %v6024 = vadd.f32 %v6017, %v6021
        %v6025 = vrot.slane %v6024, 4
        %v6026 = vadd.f32 %v6024, %v6025
        %v6027 = vrot.slane %v6026, 2
        %v6028 = vadd.f32 %v6026, %v6027
        %v6029 = vrot.slane %v6028, 1
        %v6030 = vadd.f32 %v6028, %v6029
        %v6031 = vadd.f32 %v6019, %v6023
        %v6032 = vrot.slane %v6031, 4
        %v6033 = vadd.f32 %v6031, %v6032
        %v6034 = vrot.slane %v6033, 2
        %v6035 = vadd.f32 %v6033, %v6034
        %v6036 = vrot.slane %v6035, 1
        %v6037 = vadd.f32 %v6035, %v6036
        %v6038 = vrcp.pop %v6030
        %v6039 = vrcp.pop %v6037
        %v6040 = vmul.f32 %v6017, %v6038
        %v6041 = vmul.f32 %v6019, %v6039
        %v6042 = vmul.f32 %v6021, %v6038
        %v6043 = vmul.f32 %v6023, %v6039
        %v6044 = vpack.c.bf16 %v6042, %v6040
        %v6045 = vpack.c.bf16 %v6043, %v6041
        %v6047 = vsel %vm1886, %v5608, 0
        %6049 = vmatprep.subr.bf16.mxu0 %v6045
        %6050 = vmatpush1.bf16.msra.mxu0 %v6044
        %6051 = vmatprep.subr.bf16.mxu0 0
        %6052 = vmatpush1.bf16.msra.mxu0 0
        %6053 = vmatprep.subr.bf16.mxu0 0
        %6054 = vmatpush1.bf16.msra.mxu0 0
        %6055 = vmatprep.subr.bf16.mxu0 0
        %6056 = vmatpush1.bf16.msra.mxu0 0
        %6057 = vmatprep.subr.bf16.mxu0 0
        %6058 = vmatpush1.bf16.msra.mxu0 0
        %6059 = vmatprep.subr.bf16.mxu0 0
        %6060 = vmatpush1.bf16.msra.mxu0 0
        %6061 = vmatprep.subr.bf16.mxu0 0
        %6062 = vmatpush1.bf16.msra.mxu0 0
        %6063 = vmatprep.subr.bf16.mxu0 0
        %6064 = vmatpush1.bf16.msra.mxu0 0
        %6065 = vmatprep.subr.bf16.mxu0 0
        %6066 = vmatpush1.bf16.msra.mxu0 0
        %6067 = vmatprep.subr.bf16.mxu0 0
        %6068 = vmatpush1.bf16.msra.mxu0 0
        %6069 = vmatprep.subr.bf16.mxu0 0
        %6070 = vmatpush1.bf16.msra.mxu0 0
        %6071 = vmatprep.subr.bf16.mxu0 0
        %6072 = vmatpush1.bf16.msra.mxu0 0
        %6073 = vmatprep.subr.bf16.mxu0 0
        %6074 = vmatpush1.bf16.msra.mxu0 0
        %6075 = vmatprep.subr.bf16.mxu0 0
        %6076 = vmatpush1.bf16.msra.mxu0 0
        %6077 = vmatprep.subr.bf16.mxu0 0
        %6078 = vmatpush1.bf16.msra.mxu0 0
        %6079 = vmatprep.subr.bf16.mxu0 0
        %6080 = vmatpush1.bf16.msra.mxu0 0
        %6081 = vmatprep.mubr.bf16.mxu0 0
        %6082 = vmatmul.mubr.bf16.gmra.mrb[0].mxu0 %v6047
        %v6083 = vpop.f32.mrb[0].mxu0
        %v6084 = vadd.f32 0.0, %v6083
        %v6085 = vpop.f32.mrb[0].mxu0
        %v6086 = vadd.f32 0.0, %v6085
        %v6087 = vpop.f32.mrb[0].mxu0
        %v6088 = vadd.f32 0.0, %v6087
        %v6089 = vpop.f32.mrb[0].mxu0
        %v6090 = vadd.f32 0.0, %v6089
        %6091 = vdwg.mxu0
        %v6092 = vpack.c.bf16 %v6088, %v6084
        %v6093 = vpack.c.bf16 %v6090, %v6086
        %6094 = vst [vmem:[#allocation3 + $0x20] sm:$0xff] %v6092
        %6095 = vst [vmem:[#allocation3 + $0x28] sm:$0xff] %v6093
        %v6096 = vld [vmem:[#allocation2 + $0x30] sm:$0xff]
        %v6097 = vld [vmem:[#allocation2 + $0x38] sm:$0xff]
        %6098 = vxpose.xlu0.c.b16.start [1/8] %v5605, 128
        %6099 = vxpose.xlu0.c.b16.cont [2/8] 0, 128
        %6100 = vxpose.xlu0.c.b16.cont [3/8] 0, 128
        %6101 = vxpose.xlu0.c.b16.cont [4/8] 0, 128
        %6102 = vxpose.xlu0.c.b16.cont [5/8] 0, 128
        %6103 = vxpose.xlu0.c.b16.cont [6/8] 0, 128
        %6104 = vxpose.xlu0.c.b16.cont [7/8] 0, 128
        %6105 = vxpose.xlu0.c.b16.end [8/8] 0, 128
        %v6106 = vpop.trf.xlu0
        %v6107 = vpop.trf.xlu0
        %v6108 = vpop.trf.xlu0
        %v6109 = vpop.trf.xlu0
        %v6110 = vpop.trf.xlu0
        %v6111 = vpop.trf.xlu0
        %v6112 = vpop.trf.xlu0
        %v6113 = vpop.trf.xlu0
        %v6115 = vsel %vm1886, %v6106, 0
        %6117 = vmatprep.subr.bf16.mxu0 %v6097
        %6118 = vmatpush1.bf16.msra.mxu0 %v6096
        %6119 = vmatprep.subr.bf16.mxu0 0
        %6120 = vmatpush1.bf16.msra.mxu0 0
        %6121 = vmatprep.subr.bf16.mxu0 0
        %6122 = vmatpush1.bf16.msra.mxu0 0
        %6123 = vmatprep.subr.bf16.mxu0 0
        %6124 = vmatpush1.bf16.msra.mxu0 0
        %6125 = vmatprep.subr.bf16.mxu0 0
        %6126 = vmatpush1.bf16.msra.mxu0 0
        %6127 = vmatprep.subr.bf16.mxu0 0
        %6128 = vmatpush1.bf16.msra.mxu0 0
        %6129 = vmatprep.subr.bf16.mxu0 0
        %6130 = vmatpush1.bf16.msra.mxu0 0
        %6131 = vmatprep.subr.bf16.mxu0 0
        %6132 = vmatpush1.bf16.msra.mxu0 0
        %6133 = vmatprep.subr.bf16.mxu0 0
        %6134 = vmatpush1.bf16.msra.mxu0 0
        %6135 = vmatprep.subr.bf16.mxu0 0
        %6136 = vmatpush1.bf16.msra.mxu0 0
        %6137 = vmatprep.subr.bf16.mxu0 0
        %6138 = vmatpush1.bf16.msra.mxu0 0
        %6139 = vmatprep.subr.bf16.mxu0 0
        %6140 = vmatpush1.bf16.msra.mxu0 0
        %6141 = vmatprep.subr.bf16.mxu0 0
        %6142 = vmatpush1.bf16.msra.mxu0 0
        %6143 = vmatprep.subr.bf16.mxu0 0
        %6144 = vmatpush1.bf16.msra.mxu0 0
        %6145 = vmatprep.subr.bf16.mxu0 0
        %6146 = vmatpush1.bf16.msra.mxu0 0
        %6147 = vmatprep.subr.bf16.mxu0 0
        %6148 = vmatpush1.bf16.msra.mxu0 0
        %6149 = vmatprep.mubr.bf16.mxu0 0
        %6150 = vmatmul.mubr.bf16.gmra.mrb[0].mxu0 %v6115
        %v6151 = vpop.f32.mrb[0].mxu0
        %v6152 = vadd.f32 0.0, %v6151
        %v6153 = vpop.f32.mrb[0].mxu0
        %v6154 = vadd.f32 0.0, %v6153
        %v6155 = vpop.f32.mrb[0].mxu0
        %v6156 = vadd.f32 0.0, %v6155
        %v6157 = vpop.f32.mrb[0].mxu0
        %v6158 = vadd.f32 0.0, %v6157
        %6159 = vdwg.mxu0
        %v6160 = vmax.f32 %v6152, %v6156
        %v6161 = vrot.slane %v6160, 4
        %v6162 = vmax.f32 %v6160, %v6161
        %v6163 = vrot.slane %v6162, 2
        %v6164 = vmax.f32 %v6162, %v6163
        %v6165 = vrot.slane %v6164, 1
        %v6166 = vmax.f32 %v6164, %v6165
        %v6167 = vmax.f32 %v6154, %v6158
        %v6168 = vrot.slane %v6167, 4
        %v6169 = vmax.f32 %v6167, %v6168
        %v6170 = vrot.slane %v6169, 2
        %v6171 = vmax.f32 %v6169, %v6170
        %v6172 = vrot.slane %v6171, 1
        %v6173 = vmax.f32 %v6171, %v6172
        %v6174 = vsub.f32 %v6152, %v6166
        %v6175 = vsub.f32 %v6154, %v6173
        %v6176 = vsub.f32 %v6156, %v6166
        %v6177 = vsub.f32 %v6158, %v6173
        %v6178 = vmul.f32 %v6174, 1.442695
        %v6179 = vpow.pop %v6178
        %v6180 = vmul.f32 %v6175, 1.442695
        %v6181 = vpow.pop %v6180
        %v6182 = vmul.f32 %v6176, 1.442695
        %v6183 = vpow.pop %v6182
        %v6184 = vmul.f32 %v6177, 1.442695
        %v6185 = vpow.pop %v6184
        %v6186 = vadd.f32 %v6179, %v6183
        %v6187 = vrot.slane %v6186, 4
        %v6188 = vadd.f32 %v6186, %v6187
        %v6189 = vrot.slane %v6188, 2
        %v6190 = vadd.f32 %v6188, %v6189
        %v6191 = vrot.slane %v6190, 1
        %v6192 = vadd.f32 %v6190, %v6191
        %v6193 = vadd.f32 %v6181, %v6185
        %v6194 = vrot.slane %v6193, 4
        %v6195 = vadd.f32 %v6193, %v6194
        %v6196 = vrot.slane %v6195, 2
        %v6197 = vadd.f32 %v6195, %v6196
        %v6198 = vrot.slane %v6197, 1
        %v6199 = vadd.f32 %v6197, %v6198
        %v6200 = vrcp.pop %v6192
        %v6201 = vrcp.pop %v6199
        %v6202 = vmul.f32 %v6179, %v6200
        %v6203 = vmul.f32 %v6181, %v6201
        %v6204 = vmul.f32 %v6183, %v6200
        %v6205 = vmul.f32 %v6185, %v6201
        %v6206 = vpack.c.bf16 %v6204, %v6202
        %v6207 = vpack.c.bf16 %v6205, %v6203
        %v6209 = vsel %vm1886, %v5609, 0
        %6211 = vmatprep.subr.bf16.mxu0 %v6207
        %6212 = vmatpush1.bf16.msra.mxu0 %v6206
        %6213 = vmatprep.subr.bf16.mxu0 0
        %6214 = vmatpush1.bf16.msra.mxu0 0
        %6215 = vmatprep.subr.bf16.mxu0 0
        %6216 = vmatpush1.bf16.msra.mxu0 0
        %6217 = vmatprep.subr.bf16.mxu0 0
        %6218 = vmatpush1.bf16.msra.mxu0 0
        %6219 = vmatprep.subr.bf16.mxu0 0
        %6220 = vmatpush1.bf16.msra.mxu0 0
        %6221 = vmatprep.subr.bf16.mxu0 0
        %6222 = vmatpush1.bf16.msra.mxu0 0
        %6223 = vmatprep.subr.bf16.mxu0 0
        %6224 = vmatpush1.bf16.msra.mxu0 0
        %6225 = vmatprep.subr.bf16.mxu0 0
        %6226 = vmatpush1.bf16.msra.mxu0 0
        %6227 = vmatprep.subr.bf16.mxu0 0
        %6228 = vmatpush1.bf16.msra.mxu0 0
        %6229 = vmatprep.subr.bf16.mxu0 0
        %6230 = vmatpush1.bf16.msra.mxu0 0
        %6231 = vmatprep.subr.bf16.mxu0 0
        %6232 = vmatpush1.bf16.msra.mxu0 0
        %6233 = vmatprep.subr.bf16.mxu0 0
        %6234 = vmatpush1.bf16.msra.mxu0 0
        %6235 = vmatprep.subr.bf16.mxu0 0
        %6236 = vmatpush1.bf16.msra.mxu0 0
        %6237 = vmatprep.subr.bf16.mxu0 0
        %6238 = vmatpush1.bf16.msra.mxu0 0
        %6239 = vmatprep.subr.bf16.mxu0 0
        %6240 = vmatpush1.bf16.msra.mxu0 0
        %6241 = vmatprep.subr.bf16.mxu0 0
        %6242 = vmatpush1.bf16.msra.mxu0 0
        %6243 = vmatprep.mubr.bf16.mxu0 0
        %6244 = vmatmul.mubr.bf16.gmra.mrb[0].mxu0 %v6209
        %v6245 = vpop.f32.mrb[0].mxu0
        %v6246 = vadd.f32 0.0, %v6245
        %v6247 = vpop.f32.mrb[0].mxu0
        %v6248 = vadd.f32 0.0, %v6247
        %v6249 = vpop.f32.mrb[0].mxu0
        %v6250 = vadd.f32 0.0, %v6249
        %v6251 = vpop.f32.mrb[0].mxu0
        %v6252 = vadd.f32 0.0, %v6251
        %6253 = vdwg.mxu0
        %v6254 = vpack.c.bf16 %v6250, %v6246
        %v6255 = vpack.c.bf16 %v6252, %v6248
        %6256 = vst [vmem:[#allocation3 + $0x30] sm:$0xff] %v6254
        %6257 = vst [vmem:[#allocation3 + $0x38] sm:$0xff] %v6255
        %s6258 = scalar_lea.vmem %s5, 96
        %v6259 = vld [vmem:[%s6258] sm:$0xf]
        %v6260 = vld [vmem:[%s6258 + $0x4] sm:$0xf]
        %v6261 = vld [vmem:[%s6258 + $0x8] sm:$0xf]
        %v6262 = vld [vmem:[%s6258 + $0xc] sm:$0xf]
        %v6263 = vld [vmem:[%s6258 + $0x10] sm:$0xf]
        %v6264 = vld [vmem:[%s6258 + $0x14] sm:$0xf]
        %v6265 = vld [vmem:[%s6258 + $0x18] sm:$0xf]
        %v6266 = vld [vmem:[%s6258 + $0x1c] sm:$0xf]
        %v6267 = vld [vmem:[#allocation3] sm:$0xff]
        %v6268 = vld [vmem:[#allocation3 + $0x8] sm:$0xff]
        %v6269 = vld [vmem:[#allocation3 + $0x10] sm:$0xff]
        %v6270 = vld [vmem:[#allocation3 + $0x18] sm:$0xff]
        %v6271 = vld [vmem:[#allocation3 + $0x20] sm:$0xff]
        %v6272 = vld [vmem:[#allocation3 + $0x28] sm:$0xff]
        %v6273 = vld [vmem:[#allocation3 + $0x30] sm:$0xff]
        %v6274 = vld [vmem:[#allocation3 + $0x38] sm:$0xff]
        %v6275 = vld [vmem:[%s2] sm:$0xff]
        %v6276 = vld [vmem:[%s2 + $0x8] sm:$0xff]
        %v6277 = vld [vmem:[%s2 + $0x10] sm:$0xff]
        %v6278 = vld [vmem:[%s2 + $0x18] sm:$0xff]
        %v6279 = vld [vmem:[%s2 + $0x20] sm:$0xff]
        %v6280 = vld [vmem:[%s2 + $0x28] sm:$0xff]
        %v6281 = vld [vmem:[%s2 + $0x30] sm:$0xff]
        %v6282 = vld [vmem:[%s2 + $0x38] sm:$0xff]
        %6284 = vset.pattern.permute.xlu0 8
        %6285 = vperm.xlu0 %6284, %v6275
        %v6286 = vpop.permute.xlu0 %6285
        %6289 = vset.pattern.permute.xlu0 8
        %6290 = vperm.xlu0 %6289, %v6276
        %v6291 = vpop.permute.xlu0 %6290
        %6294 = vset.pattern.permute.xlu0 8
        %6295 = vperm.xlu0 %6294, %v6277
        %v6296 = vpop.permute.xlu0 %6295
        %6299 = vset.pattern.permute.xlu0 8
        %6300 = vperm.xlu0 %6299, %v6278
        %v6301 = vpop.permute.xlu0 %6300
        %6304 = vset.pattern.permute.xlu0 8
        %6305 = vperm.xlu0 %6304, %v6279
        %v6306 = vpop.permute.xlu0 %6305
        %6309 = vset.pattern.permute.xlu0 8
        %6310 = vperm.xlu0 %6309, %v6280
        %v6311 = vpop.permute.xlu0 %6310
        %6314 = vset.pattern.permute.xlu0 8
        %6315 = vperm.xlu0 %6314, %v6281
        %v6316 = vpop.permute.xlu0 %6315
        %6319 = vset.pattern.permute.xlu0 8
        %6320 = vperm.xlu0 %6319, %v6282
        %v6321 = vpop.permute.xlu0 %6320
        %v6331 = vunpack.c.l.b16 %v6259
        %v6332 = vunpack.c.l.b16 %v6260
        %v6333 = vunpack.c.l.b16 %v6261
        %v6334 = vunpack.c.l.b16 %v6262
        %v6335 = vunpack.c.l.b16 %v6263
        %v6336 = vunpack.c.l.b16 %v6264
        %v6337 = vunpack.c.l.b16 %v6265
        %v6338 = vunpack.c.l.b16 %v6266
        %v6339 = vpack.c.b16 %v6332, %v6331
        %v6340 = vpack.c.b16 %v6334, %v6333
        %v6341 = vpack.c.b16 %v6336, %v6335
        %v6342 = vpack.c.b16 %v6338, %v6337
        %v6344 = vsel %vm431, %v6339, 0
        %v6347 = vsel %vm431, %v6340, 0
        %v6350 = vsel %vm431, %v6341, 0
        %v6353 = vsel %vm431, %v6342, 0
        %6355 = vmatprep.subr.bf16.mxu0 %v6268
        %6356 = vmatpush1.bf16.msra.mxu0 %v6267
        %6357 = vmatprep.subr.bf16.mxu0 %v6270
        %6358 = vmatpush1.bf16.msra.mxu0 %v6269
        %6359 = vmatprep.subr.bf16.mxu0 %v6272
        %6360 = vmatpush1.bf16.msra.mxu0 %v6271
        %6361 = vmatprep.subr.bf16.mxu0 %v6274
        %6362 = vmatpush1.bf16.msra.mxu0 %v6273
        %6363 = vmatprep.subr.bf16.mxu0 0
        %6364 = vmatpush1.bf16.msra.mxu0 0
        %6365 = vmatprep.subr.bf16.mxu0 0
        %6366 = vmatpush1.bf16.msra.mxu0 0
        %6367 = vmatprep.subr.bf16.mxu0 0
        %6368 = vmatpush1.bf16.msra.mxu0 0
        %6369 = vmatprep.subr.bf16.mxu0 0
        %6370 = vmatpush1.bf16.msra.mxu0 0
        %6371 = vmatprep.subr.bf16.mxu0 0
        %6372 = vmatpush1.bf16.msra.mxu0 0
        %6373 = vmatprep.subr.bf16.mxu0 0
        %6374 = vmatpush1.bf16.msra.mxu0 0
        %6375 = vmatprep.subr.bf16.mxu0 0
        %6376 = vmatpush1.bf16.msra.mxu0 0
        %6377 = vmatprep.subr.bf16.mxu0 0
        %6378 = vmatpush1.bf16.msra.mxu0 0
        %6379 = vmatprep.subr.bf16.mxu0 0
        %6380 = vmatpush1.bf16.msra.mxu0 0
        %6381 = vmatprep.subr.bf16.mxu0 0
        %6382 = vmatpush1.bf16.msra.mxu0 0
        %6383 = vmatprep.subr.bf16.mxu0 0
        %6384 = vmatpush1.bf16.msra.mxu0 0
        %6385 = vmatprep.subr.bf16.mxu0 0
        %6386 = vmatpush1.bf16.msra.mxu0 0
        %6387 = vmatprep.mubr.bf16.mxu0 0
        %6388 = vmatmul.mubr.bf16.gmra.mrb[0].mxu0 %v6344
        %v6389 = vpop.f32.mrb[0].mxu0
        %v6390 = vadd.f32 %v6286, %v6389
        %v6391 = vpop.f32.mrb[0].mxu0
        %v6392 = vadd.f32 %v6286, %v6391
        %v6393 = vpop.f32.mrb[0].mxu0
        %v6394 = vadd.f32 %v6291, %v6393
        %v6395 = vpop.f32.mrb[0].mxu0
        %v6396 = vadd.f32 %v6291, %v6395
        %6397 = vmatprep.mubr.bf16.mxu0 0
        %6398 = vmatmul.mubr.bf16.gmra.mrb[0].mxu0 %v6347
        %v6399 = vpop.f32.mrb[0].mxu0
        %v6400 = vadd.f32 %v6296, %v6399
        %v6401 = vpop.f32.mrb[0].mxu0
        %v6402 = vadd.f32 %v6296, %v6401
        %v6403 = vpop.f32.mrb[0].mxu0
        %v6404 = vadd.f32 %v6301, %v6403
        %v6405 = vpop.f32.mrb[0].mxu0
        %v6406 = vadd.f32 %v6301, %v6405
        %6407 = vmatprep.mubr.bf16.mxu0 0
        %6408 = vmatmul.mubr.bf16.gmra.mrb[0].mxu0 %v6350
        %v6409 = vpop.f32.mrb[0].mxu0
        %v6410 = vadd.f32 %v6306, %v6409
        %v6411 = vpop.f32.mrb[0].mxu0
        %v6412 = vadd.f32 %v6306, %v6411
        %v6413 = vpop.f32.mrb[0].mxu0
        %v6414 = vadd.f32 %v6311, %v6413
        %v6415 = vpop.f32.mrb[0].mxu0
        %v6416 = vadd.f32 %v6311, %v6415
        %6417 = vmatprep.mubr.bf16.mxu0 0
        %6418 = vmatmul.mubr.bf16.gmra.mrb[0].mxu0 %v6353
        %v6419 = vpop.f32.mrb[0].mxu0
        %v6420 = vadd.f32 %v6316, %v6419
        %v6421 = vpop.f32.mrb[0].mxu0
        %v6422 = vadd.f32 %v6316, %v6421
        %v6423 = vpop.f32.mrb[0].mxu0
        %v6424 = vadd.f32 %v6321, %v6423
        %v6425 = vpop.f32.mrb[0].mxu0
        %v6426 = vadd.f32 %v6321, %v6425
        %6427 = vdwg.mxu0
        %v6428 = vadd.f32 %v6390, %v5075
        %v6429 = vadd.f32 %v6392, %v5076
        %v6430 = vadd.f32 %v6394, %v5077
        %v6431 = vadd.f32 %v6396, %v5078
        %v6432 = vadd.f32 %v6400, %v5079
        %v6433 = vadd.f32 %v6402, %v5080
        %v6434 = vadd.f32 %v6404, %v5081
        %v6435 = vadd.f32 %v6406, %v5082
        %v6436 = vadd.f32 %v6410, %v5083
        %v6437 = vadd.f32 %v6412, %v5084
        %v6438 = vadd.f32 %v6414, %v5085
        %v6439 = vadd.f32 %v6416, %v5086
        %v6440 = vadd.f32 %v6420, %v5087
        %v6441 = vadd.f32 %v6422, %v5088
        %v6442 = vadd.f32 %v6424, %v5089
        %v6443 = vadd.f32 %v6426, %v5090
        %v6444 = vadd.f32 %v6428, %v6430
        %v6445 = vadd.f32 %v6444, %v6432
        %v6446 = vadd.f32 %v6445, %v6434
        %v6447 = vadd.f32 %v6446, %v6436
        %v6448 = vadd.f32 %v6447, %v6438
        %v6449 = vadd.f32 %v6448, %v6440
        %v6450 = vadd.f32 %v6449, %v6442
        %v6451 = vrot.slane %v6450, 4
        %v6452 = vadd.f32 %v6450, %v6451
        %v6453 = vrot.slane %v6452, 2
        %v6454 = vadd.f32 %v6452, %v6453
        %v6455 = vrot.slane %v6454, 1
        %v6456 = vadd.f32 %v6454, %v6455
        %v6457 = vadd.f32 %v6429, %v6431
        %v6458 = vadd.f32 %v6457, %v6433
        %v6459 = vadd.f32 %v6458, %v6435
        %v6460 = vadd.f32 %v6459, %v6437
        %v6461 = vadd.f32 %v6460, %v6439
        %v6462 = vadd.f32 %v6461, %v6441
        %v6463 = vadd.f32 %v6462, %v6443
        %v6464 = vrot.slane %v6463, 4
        %v6465 = vadd.f32 %v6463, %v6464
        %v6466 = vrot.slane %v6465, 2
        %v6467 = vadd.f32 %v6465, %v6466
        %v6468 = vrot.slane %v6467, 1
        %v6469 = vadd.f32 %v6467, %v6468
        %v6470 = vmul.f32 %v6456, %v1340
        %v6471 = vmul.f32 %v6469, %v1340
        %v6472 = vsub.f32 %v6428, %v6470
        %v6473 = vsub.f32 %v6429, %v6471
        %v6474 = vsub.f32 %v6430, %v6470
        %v6475 = vsub.f32 %v6431, %v6471
        %v6476 = vsub.f32 %v6432, %v6470
        %v6477 = vsub.f32 %v6433, %v6471
        %v6478 = vsub.f32 %v6434, %v6470
        %v6479 = vsub.f32 %v6435, %v6471
        %v6480 = vsub.f32 %v6436, %v6470
        %v6481 = vsub.f32 %v6437, %v6471
        %v6482 = vsub.f32 %v6438, %v6470
        %v6483 = vsub.f32 %v6439, %v6471
        %v6484 = vsub.f32 %v6440, %v6470
        %v6485 = vsub.f32 %v6441, %v6471
        %v6486 = vsub.f32 %v6442, %v6470
        %v6487 = vsub.f32 %v6443, %v6471
        %v6488 = vmul.f32 %v6472, %v6472
        %v6489 = vmul.f32 %v6473, %v6473
        %v6490 = vmul.f32 %v6474, %v6474
        %v6491 = vmul.f32 %v6475, %v6475
        %v6492 = vmul.f32 %v6476, %v6476
        %v6493 = vmul.f32 %v6477, %v6477
        %v6494 = vmul.f32 %v6478, %v6478
        %v6495 = vmul.f32 %v6479, %v6479
        %v6496 = vmul.f32 %v6480, %v6480
        %v6497 = vmul.f32 %v6481, %v6481
        %v6498 = vmul.f32 %v6482, %v6482
        %v6499 = vmul.f32 %v6483, %v6483
        %v6500 = vmul.f32 %v6484, %v6484
        %v6501 = vmul.f32 %v6485, %v6485
        %v6502 = vmul.f32 %v6486, %v6486
        %v6503 = vmul.f32 %v6487, %v6487
        %v6504 = vadd.f32 %v6488, %v6490
        %v6505 = vadd.f32 %v6504, %v6492
        %v6506 = vadd.f32 %v6505, %v6494
        %v6507 = vadd.f32 %v6506, %v6496
        %v6508 = vadd.f32 %v6507, %v6498
        %v6509 = vadd.f32 %v6508, %v6500
        %v6510 = vadd.f32 %v6509, %v6502
        %v6511 = vrot.slane %v6510, 4
        %v6512 = vadd.f32 %v6510, %v6511
        %v6513 = vrot.slane %v6512, 2
        %v6514 = vadd.f32 %v6512, %v6513
        %v6515 = vrot.slane %v6514, 1
        %v6516 = vadd.f32 %v6514, %v6515
        %v6517 = vadd.f32 %v6489, %v6491
        %v6518 = vadd.f32 %v6517, %v6493
        %v6519 = vadd.f32 %v6518, %v6495
        %v6520 = vadd.f32 %v6519, %v6497
        %v6521 = vadd.f32 %v6520, %v6499
        %v6522 = vadd.f32 %v6521, %v6501
        %v6523 = vadd.f32 %v6522, %v6503
        %v6524 = vrot.slane %v6523, 4
        %v6525 = vadd.f32 %v6523, %v6524
        %v6526 = vrot.slane %v6525, 2
        %v6527 = vadd.f32 %v6525, %v6526
        %v6528 = vrot.slane %v6527, 1
        %v6529 = vadd.f32 %v6527, %v6528
        %v6530 = vmul.f32 %v6516, %v1340
        %v6531 = vmul.f32 %v6529, %v1340
        %v6532 = vadd.f32 %v6530, 1e-05
        %v6533 = vadd.f32 %v6531, 1e-05
        %v6534 = vrsqrt.pop %v6532
        %v6535 = vrsqrt.pop %v6533
        %v6536 = vmul.f32 %v6472, %v6534
        %v6537 = vmul.f32 %v6473, %v6535
        %v6538 = vmul.f32 %v6474, %v6534
        %v6539 = vmul.f32 %v6475, %v6535
        %v6540 = vmul.f32 %v6476, %v6534
        %v6541 = vmul.f32 %v6477, %v6535
        %v6542 = vmul.f32 %v6478, %v6534
        %v6543 = vmul.f32 %v6479, %v6535
        %v6544 = vmul.f32 %v6480, %v6534
        %v6545 = vmul.f32 %v6481, %v6535
        %v6546 = vmul.f32 %v6482, %v6534
        %v6547 = vmul.f32 %v6483, %v6535
        %v6548 = vmul.f32 %v6484, %v6534
        %v6549 = vmul.f32 %v6485, %v6535
        %v6550 = vmul.f32 %v6486, %v6534
        %v6551 = vmul.f32 %v6487, %v6535
        %6552 = vset.pattern.permute.xlu0 9
        %6553 = vperm.xlu0 %6552, %v6275
        %v6554 = vpop.permute.xlu0 %6553
        %6556 = vset.pattern.permute.xlu0 9
        %6557 = vperm.xlu0 %6556, %v6276
        %v6558 = vpop.permute.xlu0 %6557
        %6560 = vset.pattern.permute.xlu0 9
        %6561 = vperm.xlu0 %6560, %v6277
        %v6562 = vpop.permute.xlu0 %6561
        %6564 = vset.pattern.permute.xlu0 9
        %6565 = vperm.xlu0 %6564, %v6278
        %v6566 = vpop.permute.xlu0 %6565
        %6568 = vset.pattern.permute.xlu0 9
        %6569 = vperm.xlu0 %6568, %v6279
        %v6570 = vpop.permute.xlu0 %6569
        %6572 = vset.pattern.permute.xlu0 9
        %6573 = vperm.xlu0 %6572, %v6280
        %v6574 = vpop.permute.xlu0 %6573
        %6576 = vset.pattern.permute.xlu0 9
        %6577 = vperm.xlu0 %6576, %v6281
        %v6578 = vpop.permute.xlu0 %6577
        %6580 = vset.pattern.permute.xlu0 9
        %6581 = vperm.xlu0 %6580, %v6282
        %v6582 = vpop.permute.xlu0 %6581
        %v6584 = vmul.f32 %v6536, %v6554
        %v6585 = vmul.f32 %v6537, %v6554
        %v6586 = vmul.f32 %v6538, %v6558
        %v6587 = vmul.f32 %v6539, %v6558
        %v6588 = vmul.f32 %v6540, %v6562
        %v6589 = vmul.f32 %v6541, %v6562
        %v6590 = vmul.f32 %v6542, %v6566
        %v6591 = vmul.f32 %v6543, %v6566
        %v6592 = vmul.f32 %v6544, %v6570
        %v6593 = vmul.f32 %v6545, %v6570
        %v6594 = vmul.f32 %v6546, %v6574
        %v6595 = vmul.f32 %v6547, %v6574
        %v6596 = vmul.f32 %v6548, %v6578
        %v6597 = vmul.f32 %v6549, %v6578
        %v6598 = vmul.f32 %v6550, %v6582
        %v6599 = vmul.f32 %v6551, %v6582
        %6600 = vset.pattern.permute.xlu0 10
        %6601 = vperm.xlu0 %6600, %v6275
        %v6602 = vpop.permute.xlu0 %6601
        %6604 = vset.pattern.permute.xlu0 10
        %6605 = vperm.xlu0 %6604, %v6276
        %v6606 = vpop.permute.xlu0 %6605
        %6608 = vset.pattern.permute.xlu0 10
        %6609 = vperm.xlu0 %6608, %v6277
        %v6610 = vpop.permute.xlu0 %6609
        %6612 = vset.pattern.permute.xlu0 10
        %6613 = vperm.xlu0 %6612, %v6278
        %v6614 = vpop.permute.xlu0 %6613
        %6616 = vset.pattern.permute.xlu0 10
        %6617 = vperm.xlu0 %6616, %v6279
        %v6618 = vpop.permute.xlu0 %6617
        %6620 = vset.pattern.permute.xlu0 10
        %6621 = vperm.xlu0 %6620, %v6280
        %v6622 = vpop.permute.xlu0 %6621
        %6624 = vset.pattern.permute.xlu0 10
        %6625 = vperm.xlu0 %6624, %v6281
        %v6626 = vpop.permute.xlu0 %6625
        %6628 = vset.pattern.permute.xlu0 10
        %6629 = vperm.xlu0 %6628, %v6282
        %v6630 = vpop.permute.xlu0 %6629
        %v6632 = vadd.f32 %v6584, %v6602
        %v6633 = vadd.f32 %v6585, %v6602
        %v6634 = vadd.f32 %v6586, %v6606
        %v6635 = vadd.f32 %v6587, %v6606
        %v6636 = vadd.f32 %v6588, %v6610
        %v6637 = vadd.f32 %v6589, %v6610
        %v6638 = vadd.f32 %v6590, %v6614
        %v6639 = vadd.f32 %v6591, %v6614
        %v6640 = vadd.f32 %v6592, %v6618
        %v6641 = vadd.f32 %v6593, %v6618
        %v6642 = vadd.f32 %v6594, %v6622
        %v6643 = vadd.f32 %v6595, %v6622
        %v6644 = vadd.f32 %v6596, %v6626
        %v6645 = vadd.f32 %v6597, %v6626
        %v6646 = vadd.f32 %v6598, %v6630
        %v6647 = vadd.f32 %v6599, %v6630
        %v6648 = vpack.c.bf16 %v6634, %v6632
        %v6649 = vpack.c.bf16 %v6635, %v6633
        %v6650 = vpack.c.bf16 %v6638, %v6636
        %v6651 = vpack.c.bf16 %v6639, %v6637
        %v6652 = vpack.c.bf16 %v6642, %v6640
        %v6653 = vpack.c.bf16 %v6643, %v6641
        %v6654 = vpack.c.bf16 %v6646, %v6644
        %v6655 = vpack.c.bf16 %v6647, %v6645
        %v6656 = vld [vmem:[%s8] sm:$0xf]
        %v6657 = vld [vmem:[%s8 + $0x4] sm:$0xf]
        %v6658 = vld [vmem:[%s8 + $0x8] sm:$0xf]
        %v6659 = vld [vmem:[%s8 + $0xc] sm:$0xf]
        %v6660 = vld [vmem:[%s8 + $0x10] sm:$0xf]
        %v6661 = vld [vmem:[%s8 + $0x14] sm:$0xf]
        %v6662 = vld [vmem:[%s8 + $0x18] sm:$0xf]
        %v6663 = vld [vmem:[%s8 + $0x1c] sm:$0xf]
        %v6664 = vld [vmem:[%s8 + $0x20] sm:$0xf]
        %v6665 = vld [vmem:[%s8 + $0x24] sm:$0xf]
        %v6666 = vld [vmem:[%s8 + $0x28] sm:$0xf]
        %v6667 = vld [vmem:[%s8 + $0x2c] sm:$0xf]
        %v6668 = vld [vmem:[%s8 + $0x30] sm:$0xf]
        %v6669 = vld [vmem:[%s8 + $0x34] sm:$0xf]
        %v6670 = vld [vmem:[%s8 + $0x38] sm:$0xf]
        %v6671 = vld [vmem:[%s8 + $0x3c] sm:$0xf]
        %v6672 = vld [vmem:[%s8 + $0x40] sm:$0xf]
        %v6673 = vld [vmem:[%s8 + $0x44] sm:$0xf]
        %v6674 = vld [vmem:[%s8 + $0x48] sm:$0xf]
        %v6675 = vld [vmem:[%s8 + $0x4c] sm:$0xf]
        %v6676 = vld [vmem:[%s8 + $0x50] sm:$0xf]
        %v6677 = vld [vmem:[%s8 + $0x54] sm:$0xf]
        %v6678 = vld [vmem:[%s8 + $0x58] sm:$0xf]
        %v6679 = vld [vmem:[%s8 + $0x5c] sm:$0xf]
        %v6680 = vld [vmem:[%s8 + $0x60] sm:$0xf]
        %v6681 = vld [vmem:[%s8 + $0x64] sm:$0xf]
        %v6682 = vld [vmem:[%s8 + $0x68] sm:$0xf]
        %v6683 = vld [vmem:[%s8 + $0x6c] sm:$0xf]
        %v6684 = vld [vmem:[%s8 + $0x70] sm:$0xf]
        %v6685 = vld [vmem:[%s8 + $0x74] sm:$0xf]
        %v6686 = vld [vmem:[%s8 + $0x78] sm:$0xf]
        %v6687 = vld [vmem:[%s8 + $0x7c] sm:$0xf]
        %v6688 = vld [vmem:[%s2] sm:$0xff]
        %v6689 = vld [vmem:[%s2 + $0x8] sm:$0xff]
        %v6690 = vld [vmem:[%s2 + $0x10] sm:$0xff]
        %v6691 = vld [vmem:[%s2 + $0x18] sm:$0xff]
        %v6692 = vld [vmem:[%s2 + $0x20] sm:$0xff]
        %v6693 = vld [vmem:[%s2 + $0x28] sm:$0xff]
        %v6694 = vld [vmem:[%s2 + $0x30] sm:$0xff]
        %v6695 = vld [vmem:[%s2 + $0x38] sm:$0xff]
        %v6696 = vld [vmem:[%s2 + $0x40] sm:$0xff]
        %v6697 = vld [vmem:[%s2 + $0x48] sm:$0xff]
        %v6698 = vld [vmem:[%s2 + $0x50] sm:$0xff]
        %v6699 = vld [vmem:[%s2 + $0x58] sm:$0xff]
        %v6700 = vld [vmem:[%s2 + $0x60] sm:$0xff]
        %v6701 = vld [vmem:[%s2 + $0x68] sm:$0xff]
        %v6702 = vld [vmem:[%s2 + $0x70] sm:$0xff]
        %v6703 = vld [vmem:[%s2 + $0x78] sm:$0xff]
        %v6704 = vld [vmem:[%s2 + $0x80] sm:$0xff]
        %v6705 = vld [vmem:[%s2 + $0x88] sm:$0xff]
        %v6706 = vld [vmem:[%s2 + $0x90] sm:$0xff]
        %v6707 = vld [vmem:[%s2 + $0x98] sm:$0xff]
        %v6708 = vld [vmem:[%s2 + $0xa0] sm:$0xff]
        %v6709 = vld [vmem:[%s2 + $0xa8] sm:$0xff]
        %v6710 = vld [vmem:[%s2 + $0xb0] sm:$0xff]
        %v6711 = vld [vmem:[%s2 + $0xb8] sm:$0xff]
        %v6712 = vld [vmem:[%s2 + $0xc0] sm:$0xff]
        %v6713 = vld [vmem:[%s2 + $0xc8] sm:$0xff]
        %v6714 = vld [vmem:[%s2 + $0xd0] sm:$0xff]
        %v6715 = vld [vmem:[%s2 + $0xd8] sm:$0xff]
        %v6716 = vld [vmem:[%s2 + $0xe0] sm:$0xff]
        %v6717 = vld [vmem:[%s2 + $0xe8] sm:$0xff]
        %v6718 = vld [vmem:[%s2 + $0xf0] sm:$0xff]
        %v6719 = vld [vmem:[%s2 + $0xf8] sm:$0xff]
        %6721 = vset.pattern.permute.xlu0 13
        %6722 = vperm.xlu0 %6721, %v6688
        %v6723 = vpop.permute.xlu0 %6722
        %6726 = vset.pattern.permute.xlu0 13
        %6727 = vperm.xlu0 %6726, %v6689
        %v6728 = vpop.permute.xlu0 %6727
        %6731 = vset.pattern.permute.xlu0 13
        %6732 = vperm.xlu0 %6731, %v6690
        %v6733 = vpop.permute.xlu0 %6732
        %6736 = vset.pattern.permute.xlu0 13
        %6737 = vperm.xlu0 %6736, %v6691
        %v6738 = vpop.permute.xlu0 %6737
        %6741 = vset.pattern.permute.xlu0 13
        %6742 = vperm.xlu0 %6741, %v6692
        %v6743 = vpop.permute.xlu0 %6742
        %6746 = vset.pattern.permute.xlu0 13
        %6747 = vperm.xlu0 %6746, %v6693
        %v6748 = vpop.permute.xlu0 %6747
        %6751 = vset.pattern.permute.xlu0 13
        %6752 = vperm.xlu0 %6751, %v6694
        %v6753 = vpop.permute.xlu0 %6752
        %6756 = vset.pattern.permute.xlu0 13
        %6757 = vperm.xlu0 %6756, %v6695
        %v6758 = vpop.permute.xlu0 %6757
        %6761 = vset.pattern.permute.xlu0 13
        %6762 = vperm.xlu0 %6761, %v6696
        %v6763 = vpop.permute.xlu0 %6762
        %6766 = vset.pattern.permute.xlu0 13
        %6767 = vperm.xlu0 %6766, %v6697
        %v6768 = vpop.permute.xlu0 %6767
        %6771 = vset.pattern.permute.xlu0 13
        %6772 = vperm.xlu0 %6771, %v6698
        %v6773 = vpop.permute.xlu0 %6772
        %6776 = vset.pattern.permute.xlu0 13
        %6777 = vperm.xlu0 %6776, %v6699
        %v6778 = vpop.permute.xlu0 %6777
        %6781 = vset.pattern.permute.xlu0 13
        %6782 = vperm.xlu0 %6781, %v6700
        %v6783 = vpop.permute.xlu0 %6782
        %6786 = vset.pattern.permute.xlu0 13
        %6787 = vperm.xlu0 %6786, %v6701
        %v6788 = vpop.permute.xlu0 %6787
        %6791 = vset.pattern.permute.xlu0 13
        %6792 = vperm.xlu0 %6791, %v6702
        %v6793 = vpop.permute.xlu0 %6792
        %6796 = vset.pattern.permute.xlu0 13
        %6797 = vperm.xlu0 %6796, %v6703
        %v6798 = vpop.permute.xlu0 %6797
        %6801 = vset.pattern.permute.xlu0 13
        %6802 = vperm.xlu0 %6801, %v6704
        %v6803 = vpop.permute.xlu0 %6802
        %6806 = vset.pattern.permute.xlu0 13
        %6807 = vperm.xlu0 %6806, %v6705
        %v6808 = vpop.permute.xlu0 %6807
        %6811 = vset.pattern.permute.xlu0 13
        %6812 = vperm.xlu0 %6811, %v6706
        %v6813 = vpop.permute.xlu0 %6812
        %6816 = vset.pattern.permute.xlu0 13
        %6817 = vperm.xlu0 %6816, %v6707
        %v6818 = vpop.permute.xlu0 %6817
        %6821 = vset.pattern.permute.xlu0 13
        %6822 = vperm.xlu0 %6821, %v6708
        %v6823 = vpop.permute.xlu0 %6822
        %6826 = vset.pattern.permute.xlu0 13
        %6827 = vperm.xlu0 %6826, %v6709
        %v6828 = vpop.permute.xlu0 %6827
        %6831 = vset.pattern.permute.xlu0 13
        %6832 = vperm.xlu0 %6831, %v6710
        %v6833 = vpop.permute.xlu0 %6832
        %6836 = vset.pattern.permute.xlu0 13
        %6837 = vperm.xlu0 %6836, %v6711
        %v6838 = vpop.permute.xlu0 %6837
        %6841 = vset.pattern.permute.xlu0 13
        %6842 = vperm.xlu0 %6841, %v6712
        %v6843 = vpop.permute.xlu0 %6842
        %6846 = vset.pattern.permute.xlu0 13
        %6847 = vperm.xlu0 %6846, %v6713
        %v6848 = vpop.permute.xlu0 %6847
        %6851 = vset.pattern.permute.xlu0 13
        %6852 = vperm.xlu0 %6851, %v6714
        %v6853 = vpop.permute.xlu0 %6852
        %6856 = vset.pattern.permute.xlu0 13
        %6857 = vperm.xlu0 %6856, %v6715
        %v6858 = vpop.permute.xlu0 %6857
        %6861 = vset.pattern.permute.xlu0 13
        %6862 = vperm.xlu0 %6861, %v6716
        %v6863 = vpop.permute.xlu0 %6862
        %6866 = vset.pattern.permute.xlu0 13
        %6867 = vperm.xlu0 %6866, %v6717
        %v6868 = vpop.permute.xlu0 %6867
        %6871 = vset.pattern.permute.xlu0 13
        %6872 = vperm.xlu0 %6871, %v6718
        %v6873 = vpop.permute.xlu0 %6872
        %6876 = vset.pattern.permute.xlu0 13
        %6877 = vperm.xlu0 %6876, %v6719
        %v6878 = vpop.permute.xlu0 %6877
        %v6912 = vunpack.c.l.b16 %v6656
        %v6913 = vunpack.c.l.b16 %v6657
        %v6914 = vunpack.c.l.b16 %v6658
        %v6915 = vunpack.c.l.b16 %v6659
        %v6916 = vunpack.c.l.b16 %v6660
        %v6917 = vunpack.c.l.b16 %v6661
        %v6918 = vunpack.c.l.b16 %v6662
        %v6919 = vunpack.c.l.b16 %v6663
        %v6920 = vunpack.c.l.b16 %v6664
        %v6921 = vunpack.c.l.b16 %v6665
        %v6922 = vunpack.c.l.b16 %v6666
        %v6923 = vunpack.c.l.b16 %v6667
        %v6924 = vunpack.c.l.b16 %v6668
        %v6925 = vunpack.c.l.b16 %v6669
        %v6926 = vunpack.c.l.b16 %v6670
        %v6927 = vunpack.c.l.b16 %v6671
        %v6928 = vunpack.c.l.b16 %v6672
        %v6929 = vunpack.c.l.b16 %v6673
        %v6930 = vunpack.c.l.b16 %v6674
        %v6931 = vunpack.c.l.b16 %v6675
        %v6932 = vunpack.c.l.b16 %v6676
        %v6933 = vunpack.c.l.b16 %v6677
        %v6934 = vunpack.c.l.b16 %v6678
        %v6935 = vunpack.c.l.b16 %v6679
        %v6936 = vunpack.c.l.b16 %v6680
        %v6937 = vunpack.c.l.b16 %v6681
        %v6938 = vunpack.c.l.b16 %v6682
        %v6939 = vunpack.c.l.b16 %v6683
        %v6940 = vunpack.c.l.b16 %v6684
        %v6941 = vunpack.c.l.b16 %v6685
        %v6942 = vunpack.c.l.b16 %v6686
        %v6943 = vunpack.c.l.b16 %v6687
        %v6944 = vpack.c.b16 %v6913, %v6912
        %v6945 = vpack.c.b16 %v6915, %v6914
        %v6946 = vpack.c.b16 %v6917, %v6916
        %v6947 = vpack.c.b16 %v6919, %v6918
        %v6948 = vpack.c.b16 %v6921, %v6920
        %v6949 = vpack.c.b16 %v6923, %v6922
        %v6950 = vpack.c.b16 %v6925, %v6924
        %v6951 = vpack.c.b16 %v6927, %v6926
        %v6952 = vpack.c.b16 %v6929, %v6928
        %v6953 = vpack.c.b16 %v6931, %v6930
        %v6954 = vpack.c.b16 %v6933, %v6932
        %v6955 = vpack.c.b16 %v6935, %v6934
        %v6956 = vpack.c.b16 %v6937, %v6936
        %v6957 = vpack.c.b16 %v6939, %v6938
        %v6958 = vpack.c.b16 %v6941, %v6940
        %v6959 = vpack.c.b16 %v6943, %v6942
        %v6961 = vsel %vm431, %v6944, 0
        %v6964 = vsel %vm431, %v6945, 0
        %v6967 = vsel %vm431, %v6946, 0
        %v6970 = vsel %vm431, %v6947, 0
        %v6973 = vsel %vm431, %v6948, 0
        %v6976 = vsel %vm431, %v6949, 0
        %v6979 = vsel %vm431, %v6950, 0
        %v6982 = vsel %vm431, %v6951, 0
        %v6985 = vsel %vm431, %v6952, 0
        %v6988 = vsel %vm431, %v6953, 0
        %v6991 = vsel %vm431, %v6954, 0
        %v6994 = vsel %vm431, %v6955, 0
        %v6997 = vsel %vm431, %v6956, 0
        %v7000 = vsel %vm431, %v6957, 0
        %v7003 = vsel %vm431, %v6958, 0
        %v7006 = vsel %vm431, %v6959, 0
        %7008 = vmatprep.subr.bf16.mxu0 %v6649
        %7009 = vmatpush1.bf16.msra.mxu0 %v6648
        %7010 = vmatprep.subr.bf16.mxu0 %v6651
        %7011 = vmatpush1.bf16.msra.mxu0 %v6650
        %7012 = vmatprep.subr.bf16.mxu0 %v6653
        %7013 = vmatpush1.bf16.msra.mxu0 %v6652
        %7014 = vmatprep.subr.bf16.mxu0 %v6655
        %7015 = vmatpush1.bf16.msra.mxu0 %v6654
        %7016 = vmatprep.subr.bf16.mxu0 0
        %7017 = vmatpush1.bf16.msra.mxu0 0
        %7018 = vmatprep.subr.bf16.mxu0 0
        %7019 = vmatpush1.bf16.msra.mxu0 0
        %7020 = vmatprep.subr.bf16.mxu0 0
        %7021 = vmatpush1.bf16.msra.mxu0 0
        %7022 = vmatprep.subr.bf16.mxu0 0
        %7023 = vmatpush1.bf16.msra.mxu0 0
        %7024 = vmatprep.subr.bf16.mxu0 0
        %7025 = vmatpush1.bf16.msra.mxu0 0
        %7026 = vmatprep.subr.bf16.mxu0 0
        %7027 = vmatpush1.bf16.msra.mxu0 0
        %7028 = vmatprep.subr.bf16.mxu0 0
        %7029 = vmatpush1.bf16.msra.mxu0 0
        %7030 = vmatprep.subr.bf16.mxu0 0
        %7031 = vmatpush1.bf16.msra.mxu0 0
        %7032 = vmatprep.subr.bf16.mxu0 0
        %7033 = vmatpush1.bf16.msra.mxu0 0
        %7034 = vmatprep.subr.bf16.mxu0 0
        %7035 = vmatpush1.bf16.msra.mxu0 0
        %7036 = vmatprep.subr.bf16.mxu0 0
        %7037 = vmatpush1.bf16.msra.mxu0 0
        %7038 = vmatprep.subr.bf16.mxu0 0
        %7039 = vmatpush1.bf16.msra.mxu0 0
        %7040 = vmatprep.mubr.bf16.mxu0 0
        %7041 = vmatmul.mubr.bf16.gmra.mrb[0].mxu0 %v6961
        %v7042 = vpop.f32.mrb[0].mxu0
        %v7043 = vadd.f32 %v6723, %v7042
        %v7044 = vpop.f32.mrb[0].mxu0
        %v7045 = vadd.f32 %v6723, %v7044
        %v7046 = vpop.f32.mrb[0].mxu0
        %v7047 = vadd.f32 %v6728, %v7046
        %v7048 = vpop.f32.mrb[0].mxu0
        %v7049 = vadd.f32 %v6728, %v7048
        %7050 = vmatprep.mubr.bf16.mxu0 0
        %7051 = vmatmul.mubr.bf16.gmra.mrb[0].mxu0 %v6964
        %v7052 = vpop.f32.mrb[0].mxu0
        %v7053 = vadd.f32 %v6733, %v7052
        %v7054 = vpop.f32.mrb[0].mxu0
        %v7055 = vadd.f32 %v6733, %v7054
        %v7056 = vpop.f32.mrb[0].mxu0
        %v7057 = vadd.f32 %v6738, %v7056
        %v7058 = vpop.f32.mrb[0].mxu0
        %v7059 = vadd.f32 %v6738, %v7058
        %7060 = vmatprep.mubr.bf16.mxu0 0
        %7061 = vmatmul.mubr.bf16.gmra.mrb[0].mxu0 %v6967
        %v7062 = vpop.f32.mrb[0].mxu0
        %v7063 = vadd.f32 %v6743, %v7062
        %v7064 = vpop.f32.mrb[0].mxu0
        %v7065 = vadd.f32 %v6743, %v7064
        %v7066 = vpop.f32.mrb[0].mxu0
        %v7067 = vadd.f32 %v6748, %v7066
        %v7068 = vpop.f32.mrb[0].mxu0
        %v7069 = vadd.f32 %v6748, %v7068
        %7070 = vmatprep.mubr.bf16.mxu0 0
        %7071 = vmatmul.mubr.bf16.gmra.mrb[0].mxu0 %v6970
        %v7072 = vpop.f32.mrb[0].mxu0
        %v7073 = vadd.f32 %v6753, %v7072
        %v7074 = vpop.f32.mrb[0].mxu0
        %v7075 = vadd.f32 %v6753, %v7074
        %v7076 = vpop.f32.mrb[0].mxu0
        %v7077 = vadd.f32 %v6758, %v7076
        %v7078 = vpop.f32.mrb[0].mxu0
        %v7079 = vadd.f32 %v6758, %v7078
        %7080 = vmatprep.mubr.bf16.mxu0 0
        %7081 = vmatmul.mubr.bf16.gmra.mrb[0].mxu0 %v6973
        %v7082 = vpop.f32.mrb[0].mxu0
        %v7083 = vadd.f32 %v6763, %v7082
        %v7084 = vpop.f32.mrb[0].mxu0
        %v7085 = vadd.f32 %v6763, %v7084
        %v7086 = vpop.f32.mrb[0].mxu0
        %v7087 = vadd.f32 %v6768, %v7086
        %v7088 = vpop.f32.mrb[0].mxu0
        %v7089 = vadd.f32 %v6768, %v7088
        %7090 = vmatprep.mubr.bf16.mxu0 0
        %7091 = vmatmul.mubr.bf16.gmra.mrb[0].mxu0 %v6976
        %v7092 = vpop.f32.mrb[0].mxu0
        %v7093 = vadd.f32 %v6773, %v7092
        %v7094 = vpop.f32.mrb[0].mxu0
        %v7095 = vadd.f32 %v6773, %v7094
        %v7096 = vpop.f32.mrb[0].mxu0
        %v7097 = vadd.f32 %v6778, %v7096
        %v7098 = vpop.f32.mrb[0].mxu0
        %v7099 = vadd.f32 %v6778, %v7098
        %7100 = vmatprep.mubr.bf16.mxu0 0
        %7101 = vmatmul.mubr.bf16.gmra.mrb[0].mxu0 %v6979
        %v7102 = vpop.f32.mrb[0].mxu0
        %v7103 = vadd.f32 %v6783, %v7102
        %v7104 = vpop.f32.mrb[0].mxu0
        %v7105 = vadd.f32 %v6783, %v7104
        %v7106 = vpop.f32.mrb[0].mxu0
        %v7107 = vadd.f32 %v6788, %v7106
        %v7108 = vpop.f32.mrb[0].mxu0
        %v7109 = vadd.f32 %v6788, %v7108
        %7110 = vmatprep.mubr.bf16.mxu0 0
        %7111 = vmatmul.mubr.bf16.gmra.mrb[0].mxu0 %v6982
        %v7112 = vpop.f32.mrb[0].mxu0
        %v7113 = vadd.f32 %v6793, %v7112
        %v7114 = vpop.f32.mrb[0].mxu0
        %v7115 = vadd.f32 %v6793, %v7114
        %v7116 = vpop.f32.mrb[0].mxu0
        %v7117 = vadd.f32 %v6798, %v7116
        %v7118 = vpop.f32.mrb[0].mxu0
        %v7119 = vadd.f32 %v6798, %v7118
        %7120 = vmatprep.mubr.bf16.mxu0 0
        %7121 = vmatmul.mubr.bf16.gmra.mrb[0].mxu0 %v6985
        %v7122 = vpop.f32.mrb[0].mxu0
        %v7123 = vadd.f32 %v6803, %v7122
        %v7124 = vpop.f32.mrb[0].mxu0
        %v7125 = vadd.f32 %v6803, %v7124
        %v7126 = vpop.f32.mrb[0].mxu0
        %v7127 = vadd.f32 %v6808, %v7126
        %v7128 = vpop.f32.mrb[0].mxu0
        %v7129 = vadd.f32 %v6808, %v7128
        %7130 = vmatprep.mubr.bf16.mxu0 0
        %7131 = vmatmul.mubr.bf16.gmra.mrb[0].mxu0 %v6988
        %v7132 = vpop.f32.mrb[0].mxu0
        %v7133 = vadd.f32 %v6813, %v7132
        %v7134 = vpop.f32.mrb[0].mxu0
        %v7135 = vadd.f32 %v6813, %v7134
        %v7136 = vpop.f32.mrb[0].mxu0
        %v7137 = vadd.f32 %v6818, %v7136
        %v7138 = vpop.f32.mrb[0].mxu0
        %v7139 = vadd.f32 %v6818, %v7138
        %7140 = vmatprep.mubr.bf16.mxu0 0
        %7141 = vmatmul.mubr.bf16.gmra.mrb[0].mxu0 %v6991
        %v7142 = vpop.f32.mrb[0].mxu0
        %v7143 = vadd.f32 %v6823, %v7142
        %v7144 = vpop.f32.mrb[0].mxu0
        %v7145 = vadd.f32 %v6823, %v7144
        %v7146 = vpop.f32.mrb[0].mxu0
        %v7147 = vadd.f32 %v6828, %v7146
        %v7148 = vpop.f32.mrb[0].mxu0
        %v7149 = vadd.f32 %v6828, %v7148
        %7150 = vmatprep.mubr.bf16.mxu0 0
        %7151 = vmatmul.mubr.bf16.gmra.mrb[0].mxu0 %v6994
        %v7152 = vpop.f32.mrb[0].mxu0
        %v7153 = vadd.f32 %v6833, %v7152
        %v7154 = vpop.f32.mrb[0].mxu0
        %v7155 = vadd.f32 %v6833, %v7154
        %v7156 = vpop.f32.mrb[0].mxu0
        %v7157 = vadd.f32 %v6838, %v7156
        %v7158 = vpop.f32.mrb[0].mxu0
        %v7159 = vadd.f32 %v6838, %v7158
        %7160 = vmatprep.mubr.bf16.mxu0 0
        %7161 = vmatmul.mubr.bf16.gmra.mrb[0].mxu0 %v6997
        %v7162 = vpop.f32.mrb[0].mxu0
        %v7163 = vadd.f32 %v6843, %v7162
        %v7164 = vpop.f32.mrb[0].mxu0
        %v7165 = vadd.f32 %v6843, %v7164
        %v7166 = vpop.f32.mrb[0].mxu0
        %v7167 = vadd.f32 %v6848, %v7166
        %v7168 = vpop.f32.mrb[0].mxu0
        %v7169 = vadd.f32 %v6848, %v7168
        %7170 = vmatprep.mubr.bf16.mxu0 0
        %7171 = vmatmul.mubr.bf16.gmra.mrb[0].mxu0 %v7000
        %v7172 = vpop.f32.mrb[0].mxu0
        %v7173 = vadd.f32 %v6853, %v7172
        %v7174 = vpop.f32.mrb[0].mxu0
        %v7175 = vadd.f32 %v6853, %v7174
        %v7176 = vpop.f32.mrb[0].mxu0
        %v7177 = vadd.f32 %v6858, %v7176
        %v7178 = vpop.f32.mrb[0].mxu0
        %v7179 = vadd.f32 %v6858, %v7178
        %7180 = vmatprep.mubr.bf16.mxu0 0
        %7181 = vmatmul.mubr.bf16.gmra.mrb[0].mxu0 %v7003
        %v7182 = vpop.f32.mrb[0].mxu0
        %v7183 = vadd.f32 %v6863, %v7182
        %v7184 = vpop.f32.mrb[0].mxu0
        %v7185 = vadd.f32 %v6863, %v7184
        %v7186 = vpop.f32.mrb[0].mxu0
        %v7187 = vadd.f32 %v6868, %v7186
        %v7188 = vpop.f32.mrb[0].mxu0
        %v7189 = vadd.f32 %v6868, %v7188
        %7190 = vmatprep.mubr.bf16.mxu0 0
        %7191 = vmatmul.mubr.bf16.gmra.mrb[0].mxu0 %v7006
        %v7192 = vpop.f32.mrb[0].mxu0
        %v7193 = vadd.f32 %v6873, %v7192
        %v7194 = vpop.f32.mrb[0].mxu0
        %v7195 = vadd.f32 %v6873, %v7194
        %v7196 = vpop.f32.mrb[0].mxu0
        %v7197 = vadd.f32 %v6878, %v7196
        %v7198 = vpop.f32.mrb[0].mxu0
        %v7199 = vadd.f32 %v6878, %v7198
        %7200 = vdwg.mxu0
        %v7201 = vpack.c.bf16 %v7047, %v7043
        %v7202 = vpack.c.bf16 %v7049, %v7045
        %v7203 = vpack.c.bf16 %v7057, %v7053
        %v7204 = vpack.c.bf16 %v7059, %v7055
        %v7205 = vpack.c.bf16 %v7067, %v7063
        %v7206 = vpack.c.bf16 %v7069, %v7065
        %v7207 = vpack.c.bf16 %v7077, %v7073
        %v7208 = vpack.c.bf16 %v7079, %v7075
        %v7209 = vpack.c.bf16 %v7087, %v7083
        %v7210 = vpack.c.bf16 %v7089, %v7085
        %v7211 = vpack.c.bf16 %v7097, %v7093
        %v7212 = vpack.c.bf16 %v7099, %v7095
        %v7213 = vpack.c.bf16 %v7107, %v7103
        %v7214 = vpack.c.bf16 %v7109, %v7105
        %v7215 = vpack.c.bf16 %v7117, %v7113
        %v7216 = vpack.c.bf16 %v7119, %v7115
        %v7217 = vpack.c.bf16 %v7127, %v7123
        %v7218 = vpack.c.bf16 %v7129, %v7125
        %v7219 = vpack.c.bf16 %v7137, %v7133
        %v7220 = vpack.c.bf16 %v7139, %v7135
        %v7221 = vpack.c.bf16 %v7147, %v7143
        %v7222 = vpack.c.bf16 %v7149, %v7145
        %v7223 = vpack.c.bf16 %v7157, %v7153
        %v7224 = vpack.c.bf16 %v7159, %v7155
        %v7225 = vpack.c.bf16 %v7167, %v7163
        %v7226 = vpack.c.bf16 %v7169, %v7165
        %v7227 = vpack.c.bf16 %v7177, %v7173
        %v7228 = vpack.c.bf16 %v7179, %v7175
        %v7229 = vpack.c.bf16 %v7187, %v7183
        %v7230 = vpack.c.bf16 %v7189, %v7185
        %v7231 = vpack.c.bf16 %v7197, %v7193
        %v7232 = vpack.c.bf16 %v7199, %v7195
        %7233 = vst [vmem:[#allocation2] sm:$0xff] %v7201
        %7234 = vst [vmem:[#allocation2 + $0x8] sm:$0xff] %v7202
        %7235 = vst [vmem:[#allocation2 + $0x10] sm:$0xff] %v7203
        %7236 = vst [vmem:[#allocation2 + $0x18] sm:$0xff] %v7204
        %7237 = vst [vmem:[#allocation2 + $0x20] sm:$0xff] %v7205
        %7238 = vst [vmem:[#allocation2 + $0x28] sm:$0xff] %v7206
        %7239 = vst [vmem:[#allocation2 + $0x30] sm:$0xff] %v7207
        %7240 = vst [vmem:[#allocation2 + $0x38] sm:$0xff] %v7208
        %7241 = vst [vmem:[#allocation2 + $0x40] sm:$0xff] %v7209
        %7242 = vst [vmem:[#allocation2 + $0x48] sm:$0xff] %v7210
        %7243 = vst [vmem:[#allocation2 + $0x50] sm:$0xff] %v7211
        %7244 = vst [vmem:[#allocation2 + $0x58] sm:$0xff] %v7212
        %7245 = vst [vmem:[#allocation2 + $0x60] sm:$0xff] %v7213
        %7246 = vst [vmem:[#allocation2 + $0x68] sm:$0xff] %v7214
        %7247 = vst [vmem:[#allocation2 + $0x70] sm:$0xff] %v7215
        %7248 = vst [vmem:[#allocation2 + $0x78] sm:$0xff] %v7216
        %7249 = vst [vmem:[#allocation2 + $0x80] sm:$0xff] %v7217
        %7250 = vst [vmem:[#allocation2 + $0x88] sm:$0xff] %v7218
        %7251 = vst [vmem:[#allocation2 + $0x90] sm:$0xff] %v7219
        %7252 = vst [vmem:[#allocation2 + $0x98] sm:$0xff] %v7220
        %7253 = vst [vmem:[#allocation2 + $0xa0] sm:$0xff] %v7221
        %7254 = vst [vmem:[#allocation2 + $0xa8] sm:$0xff] %v7222
        %7255 = vst [vmem:[#allocation2 + $0xb0] sm:$0xff] %v7223
        %7256 = vst [vmem:[#allocation2 + $0xb8] sm:$0xff] %v7224
        %7257 = vst [vmem:[#allocation2 + $0xc0] sm:$0xff] %v7225
        %7258 = vst [vmem:[#allocation2 + $0xc8] sm:$0xff] %v7226
        %7259 = vst [vmem:[#allocation2 + $0xd0] sm:$0xff] %v7227
        %7260 = vst [vmem:[#allocation2 + $0xd8] sm:$0xff] %v7228
        %7261 = vst [vmem:[#allocation2 + $0xe0] sm:$0xff] %v7229
        %7262 = vst [vmem:[#allocation2 + $0xe8] sm:$0xff] %v7230
        %7263 = vst [vmem:[#allocation2 + $0xf0] sm:$0xff] %v7231
        %7264 = vst [vmem:[#allocation2 + $0xf8] sm:$0xff] %v7232
        %s7265 = scalar_lea.vmem %s8, 128
        %v7266 = vld [vmem:[%s7265] sm:$0xf]
        %v7267 = vld [vmem:[%s7265 + $0x4] sm:$0xf]
        %v7268 = vld [vmem:[%s7265 + $0x8] sm:$0xf]
        %v7269 = vld [vmem:[%s7265 + $0xc] sm:$0xf]
        %v7270 = vld [vmem:[%s7265 + $0x10] sm:$0xf]
        %v7271 = vld [vmem:[%s7265 + $0x14] sm:$0xf]
        %v7272 = vld [vmem:[%s7265 + $0x18] sm:$0xf]
        %v7273 = vld [vmem:[%s7265 + $0x1c] sm:$0xf]
        %v7274 = vld [vmem:[%s7265 + $0x20] sm:$0xf]
        %v7275 = vld [vmem:[%s7265 + $0x24] sm:$0xf]
        %v7276 = vld [vmem:[%s7265 + $0x28] sm:$0xf]
        %v7277 = vld [vmem:[%s7265 + $0x2c] sm:$0xf]
        %v7278 = vld [vmem:[%s7265 + $0x30] sm:$0xf]
        %v7279 = vld [vmem:[%s7265 + $0x34] sm:$0xf]
        %v7280 = vld [vmem:[%s7265 + $0x38] sm:$0xf]
        %v7281 = vld [vmem:[%s7265 + $0x3c] sm:$0xf]
        %v7282 = vld [vmem:[%s7265 + $0x40] sm:$0xf]
        %v7283 = vld [vmem:[%s7265 + $0x44] sm:$0xf]
        %v7284 = vld [vmem:[%s7265 + $0x48] sm:$0xf]
        %v7285 = vld [vmem:[%s7265 + $0x4c] sm:$0xf]
        %v7286 = vld [vmem:[%s7265 + $0x50] sm:$0xf]
        %v7287 = vld [vmem:[%s7265 + $0x54] sm:$0xf]
        %v7288 = vld [vmem:[%s7265 + $0x58] sm:$0xf]
        %v7289 = vld [vmem:[%s7265 + $0x5c] sm:$0xf]
        %v7290 = vld [vmem:[%s7265 + $0x60] sm:$0xf]
        %v7291 = vld [vmem:[%s7265 + $0x64] sm:$0xf]
        %v7292 = vld [vmem:[%s7265 + $0x68] sm:$0xf]
        %v7293 = vld [vmem:[%s7265 + $0x6c] sm:$0xf]
        %v7294 = vld [vmem:[%s7265 + $0x70] sm:$0xf]
        %v7295 = vld [vmem:[%s7265 + $0x74] sm:$0xf]
        %v7296 = vld [vmem:[%s7265 + $0x78] sm:$0xf]
        %v7297 = vld [vmem:[%s7265 + $0x7c] sm:$0xf]
        %v7298 = vld [vmem:[%s2] sm:$0xff]
        %v7299 = vld [vmem:[%s2 + $0x8] sm:$0xff]
        %v7300 = vld [vmem:[%s2 + $0x10] sm:$0xff]
        %v7301 = vld [vmem:[%s2 + $0x18] sm:$0xff]
        %v7302 = vld [vmem:[%s2 + $0x20] sm:$0xff]
        %v7303 = vld [vmem:[%s2 + $0x28] sm:$0xff]
        %v7304 = vld [vmem:[%s2 + $0x30] sm:$0xff]
        %v7305 = vld [vmem:[%s2 + $0x38] sm:$0xff]
        %v7306 = vld [vmem:[%s2 + $0x40] sm:$0xff]
        %v7307 = vld [vmem:[%s2 + $0x48] sm:$0xff]
        %v7308 = vld [vmem:[%s2 + $0x50] sm:$0xff]
        %v7309 = vld [vmem:[%s2 + $0x58] sm:$0xff]
        %v7310 = vld [vmem:[%s2 + $0x60] sm:$0xff]
        %v7311 = vld [vmem:[%s2 + $0x68] sm:$0xff]
        %v7312 = vld [vmem:[%s2 + $0x70] sm:$0xff]
        %v7313 = vld [vmem:[%s2 + $0x78] sm:$0xff]
        %v7314 = vld [vmem:[%s2 + $0x80] sm:$0xff]
        %v7315 = vld [vmem:[%s2 + $0x88] sm:$0xff]
        %v7316 = vld [vmem:[%s2 + $0x90] sm:$0xff]
        %v7317 = vld [vmem:[%s2 + $0x98] sm:$0xff]
        %v7318 = vld [vmem:[%s2 + $0xa0] sm:$0xff]
        %v7319 = vld [vmem:[%s2 + $0xa8] sm:$0xff]
        %v7320 = vld [vmem:[%s2 + $0xb0] sm:$0xff]
        %v7321 = vld [vmem:[%s2 + $0xb8] sm:$0xff]
        %v7322 = vld [vmem:[%s2 + $0xc0] sm:$0xff]
        %v7323 = vld [vmem:[%s2 + $0xc8] sm:$0xff]
        %v7324 = vld [vmem:[%s2 + $0xd0] sm:$0xff]
        %v7325 = vld [vmem:[%s2 + $0xd8] sm:$0xff]
        %v7326 = vld [vmem:[%s2 + $0xe0] sm:$0xff]
        %v7327 = vld [vmem:[%s2 + $0xe8] sm:$0xff]
        %v7328 = vld [vmem:[%s2 + $0xf0] sm:$0xff]
        %v7329 = vld [vmem:[%s2 + $0xf8] sm:$0xff]
        %7331 = vset.pattern.permute.xlu0 14
        %7332 = vperm.xlu0 %7331, %v7298
        %v7333 = vpop.permute.xlu0 %7332
        %7336 = vset.pattern.permute.xlu0 14
        %7337 = vperm.xlu0 %7336, %v7299
        %v7338 = vpop.permute.xlu0 %7337
        %7341 = vset.pattern.permute.xlu0 14
        %7342 = vperm.xlu0 %7341, %v7300
        %v7343 = vpop.permute.xlu0 %7342
        %7346 = vset.pattern.permute.xlu0 14
        %7347 = vperm.xlu0 %7346, %v7301
        %v7348 = vpop.permute.xlu0 %7347
        %7351 = vset.pattern.permute.xlu0 14
        %7352 = vperm.xlu0 %7351, %v7302
        %v7353 = vpop.permute.xlu0 %7352
        %7356 = vset.pattern.permute.xlu0 14
        %7357 = vperm.xlu0 %7356, %v7303
        %v7358 = vpop.permute.xlu0 %7357
        %7361 = vset.pattern.permute.xlu0 14
        %7362 = vperm.xlu0 %7361, %v7304
        %v7363 = vpop.permute.xlu0 %7362
        %7366 = vset.pattern.permute.xlu0 14
        %7367 = vperm.xlu0 %7366, %v7305
        %v7368 = vpop.permute.xlu0 %7367
        %7371 = vset.pattern.permute.xlu0 14
        %7372 = vperm.xlu0 %7371, %v7306
        %v7373 = vpop.permute.xlu0 %7372
        %7376 = vset.pattern.permute.xlu0 14
        %7377 = vperm.xlu0 %7376, %v7307
        %v7378 = vpop.permute.xlu0 %7377
        %7381 = vset.pattern.permute.xlu0 14
        %7382 = vperm.xlu0 %7381, %v7308
        %v7383 = vpop.permute.xlu0 %7382
        %7386 = vset.pattern.permute.xlu0 14
        %7387 = vperm.xlu0 %7386, %v7309
        %v7388 = vpop.permute.xlu0 %7387
        %7391 = vset.pattern.permute.xlu0 14
        %7392 = vperm.xlu0 %7391, %v7310
        %v7393 = vpop.permute.xlu0 %7392
        %7396 = vset.pattern.permute.xlu0 14
        %7397 = vperm.xlu0 %7396, %v7311
        %v7398 = vpop.permute.xlu0 %7397
        %7401 = vset.pattern.permute.xlu0 14
        %7402 = vperm.xlu0 %7401, %v7312
        %v7403 = vpop.permute.xlu0 %7402
        %7406 = vset.pattern.permute.xlu0 14
        %7407 = vperm.xlu0 %7406, %v7313
        %v7408 = vpop.permute.xlu0 %7407
        %7411 = vset.pattern.permute.xlu0 14
        %7412 = vperm.xlu0 %7411, %v7314
        %v7413 = vpop.permute.xlu0 %7412
        %7416 = vset.pattern.permute.xlu0 14
        %7417 = vperm.xlu0 %7416, %v7315
        %v7418 = vpop.permute.xlu0 %7417
        %7421 = vset.pattern.permute.xlu0 14
        %7422 = vperm.xlu0 %7421, %v7316
        %v7423 = vpop.permute.xlu0 %7422
        %7426 = vset.pattern.permute.xlu0 14
        %7427 = vperm.xlu0 %7426, %v7317
        %v7428 = vpop.permute.xlu0 %7427
        %7431 = vset.pattern.permute.xlu0 14
        %7432 = vperm.xlu0 %7431, %v7318
        %v7433 = vpop.permute.xlu0 %7432
        %7436 = vset.pattern.permute.xlu0 14
        %7437 = vperm.xlu0 %7436, %v7319
        %v7438 = vpop.permute.xlu0 %7437
        %7441 = vset.pattern.permute.xlu0 14
        %7442 = vperm.xlu0 %7441, %v7320
        %v7443 = vpop.permute.xlu0 %7442
        %7446 = vset.pattern.permute.xlu0 14
        %7447 = vperm.xlu0 %7446, %v7321
        %v7448 = vpop.permute.xlu0 %7447
        %7451 = vset.pattern.permute.xlu0 14
        %7452 = vperm.xlu0 %7451, %v7322
        %v7453 = vpop.permute.xlu0 %7452
        %7456 = vset.pattern.permute.xlu0 14
        %7457 = vperm.xlu0 %7456, %v7323
        %v7458 = vpop.permute.xlu0 %7457
        %7461 = vset.pattern.permute.xlu0 14
        %7462 = vperm.xlu0 %7461, %v7324
        %v7463 = vpop.permute.xlu0 %7462
        %7466 = vset.pattern.permute.xlu0 14
        %7467 = vperm.xlu0 %7466, %v7325
        %v7468 = vpop.permute.xlu0 %7467
        %7471 = vset.pattern.permute.xlu0 14
        %7472 = vperm.xlu0 %7471, %v7326
        %v7473 = vpop.permute.xlu0 %7472
        %7476 = vset.pattern.permute.xlu0 14
        %7477 = vperm.xlu0 %7476, %v7327
        %v7478 = vpop.permute.xlu0 %7477
        %7481 = vset.pattern.permute.xlu0 14
        %7482 = vperm.xlu0 %7481, %v7328
        %v7483 = vpop.permute.xlu0 %7482
        %7486 = vset.pattern.permute.xlu0 14
        %7487 = vperm.xlu0 %7486, %v7329
        %v7488 = vpop.permute.xlu0 %7487
        %v7522 = vunpack.c.l.b16 %v7266
        %v7523 = vunpack.c.l.b16 %v7267
        %v7524 = vunpack.c.l.b16 %v7268
        %v7525 = vunpack.c.l.b16 %v7269
        %v7526 = vunpack.c.l.b16 %v7270
        %v7527 = vunpack.c.l.b16 %v7271
        %v7528 = vunpack.c.l.b16 %v7272
        %v7529 = vunpack.c.l.b16 %v7273
        %v7530 = vunpack.c.l.b16 %v7274
        %v7531 = vunpack.c.l.b16 %v7275
        %v7532 = vunpack.c.l.b16 %v7276
        %v7533 = vunpack.c.l.b16 %v7277
        %v7534 = vunpack.c.l.b16 %v7278
        %v7535 = vunpack.c.l.b16 %v7279
        %v7536 = vunpack.c.l.b16 %v7280
        %v7537 = vunpack.c.l.b16 %v7281
        %v7538 = vunpack.c.l.b16 %v7282
        %v7539 = vunpack.c.l.b16 %v7283
        %v7540 = vunpack.c.l.b16 %v7284
        %v7541 = vunpack.c.l.b16 %v7285
        %v7542 = vunpack.c.l.b16 %v7286
        %v7543 = vunpack.c.l.b16 %v7287
        %v7544 = vunpack.c.l.b16 %v7288
        %v7545 = vunpack.c.l.b16 %v7289
        %v7546 = vunpack.c.l.b16 %v7290
        %v7547 = vunpack.c.l.b16 %v7291
        %v7548 = vunpack.c.l.b16 %v7292
        %v7549 = vunpack.c.l.b16 %v7293
        %v7550 = vunpack.c.l.b16 %v7294
        %v7551 = vunpack.c.l.b16 %v7295
        %v7552 = vunpack.c.l.b16 %v7296
        %v7553 = vunpack.c.l.b16 %v7297
        %v7554 = vpack.c.b16 %v7523, %v7522
        %v7555 = vpack.c.b16 %v7525, %v7524
        %v7556 = vpack.c.b16 %v7527, %v7526
        %v7557 = vpack.c.b16 %v7529, %v7528
        %v7558 = vpack.c.b16 %v7531, %v7530
        %v7559 = vpack.c.b16 %v7533, %v7532
        %v7560 = vpack.c.b16 %v7535, %v7534
        %v7561 = vpack.c.b16 %v7537, %v7536
        %v7562 = vpack.c.b16 %v7539, %v7538
        %v7563 = vpack.c.b16 %v7541, %v7540
        %v7564 = vpack.c.b16 %v7543, %v7542
        %v7565 = vpack.c.b16 %v7545, %v7544
        %v7566 = vpack.c.b16 %v7547, %v7546
        %v7567 = vpack.c.b16 %v7549, %v7548
        %v7568 = vpack.c.b16 %v7551, %v7550
        %v7569 = vpack.c.b16 %v7553, %v7552
        %v7571 = vsel %vm431, %v7554, 0
        %v7574 = vsel %vm431, %v7555, 0
        %v7577 = vsel %vm431, %v7556, 0
        %v7580 = vsel %vm431, %v7557, 0
        %v7583 = vsel %vm431, %v7558, 0
        %v7586 = vsel %vm431, %v7559, 0
        %v7589 = vsel %vm431, %v7560, 0
        %v7592 = vsel %vm431, %v7561, 0
        %v7595 = vsel %vm431, %v7562, 0
        %v7598 = vsel %vm431, %v7563, 0
        %v7601 = vsel %vm431, %v7564, 0
        %v7604 = vsel %vm431, %v7565, 0
        %v7607 = vsel %vm431, %v7566, 0
        %v7610 = vsel %vm431, %v7567, 0
        %v7613 = vsel %vm431, %v7568, 0
        %v7616 = vsel %vm431, %v7569, 0
        %7618 = vmatprep.subr.bf16.mxu0 %v6649
        %7619 = vmatpush1.bf16.msra.mxu0 %v6648
        %7620 = vmatprep.subr.bf16.mxu0 %v6651
        %7621 = vmatpush1.bf16.msra.mxu0 %v6650
        %7622 = vmatprep.subr.bf16.mxu0 %v6653
        %7623 = vmatpush1.bf16.msra.mxu0 %v6652
        %7624 = vmatprep.subr.bf16.mxu0 %v6655
        %7625 = vmatpush1.bf16.msra.mxu0 %v6654
        %7626 = vmatprep.subr.bf16.mxu0 0
        %7627 = vmatpush1.bf16.msra.mxu0 0
        %7628 = vmatprep.subr.bf16.mxu0 0
        %7629 = vmatpush1.bf16.msra.mxu0 0
        %7630 = vmatprep.subr.bf16.mxu0 0
        %7631 = vmatpush1.bf16.msra.mxu0 0
        %7632 = vmatprep.subr.bf16.mxu0 0
        %7633 = vmatpush1.bf16.msra.mxu0 0
        %7634 = vmatprep.subr.bf16.mxu0 0
        %7635 = vmatpush1.bf16.msra.mxu0 0
        %7636 = vmatprep.subr.bf16.mxu0 0
        %7637 = vmatpush1.bf16.msra.mxu0 0
        %7638 = vmatprep.subr.bf16.mxu0 0
        %7639 = vmatpush1.bf16.msra.mxu0 0
        %7640 = vmatprep.subr.bf16.mxu0 0
        %7641 = vmatpush1.bf16.msra.mxu0 0
        %7642 = vmatprep.subr.bf16.mxu0 0
        %7643 = vmatpush1.bf16.msra.mxu0 0
        %7644 = vmatprep.subr.bf16.mxu0 0
        %7645 = vmatpush1.bf16.msra.mxu0 0
        %7646 = vmatprep.subr.bf16.mxu0 0
        %7647 = vmatpush1.bf16.msra.mxu0 0
        %7648 = vmatprep.subr.bf16.mxu0 0
        %7649 = vmatpush1.bf16.msra.mxu0 0
        %7650 = vmatprep.mubr.bf16.mxu0 0
        %7651 = vmatmul.mubr.bf16.gmra.mrb[0].mxu0 %v7571
        %v7652 = vpop.f32.mrb[0].mxu0
        %v7653 = vadd.f32 %v7333, %v7652
        %v7654 = vpop.f32.mrb[0].mxu0
        %v7655 = vadd.f32 %v7333, %v7654
        %v7656 = vpop.f32.mrb[0].mxu0
        %v7657 = vadd.f32 %v7338, %v7656
        %v7658 = vpop.f32.mrb[0].mxu0
        %v7659 = vadd.f32 %v7338, %v7658
        %7660 = vmatprep.mubr.bf16.mxu0 0
        %7661 = vmatmul.mubr.bf16.gmra.mrb[0].mxu0 %v7574
        %v7662 = vpop.f32.mrb[0].mxu0
        %v7663 = vadd.f32 %v7343, %v7662
        %v7664 = vpop.f32.mrb[0].mxu0
        %v7665 = vadd.f32 %v7343, %v7664
        %v7666 = vpop.f32.mrb[0].mxu0
        %v7667 = vadd.f32 %v7348, %v7666
        %v7668 = vpop.f32.mrb[0].mxu0
        %v7669 = vadd.f32 %v7348, %v7668
        %7670 = vmatprep.mubr.bf16.mxu0 0
        %7671 = vmatmul.mubr.bf16.gmra.mrb[0].mxu0 %v7577
        %v7672 = vpop.f32.mrb[0].mxu0
        %v7673 = vadd.f32 %v7353, %v7672
        %v7674 = vpop.f32.mrb[0].mxu0
        %v7675 = vadd.f32 %v7353, %v7674
        %v7676 = vpop.f32.mrb[0].mxu0
        %v7677 = vadd.f32 %v7358, %v7676
        %v7678 = vpop.f32.mrb[0].mxu0
        %v7679 = vadd.f32 %v7358, %v7678
        %7680 = vmatprep.mubr.bf16.mxu0 0
        %7681 = vmatmul.mubr.bf16.gmra.mrb[0].mxu0 %v7580
        %v7682 = vpop.f32.mrb[0].mxu0
        %v7683 = vadd.f32 %v7363, %v7682
        %v7684 = vpop.f32.mrb[0].mxu0
        %v7685 = vadd.f32 %v7363, %v7684
        %v7686 = vpop.f32.mrb[0].mxu0
        %v7687 = vadd.f32 %v7368, %v7686
        %v7688 = vpop.f32.mrb[0].mxu0
        %v7689 = vadd.f32 %v7368, %v7688
        %7690 = vmatprep.mubr.bf16.mxu0 0
        %7691 = vmatmul.mubr.bf16.gmra.mrb[0].mxu0 %v7583
        %v7692 = vpop.f32.mrb[0].mxu0
        %v7693 = vadd.f32 %v7373, %v7692
        %v7694 = vpop.f32.mrb[0].mxu0
        %v7695 = vadd.f32 %v7373, %v7694
        %v7696 = vpop.f32.mrb[0].mxu0
        %v7697 = vadd.f32 %v7378, %v7696
        %v7698 = vpop.f32.mrb[0].mxu0
        %v7699 = vadd.f32 %v7378, %v7698
        %7700 = vmatprep.mubr.bf16.mxu0 0
        %7701 = vmatmul.mubr.bf16.gmra.mrb[0].mxu0 %v7586
        %v7702 = vpop.f32.mrb[0].mxu0
        %v7703 = vadd.f32 %v7383, %v7702
        %v7704 = vpop.f32.mrb[0].mxu0
        %v7705 = vadd.f32 %v7383, %v7704
        %v7706 = vpop.f32.mrb[0].mxu0
        %v7707 = vadd.f32 %v7388, %v7706
        %v7708 = vpop.f32.mrb[0].mxu0
        %v7709 = vadd.f32 %v7388, %v7708
        %7710 = vmatprep.mubr.bf16.mxu0 0
        %7711 = vmatmul.mubr.bf16.gmra.mrb[0].mxu0 %v7589
        %v7712 = vpop.f32.mrb[0].mxu0
        %v7713 = vadd.f32 %v7393, %v7712
        %v7714 = vpop.f32.mrb[0].mxu0
        %v7715 = vadd.f32 %v7393, %v7714
        %v7716 = vpop.f32.mrb[0].mxu0
        %v7717 = vadd.f32 %v7398, %v7716
        %v7718 = vpop.f32.mrb[0].mxu0
        %v7719 = vadd.f32 %v7398, %v7718
        %7720 = vmatprep.mubr.bf16.mxu0 0
        %7721 = vmatmul.mubr.bf16.gmra.mrb[0].mxu0 %v7592
        %v7722 = vpop.f32.mrb[0].mxu0
        %v7723 = vadd.f32 %v7403, %v7722
        %v7724 = vpop.f32.mrb[0].mxu0
        %v7725 = vadd.f32 %v7403, %v7724
        %v7726 = vpop.f32.mrb[0].mxu0
        %v7727 = vadd.f32 %v7408, %v7726
        %v7728 = vpop.f32.mrb[0].mxu0
        %v7729 = vadd.f32 %v7408, %v7728
        %7730 = vmatprep.mubr.bf16.mxu0 0
        %7731 = vmatmul.mubr.bf16.gmra.mrb[0].mxu0 %v7595
        %v7732 = vpop.f32.mrb[0].mxu0
        %v7733 = vadd.f32 %v7413, %v7732
        %v7734 = vpop.f32.mrb[0].mxu0
        %v7735 = vadd.f32 %v7413, %v7734
        %v7736 = vpop.f32.mrb[0].mxu0
        %v7737 = vadd.f32 %v7418, %v7736
        %v7738 = vpop.f32.mrb[0].mxu0
        %v7739 = vadd.f32 %v7418, %v7738
        %7740 = vmatprep.mubr.bf16.mxu0 0
        %7741 = vmatmul.mubr.bf16.gmra.mrb[0].mxu0 %v7598
        %v7742 = vpop.f32.mrb[0].mxu0
        %v7743 = vadd.f32 %v7423, %v7742
        %v7744 = vpop.f32.mrb[0].mxu0
        %v7745 = vadd.f32 %v7423, %v7744
        %v7746 = vpop.f32.mrb[0].mxu0
        %v7747 = vadd.f32 %v7428, %v7746
        %v7748 = vpop.f32.mrb[0].mxu0
        %v7749 = vadd.f32 %v7428, %v7748
        %7750 = vmatprep.mubr.bf16.mxu0 0
        %7751 = vmatmul.mubr.bf16.gmra.mrb[0].mxu0 %v7601
        %v7752 = vpop.f32.mrb[0].mxu0
        %v7753 = vadd.f32 %v7433, %v7752
        %v7754 = vpop.f32.mrb[0].mxu0
        %v7755 = vadd.f32 %v7433, %v7754
        %v7756 = vpop.f32.mrb[0].mxu0
        %v7757 = vadd.f32 %v7438, %v7756
        %v7758 = vpop.f32.mrb[0].mxu0
        %v7759 = vadd.f32 %v7438, %v7758
        %7760 = vmatprep.mubr.bf16.mxu0 0
        %7761 = vmatmul.mubr.bf16.gmra.mrb[0].mxu0 %v7604
        %v7762 = vpop.f32.mrb[0].mxu0
        %v7763 = vadd.f32 %v7443, %v7762
        %v7764 = vpop.f32.mrb[0].mxu0
        %v7765 = vadd.f32 %v7443, %v7764
        %v7766 = vpop.f32.mrb[0].mxu0
        %v7767 = vadd.f32 %v7448, %v7766
        %v7768 = vpop.f32.mrb[0].mxu0
        %v7769 = vadd.f32 %v7448, %v7768
        %7770 = vmatprep.mubr.bf16.mxu0 0
        %7771 = vmatmul.mubr.bf16.gmra.mrb[0].mxu0 %v7607
        %v7772 = vpop.f32.mrb[0].mxu0
        %v7773 = vadd.f32 %v7453, %v7772
        %v7774 = vpop.f32.mrb[0].mxu0
        %v7775 = vadd.f32 %v7453, %v7774
        %v7776 = vpop.f32.mrb[0].mxu0
        %v7777 = vadd.f32 %v7458, %v7776
        %v7778 = vpop.f32.mrb[0].mxu0
        %v7779 = vadd.f32 %v7458, %v7778
        %7780 = vmatprep.mubr.bf16.mxu0 0
        %7781 = vmatmul.mubr.bf16.gmra.mrb[0].mxu0 %v7610
        %v7782 = vpop.f32.mrb[0].mxu0
        %v7783 = vadd.f32 %v7463, %v7782
        %v7784 = vpop.f32.mrb[0].mxu0
        %v7785 = vadd.f32 %v7463, %v7784
        %v7786 = vpop.f32.mrb[0].mxu0
        %v7787 = vadd.f32 %v7468, %v7786
        %v7788 = vpop.f32.mrb[0].mxu0
        %v7789 = vadd.f32 %v7468, %v7788
        %7790 = vmatprep.mubr.bf16.mxu0 0
        %7791 = vmatmul.mubr.bf16.gmra.mrb[0].mxu0 %v7613
        %v7792 = vpop.f32.mrb[0].mxu0
        %v7793 = vadd.f32 %v7473, %v7792
        %v7794 = vpop.f32.mrb[0].mxu0
        %v7795 = vadd.f32 %v7473, %v7794
        %v7796 = vpop.f32.mrb[0].mxu0
        %v7797 = vadd.f32 %v7478, %v7796
        %v7798 = vpop.f32.mrb[0].mxu0
        %v7799 = vadd.f32 %v7478, %v7798
        %7800 = vmatprep.mubr.bf16.mxu0 0
        %7801 = vmatmul.mubr.bf16.gmra.mrb[0].mxu0 %v7616
        %v7802 = vpop.f32.mrb[0].mxu0
        %v7803 = vadd.f32 %v7483, %v7802
        %v7804 = vpop.f32.mrb[0].mxu0
        %v7805 = vadd.f32 %v7483, %v7804
        %v7806 = vpop.f32.mrb[0].mxu0
        %v7807 = vadd.f32 %v7488, %v7806
        %v7808 = vpop.f32.mrb[0].mxu0
        %v7809 = vadd.f32 %v7488, %v7808
        %7810 = vdwg.mxu0
        %v7811 = vld [vmem:[#allocation2] sm:$0xff]
        %v7812 = vld [vmem:[#allocation2 + $0x8] sm:$0xff]
        %v7813 = vld [vmem:[#allocation2 + $0x10] sm:$0xff]
        %v7814 = vld [vmem:[#allocation2 + $0x18] sm:$0xff]
        %v7815 = vld [vmem:[#allocation2 + $0x20] sm:$0xff]
        %v7816 = vld [vmem:[#allocation2 + $0x28] sm:$0xff]
        %v7817 = vld [vmem:[#allocation2 + $0x30] sm:$0xff]
        %v7818 = vld [vmem:[#allocation2 + $0x38] sm:$0xff]
        %v7819 = vld [vmem:[#allocation2 + $0x40] sm:$0xff]
        %v7820 = vld [vmem:[#allocation2 + $0x48] sm:$0xff]
        %v7821 = vld [vmem:[#allocation2 + $0x50] sm:$0xff]
        %v7822 = vld [vmem:[#allocation2 + $0x58] sm:$0xff]
        %v7823 = vld [vmem:[#allocation2 + $0x60] sm:$0xff]
        %v7824 = vld [vmem:[#allocation2 + $0x68] sm:$0xff]
        %v7825 = vld [vmem:[#allocation2 + $0x70] sm:$0xff]
        %v7826 = vld [vmem:[#allocation2 + $0x78] sm:$0xff]
        %v7827 = vld [vmem:[#allocation2 + $0x80] sm:$0xff]
        %v7828 = vld [vmem:[#allocation2 + $0x88] sm:$0xff]
        %v7829 = vld [vmem:[#allocation2 + $0x90] sm:$0xff]
        %v7830 = vld [vmem:[#allocation2 + $0x98] sm:$0xff]
        %v7831 = vld [vmem:[#allocation2 + $0xa0] sm:$0xff]
        %v7832 = vld [vmem:[#allocation2 + $0xa8] sm:$0xff]
        %v7833 = vld [vmem:[#allocation2 + $0xb0] sm:$0xff]
        %v7834 = vld [vmem:[#allocation2 + $0xb8] sm:$0xff]
        %v7835 = vld [vmem:[#allocation2 + $0xc0] sm:$0xff]
        %v7836 = vld [vmem:[#allocation2 + $0xc8] sm:$0xff]
        %v7837 = vld [vmem:[#allocation2 + $0xd0] sm:$0xff]
        %v7838 = vld [vmem:[#allocation2 + $0xd8] sm:$0xff]
        %v7839 = vld [vmem:[#allocation2 + $0xe0] sm:$0xff]
        %v7840 = vld [vmem:[#allocation2 + $0xe8] sm:$0xff]
        %v7841 = vld [vmem:[#allocation2 + $0xf0] sm:$0xff]
        %v7842 = vld [vmem:[#allocation2 + $0xf8] sm:$0xff]
        %v7843 = vmul.f32 %v7653, 0.5
        %v7844 = vmul.f32 %v7655, 0.5
        %v7845 = vmul.f32 %v7657, 0.5
        %v7846 = vmul.f32 %v7659, 0.5
        %v7847 = vmul.f32 %v7663, 0.5
        %v7848 = vmul.f32 %v7665, 0.5
        %v7849 = vmul.f32 %v7667, 0.5
        %v7850 = vmul.f32 %v7669, 0.5
        %v7851 = vmul.f32 %v7673, 0.5
        %v7852 = vmul.f32 %v7675, 0.5
        %v7853 = vmul.f32 %v7677, 0.5
        %v7854 = vmul.f32 %v7679, 0.5
        %v7855 = vmul.f32 %v7683, 0.5
        %v7856 = vmul.f32 %v7685, 0.5
        %v7857 = vmul.f32 %v7687, 0.5
        %v7858 = vmul.f32 %v7689, 0.5
        %v7859 = vmul.f32 %v7693, 0.5
        %v7860 = vmul.f32 %v7695, 0.5
        %v7861 = vmul.f32 %v7697, 0.5
        %v7862 = vmul.f32 %v7699, 0.5
        %v7863 = vmul.f32 %v7703, 0.5
        %v7864 = vmul.f32 %v7705, 0.5
        %v7865 = vmul.f32 %v7707, 0.5
        %v7866 = vmul.f32 %v7709, 0.5
        %v7867 = vmul.f32 %v7713, 0.5
        %v7868 = vmul.f32 %v7715, 0.5
        %v7869 = vmul.f32 %v7717, 0.5
        %v7870 = vmul.f32 %v7719, 0.5
        %v7871 = vmul.f32 %v7723, 0.5
        %v7872 = vmul.f32 %v7725, 0.5
        %v7873 = vmul.f32 %v7727, 0.5
        %v7874 = vmul.f32 %v7729, 0.5
        %v7875 = vmul.f32 %v7733, 0.5
        %v7876 = vmul.f32 %v7735, 0.5
        %v7877 = vmul.f32 %v7737, 0.5
        %v7878 = vmul.f32 %v7739, 0.5
        %v7879 = vmul.f32 %v7743, 0.5
        %v7880 = vmul.f32 %v7745, 0.5
        %v7881 = vmul.f32 %v7747, 0.5
        %v7882 = vmul.f32 %v7749, 0.5
        %v7883 = vmul.f32 %v7753, 0.5
        %v7884 = vmul.f32 %v7755, 0.5
        %v7885 = vmul.f32 %v7757, 0.5
        %v7886 = vmul.f32 %v7759, 0.5
        %v7887 = vmul.f32 %v7763, 0.5
        %v7888 = vmul.f32 %v7765, 0.5
        %v7889 = vmul.f32 %v7767, 0.5
        %v7890 = vmul.f32 %v7769, 0.5
        %v7891 = vmul.f32 %v7773, 0.5
        %v7892 = vmul.f32 %v7775, 0.5
        %v7893 = vmul.f32 %v7777, 0.5
        %v7894 = vmul.f32 %v7779, 0.5
        %v7895 = vmul.f32 %v7783, 0.5
        %v7896 = vmul.f32 %v7785, 0.5
        %v7897 = vmul.f32 %v7787, 0.5
        %v7898 = vmul.f32 %v7789, 0.5
        %v7899 = vmul.f32 %v7793, 0.5
        %v7900 = vmul.f32 %v7795, 0.5
        %v7901 = vmul.f32 %v7797, 0.5
        %v7902 = vmul.f32 %v7799, 0.5
        %v7903 = vmul.f32 %v7803, 0.5
        %v7904 = vmul.f32 %v7805, 0.5
        %v7905 = vmul.f32 %v7807, 0.5
        %v7906 = vmul.f32 %v7809, 0.5
        %v7907 = vmul.f32 %v7653, 0.70710677
        %v7908 = vmul.f32 %v7655, 0.70710677
        %v7909 = vmul.f32 %v7657, 0.70710677
        %v7910 = vmul.f32 %v7659, 0.70710677
        %v7911 = vmul.f32 %v7663, 0.70710677
        %v7912 = vmul.f32 %v7665, 0.70710677
        %v7913 = vmul.f32 %v7667, 0.70710677
        %v7914 = vmul.f32 %v7669, 0.70710677
        %v7915 = vmul.f32 %v7673, 0.70710677
        %v7916 = vmul.f32 %v7675, 0.70710677
        %v7917 = vmul.f32 %v7677, 0.70710677
        %v7918 = vmul.f32 %v7679, 0.70710677
        %v7919 = vmul.f32 %v7683, 0.70710677
        %v7920 = vmul.f32 %v7685, 0.70710677
        %v7921 = vmul.f32 %v7687, 0.70710677
        %v7922 = vmul.f32 %v7689, 0.70710677
        %v7923 = vmul.f32 %v7693, 0.70710677
        %v7924 = vmul.f32 %v7695, 0.70710677
        %v7925 = vmul.f32 %v7697, 0.70710677
        %v7926 = vmul.f32 %v7699, 0.70710677
        %v7927 = vmul.f32 %v7703, 0.70710677
        %v7928 = vmul.f32 %v7705, 0.70710677
        %v7929 = vmul.f32 %v7707, 0.70710677
        %v7930 = vmul.f32 %v7709, 0.70710677
        %v7931 = vmul.f32 %v7713, 0.70710677
        %v7932 = vmul.f32 %v7715, 0.70710677
        %v7933 = vmul.f32 %v7717, 0.70710677
        %v7934 = vmul.f32 %v7719, 0.70710677
        %v7935 = vmul.f32 %v7723, 0.70710677
        %v7936 = vmul.f32 %v7725, 0.70710677
        %v7937 = vmul.f32 %v7727, 0.70710677
        %v7938 = vmul.f32 %v7729, 0.70710677
        %v7939 = vmul.f32 %v7733, 0.70710677
        %v7940 = vmul.f32 %v7735, 0.70710677
        %v7941 = vmul.f32 %v7737, 0.70710677
        %v7942 = vmul.f32 %v7739, 0.70710677
        %v7943 = vmul.f32 %v7743, 0.70710677
        %v7944 = vmul.f32 %v7745, 0.70710677
        %v7945 = vmul.f32 %v7747, 0.70710677
        %v7946 = vmul.f32 %v7749, 0.70710677
        %v7947 = vmul.f32 %v7753, 0.70710677
        %v7948 = vmul.f32 %v7755, 0.70710677
        %v7949 = vmul.f32 %v7757, 0.70710677
        %v7950 = vmul.f32 %v7759, 0.70710677
        %v7951 = vmul.f32 %v7763, 0.70710677
        %v7952 = vmul.f32 %v7765, 0.70710677
        %v7953 = vmul.f32 %v7767, 0.70710677
        %v7954 = vmul.f32 %v7769, 0.70710677
        %v7955 = vmul.f32 %v7773, 0.70710677
        %v7956 = vmul.f32 %v7775, 0.70710677
        %v7957 = vmul.f32 %v7777, 0.70710677
        %v7958 = vmul.f32 %v7779, 0.70710677
        %v7959 = vmul.f32 %v7783, 0.70710677
        %v7960 = vmul.f32 %v7785, 0.70710677
        %v7961 = vmul.f32 %v7787, 0.70710677
        %v7962 = vmul.f32 %v7789, 0.70710677
        %v7963 = vmul.f32 %v7793, 0.70710677
        %v7964 = vmul.f32 %v7795, 0.70710677
        %v7965 = vmul.f32 %v7797, 0.70710677
        %v7966 = vmul.f32 %v7799, 0.70710677
        %v7967 = vmul.f32 %v7803, 0.70710677
        %v7968 = vmul.f32 %v7805, 0.70710677
        %v7969 = vmul.f32 %v7807, 0.70710677
        %v7970 = vmul.f32 %v7809, 0.70710677
        %vm7971 = vcmp.ge.f32.partialorder %v7907, 0.0
        %vm7972 = vcmp.ge.f32.partialorder %v7908, 0.0
        %vm7973 = vcmp.ge.f32.partialorder %v7909, 0.0
        %vm7974 = vcmp.ge.f32.partialorder %v7910, 0.0
        %vm7975 = vcmp.ge.f32.partialorder %v7911, 0.0
        %vm7976 = vcmp.ge.f32.partialorder %v7912, 0.0
        %vm7977 = vcmp.ge.f32.partialorder %v7913, 0.0
        %vm7978 = vcmp.ge.f32.partialorder %v7914, 0.0
        %vm7979 = vcmp.ge.f32.partialorder %v7915, 0.0
        %vm7980 = vcmp.ge.f32.partialorder %v7916, 0.0
        %vm7981 = vcmp.ge.f32.partialorder %v7917, 0.0
        %vm7982 = vcmp.ge.f32.partialorder %v7918, 0.0
        %vm7983 = vcmp.ge.f32.partialorder %v7919, 0.0
        %vm7984 = vcmp.ge.f32.partialorder %v7920, 0.0
        %vm7985 = vcmp.ge.f32.partialorder %v7921, 0.0
        %vm7986 = vcmp.ge.f32.partialorder %v7922, 0.0
        %vm7987 = vcmp.ge.f32.partialorder %v7923, 0.0
        %vm7988 = vcmp.ge.f32.partialorder %v7924, 0.0
        %vm7989 = vcmp.ge.f32.partialorder %v7925, 0.0
        %vm7990 = vcmp.ge.f32.partialorder %v7926, 0.0
        %vm7991 = vcmp.ge.f32.partialorder %v7927, 0.0
        %vm7992 = vcmp.ge.f32.partialorder %v7928, 0.0
        %vm7993 = vcmp.ge.f32.partialorder %v7929, 0.0
        %vm7994 = vcmp.ge.f32.partialorder %v7930, 0.0
        %vm7995 = vcmp.ge.f32.partialorder %v7931, 0.0
        %vm7996 = vcmp.ge.f32.partialorder %v7932, 0.0
        %vm7997 = vcmp.ge.f32.partialorder %v7933, 0.0
        %vm7998 = vcmp.ge.f32.partialorder %v7934, 0.0
        %vm7999 = vcmp.ge.f32.partialorder %v7935, 0.0
        %vm8000 = vcmp.ge.f32.partialorder %v7936, 0.0
        %vm8001 = vcmp.ge.f32.partialorder %v7937, 0.0
        %vm8002 = vcmp.ge.f32.partialorder %v7938, 0.0
        %vm8003 = vcmp.ge.f32.partialorder %v7939, 0.0
        %vm8004 = vcmp.ge.f32.partialorder %v7940, 0.0
        %vm8005 = vcmp.ge.f32.partialorder %v7941, 0.0
        %vm8006 = vcmp.ge.f32.partialorder %v7942, 0.0
        %vm8007 = vcmp.ge.f32.partialorder %v7943, 0.0
        %vm8008 = vcmp.ge.f32.partialorder %v7944, 0.0
        %vm8009 = vcmp.ge.f32.partialorder %v7945, 0.0
        %vm8010 = vcmp.ge.f32.partialorder %v7946, 0.0
        %vm8011 = vcmp.ge.f32.partialorder %v7947, 0.0
        %vm8012 = vcmp.ge.f32.partialorder %v7948, 0.0
        %vm8013 = vcmp.ge.f32.partialorder %v7949, 0.0
        %vm8014 = vcmp.ge.f32.partialorder %v7950, 0.0
        %vm8015 = vcmp.ge.f32.partialorder %v7951, 0.0
        %vm8016 = vcmp.ge.f32.partialorder %v7952, 0.0
        %vm8017 = vcmp.ge.f32.partialorder %v7953, 0.0
        %vm8018 = vcmp.ge.f32.partialorder %v7954, 0.0
        %vm8019 = vcmp.ge.f32.partialorder %v7955, 0.0
        %vm8020 = vcmp.ge.f32.partialorder %v7956, 0.0
        %vm8021 = vcmp.ge.f32.partialorder %v7957, 0.0
        %vm8022 = vcmp.ge.f32.partialorder %v7958, 0.0
        %vm8023 = vcmp.ge.f32.partialorder %v7959, 0.0
        %vm8024 = vcmp.ge.f32.partialorder %v7960, 0.0
        %vm8025 = vcmp.ge.f32.partialorder %v7961, 0.0
        %vm8026 = vcmp.ge.f32.partialorder %v7962, 0.0
        %vm8027 = vcmp.ge.f32.partialorder %v7963, 0.0
        %vm8028 = vcmp.ge.f32.partialorder %v7964, 0.0
        %vm8029 = vcmp.ge.f32.partialorder %v7965, 0.0
        %vm8030 = vcmp.ge.f32.partialorder %v7966, 0.0
        %vm8031 = vcmp.ge.f32.partialorder %v7967, 0.0
        %vm8032 = vcmp.ge.f32.partialorder %v7968, 0.0
        %vm8033 = vcmp.ge.f32.partialorder %v7969, 0.0
        %vm8034 = vcmp.ge.f32.partialorder %v7970, 0.0
        %v8035 = vsel %vm7971, 1.0, -1.0
        %v8036 = vsel %vm7972, 1.0, -1.0
        %v8037 = vsel %vm7973, 1.0, -1.0
        %v8038 = vsel %vm7974, 1.0, -1.0
        %v8039 = vsel %vm7975, 1.0, -1.0
        %v8040 = vsel %vm7976, 1.0, -1.0
        %v8041 = vsel %vm7977, 1.0, -1.0
        %v8042 = vsel %vm7978, 1.0, -1.0
        %v8043 = vsel %vm7979, 1.0, -1.0
        %v8044 = vsel %vm7980, 1.0, -1.0
        %v8045 = vsel %vm7981, 1.0, -1.0
        %v8046 = vsel %vm7982, 1.0, -1.0
        %v8047 = vsel %vm7983, 1.0, -1.0
        %v8048 = vsel %vm7984, 1.0, -1.0
        %v8049 = vsel %vm7985, 1.0, -1.0
        %v8050 = vsel %vm7986, 1.0, -1.0
        %v8051 = vsel %vm7987, 1.0, -1.0
        %v8052 = vsel %vm7988, 1.0, -1.0
        %v8053 = vsel %vm7989, 1.0, -1.0
        %v8054 = vsel %vm7990, 1.0, -1.0
        %v8055 = vsel %vm7991, 1.0, -1.0
        %v8056 = vsel %vm7992, 1.0, -1.0
        %v8057 = vsel %vm7993, 1.0, -1.0
        %v8058 = vsel %vm7994, 1.0, -1.0
        %v8059 = vsel %vm7995, 1.0, -1.0
        %v8060 = vsel %vm7996, 1.0, -1.0
        %v8061 = vsel %vm7997, 1.0, -1.0
        %v8062 = vsel %vm7998, 1.0, -1.0
        %v8063 = vsel %vm7999, 1.0, -1.0
        %v8064 = vsel %vm8000, 1.0, -1.0
        %v8065 = vsel %vm8001, 1.0, -1.0
        %v8066 = vsel %vm8002, 1.0, -1.0
        %v8067 = vsel %vm8003, 1.0, -1.0
        %v8068 = vsel %vm8004, 1.0, -1.0
        %v8069 = vsel %vm8005, 1.0, -1.0
        %v8070 = vsel %vm8006, 1.0, -1.0
        %v8071 = vsel %vm8007, 1.0, -1.0
        %v8072 = vsel %vm8008, 1.0, -1.0
        %v8073 = vsel %vm8009, 1.0, -1.0
        %v8074 = vsel %vm8010, 1.0, -1.0
        %v8075 = vsel %vm8011, 1.0, -1.0
        %v8076 = vsel %vm8012, 1.0, -1.0
        %v8077 = vsel %vm8013, 1.0, -1.0
        %v8078 = vsel %vm8014, 1.0, -1.0
        %v8079 = vsel %vm8015, 1.0, -1.0
        %v8080 = vsel %vm8016, 1.0, -1.0
        %v8081 = vsel %vm8017, 1.0, -1.0
        %v8082 = vsel %vm8018, 1.0, -1.0
        %v8083 = vsel %vm8019, 1.0, -1.0
        %v8084 = vsel %vm8020, 1.0, -1.0
        %v8085 = vsel %vm8021, 1.0, -1.0
        %v8086 = vsel %vm8022, 1.0, -1.0
        %v8087 = vsel %vm8023, 1.0, -1.0
        %v8088 = vsel %vm8024, 1.0, -1.0
        %v8089 = vsel %vm8025, 1.0, -1.0
        %v8090 = vsel %vm8026, 1.0, -1.0
        %v8091 = vsel %vm8027, 1.0, -1.0
        %v8092 = vsel %vm8028, 1.0, -1.0
        %v8093 = vsel %vm8029, 1.0, -1.0
        %v8094 = vsel %vm8030, 1.0, -1.0
        %v8095 = vsel %vm8031, 1.0, -1.0
        %v8096 = vsel %vm8032, 1.0, -1.0
        %v8097 = vsel %vm8033, 1.0, -1.0
        %v8098 = vsel %vm8034, 1.0, -1.0
        %v8099 = vand.u32 2147483647, %v7907
        %v8100 = vand.u32 2147483647, %v7908
        %v8101 = vand.u32 2147483647, %v7909
        %v8102 = vand.u32 2147483647, %v7910
        %v8103 = vand.u32 2147483647, %v7911
        %v8104 = vand.u32 2147483647, %v7912
        %v8105 = vand.u32 2147483647, %v7913
        %v8106 = vand.u32 2147483647, %v7914
        %v8107 = vand.u32 2147483647, %v7915
        %v8108 = vand.u32 2147483647, %v7916
        %v8109 = vand.u32 2147483647, %v7917
        %v8110 = vand.u32 2147483647, %v7918
        %v8111 = vand.u32 2147483647, %v7919
        %v8112 = vand.u32 2147483647, %v7920
        %v8113 = vand.u32 2147483647, %v7921
        %v8114 = vand.u32 2147483647, %v7922
        %v8115 = vand.u32 2147483647, %v7923
        %v8116 = vand.u32 2147483647, %v7924
        %v8117 = vand.u32 2147483647, %v7925
        %v8118 = vand.u32 2147483647, %v7926
        %v8119 = vand.u32 2147483647, %v7927
        %v8120 = vand.u32 2147483647, %v7928
        %v8121 = vand.u32 2147483647, %v7929
        %v8122 = vand.u32 2147483647, %v7930
        %v8123 = vand.u32 2147483647, %v7931
        %v8124 = vand.u32 2147483647, %v7932
        %v8125 = vand.u32 2147483647, %v7933
        %v8126 = vand.u32 2147483647, %v7934
        %v8127 = vand.u32 2147483647, %v7935
        %v8128 = vand.u32 2147483647, %v7936
        %v8129 = vand.u32 2147483647, %v7937
        %v8130 = vand.u32 2147483647, %v7938
        %v8131 = vand.u32 2147483647, %v7939
        %v8132 = vand.u32 2147483647, %v7940
        %v8133 = vand.u32 2147483647, %v7941
        %v8134 = vand.u32 2147483647, %v7942
        %v8135 = vand.u32 2147483647, %v7943
        %v8136 = vand.u32 2147483647, %v7944
        %v8137 = vand.u32 2147483647, %v7945
        %v8138 = vand.u32 2147483647, %v7946
        %v8139 = vand.u32 2147483647, %v7947
        %v8140 = vand.u32 2147483647, %v7948
        %v8141 = vand.u32 2147483647, %v7949
        %v8142 = vand.u32 2147483647, %v7950
        %v8143 = vand.u32 2147483647, %v7951
        %v8144 = vand.u32 2147483647, %v7952
        %v8145 = vand.u32 2147483647, %v7953
        %v8146 = vand.u32 2147483647, %v7954
        %v8147 = vand.u32 2147483647, %v7955
        %v8148 = vand.u32 2147483647, %v7956
        %v8149 = vand.u32 2147483647, %v7957
        %v8150 = vand.u32 2147483647, %v7958
        %v8151 = vand.u32 2147483647, %v7959
        %v8152 = vand.u32 2147483647, %v7960
        %v8153 = vand.u32 2147483647, %v7961
        %v8154 = vand.u32 2147483647, %v7962
        %v8155 = vand.u32 2147483647, %v7963
        %v8156 = vand.u32 2147483647, %v7964
        %v8157 = vand.u32 2147483647, %v7965
        %v8158 = vand.u32 2147483647, %v7966
        %v8159 = vand.u32 2147483647, %v7967
        %v8160 = vand.u32 2147483647, %v7968
        %v8161 = vand.u32 2147483647, %v7969
        %v8162 = vand.u32 2147483647, %v7970
        %v8163 = vmul.f32 %v8099, 0.3275911
        %v8164 = vmul.f32 %v8100, 0.3275911
        %v8165 = vmul.f32 %v8101, 0.3275911
        %v8166 = vmul.f32 %v8102, 0.3275911
        %v8167 = vmul.f32 %v8103, 0.3275911
        %v8168 = vmul.f32 %v8104, 0.3275911
        %v8169 = vmul.f32 %v8105, 0.3275911
        %v8170 = vmul.f32 %v8106, 0.3275911
        %v8171 = vmul.f32 %v8107, 0.3275911
        %v8172 = vmul.f32 %v8108, 0.3275911
        %v8173 = vmul.f32 %v8109, 0.3275911
        %v8174 = vmul.f32 %v8110, 0.3275911
        %v8175 = vmul.f32 %v8111, 0.3275911
        %v8176 = vmul.f32 %v8112, 0.3275911
        %v8177 = vmul.f32 %v8113, 0.3275911
        %v8178 = vmul.f32 %v8114, 0.3275911
        %v8179 = vmul.f32 %v8115, 0.3275911
        %v8180 = vmul.f32 %v8116, 0.3275911
        %v8181 = vmul.f32 %v8117, 0.3275911
        %v8182 = vmul.f32 %v8118, 0.3275911
        %v8183 = vmul.f32 %v8119, 0.3275911
        %v8184 = vmul.f32 %v8120, 0.3275911
        %v8185 = vmul.f32 %v8121, 0.3275911
        %v8186 = vmul.f32 %v8122, 0.3275911
        %v8187 = vmul.f32 %v8123, 0.3275911
        %v8188 = vmul.f32 %v8124, 0.3275911
        %v8189 = vmul.f32 %v8125, 0.3275911
        %v8190 = vmul.f32 %v8126, 0.3275911
        %v8191 = vmul.f32 %v8127, 0.3275911
        %v8192 = vmul.f32 %v8128, 0.3275911
        %v8193 = vmul.f32 %v8129, 0.3275911
        %v8194 = vmul.f32 %v8130, 0.3275911
        %v8195 = vmul.f32 %v8131, 0.3275911
        %v8196 = vmul.f32 %v8132, 0.3275911
        %v8197 = vmul.f32 %v8133, 0.3275911
        %v8198 = vmul.f32 %v8134, 0.3275911
        %v8199 = vmul.f32 %v8135, 0.3275911
        %v8200 = vmul.f32 %v8136, 0.3275911
        %v8201 = vmul.f32 %v8137, 0.3275911
        %v8202 = vmul.f32 %v8138, 0.3275911
        %v8203 = vmul.f32 %v8139, 0.3275911
        %v8204 = vmul.f32 %v8140, 0.3275911
        %v8205 = vmul.f32 %v8141, 0.3275911
        %v8206 = vmul.f32 %v8142, 0.3275911
        %v8207 = vmul.f32 %v8143, 0.3275911
        %v8208 = vmul.f32 %v8144, 0.3275911
        %v8209 = vmul.f32 %v8145, 0.3275911
        %v8210 = vmul.f32 %v8146, 0.3275911
        %v8211 = vmul.f32 %v8147, 0.3275911
        %v8212 = vmul.f32 %v8148, 0.3275911
        %v8213 = vmul.f32 %v8149, 0.3275911
        %v8214 = vmul.f32 %v8150, 0.3275911
        %v8215 = vmul.f32 %v8151, 0.3275911
        %v8216 = vmul.f32 %v8152, 0.3275911
        %v8217 = vmul.f32 %v8153, 0.3275911
        %v8218 = vmul.f32 %v8154, 0.3275911
        %v8219 = vmul.f32 %v8155, 0.3275911
        %v8220 = vmul.f32 %v8156, 0.3275911
        %v8221 = vmul.f32 %v8157, 0.3275911
        %v8222 = vmul.f32 %v8158, 0.3275911
        %v8223 = vmul.f32 %v8159, 0.3275911
        %v8224 = vmul.f32 %v8160, 0.3275911
        %v8225 = vmul.f32 %v8161, 0.3275911
        %v8226 = vmul.f32 %v8162, 0.3275911
        %v8227 = vadd.f32 %v8163, 1.0
        %v8228 = vadd.f32 %v8164, 1.0
        %v8229 = vadd.f32 %v8165, 1.0
        %v8230 = vadd.f32 %v8166, 1.0
        %v8231 = vadd.f32 %v8167, 1.0
        %v8232 = vadd.f32 %v8168, 1.0
        %v8233 = vadd.f32 %v8169, 1.0
        %v8234 = vadd.f32 %v8170, 1.0
        %v8235 = vadd.f32 %v8171, 1.0
        %v8236 = vadd.f32 %v8172, 1.0
        %v8237 = vadd.f32 %v8173, 1.0
        %v8238 = vadd.f32 %v8174, 1.0
        %v8239 = vadd.f32 %v8175, 1.0
        %v8240 = vadd.f32 %v8176, 1.0
        %v8241 = vadd.f32 %v8177, 1.0
        %v8242 = vadd.f32 %v8178, 1.0
        %v8243 = vadd.f32 %v8179, 1.0
        %v8244 = vadd.f32 %v8180, 1.0
        %v8245 = vadd.f32 %v8181, 1.0
        %v8246 = vadd.f32 %v8182, 1.0
        %v8247 = vadd.f32 %v8183, 1.0
        %v8248 = vadd.f32 %v8184, 1.0
        %v8249 = vadd.f32 %v8185, 1.0
        %v8250 = vadd.f32 %v8186, 1.0
        %v8251 = vadd.f32 %v8187, 1.0
        %v8252 = vadd.f32 %v8188, 1.0
        %v8253 = vadd.f32 %v8189, 1.0
        %v8254 = vadd.f32 %v8190, 1.0
        %v8255 = vadd.f32 %v8191, 1.0
        %v8256 = vadd.f32 %v8192, 1.0
        %v8257 = vadd.f32 %v8193, 1.0
        %v8258 = vadd.f32 %v8194, 1.0
        %v8259 = vadd.f32 %v8195, 1.0
        %v8260 = vadd.f32 %v8196, 1.0
        %v8261 = vadd.f32 %v8197, 1.0
        %v8262 = vadd.f32 %v8198, 1.0
        %v8263 = vadd.f32 %v8199, 1.0
        %v8264 = vadd.f32 %v8200, 1.0
        %v8265 = vadd.f32 %v8201, 1.0
        %v8266 = vadd.f32 %v8202, 1.0
        %v8267 = vadd.f32 %v8203, 1.0
        %v8268 = vadd.f32 %v8204, 1.0
        %v8269 = vadd.f32 %v8205, 1.0
        %v8270 = vadd.f32 %v8206, 1.0
        %v8271 = vadd.f32 %v8207, 1.0
        %v8272 = vadd.f32 %v8208, 1.0
        %v8273 = vadd.f32 %v8209, 1.0
        %v8274 = vadd.f32 %v8210, 1.0
        %v8275 = vadd.f32 %v8211, 1.0
        %v8276 = vadd.f32 %v8212, 1.0
        %v8277 = vadd.f32 %v8213, 1.0
        %v8278 = vadd.f32 %v8214, 1.0
        %v8279 = vadd.f32 %v8215, 1.0
        %v8280 = vadd.f32 %v8216, 1.0
        %v8281 = vadd.f32 %v8217, 1.0
        %v8282 = vadd.f32 %v8218, 1.0
        %v8283 = vadd.f32 %v8219, 1.0
        %v8284 = vadd.f32 %v8220, 1.0
        %v8285 = vadd.f32 %v8221, 1.0
        %v8286 = vadd.f32 %v8222, 1.0
        %v8287 = vadd.f32 %v8223, 1.0
        %v8288 = vadd.f32 %v8224, 1.0
        %v8289 = vadd.f32 %v8225, 1.0
        %v8290 = vadd.f32 %v8226, 1.0
        %v8291 = vrcp.pop %v8227
        %v8292 = vmul.f32 1.0, %v8291
        %v8293 = vrcp.pop %v8228
        %v8294 = vmul.f32 1.0, %v8293
        %v8295 = vrcp.pop %v8229
        %v8296 = vmul.f32 1.0, %v8295
        %v8297 = vrcp.pop %v8230
        %v8298 = vmul.f32 1.0, %v8297
        %v8299 = vrcp.pop %v8231
        %v8300 = vmul.f32 1.0, %v8299
        %v8301 = vrcp.pop %v8232
        %v8302 = vmul.f32 1.0, %v8301
        %v8303 = vrcp.pop %v8233
        %v8304 = vmul.f32 1.0, %v8303
        %v8305 = vrcp.pop %v8234
        %v8306 = vmul.f32 1.0, %v8305
        %v8307 = vrcp.pop %v8235
        %v8308 = vmul.f32 1.0, %v8307
        %v8309 = vrcp.pop %v8236
        %v8310 = vmul.f32 1.0, %v8309
        %v8311 = vrcp.pop %v8237
        %v8312 = vmul.f32 1.0, %v8311
        %v8313 = vrcp.pop %v8238
        %v8314 = vmul.f32 1.0, %v8313
        %v8315 = vrcp.pop %v8239
        %v8316 = vmul.f32 1.0, %v8315
        %v8317 = vrcp.pop %v8240
        %v8318 = vmul.f32 1.0, %v8317
        %v8319 = vrcp.pop %v8241
        %v8320 = vmul.f32 1.0, %v8319
        %v8321 = vrcp.pop %v8242
        %v8322 = vmul.f32 1.0, %v8321
        %v8323 = vrcp.pop %v8243
        %v8324 = vmul.f32 1.0, %v8323
        %v8325 = vrcp.pop %v8244
        %v8326 = vmul.f32 1.0, %v8325
        %v8327 = vrcp.pop %v8245
        %v8328 = vmul.f32 1.0, %v8327
        %v8329 = vrcp.pop %v8246
        %v8330 = vmul.f32 1.0, %v8329
        %v8331 = vrcp.pop %v8247
        %v8332 = vmul.f32 1.0, %v8331
        %v8333 = vrcp.pop %v8248
        %v8334 = vmul.f32 1.0, %v8333
        %v8335 = vrcp.pop %v8249
        %v8336 = vmul.f32 1.0, %v8335
        %v8337 = vrcp.pop %v8250
        %v8338 = vmul.f32 1.0, %v8337
        %v8339 = vrcp.pop %v8251
        %v8340 = vmul.f32 1.0, %v8339
        %v8341 = vrcp.pop %v8252
        %v8342 = vmul.f32 1.0, %v8341
        %v8343 = vrcp.pop %v8253
        %v8344 = vmul.f32 1.0, %v8343
        %v8345 = vrcp.pop %v8254
        %v8346 = vmul.f32 1.0, %v8345
        %v8347 = vrcp.pop %v8255
        %v8348 = vmul.f32 1.0, %v8347
        %v8349 = vrcp.pop %v8256
        %v8350 = vmul.f32 1.0, %v8349
        %v8351 = vrcp.pop %v8257
        %v8352 = vmul.f32 1.0, %v8351
        %v8353 = vrcp.pop %v8258
        %v8354 = vmul.f32 1.0, %v8353
        %v8355 = vrcp.pop %v8259
        %v8356 = vmul.f32 1.0, %v8355
        %v8357 = vrcp.pop %v8260
        %v8358 = vmul.f32 1.0, %v8357
        %v8359 = vrcp.pop %v8261
        %v8360 = vmul.f32 1.0, %v8359
        %v8361 = vrcp.pop %v8262
        %v8362 = vmul.f32 1.0, %v8361
        %v8363 = vrcp.pop %v8263
        %v8364 = vmul.f32 1.0, %v8363
        %v8365 = vrcp.pop %v8264
        %v8366 = vmul.f32 1.0, %v8365
        %v8367 = vrcp.pop %v8265
        %v8368 = vmul.f32 1.0, %v8367
        %v8369 = vrcp.pop %v8266
        %v8370 = vmul.f32 1.0, %v8369
        %v8371 = vrcp.pop %v8267
        %v8372 = vmul.f32 1.0, %v8371
        %v8373 = vrcp.pop %v8268
        %v8374 = vmul.f32 1.0, %v8373
        %v8375 = vrcp.pop %v8269
        %v8376 = vmul.f32 1.0, %v8375
        %v8377 = vrcp.pop %v8270
        %v8378 = vmul.f32 1.0, %v8377
        %v8379 = vrcp.pop %v8271
        %v8380 = vmul.f32 1.0, %v8379
        %v8381 = vrcp.pop %v8272
        %v8382 = vmul.f32 1.0, %v8381
        %v8383 = vrcp.pop %v8273
        %v8384 = vmul.f32 1.0, %v8383
        %v8385 = vrcp.pop %v8274
        %v8386 = vmul.f32 1.0, %v8385
        %v8387 = vrcp.pop %v8275
        %v8388 = vmul.f32 1.0, %v8387
        %v8389 = vrcp.pop %v8276
        %v8390 = vmul.f32 1.0, %v8389
        %v8391 = vrcp.pop %v8277
        %v8392 = vmul.f32 1.0, %v8391
        %v8393 = vrcp.pop %v8278
        %v8394 = vmul.f32 1.0, %v8393
        %v8395 = vrcp.pop %v8279
        %v8396 = vmul.f32 1.0, %v8395
        %v8397 = vrcp.pop %v8280
        %v8398 = vmul.f32 1.0, %v8397
        %v8399 = vrcp.pop %v8281
        %v8400 = vmul.f32 1.0, %v8399
        %v8401 = vrcp.pop %v8282
        %v8402 = vmul.f32 1.0, %v8401
        %v8403 = vrcp.pop %v8283
        %v8404 = vmul.f32 1.0, %v8403
        %v8405 = vrcp.pop %v8284
        %v8406 = vmul.f32 1.0, %v8405
        %v8407 = vrcp.pop %v8285
        %v8408 = vmul.f32 1.0, %v8407
        %v8409 = vrcp.pop %v8286
        %v8410 = vmul.f32 1.0, %v8409
        %v8411 = vrcp.pop %v8287
        %v8412 = vmul.f32 1.0, %v8411
        %v8413 = vrcp.pop %v8288
        %v8414 = vmul.f32 1.0, %v8413
        %v8415 = vrcp.pop %v8289
        %v8416 = vmul.f32 1.0, %v8415
        %v8417 = vrcp.pop %v8290
        %v8418 = vmul.f32 1.0, %v8417
        %v8419 = vmul.f32 %v8292, 1.0614054
        %v8420 = vmul.f32 %v8294, 1.0614054
        %v8421 = vmul.f32 %v8296, 1.0614054
        %v8422 = vmul.f32 %v8298, 1.0614054
        %v8423 = vmul.f32 %v8300, 1.0614054
        %v8424 = vmul.f32 %v8302, 1.0614054
        %v8425 = vmul.f32 %v8304, 1.0614054
        %v8426 = vmul.f32 %v8306, 1.0614054
        %v8427 = vmul.f32 %v8308, 1.0614054
        %v8428 = vmul.f32 %v8310, 1.0614054
        %v8429 = vmul.f32 %v8312, 1.0614054
        %v8430 = vmul.f32 %v8314, 1.0614054
        %v8431 = vmul.f32 %v8316, 1.0614054
        %v8432 = vmul.f32 %v8318, 1.0614054
        %v8433 = vmul.f32 %v8320, 1.0614054
        %v8434 = vmul.f32 %v8322, 1.0614054
        %v8435 = vmul.f32 %v8324, 1.0614054
        %v8436 = vmul.f32 %v8326, 1.0614054
        %v8437 = vmul.f32 %v8328, 1.0614054
        %v8438 = vmul.f32 %v8330, 1.0614054
        %v8439 = vmul.f32 %v8332, 1.0614054
        %v8440 = vmul.f32 %v8334, 1.0614054
        %v8441 = vmul.f32 %v8336, 1.0614054
        %v8442 = vmul.f32 %v8338, 1.0614054
        %v8443 = vmul.f32 %v8340, 1.0614054
        %v8444 = vmul.f32 %v8342, 1.0614054
        %v8445 = vmul.f32 %v8344, 1.0614054
        %v8446 = vmul.f32 %v8346, 1.0614054
        %v8447 = vmul.f32 %v8348, 1.0614054
        %v8448 = vmul.f32 %v8350, 1.0614054
        %v8449 = vmul.f32 %v8352, 1.0614054
        %v8450 = vmul.f32 %v8354, 1.0614054
        %v8451 = vmul.f32 %v8356, 1.0614054
        %v8452 = vmul.f32 %v8358, 1.0614054
        %v8453 = vmul.f32 %v8360, 1.0614054
        %v8454 = vmul.f32 %v8362, 1.0614054
        %v8455 = vmul.f32 %v8364, 1.0614054
        %v8456 = vmul.f32 %v8366, 1.0614054
        %v8457 = vmul.f32 %v8368, 1.0614054
        %v8458 = vmul.f32 %v8370, 1.0614054
        %v8459 = vmul.f32 %v8372, 1.0614054
        %v8460 = vmul.f32 %v8374, 1.0614054
        %v8461 = vmul.f32 %v8376, 1.0614054
        %v8462 = vmul.f32 %v8378, 1.0614054
        %v8463 = vmul.f32 %v8380, 1.0614054
        %v8464 = vmul.f32 %v8382, 1.0614054
        %v8465 = vmul.f32 %v8384, 1.0614054
        %v8466 = vmul.f32 %v8386, 1.0614054
        %v8467 = vmul.f32 %v8388, 1.0614054
        %v8468 = vmul.f32 %v8390, 1.0614054
        %v8469 = vmul.f32 %v8392, 1.0614054
        %v8470 = vmul.f32 %v8394, 1.0614054
        %v8471 = vmul.f32 %v8396, 1.0614054
        %v8472 = vmul.f32 %v8398, 1.0614054
        %v8473 = vmul.f32 %v8400, 1.0614054
        %v8474 = vmul.f32 %v8402, 1.0614054
        %v8475 = vmul.f32 %v8404, 1.0614054
        %v8476 = vmul.f32 %v8406, 1.0614054
        %v8477 = vmul.f32 %v8408, 1.0614054
        %v8478 = vmul.f32 %v8410, 1.0614054
        %v8479 = vmul.f32 %v8412, 1.0614054
        %v8480 = vmul.f32 %v8414, 1.0614054
        %v8481 = vmul.f32 %v8416, 1.0614054
        %v8482 = vmul.f32 %v8418, 1.0614054
        %v8483 = vadd.f32 %v8419, -1.4531521
        %v8484 = vadd.f32 %v8420, -1.4531521
        %v8485 = vadd.f32 %v8421, -1.4531521
        %v8486 = vadd.f32 %v8422, -1.4531521
        %v8487 = vadd.f32 %v8423, -1.4531521
        %v8488 = vadd.f32 %v8424, -1.4531521
        %v8489 = vadd.f32 %v8425, -1.4531521
        %v8490 = vadd.f32 %v8426, -1.4531521
        %v8491 = vadd.f32 %v8427, -1.4531521
        %v8492 = vadd.f32 %v8428, -1.4531521
        %v8493 = vadd.f32 %v8429, -1.4531521
        %v8494 = vadd.f32 %v8430, -1.4531521
        %v8495 = vadd.f32 %v8431, -1.4531521
        %v8496 = vadd.f32 %v8432, -1.4531521
        %v8497 = vadd.f32 %v8433, -1.4531521
        %v8498 = vadd.f32 %v8434, -1.4531521
        %v8499 = vadd.f32 %v8435, -1.4531521
        %v8500 = vadd.f32 %v8436, -1.4531521
        %v8501 = vadd.f32 %v8437, -1.4531521
        %v8502 = vadd.f32 %v8438, -1.4531521
        %v8503 = vadd.f32 %v8439, -1.4531521
        %v8504 = vadd.f32 %v8440, -1.4531521
        %v8505 = vadd.f32 %v8441, -1.4531521
        %v8506 = vadd.f32 %v8442, -1.4531521
        %v8507 = vadd.f32 %v8443, -1.4531521
        %v8508 = vadd.f32 %v8444, -1.4531521
        %v8509 = vadd.f32 %v8445, -1.4531521
        %v8510 = vadd.f32 %v8446, -1.4531521
        %v8511 = vadd.f32 %v8447, -1.4531521
        %v8512 = vadd.f32 %v8448, -1.4531521
        %v8513 = vadd.f32 %v8449, -1.4531521
        %v8514 = vadd.f32 %v8450, -1.4531521
        %v8515 = vadd.f32 %v8451, -1.4531521
        %v8516 = vadd.f32 %v8452, -1.4531521
        %v8517 = vadd.f32 %v8453, -1.4531521
        %v8518 = vadd.f32 %v8454, -1.4531521
        %v8519 = vadd.f32 %v8455, -1.4531521
        %v8520 = vadd.f32 %v8456, -1.4531521
        %v8521 = vadd.f32 %v8457, -1.4531521
        %v8522 = vadd.f32 %v8458, -1.4531521
        %v8523 = vadd.f32 %v8459, -1.4531521
        %v8524 = vadd.f32 %v8460, -1.4531521
        %v8525 = vadd.f32 %v8461, -1.4531521
        %v8526 = vadd.f32 %v8462, -1.4531521
        %v8527 = vadd.f32 %v8463, -1.4531521
        %v8528 = vadd.f32 %v8464, -1.4531521
        %v8529 = vadd.f32 %v8465, -1.4531521
        %v8530 = vadd.f32 %v8466, -1.4531521
        %v8531 = vadd.f32 %v8467, -1.4531521
        %v8532 = vadd.f32 %v8468, -1.4531521
        %v8533 = vadd.f32 %v8469, -1.4531521
        %v8534 = vadd.f32 %v8470, -1.4531521
        %v8535 = vadd.f32 %v8471, -1.4531521
        %v8536 = vadd.f32 %v8472, -1.4531521
        %v8537 = vadd.f32 %v8473, -1.4531521
        %v8538 = vadd.f32 %v8474, -1.4531521
        %v8539 = vadd.f32 %v8475, -1.4531521
        %v8540 = vadd.f32 %v8476, -1.4531521
        %v8541 = vadd.f32 %v8477, -1.4531521
        %v8542 = vadd.f32 %v8478, -1.4531521
        %v8543 = vadd.f32 %v8479, -1.4531521
        %v8544 = vadd.f32 %v8480, -1.4531521
        %v8545 = vadd.f32 %v8481, -1.4531521
        %v8546 = vadd.f32 %v8482, -1.4531521
        %v8547 = vmul.f32 %v8292, %v8483
        %v8548 = vmul.f32 %v8294, %v8484
        %v8549 = vmul.f32 %v8296, %v8485
        %v8550 = vmul.f32 %v8298, %v8486
        %v8551 = vmul.f32 %v8300, %v8487
        %v8552 = vmul.f32 %v8302, %v8488
        %v8553 = vmul.f32 %v8304, %v8489
        %v8554 = vmul.f32 %v8306, %v8490
        %v8555 = vmul.f32 %v8308, %v8491
        %v8556 = vmul.f32 %v8310, %v8492
        %v8557 = vmul.f32 %v8312, %v8493
        %v8558 = vmul.f32 %v8314, %v8494
        %v8559 = vmul.f32 %v8316, %v8495
        %v8560 = vmul.f32 %v8318, %v8496
        %v8561 = vmul.f32 %v8320, %v8497
        %v8562 = vmul.f32 %v8322, %v8498
        %v8563 = vmul.f32 %v8324, %v8499
        %v8564 = vmul.f32 %v8326, %v8500
        %v8565 = vmul.f32 %v8328, %v8501
        %v8566 = vmul.f32 %v8330, %v8502
        %v8567 = vmul.f32 %v8332, %v8503
        %v8568 = vmul.f32 %v8334, %v8504
        %v8569 = vmul.f32 %v8336, %v8505
        %v8570 = vmul.f32 %v8338, %v8506
        %v8571 = vmul.f32 %v8340, %v8507
        %v8572 = vmul.f32 %v8342, %v8508
        %v8573 = vmul.f32 %v8344, %v8509
        %v8574 = vmul.f32 %v8346, %v8510
        %v8575 = vmul.f32 %v8348, %v8511
        %v8576 = vmul.f32 %v8350, %v8512
        %v8577 = vmul.f32 %v8352, %v8513
        %v8578 = vmul.f32 %v8354, %v8514
        %v8579 = vmul.f32 %v8356, %v8515
        %v8580 = vmul.f32 %v8358, %v8516
        %v8581 = vmul.f32 %v8360, %v8517
        %v8582 = vmul.f32 %v8362, %v8518
        %v8583 = vmul.f32 %v8364, %v8519
        %v8584 = vmul.f32 %v8366, %v8520
        %v8585 = vmul.f32 %v8368, %v8521
        %v8586 = vmul.f32 %v8370, %v8522
        %v8587 = vmul.f32 %v8372, %v8523
        %v8588 = vmul.f32 %v8374, %v8524
        %v8589 = vmul.f32 %v8376, %v8525
        %v8590 = vmul.f32 %v8378, %v8526
        %v8591 = vmul.f32 %v8380, %v8527
        %v8592 = vmul.f32 %v8382, %v8528
        %v8593 = vmul.f32 %v8384, %v8529
        %v8594 = vmul.f32 %v8386, %v8530
        %v8595 = vmul.f32 %v8388, %v8531
        %v8596 = vmul.f32 %v8390, %v8532
        %v8597 = vmul.f32 %v8392, %v8533
        %v8598 = vmul.f32 %v8394, %v8534
        %v8599 = vmul.f32 %v8396, %v8535
        %v8600 = vmul.f32 %v8398, %v8536
        %v8601 = vmul.f32 %v8400, %v8537
        %v8602 = vmul.f32 %v8402, %v8538
        %v8603 = vmul.f32 %v8404, %v8539
        %v8604 = vmul.f32 %v8406, %v8540
        %v8605 = vmul.f32 %v8408, %v8541
        %v8606 = vmul.f32 %v8410, %v8542
        %v8607 = vmul.f32 %v8412, %v8543
        %v8608 = vmul.f32 %v8414, %v8544
        %v8609 = vmul.f32 %v8416, %v8545
        %v8610 = vmul.f32 %v8418, %v8546
        %v8611 = vadd.f32 %v8547, 1.4214138
        %v8612 = vadd.f32 %v8548, 1.4214138
        %v8613 = vadd.f32 %v8549, 1.4214138
        %v8614 = vadd.f32 %v8550, 1.4214138
        %v8615 = vadd.f32 %v8551, 1.4214138
        %v8616 = vadd.f32 %v8552, 1.4214138
        %v8617 = vadd.f32 %v8553, 1.4214138
        %v8618 = vadd.f32 %v8554, 1.4214138
        %v8619 = vadd.f32 %v8555, 1.4214138
        %v8620 = vadd.f32 %v8556, 1.4214138
        %v8621 = vadd.f32 %v8557, 1.4214138
        %v8622 = vadd.f32 %v8558, 1.4214138
        %v8623 = vadd.f32 %v8559, 1.4214138
        %v8624 = vadd.f32 %v8560, 1.4214138
        %v8625 = vadd.f32 %v8561, 1.4214138
        %v8626 = vadd.f32 %v8562, 1.4214138
        %v8627 = vadd.f32 %v8563, 1.4214138
        %v8628 = vadd.f32 %v8564, 1.4214138
        %v8629 = vadd.f32 %v8565, 1.4214138
        %v8630 = vadd.f32 %v8566, 1.4214138
        %v8631 = vadd.f32 %v8567, 1.4214138
        %v8632 = vadd.f32 %v8568, 1.4214138
        %v8633 = vadd.f32 %v8569, 1.4214138
        %v8634 = vadd.f32 %v8570, 1.4214138
        %v8635 = vadd.f32 %v8571, 1.4214138
        %v8636 = vadd.f32 %v8572, 1.4214138
        %v8637 = vadd.f32 %v8573, 1.4214138
        %v8638 = vadd.f32 %v8574, 1.4214138
        %v8639 = vadd.f32 %v8575, 1.4214138
        %v8640 = vadd.f32 %v8576, 1.4214138
        %v8641 = vadd.f32 %v8577, 1.4214138
        %v8642 = vadd.f32 %v8578, 1.4214138
        %v8643 = vadd.f32 %v8579, 1.4214138
        %v8644 = vadd.f32 %v8580, 1.4214138
        %v8645 = vadd.f32 %v8581, 1.4214138
        %v8646 = vadd.f32 %v8582, 1.4214138
        %v8647 = vadd.f32 %v8583, 1.4214138
        %v8648 = vadd.f32 %v8584, 1.4214138
        %v8649 = vadd.f32 %v8585, 1.4214138
        %v8650 = vadd.f32 %v8586, 1.4214138
        %v8651 = vadd.f32 %v8587, 1.4214138
        %v8652 = vadd.f32 %v8588, 1.4214138
        %v8653 = vadd.f32 %v8589, 1.4214138
        %v8654 = vadd.f32 %v8590, 1.4214138
        %v8655 = vadd.f32 %v8591, 1.4214138
        %v8656 = vadd.f32 %v8592, 1.4214138
        %v8657 = vadd.f32 %v8593, 1.4214138
        %v8658 = vadd.f32 %v8594, 1.4214138
        %v8659 = vadd.f32 %v8595, 1.4214138
        %v8660 = vadd.f32 %v8596, 1.4214138
        %v8661 = vadd.f32 %v8597, 1.4214138
        %v8662 = vadd.f32 %v8598, 1.4214138
        %v8663 = vadd.f32 %v8599, 1.4214138
        %v8664 = vadd.f32 %v8600, 1.4214138
        %v8665 = vadd.f32 %v8601, 1.4214138
        %v8666 = vadd.f32 %v8602, 1.4214138
        %v8667 = vadd.f32 %v8603, 1.4214138
        %v8668 = vadd.f32 %v8604, 1.4214138
        %v8669 = vadd.f32 %v8605, 1.4214138
        %v8670 = vadd.f32 %v8606, 1.4214138
        %v8671 = vadd.f32 %v8607, 1.4214138
        %v8672 = vadd.f32 %v8608, 1.4214138
        %v8673 = vadd.f32 %v8609, 1.4214138
        %v8674 = vadd.f32 %v8610, 1.4214138
        %v8675 = vmul.f32 %v8292, %v8611
        %v8676 = vmul.f32 %v8294, %v8612
        %v8677 = vmul.f32 %v8296, %v8613
        %v8678 = vmul.f32 %v8298, %v8614
        %v8679 = vmul.f32 %v8300, %v8615
        %v8680 = vmul.f32 %v8302, %v8616
        %v8681 = vmul.f32 %v8304, %v8617
        %v8682 = vmul.f32 %v8306, %v8618
        %v8683 = vmul.f32 %v8308, %v8619
        %v8684 = vmul.f32 %v8310, %v8620
        %v8685 = vmul.f32 %v8312, %v8621
        %v8686 = vmul.f32 %v8314, %v8622
        %v8687 = vmul.f32 %v8316, %v8623
        %v8688 = vmul.f32 %v8318, %v8624
        %v8689 = vmul.f32 %v8320, %v8625
        %v8690 = vmul.f32 %v8322, %v8626
        %v8691 = vmul.f32 %v8324, %v8627
        %v8692 = vmul.f32 %v8326, %v8628
        %v8693 = vmul.f32 %v8328, %v8629
        %v8694 = vmul.f32 %v8330, %v8630
        %v8695 = vmul.f32 %v8332, %v8631
        %v8696 = vmul.f32 %v8334, %v8632
        %v8697 = vmul.f32 %v8336, %v8633
        %v8698 = vmul.f32 %v8338, %v8634
        %v8699 = vmul.f32 %v8340, %v8635
        %v8700 = vmul.f32 %v8342, %v8636
        %v8701 = vmul.f32 %v8344, %v8637
        %v8702 = vmul.f32 %v8346, %v8638
        %v8703 = vmul.f32 %v8348, %v8639
        %v8704 = vmul.f32 %v8350, %v8640
        %v8705 = vmul.f32 %v8352, %v8641
        %v8706 = vmul.f32 %v8354, %v8642
        %v8707 = vmul.f32 %v8356, %v8643
        %v8708 = vmul.f32 %v8358, %v8644
        %v8709 = vmul.f32 %v8360, %v8645
        %v8710 = vmul.f32 %v8362, %v8646
        %v8711 = vmul.f32 %v8364, %v8647
        %v8712 = vmul.f32 %v8366, %v8648
        %v8713 = vmul.f32 %v8368, %v8649
        %v8714 = vmul.f32 %v8370, %v8650
        %v8715 = vmul.f32 %v8372, %v8651
        %v8716 = vmul.f32 %v8374, %v8652
        %v8717 = vmul.f32 %v8376, %v8653
        %v8718 = vmul.f32 %v8378, %v8654
        %v8719 = vmul.f32 %v8380, %v8655
        %v8720 = vmul.f32 %v8382, %v8656
        %v8721 = vmul.f32 %v8384, %v8657
        %v8722 = vmul.f32 %v8386, %v8658
        %v8723 = vmul.f32 %v8388, %v8659
        %v8724 = vmul.f32 %v8390, %v8660
        %v8725 = vmul.f32 %v8392, %v8661
        %v8726 = vmul.f32 %v8394, %v8662
        %v8727 = vmul.f32 %v8396, %v8663
        %v8728 = vmul.f32 %v8398, %v8664
        %v8729 = vmul.f32 %v8400, %v8665
        %v8730 = vmul.f32 %v8402, %v8666
        %v8731 = vmul.f32 %v8404, %v8667
        %v8732 = vmul.f32 %v8406, %v8668
        %v8733 = vmul.f32 %v8408, %v8669
        %v8734 = vmul.f32 %v8410, %v8670
        %v8735 = vmul.f32 %v8412, %v8671
        %v8736 = vmul.f32 %v8414, %v8672
        %v8737 = vmul.f32 %v8416, %v8673
        %v8738 = vmul.f32 %v8418, %v8674
        %v8739 = vadd.f32 %v8675, -0.28449672
        %v8740 = vadd.f32 %v8676, -0.28449672
        %v8741 = vadd.f32 %v8677, -0.28449672
        %v8742 = vadd.f32 %v8678, -0.28449672
        %v8743 = vadd.f32 %v8679, -0.28449672
        %v8744 = vadd.f32 %v8680, -0.28449672
        %v8745 = vadd.f32 %v8681, -0.28449672
        %v8746 = vadd.f32 %v8682, -0.28449672
        %v8747 = vadd.f32 %v8683, -0.28449672
        %v8748 = vadd.f32 %v8684, -0.28449672
        %v8749 = vadd.f32 %v8685, -0.28449672
        %v8750 = vadd.f32 %v8686, -0.28449672
        %v8751 = vadd.f32 %v8687, -0.28449672
        %v8752 = vadd.f32 %v8688, -0.28449672
        %v8753 = vadd.f32 %v8689, -0.28449672
        %v8754 = vadd.f32 %v8690, -0.28449672
        %v8755 = vadd.f32 %v8691, -0.28449672
        %v8756 = vadd.f32 %v8692, -0.28449672
        %v8757 = vadd.f32 %v8693, -0.28449672
        %v8758 = vadd.f32 %v8694, -0.28449672
        %v8759 = vadd.f32 %v8695, -0.28449672
        %v8760 = vadd.f32 %v8696, -0.28449672
        %v8761 = vadd.f32 %v8697, -0.28449672
        %v8762 = vadd.f32 %v8698, -0.28449672
        %v8763 = vadd.f32 %v8699, -0.28449672
        %v8764 = vadd.f32 %v8700, -0.28449672
        %v8765 = vadd.f32 %v8701, -0.28449672
        %v8766 = vadd.f32 %v8702, -0.28449672
        %v8767 = vadd.f32 %v8703, -0.28449672
        %v8768 = vadd.f32 %v8704, -0.28449672
        %v8769 = vadd.f32 %v8705, -0.28449672
        %v8770 = vadd.f32 %v8706, -0.28449672
        %v8771 = vadd.f32 %v8707, -0.28449672
        %v8772 = vadd.f32 %v8708, -0.28449672
        %v8773 = vadd.f32 %v8709, -0.28449672
        %v8774 = vadd.f32 %v8710, -0.28449672
        %v8775 = vadd.f32 %v8711, -0.28449672
        %v8776 = vadd.f32 %v8712, -0.28449672
        %v8777 = vadd.f32 %v8713, -0.28449672
        %v8778 = vadd.f32 %v8714, -0.28449672
        %v8779 = vadd.f32 %v8715, -0.28449672
        %v8780 = vadd.f32 %v8716, -0.28449672
        %v8781 = vadd.f32 %v8717, -0.28449672
        %v8782 = vadd.f32 %v8718, -0.28449672
        %v8783 = vadd.f32 %v8719, -0.28449672
        %v8784 = vadd.f32 %v8720, -0.28449672
        %v8785 = vadd.f32 %v8721, -0.28449672
        %v8786 = vadd.f32 %v8722, -0.28449672
        %v8787 = vadd.f32 %v8723, -0.28449672
        %v8788 = vadd.f32 %v8724, -0.28449672
        %v8789 = vadd.f32 %v8725, -0.28449672
        %v8790 = vadd.f32 %v8726, -0.28449672
        %v8791 = vadd.f32 %v8727, -0.28449672
        %v8792 = vadd.f32 %v8728, -0.28449672
        %v8793 = vadd.f32 %v8729, -0.28449672
        %v8794 = vadd.f32 %v8730, -0.28449672
        %v8795 = vadd.f32 %v8731, -0.28449672
        %v8796 = vadd.f32 %v8732, -0.28449672
        %v8797 = vadd.f32 %v8733, -0.28449672
        %v8798 = vadd.f32 %v8734, -0.28449672
        %v8799 = vadd.f32 %v8735, -0.28449672
        %v8800 = vadd.f32 %v8736, -0.28449672
        %v8801 = vadd.f32 %v8737, -0.28449672
        %v8802 = vadd.f32 %v8738, -0.28449672
        %v8803 = vmul.f32 %v8292, %v8739
        %v8804 = vmul.f32 %v8294, %v8740
        %v8805 = vmul.f32 %v8296, %v8741
        %v8806 = vmul.f32 %v8298, %v8742
        %v8807 = vmul.f32 %v8300, %v8743
        %v8808 = vmul.f32 %v8302, %v8744
        %v8809 = vmul.f32 %v8304, %v8745
        %v8810 = vmul.f32 %v8306, %v8746
        %v8811 = vmul.f32 %v8308, %v8747
        %v8812 = vmul.f32 %v8310, %v8748
        %v8813 = vmul.f32 %v8312, %v8749
        %v8814 = vmul.f32 %v8314, %v8750
        %v8815 = vmul.f32 %v8316, %v8751
        %v8816 = vmul.f32 %v8318, %v8752
        %v8817 = vmul.f32 %v8320, %v8753
        %v8818 = vmul.f32 %v8322, %v8754
        %v8819 = vmul.f32 %v8324, %v8755
        %v8820 = vmul.f32 %v8326, %v8756
        %v8821 = vmul.f32 %v8328, %v8757
        %v8822 = vmul.f32 %v8330, %v8758
        %v8823 = vmul.f32 %v8332, %v8759
        %v8824 = vmul.f32 %v8334, %v8760
        %v8825 = vmul.f32 %v8336, %v8761
        %v8826 = vmul.f32 %v8338, %v8762
        %v8827 = vmul.f32 %v8340, %v8763
        %v8828 = vmul.f32 %v8342, %v8764
        %v8829 = vmul.f32 %v8344, %v8765
        %v8830 = vmul.f32 %v8346, %v8766
        %v8831 = vmul.f32 %v8348, %v8767
        %v8832 = vmul.f32 %v8350, %v8768
        %v8833 = vmul.f32 %v8352, %v8769
        %v8834 = vmul.f32 %v8354, %v8770
        %v8835 = vmul.f32 %v8356, %v8771
        %v8836 = vmul.f32 %v8358, %v8772
        %v8837 = vmul.f32 %v8360, %v8773
        %v8838 = vmul.f32 %v8362, %v8774
        %v8839 = vmul.f32 %v8364, %v8775
        %v8840 = vmul.f32 %v8366, %v8776
        %v8841 = vmul.f32 %v8368, %v8777
        %v8842 = vmul.f32 %v8370, %v8778
        %v8843 = vmul.f32 %v8372, %v8779
        %v8844 = vmul.f32 %v8374, %v8780
        %v8845 = vmul.f32 %v8376, %v8781
        %v8846 = vmul.f32 %v8378, %v8782
        %v8847 = vmul.f32 %v8380, %v8783
        %v8848 = vmul.f32 %v8382, %v8784
        %v8849 = vmul.f32 %v8384, %v8785
        %v8850 = vmul.f32 %v8386, %v8786
        %v8851 = vmul.f32 %v8388, %v8787
        %v8852 = vmul.f32 %v8390, %v8788
        %v8853 = vmul.f32 %v8392, %v8789
        %v8854 = vmul.f32 %v8394, %v8790
        %v8855 = vmul.f32 %v8396, %v8791
        %v8856 = vmul.f32 %v8398, %v8792
        %v8857 = vmul.f32 %v8400, %v8793
        %v8858 = vmul.f32 %v8402, %v8794
        %v8859 = vmul.f32 %v8404, %v8795
        %v8860 = vmul.f32 %v8406, %v8796
        %v8861 = vmul.f32 %v8408, %v8797
        %v8862 = vmul.f32 %v8410, %v8798
        %v8863 = vmul.f32 %v8412, %v8799
        %v8864 = vmul.f32 %v8414, %v8800
        %v8865 = vmul.f32 %v8416, %v8801
        %v8866 = vmul.f32 %v8418, %v8802
        %v8867 = vadd.f32 %v8803, 0.2548296
        %v8868 = vadd.f32 %v8804, 0.2548296
        %v8869 = vadd.f32 %v8805, 0.2548296
        %v8870 = vadd.f32 %v8806, 0.2548296
        %v8871 = vadd.f32 %v8807, 0.2548296
        %v8872 = vadd.f32 %v8808, 0.2548296
        %v8873 = vadd.f32 %v8809, 0.2548296
        %v8874 = vadd.f32 %v8810, 0.2548296
        %v8875 = vadd.f32 %v8811, 0.2548296
        %v8876 = vadd.f32 %v8812, 0.2548296
        %v8877 = vadd.f32 %v8813, 0.2548296
        %v8878 = vadd.f32 %v8814, 0.2548296
        %v8879 = vadd.f32 %v8815, 0.2548296
        %v8880 = vadd.f32 %v8816, 0.2548296
        %v8881 = vadd.f32 %v8817, 0.2548296
        %v8882 = vadd.f32 %v8818, 0.2548296
        %v8883 = vadd.f32 %v8819, 0.2548296
        %v8884 = vadd.f32 %v8820, 0.2548296
        %v8885 = vadd.f32 %v8821, 0.2548296
        %v8886 = vadd.f32 %v8822, 0.2548296
        %v8887 = vadd.f32 %v8823, 0.2548296
        %v8888 = vadd.f32 %v8824, 0.2548296
        %v8889 = vadd.f32 %v8825, 0.2548296
        %v8890 = vadd.f32 %v8826, 0.2548296
        %v8891 = vadd.f32 %v8827, 0.2548296
        %v8892 = vadd.f32 %v8828, 0.2548296
        %v8893 = vadd.f32 %v8829, 0.2548296
        %v8894 = vadd.f32 %v8830, 0.2548296
        %v8895 = vadd.f32 %v8831, 0.2548296
        %v8896 = vadd.f32 %v8832, 0.2548296
        %v8897 = vadd.f32 %v8833, 0.2548296
        %v8898 = vadd.f32 %v8834, 0.2548296
        %v8899 = vadd.f32 %v8835, 0.2548296
        %v8900 = vadd.f32 %v8836, 0.2548296
        %v8901 = vadd.f32 %v8837, 0.2548296
        %v8902 = vadd.f32 %v8838, 0.2548296
        %v8903 = vadd.f32 %v8839, 0.2548296
        %v8904 = vadd.f32 %v8840, 0.2548296
        %v8905 = vadd.f32 %v8841, 0.2548296
        %v8906 = vadd.f32 %v8842, 0.2548296
        %v8907 = vadd.f32 %v8843, 0.2548296
        %v8908 = vadd.f32 %v8844, 0.2548296
        %v8909 = vadd.f32 %v8845, 0.2548296
        %v8910 = vadd.f32 %v8846, 0.2548296
        %v8911 = vadd.f32 %v8847, 0.2548296
        %v8912 = vadd.f32 %v8848, 0.2548296
        %v8913 = vadd.f32 %v8849, 0.2548296
        %v8914 = vadd.f32 %v8850, 0.2548296
        %v8915 = vadd.f32 %v8851, 0.2548296
        %v8916 = vadd.f32 %v8852, 0.2548296
        %v8917 = vadd.f32 %v8853, 0.2548296
        %v8918 = vadd.f32 %v8854, 0.2548296
        %v8919 = vadd.f32 %v8855, 0.2548296
        %v8920 = vadd.f32 %v8856, 0.2548296
        %v8921 = vadd.f32 %v8857, 0.2548296
        %v8922 = vadd.f32 %v8858, 0.2548296
        %v8923 = vadd.f32 %v8859, 0.2548296
        %v8924 = vadd.f32 %v8860, 0.2548296
        %v8925 = vadd.f32 %v8861, 0.2548296
        %v8926 = vadd.f32 %v8862, 0.2548296
        %v8927 = vadd.f32 %v8863, 0.2548296
        %v8928 = vadd.f32 %v8864, 0.2548296
        %v8929 = vadd.f32 %v8865, 0.2548296
        %v8930 = vadd.f32 %v8866, 0.2548296
        %v8931 = vmul.f32 %v8292, %v8867
        %v8932 = vmul.f32 %v8294, %v8868
        %v8933 = vmul.f32 %v8296, %v8869
        %v8934 = vmul.f32 %v8298, %v8870
        %v8935 = vmul.f32 %v8300, %v8871
        %v8936 = vmul.f32 %v8302, %v8872
        %v8937 = vmul.f32 %v8304, %v8873
        %v8938 = vmul.f32 %v8306, %v8874
        %v8939 = vmul.f32 %v8308, %v8875
        %v8940 = vmul.f32 %v8310, %v8876
        %v8941 = vmul.f32 %v8312, %v8877
        %v8942 = vmul.f32 %v8314, %v8878
        %v8943 = vmul.f32 %v8316, %v8879
        %v8944 = vmul.f32 %v8318, %v8880
        %v8945 = vmul.f32 %v8320, %v8881
        %v8946 = vmul.f32 %v8322, %v8882
        %v8947 = vmul.f32 %v8324, %v8883
        %v8948 = vmul.f32 %v8326, %v8884
        %v8949 = vmul.f32 %v8328, %v8885
        %v8950 = vmul.f32 %v8330, %v8886
        %v8951 = vmul.f32 %v8332, %v8887
        %v8952 = vmul.f32 %v8334, %v8888
        %v8953 = vmul.f32 %v8336, %v8889
        %v8954 = vmul.f32 %v8338, %v8890
        %v8955 = vmul.f32 %v8340, %v8891
        %v8956 = vmul.f32 %v8342, %v8892
        %v8957 = vmul.f32 %v8344, %v8893
        %v8958 = vmul.f32 %v8346, %v8894
        %v8959 = vmul.f32 %v8348, %v8895
        %v8960 = vmul.f32 %v8350, %v8896
        %v8961 = vmul.f32 %v8352, %v8897
        %v8962 = vmul.f32 %v8354, %v8898
        %v8963 = vmul.f32 %v8356, %v8899
        %v8964 = vmul.f32 %v8358, %v8900
        %v8965 = vmul.f32 %v8360, %v8901
        %v8966 = vmul.f32 %v8362, %v8902
        %v8967 = vmul.f32 %v8364, %v8903
        %v8968 = vmul.f32 %v8366, %v8904
        %v8969 = vmul.f32 %v8368, %v8905
        %v8970 = vmul.f32 %v8370, %v8906
        %v8971 = vmul.f32 %v8372, %v8907
        %v8972 = vmul.f32 %v8374, %v8908
        %v8973 = vmul.f32 %v8376, %v8909
        %v8974 = vmul.f32 %v8378, %v8910
        %v8975 = vmul.f32 %v8380, %v8911
        %v8976 = vmul.f32 %v8382, %v8912
        %v8977 = vmul.f32 %v8384, %v8913
        %v8978 = vmul.f32 %v8386, %v8914
        %v8979 = vmul.f32 %v8388, %v8915
        %v8980 = vmul.f32 %v8390, %v8916
        %v8981 = vmul.f32 %v8392, %v8917
        %v8982 = vmul.f32 %v8394, %v8918
        %v8983 = vmul.f32 %v8396, %v8919
        %v8984 = vmul.f32 %v8398, %v8920
        %v8985 = vmul.f32 %v8400, %v8921
        %v8986 = vmul.f32 %v8402, %v8922
        %v8987 = vmul.f32 %v8404, %v8923
        %v8988 = vmul.f32 %v8406, %v8924
        %v8989 = vmul.f32 %v8408, %v8925
        %v8990 = vmul.f32 %v8410, %v8926
        %v8991 = vmul.f32 %v8412, %v8927
        %v8992 = vmul.f32 %v8414, %v8928
        %v8993 = vmul.f32 %v8416, %v8929
        %v8994 = vmul.f32 %v8418, %v8930
        %v8995 = vsub.f32 0.0, %v8099
        %v8996 = vsub.f32 0.0, %v8100
        %v8997 = vsub.f32 0.0, %v8101
        %v8998 = vsub.f32 0.0, %v8102
        %v8999 = vsub.f32 0.0, %v8103
        %v9000 = vsub.f32 0.0, %v8104
        %v9001 = vsub.f32 0.0, %v8105
        %v9002 = vsub.f32 0.0, %v8106
        %v9003 = vsub.f32 0.0, %v8107
        %v9004 = vsub.f32 0.0, %v8108
        %v9005 = vsub.f32 0.0, %v8109
        %v9006 = vsub.f32 0.0, %v8110
        %v9007 = vsub.f32 0.0, %v8111
        %v9008 = vsub.f32 0.0, %v8112
        %v9009 = vsub.f32 0.0, %v8113
        %v9010 = vsub.f32 0.0, %v8114
        %v9011 = vsub.f32 0.0, %v8115
        %v9012 = vsub.f32 0.0, %v8116
        %v9013 = vsub.f32 0.0, %v8117
        %v9014 = vsub.f32 0.0, %v8118
        %v9015 = vsub.f32 0.0, %v8119
        %v9016 = vsub.f32 0.0, %v8120
        %v9017 = vsub.f32 0.0, %v8121
        %v9018 = vsub.f32 0.0, %v8122
        %v9019 = vsub.f32 0.0, %v8123
        %v9020 = vsub.f32 0.0, %v8124
        %v9021 = vsub.f32 0.0, %v8125
        %v9022 = vsub.f32 0.0, %v8126
        %v9023 = vsub.f32 0.0, %v8127
        %v9024 = vsub.f32 0.0, %v8128
        %v9025 = vsub.f32 0.0, %v8129
        %v9026 = vsub.f32 0.0, %v8130
        %v9027 = vsub.f32 0.0, %v8131
        %v9028 = vsub.f32 0.0, %v8132
        %v9029 = vsub.f32 0.0, %v8133
        %v9030 = vsub.f32 0.0, %v8134
        %v9031 = vsub.f32 0.0, %v8135
        %v9032 = vsub.f32 0.0, %v8136
        %v9033 = vsub.f32 0.0, %v8137
        %v9034 = vsub.f32 0.0, %v8138
        %v9035 = vsub.f32 0.0, %v8139
        %v9036 = vsub.f32 0.0, %v8140
        %v9037 = vsub.f32 0.0, %v8141
        %v9038 = vsub.f32 0.0, %v8142
        %v9039 = vsub.f32 0.0, %v8143
        %v9040 = vsub.f32 0.0, %v8144
        %v9041 = vsub.f32 0.0, %v8145
        %v9042 = vsub.f32 0.0, %v8146
        %v9043 = vsub.f32 0.0, %v8147
        %v9044 = vsub.f32 0.0, %v8148
        %v9045 = vsub.f32 0.0, %v8149
        %v9046 = vsub.f32 0.0, %v8150
        %v9047 = vsub.f32 0.0, %v8151
        %v9048 = vsub.f32 0.0, %v8152
        %v9049 = vsub.f32 0.0, %v8153
        %v9050 = vsub.f32 0.0, %v8154
        %v9051 = vsub.f32 0.0, %v8155
        %v9052 = vsub.f32 0.0, %v8156
        %v9053 = vsub.f32 0.0, %v8157
        %v9054 = vsub.f32 0.0, %v8158
        %v9055 = vsub.f32 0.0, %v8159
        %v9056 = vsub.f32 0.0, %v8160
        %v9057 = vsub.f32 0.0, %v8161
        %v9058 = vsub.f32 0.0, %v8162
        %v9059 = vmul.f32 %v8995, %v8099
        %v9060 = vmul.f32 %v8996, %v8100
        %v9061 = vmul.f32 %v8997, %v8101
        %v9062 = vmul.f32 %v8998, %v8102
        %v9063 = vmul.f32 %v8999, %v8103
        %v9064 = vmul.f32 %v9000, %v8104
        %v9065 = vmul.f32 %v9001, %v8105
        %v9066 = vmul.f32 %v9002, %v8106
        %v9067 = vmul.f32 %v9003, %v8107
        %v9068 = vmul.f32 %v9004, %v8108
        %v9069 = vmul.f32 %v9005, %v8109
        %v9070 = vmul.f32 %v9006, %v8110
        %v9071 = vmul.f32 %v9007, %v8111
        %v9072 = vmul.f32 %v9008, %v8112
        %v9073 = vmul.f32 %v9009, %v8113
        %v9074 = vmul.f32 %v9010, %v8114
        %v9075 = vmul.f32 %v9011, %v8115
        %v9076 = vmul.f32 %v9012, %v8116
        %v9077 = vmul.f32 %v9013, %v8117
        %v9078 = vmul.f32 %v9014, %v8118
        %v9079 = vmul.f32 %v9015, %v8119
        %v9080 = vmul.f32 %v9016, %v8120
        %v9081 = vmul.f32 %v9017, %v8121
        %v9082 = vmul.f32 %v9018, %v8122
        %v9083 = vmul.f32 %v9019, %v8123
        %v9084 = vmul.f32 %v9020, %v8124
        %v9085 = vmul.f32 %v9021, %v8125
        %v9086 = vmul.f32 %v9022, %v8126
        %v9087 = vmul.f32 %v9023, %v8127
        %v9088 = vmul.f32 %v9024, %v8128
        %v9089 = vmul.f32 %v9025, %v8129
        %v9090 = vmul.f32 %v9026, %v8130
        %v9091 = vmul.f32 %v9027, %v8131
        %v9092 = vmul.f32 %v9028, %v8132
        %v9093 = vmul.f32 %v9029, %v8133
        %v9094 = vmul.f32 %v9030, %v8134
        %v9095 = vmul.f32 %v9031, %v8135
        %v9096 = vmul.f32 %v9032, %v8136
        %v9097 = vmul.f32 %v9033, %v8137
        %v9098 = vmul.f32 %v9034, %v8138
        %v9099 = vmul.f32 %v9035, %v8139
        %v9100 = vmul.f32 %v9036, %v8140
        %v9101 = vmul.f32 %v9037, %v8141
        %v9102 = vmul.f32 %v9038, %v8142
        %v9103 = vmul.f32 %v9039, %v8143
        %v9104 = vmul.f32 %v9040, %v8144
        %v9105 = vmul.f32 %v9041, %v8145
        %v9106 = vmul.f32 %v9042, %v8146
        %v9107 = vmul.f32 %v9043, %v8147
        %v9108 = vmul.f32 %v9044, %v8148
        %v9109 = vmul.f32 %v9045, %v8149
        %v9110 = vmul.f32 %v9046, %v8150
        %v9111 = vmul.f32 %v9047, %v8151
        %v9112 = vmul.f32 %v9048, %v8152
        %v9113 = vmul.f32 %v9049, %v8153
        %v9114 = vmul.f32 %v9050, %v8154
        %v9115 = vmul.f32 %v9051, %v8155
        %v9116 = vmul.f32 %v9052, %v8156
        %v9117 = vmul.f32 %v9053, %v8157
        %v9118 = vmul.f32 %v9054, %v8158
        %v9119 = vmul.f32 %v9055, %v8159
        %v9120 = vmul.f32 %v9056, %v8160
        %v9121 = vmul.f32 %v9057, %v8161
        %v9122 = vmul.f32 %v9058, %v8162
        %v9123 = vmul.f32 %v9059, 1.442695
        %v9124 = vpow.pop %v9123
        %v9125 = vmul.f32 %v9060, 1.442695
        %v9126 = vpow.pop %v9125
        %v9127 = vmul.f32 %v9061, 1.442695
        %v9128 = vpow.pop %v9127
        %v9129 = vmul.f32 %v9062, 1.442695
        %v9130 = vpow.pop %v9129
        %v9131 = vmul.f32 %v9063, 1.442695
        %v9132 = vpow.pop %v9131
        %v9133 = vmul.f32 %v9064, 1.442695
        %v9134 = vpow.pop %v9133
        %v9135 = vmul.f32 %v9065, 1.442695
        %v9136 = vpow.pop %v9135
        %v9137 = vmul.f32 %v9066, 1.442695
        %v9138 = vpow.pop %v9137
        %v9139 = vmul.f32 %v9067, 1.442695
        %v9140 = vpow.pop %v9139
        %v9141 = vmul.f32 %v9068, 1.442695
        %v9142 = vpow.pop %v9141
        %v9143 = vmul.f32 %v9069, 1.442695
        %v9144 = vpow.pop %v9143
        %v9145 = vmul.f32 %v9070, 1.442695
        %v9146 = vpow.pop %v9145
        %v9147 = vmul.f32 %v9071, 1.442695
        %v9148 = vpow.pop %v9147
        %v9149 = vmul.f32 %v9072, 1.442695
        %v9150 = vpow.pop %v9149
        %v9151 = vmul.f32 %v9073, 1.442695
        %v9152 = vpow.pop %v9151
        %v9153 = vmul.f32 %v9074, 1.442695
        %v9154 = vpow.pop %v9153
        %v9155 = vmul.f32 %v9075, 1.442695
        %v9156 = vpow.pop %v9155
        %v9157 = vmul.f32 %v9076, 1.442695
        %v9158 = vpow.pop %v9157
        %v9159 = vmul.f32 %v9077, 1.442695
        %v9160 = vpow.pop %v9159
        %v9161 = vmul.f32 %v9078, 1.442695
        %v9162 = vpow.pop %v9161
        %v9163 = vmul.f32 %v9079, 1.442695
        %v9164 = vpow.pop %v9163
        %v9165 = vmul.f32 %v9080, 1.442695
        %v9166 = vpow.pop %v9165
        %v9167 = vmul.f32 %v9081, 1.442695
        %v9168 = vpow.pop %v9167
        %v9169 = vmul.f32 %v9082, 1.442695
        %v9170 = vpow.pop %v9169
        %v9171 = vmul.f32 %v9083, 1.442695
        %v9172 = vpow.pop %v9171
        %v9173 = vmul.f32 %v9084, 1.442695
        %v9174 = vpow.pop %v9173
        %v9175 = vmul.f32 %v9085, 1.442695
        %v9176 = vpow.pop %v9175
        %v9177 = vmul.f32 %v9086, 1.442695
        %v9178 = vpow.pop %v9177
        %v9179 = vmul.f32 %v9087, 1.442695
        %v9180 = vpow.pop %v9179
        %v9181 = vmul.f32 %v9088, 1.442695
        %v9182 = vpow.pop %v9181
        %v9183 = vmul.f32 %v9089, 1.442695
        %v9184 = vpow.pop %v9183
        %v9185 = vmul.f32 %v9090, 1.442695
        %v9186 = vpow.pop %v9185
        %v9187 = vmul.f32 %v9091, 1.442695
        %v9188 = vpow.pop %v9187
        %v9189 = vmul.f32 %v9092, 1.442695
        %v9190 = vpow.pop %v9189
        %v9191 = vmul.f32 %v9093, 1.442695
        %v9192 = vpow.pop %v9191
        %v9193 = vmul.f32 %v9094, 1.442695
        %v9194 = vpow.pop %v9193
        %v9195 = vmul.f32 %v9095, 1.442695
        %v9196 = vpow.pop %v9195
        %v9197 = vmul.f32 %v9096, 1.442695
        %v9198 = vpow.pop %v9197
        %v9199 = vmul.f32 %v9097, 1.442695
        %v9200 = vpow.pop %v9199
        %v9201 = vmul.f32 %v9098, 1.442695
        %v9202 = vpow.pop %v9201
        %v9203 = vmul.f32 %v9099, 1.442695
        %v9204 = vpow.pop %v9203
        %v9205 = vmul.f32 %v9100, 1.442695
        %v9206 = vpow.pop %v9205
        %v9207 = vmul.f32 %v9101, 1.442695
        %v9208 = vpow.pop %v9207
        %v9209 = vmul.f32 %v9102, 1.442695
        %v9210 = vpow.pop %v9209
        %v9211 = vmul.f32 %v9103, 1.442695
        %v9212 = vpow.pop %v9211
        %v9213 = vmul.f32 %v9104, 1.442695
        %v9214 = vpow.pop %v9213
        %v9215 = vmul.f32 %v9105, 1.442695
        %v9216 = vpow.pop %v9215
        %v9217 = vmul.f32 %v9106, 1.442695
        %v9218 = vpow.pop %v9217
        %v9219 = vmul.f32 %v9107, 1.442695
        %v9220 = vpow.pop %v9219
        %v9221 = vmul.f32 %v9108, 1.442695
        %v9222 = vpow.pop %v9221
        %v9223 = vmul.f32 %v9109, 1.442695
        %v9224 = vpow.pop %v9223
        %v9225 = vmul.f32 %v9110, 1.442695
        %v9226 = vpow.pop %v9225
        %v9227 = vmul.f32 %v9111, 1.442695
        %v9228 = vpow.pop %v9227
        %v9229 = vmul.f32 %v9112, 1.442695
        %v9230 = vpow.pop %v9229
        %v9231 = vmul.f32 %v9113, 1.442695
        %v9232 = vpow.pop %v9231
        %v9233 = vmul.f32 %v9114, 1.442695
        %v9234 = vpow.pop %v9233
        %v9235 = vmul.f32 %v9115, 1.442695
        %v9236 = vpow.pop %v9235
        %v9237 = vmul.f32 %v9116, 1.442695
        %v9238 = vpow.pop %v9237
        %v9239 = vmul.f32 %v9117, 1.442695
        %v9240 = vpow.pop %v9239
        %v9241 = vmul.f32 %v9118, 1.442695
        %v9242 = vpow.pop %v9241
        %v9243 = vmul.f32 %v9119, 1.442695
        %v9244 = vpow.pop %v9243
        %v9245 = vmul.f32 %v9120, 1.442695
        %v9246 = vpow.pop %v9245
        %v9247 = vmul.f32 %v9121, 1.442695
        %v9248 = vpow.pop %v9247
        %v9249 = vmul.f32 %v9122, 1.442695
        %v9250 = vpow.pop %v9249
        %v9251 = vmul.f32 %v8931, %v9124
        %v9252 = vmul.f32 %v8932, %v9126
        %v9253 = vmul.f32 %v8933, %v9128
        %v9254 = vmul.f32 %v8934, %v9130
        %v9255 = vmul.f32 %v8935, %v9132
        %v9256 = vmul.f32 %v8936, %v9134
        %v9257 = vmul.f32 %v8937, %v9136
        %v9258 = vmul.f32 %v8938, %v9138
        %v9259 = vmul.f32 %v8939, %v9140
        %v9260 = vmul.f32 %v8940, %v9142
        %v9261 = vmul.f32 %v8941, %v9144
        %v9262 = vmul.f32 %v8942, %v9146
        %v9263 = vmul.f32 %v8943, %v9148
        %v9264 = vmul.f32 %v8944, %v9150
        %v9265 = vmul.f32 %v8945, %v9152
        %v9266 = vmul.f32 %v8946, %v9154
        %v9267 = vmul.f32 %v8947, %v9156
        %v9268 = vmul.f32 %v8948, %v9158
        %v9269 = vmul.f32 %v8949, %v9160
        %v9270 = vmul.f32 %v8950, %v9162
        %v9271 = vmul.f32 %v8951, %v9164
        %v9272 = vmul.f32 %v8952, %v9166
        %v9273 = vmul.f32 %v8953, %v9168
        %v9274 = vmul.f32 %v8954, %v9170
        %v9275 = vmul.f32 %v8955, %v9172
        %v9276 = vmul.f32 %v8956, %v9174
        %v9277 = vmul.f32 %v8957, %v9176
        %v9278 = vmul.f32 %v8958, %v9178
        %v9279 = vmul.f32 %v8959, %v9180
        %v9280 = vmul.f32 %v8960, %v9182
        %v9281 = vmul.f32 %v8961, %v9184
        %v9282 = vmul.f32 %v8962, %v9186
        %v9283 = vmul.f32 %v8963, %v9188
        %v9284 = vmul.f32 %v8964, %v9190
        %v9285 = vmul.f32 %v8965, %v9192
        %v9286 = vmul.f32 %v8966, %v9194
        %v9287 = vmul.f32 %v8967, %v9196
        %v9288 = vmul.f32 %v8968, %v9198
        %v9289 = vmul.f32 %v8969, %v9200
        %v9290 = vmul.f32 %v8970, %v9202
        %v9291 = vmul.f32 %v8971, %v9204
        %v9292 = vmul.f32 %v8972, %v9206
        %v9293 = vmul.f32 %v8973, %v9208
        %v9294 = vmul.f32 %v8974, %v9210
        %v9295 = vmul.f32 %v8975, %v9212
        %v9296 = vmul.f32 %v8976, %v9214
        %v9297 = vmul.f32 %v8977, %v9216
        %v9298 = vmul.f32 %v8978, %v9218
        %v9299 = vmul.f32 %v8979, %v9220
        %v9300 = vmul.f32 %v8980, %v9222
        %v9301 = vmul.f32 %v8981, %v9224
        %v9302 = vmul.f32 %v8982, %v9226
        %v9303 = vmul.f32 %v8983, %v9228
        %v9304 = vmul.f32 %v8984, %v9230
        %v9305 = vmul.f32 %v8985, %v9232
        %v9306 = vmul.f32 %v8986, %v9234
        %v9307 = vmul.f32 %v8987, %v9236
        %v9308 = vmul.f32 %v8988, %v9238
        %v9309 = vmul.f32 %v8989, %v9240
        %v9310 = vmul.f32 %v8990, %v9242
        %v9311 = vmul.f32 %v8991, %v9244
        %v9312 = vmul.f32 %v8992, %v9246
        %v9313 = vmul.f32 %v8993, %v9248
        %v9314 = vmul.f32 %v8994, %v9250
        %v9315 = vsub.f32 1.0, %v9251
        %v9316 = vsub.f32 1.0, %v9252
        %v9317 = vsub.f32 1.0, %v9253
        %v9318 = vsub.f32 1.0, %v9254
        %v9319 = vsub.f32 1.0, %v9255
        %v9320 = vsub.f32 1.0, %v9256
        %v9321 = vsub.f32 1.0, %v9257
        %v9322 = vsub.f32 1.0, %v9258
        %v9323 = vsub.f32 1.0, %v9259
        %v9324 = vsub.f32 1.0, %v9260
        %v9325 = vsub.f32 1.0, %v9261
        %v9326 = vsub.f32 1.0, %v9262
        %v9327 = vsub.f32 1.0, %v9263
        %v9328 = vsub.f32 1.0, %v9264
        %v9329 = vsub.f32 1.0, %v9265
        %v9330 = vsub.f32 1.0, %v9266
        %v9331 = vsub.f32 1.0, %v9267
        %v9332 = vsub.f32 1.0, %v9268
        %v9333 = vsub.f32 1.0, %v9269
        %v9334 = vsub.f32 1.0, %v9270
        %v9335 = vsub.f32 1.0, %v9271
        %v9336 = vsub.f32 1.0, %v9272
        %v9337 = vsub.f32 1.0, %v9273
        %v9338 = vsub.f32 1.0, %v9274
        %v9339 = vsub.f32 1.0, %v9275
        %v9340 = vsub.f32 1.0, %v9276
        %v9341 = vsub.f32 1.0, %v9277
        %v9342 = vsub.f32 1.0, %v9278
        %v9343 = vsub.f32 1.0, %v9279
        %v9344 = vsub.f32 1.0, %v9280
        %v9345 = vsub.f32 1.0, %v9281
        %v9346 = vsub.f32 1.0, %v9282
        %v9347 = vsub.f32 1.0, %v9283
        %v9348 = vsub.f32 1.0, %v9284
        %v9349 = vsub.f32 1.0, %v9285
        %v9350 = vsub.f32 1.0, %v9286
        %v9351 = vsub.f32 1.0, %v9287
        %v9352 = vsub.f32 1.0, %v9288
        %v9353 = vsub.f32 1.0, %v9289
        %v9354 = vsub.f32 1.0, %v9290
        %v9355 = vsub.f32 1.0, %v9291
        %v9356 = vsub.f32 1.0, %v9292
        %v9357 = vsub.f32 1.0, %v9293
        %v9358 = vsub.f32 1.0, %v9294
        %v9359 = vsub.f32 1.0, %v9295
        %v9360 = vsub.f32 1.0, %v9296
        %v9361 = vsub.f32 1.0, %v9297
        %v9362 = vsub.f32 1.0, %v9298
        %v9363 = vsub.f32 1.0, %v9299
        %v9364 = vsub.f32 1.0, %v9300
        %v9365 = vsub.f32 1.0, %v9301
        %v9366 = vsub.f32 1.0, %v9302
        %v9367 = vsub.f32 1.0, %v9303
        %v9368 = vsub.f32 1.0, %v9304
        %v9369 = vsub.f32 1.0, %v9305
        %v9370 = vsub.f32 1.0, %v9306
        %v9371 = vsub.f32 1.0, %v9307
        %v9372 = vsub.f32 1.0, %v9308
        %v9373 = vsub.f32 1.0, %v9309
        %v9374 = vsub.f32 1.0, %v9310
        %v9375 = vsub.f32 1.0, %v9311
        %v9376 = vsub.f32 1.0, %v9312
        %v9377 = vsub.f32 1.0, %v9313
        %v9378 = vsub.f32 1.0, %v9314
        %v9379 = vmul.f32 %v8035, %v9315
        %v9380 = vmul.f32 %v8036, %v9316
        %v9381 = vmul.f32 %v8037, %v9317
        %v9382 = vmul.f32 %v8038, %v9318
        %v9383 = vmul.f32 %v8039, %v9319
        %v9384 = vmul.f32 %v8040, %v9320
        %v9385 = vmul.f32 %v8041, %v9321
        %v9386 = vmul.f32 %v8042, %v9322
        %v9387 = vmul.f32 %v8043, %v9323
        %v9388 = vmul.f32 %v8044, %v9324
        %v9389 = vmul.f32 %v8045, %v9325
        %v9390 = vmul.f32 %v8046, %v9326
        %v9391 = vmul.f32 %v8047, %v9327
        %v9392 = vmul.f32 %v8048, %v9328
        %v9393 = vmul.f32 %v8049, %v9329
        %v9394 = vmul.f32 %v8050, %v9330
        %v9395 = vmul.f32 %v8051, %v9331
        %v9396 = vmul.f32 %v8052, %v9332
        %v9397 = vmul.f32 %v8053, %v9333
        %v9398 = vmul.f32 %v8054, %v9334
        %v9399 = vmul.f32 %v8055, %v9335
        %v9400 = vmul.f32 %v8056, %v9336
        %v9401 = vmul.f32 %v8057, %v9337
        %v9402 = vmul.f32 %v8058, %v9338
        %v9403 = vmul.f32 %v8059, %v9339
        %v9404 = vmul.f32 %v8060, %v9340
        %v9405 = vmul.f32 %v8061, %v9341
        %v9406 = vmul.f32 %v8062, %v9342
        %v9407 = vmul.f32 %v8063, %v9343
        %v9408 = vmul.f32 %v8064, %v9344
        %v9409 = vmul.f32 %v8065, %v9345
        %v9410 = vmul.f32 %v8066, %v9346
        %v9411 = vmul.f32 %v8067, %v9347
        %v9412 = vmul.f32 %v8068, %v9348
        %v9413 = vmul.f32 %v8069, %v9349
        %v9414 = vmul.f32 %v8070, %v9350
        %v9415 = vmul.f32 %v8071, %v9351
        %v9416 = vmul.f32 %v8072, %v9352
        %v9417 = vmul.f32 %v8073, %v9353
        %v9418 = vmul.f32 %v8074, %v9354
        %v9419 = vmul.f32 %v8075, %v9355
        %v9420 = vmul.f32 %v8076, %v9356
        %v9421 = vmul.f32 %v8077, %v9357
        %v9422 = vmul.f32 %v8078, %v9358
        %v9423 = vmul.f32 %v8079, %v9359
        %v9424 = vmul.f32 %v8080, %v9360
        %v9425 = vmul.f32 %v8081, %v9361
        %v9426 = vmul.f32 %v8082, %v9362
        %v9427 = vmul.f32 %v8083, %v9363
        %v9428 = vmul.f32 %v8084, %v9364
        %v9429 = vmul.f32 %v8085, %v9365
        %v9430 = vmul.f32 %v8086, %v9366
        %v9431 = vmul.f32 %v8087, %v9367
        %v9432 = vmul.f32 %v8088, %v9368
        %v9433 = vmul.f32 %v8089, %v9369
        %v9434 = vmul.f32 %v8090, %v9370
        %v9435 = vmul.f32 %v8091, %v9371
        %v9436 = vmul.f32 %v8092, %v9372
        %v9437 = vmul.f32 %v8093, %v9373
        %v9438 = vmul.f32 %v8094, %v9374
        %v9439 = vmul.f32 %v8095, %v9375
        %v9440 = vmul.f32 %v8096, %v9376
        %v9441 = vmul.f32 %v8097, %v9377
        %v9442 = vmul.f32 %v8098, %v9378
        %v9443 = vadd.f32 %v9379, 1.0
        %v9444 = vadd.f32 %v9380, 1.0
        %v9445 = vadd.f32 %v9381, 1.0
        %v9446 = vadd.f32 %v9382, 1.0
        %v9447 = vadd.f32 %v9383, 1.0
        %v9448 = vadd.f32 %v9384, 1.0
        %v9449 = vadd.f32 %v9385, 1.0
        %v9450 = vadd.f32 %v9386, 1.0
        %v9451 = vadd.f32 %v9387, 1.0
        %v9452 = vadd.f32 %v9388, 1.0
        %v9453 = vadd.f32 %v9389, 1.0
        %v9454 = vadd.f32 %v9390, 1.0
        %v9455 = vadd.f32 %v9391, 1.0
        %v9456 = vadd.f32 %v9392, 1.0
        %v9457 = vadd.f32 %v9393, 1.0
        %v9458 = vadd.f32 %v9394, 1.0
        %v9459 = vadd.f32 %v9395, 1.0
        %v9460 = vadd.f32 %v9396, 1.0
        %v9461 = vadd.f32 %v9397, 1.0
        %v9462 = vadd.f32 %v9398, 1.0
        %v9463 = vadd.f32 %v9399, 1.0
        %v9464 = vadd.f32 %v9400, 1.0
        %v9465 = vadd.f32 %v9401, 1.0
        %v9466 = vadd.f32 %v9402, 1.0
        %v9467 = vadd.f32 %v9403, 1.0
        %v9468 = vadd.f32 %v9404, 1.0
        %v9469 = vadd.f32 %v9405, 1.0
        %v9470 = vadd.f32 %v9406, 1.0
        %v9471 = vadd.f32 %v9407, 1.0
        %v9472 = vadd.f32 %v9408, 1.0
        %v9473 = vadd.f32 %v9409, 1.0
        %v9474 = vadd.f32 %v9410, 1.0
        %v9475 = vadd.f32 %v9411, 1.0
        %v9476 = vadd.f32 %v9412, 1.0
        %v9477 = vadd.f32 %v9413, 1.0
        %v9478 = vadd.f32 %v9414, 1.0
        %v9479 = vadd.f32 %v9415, 1.0
        %v9480 = vadd.f32 %v9416, 1.0
        %v9481 = vadd.f32 %v9417, 1.0
        %v9482 = vadd.f32 %v9418, 1.0
        %v9483 = vadd.f32 %v9419, 1.0
        %v9484 = vadd.f32 %v9420, 1.0
        %v9485 = vadd.f32 %v9421, 1.0
        %v9486 = vadd.f32 %v9422, 1.0
        %v9487 = vadd.f32 %v9423, 1.0
        %v9488 = vadd.f32 %v9424, 1.0
        %v9489 = vadd.f32 %v9425, 1.0
        %v9490 = vadd.f32 %v9426, 1.0
        %v9491 = vadd.f32 %v9427, 1.0
        %v9492 = vadd.f32 %v9428, 1.0
        %v9493 = vadd.f32 %v9429, 1.0
        %v9494 = vadd.f32 %v9430, 1.0
        %v9495 = vadd.f32 %v9431, 1.0
        %v9496 = vadd.f32 %v9432, 1.0
        %v9497 = vadd.f32 %v9433, 1.0
        %v9498 = vadd.f32 %v9434, 1.0
        %v9499 = vadd.f32 %v9435, 1.0
        %v9500 = vadd.f32 %v9436, 1.0
        %v9501 = vadd.f32 %v9437, 1.0
        %v9502 = vadd.f32 %v9438, 1.0
        %v9503 = vadd.f32 %v9439, 1.0
        %v9504 = vadd.f32 %v9440, 1.0
        %v9505 = vadd.f32 %v9441, 1.0
        %v9506 = vadd.f32 %v9442, 1.0
        %v9507 = vmul.f32 %v7843, %v9443
        %v9508 = vmul.f32 %v7844, %v9444
        %v9509 = vmul.f32 %v7845, %v9445
        %v9510 = vmul.f32 %v7846, %v9446
        %v9511 = vmul.f32 %v7847, %v9447
        %v9512 = vmul.f32 %v7848, %v9448
        %v9513 = vmul.f32 %v7849, %v9449
        %v9514 = vmul.f32 %v7850, %v9450
        %v9515 = vmul.f32 %v7851, %v9451
        %v9516 = vmul.f32 %v7852, %v9452
        %v9517 = vmul.f32 %v7853, %v9453
        %v9518 = vmul.f32 %v7854, %v9454
        %v9519 = vmul.f32 %v7855, %v9455
        %v9520 = vmul.f32 %v7856, %v9456
        %v9521 = vmul.f32 %v7857, %v9457
        %v9522 = vmul.f32 %v7858, %v9458
        %v9523 = vmul.f32 %v7859, %v9459
        %v9524 = vmul.f32 %v7860, %v9460
        %v9525 = vmul.f32 %v7861, %v9461
        %v9526 = vmul.f32 %v7862, %v9462
        %v9527 = vmul.f32 %v7863, %v9463
        %v9528 = vmul.f32 %v7864, %v9464
        %v9529 = vmul.f32 %v7865, %v9465
        %v9530 = vmul.f32 %v7866, %v9466
        %v9531 = vmul.f32 %v7867, %v9467
        %v9532 = vmul.f32 %v7868, %v9468
        %v9533 = vmul.f32 %v7869, %v9469
        %v9534 = vmul.f32 %v7870, %v9470
        %v9535 = vmul.f32 %v7871, %v9471
        %v9536 = vmul.f32 %v7872, %v9472
        %v9537 = vmul.f32 %v7873, %v9473
        %v9538 = vmul.f32 %v7874, %v9474
        %v9539 = vmul.f32 %v7875, %v9475
        %v9540 = vmul.f32 %v7876, %v9476
        %v9541 = vmul.f32 %v7877, %v9477
        %v9542 = vmul.f32 %v7878, %v9478
        %v9543 = vmul.f32 %v7879, %v9479
        %v9544 = vmul.f32 %v7880, %v9480
        %v9545 = vmul.f32 %v7881, %v9481
        %v9546 = vmul.f32 %v7882, %v9482
        %v9547 = vmul.f32 %v7883, %v9483
        %v9548 = vmul.f32 %v7884, %v9484
        %v9549 = vmul.f32 %v7885, %v9485
        %v9550 = vmul.f32 %v7886, %v9486
        %v9551 = vmul.f32 %v7887, %v9487
        %v9552 = vmul.f32 %v7888, %v9488
        %v9553 = vmul.f32 %v7889, %v9489
        %v9554 = vmul.f32 %v7890, %v9490
        %v9555 = vmul.f32 %v7891, %v9491
        %v9556 = vmul.f32 %v7892, %v9492
        %v9557 = vmul.f32 %v7893, %v9493
        %v9558 = vmul.f32 %v7894, %v9494
        %v9559 = vmul.f32 %v7895, %v9495
        %v9560 = vmul.f32 %v7896, %v9496
        %v9561 = vmul.f32 %v7897, %v9497
        %v9562 = vmul.f32 %v7898, %v9498
        %v9563 = vmul.f32 %v7899, %v9499
        %v9564 = vmul.f32 %v7900, %v9500
        %v9565 = vmul.f32 %v7901, %v9501
        %v9566 = vmul.f32 %v7902, %v9502
        %v9567 = vmul.f32 %v7903, %v9503
        %v9568 = vmul.f32 %v7904, %v9504
        %v9569 = vmul.f32 %v7905, %v9505
        %v9570 = vmul.f32 %v7906, %v9506
        %v9571 = vpack.c.bf16 %v9509, %v9507
        %v9572 = vpack.c.bf16 %v9510, %v9508
        %v9573 = vpack.c.bf16 %v9513, %v9511
        %v9574 = vpack.c.bf16 %v9514, %v9512
        %v9575 = vpack.c.bf16 %v9517, %v9515
        %v9576 = vpack.c.bf16 %v9518, %v9516
        %v9577 = vpack.c.bf16 %v9521, %v9519
        %v9578 = vpack.c.bf16 %v9522, %v9520
        %v9579 = vpack.c.bf16 %v9525, %v9523
        %v9580 = vpack.c.bf16 %v9526, %v9524
        %v9581 = vpack.c.bf16 %v9529, %v9527
        %v9582 = vpack.c.bf16 %v9530, %v9528
        %v9583 = vpack.c.bf16 %v9533, %v9531
        %v9584 = vpack.c.bf16 %v9534, %v9532
        %v9585 = vpack.c.bf16 %v9537, %v9535
        %v9586 = vpack.c.bf16 %v9538, %v9536
        %v9587 = vpack.c.bf16 %v9541, %v9539
        %v9588 = vpack.c.bf16 %v9542, %v9540
        %v9589 = vpack.c.bf16 %v9545, %v9543
        %v9590 = vpack.c.bf16 %v9546, %v9544
        %v9591 = vpack.c.bf16 %v9549, %v9547
        %v9592 = vpack.c.bf16 %v9550, %v9548
        %v9593 = vpack.c.bf16 %v9553, %v9551
        %v9594 = vpack.c.bf16 %v9554, %v9552
        %v9595 = vpack.c.bf16 %v9557, %v9555
        %v9596 = vpack.c.bf16 %v9558, %v9556
        %v9597 = vpack.c.bf16 %v9561, %v9559
        %v9598 = vpack.c.bf16 %v9562, %v9560
        %v9599 = vpack.c.bf16 %v9565, %v9563
        %v9600 = vpack.c.bf16 %v9566, %v9564
        %v9601 = vpack.c.bf16 %v9569, %v9567
        %v9602 = vpack.c.bf16 %v9570, %v9568
        %v9603 = vmul.bf16 %v7811, %v9571
        %v9604 = vmul.bf16 %v7812, %v9572
        %v9605 = vmul.bf16 %v7813, %v9573
        %v9606 = vmul.bf16 %v7814, %v9574
        %v9607 = vmul.bf16 %v7815, %v9575
        %v9608 = vmul.bf16 %v7816, %v9576
        %v9609 = vmul.bf16 %v7817, %v9577
        %v9610 = vmul.bf16 %v7818, %v9578
        %v9611 = vmul.bf16 %v7819, %v9579
        %v9612 = vmul.bf16 %v7820, %v9580
        %v9613 = vmul.bf16 %v7821, %v9581
        %v9614 = vmul.bf16 %v7822, %v9582
        %v9615 = vmul.bf16 %v7823, %v9583
        %v9616 = vmul.bf16 %v7824, %v9584
        %v9617 = vmul.bf16 %v7825, %v9585
        %v9618 = vmul.bf16 %v7826, %v9586
        %v9619 = vmul.bf16 %v7827, %v9587
        %v9620 = vmul.bf16 %v7828, %v9588
        %v9621 = vmul.bf16 %v7829, %v9589
        %v9622 = vmul.bf16 %v7830, %v9590
        %v9623 = vmul.bf16 %v7831, %v9591
        %v9624 = vmul.bf16 %v7832, %v9592
        %v9625 = vmul.bf16 %v7833, %v9593
        %v9626 = vmul.bf16 %v7834, %v9594
        %v9627 = vmul.bf16 %v7835, %v9595
        %v9628 = vmul.bf16 %v7836, %v9596
        %v9629 = vmul.bf16 %v7837, %v9597
        %v9630 = vmul.bf16 %v7838, %v9598
        %v9631 = vmul.bf16 %v7839, %v9599
        %v9632 = vmul.bf16 %v7840, %v9600
        %v9633 = vmul.bf16 %v7841, %v9601
        %v9634 = vmul.bf16 %v7842, %v9602
        %v9635 = vld [vmem:[%s9] sm:$0xff]
        %v9636 = vld [vmem:[%s9 + $0x8] sm:$0xff]
        %v9637 = vld [vmem:[%s9 + $0x10] sm:$0xff]
        %v9638 = vld [vmem:[%s9 + $0x18] sm:$0xff]
        %v9639 = vld [vmem:[%s9 + $0x20] sm:$0xff]
        %v9640 = vld [vmem:[%s9 + $0x28] sm:$0xff]
        %v9641 = vld [vmem:[%s9 + $0x30] sm:$0xff]
        %v9642 = vld [vmem:[%s9 + $0x38] sm:$0xff]
        %v9643 = vld [vmem:[%s2] sm:$0xff]
        %v9644 = vld [vmem:[%s2 + $0x8] sm:$0xff]
        %v9645 = vld [vmem:[%s2 + $0x10] sm:$0xff]
        %v9646 = vld [vmem:[%s2 + $0x18] sm:$0xff]
        %v9647 = vld [vmem:[%s2 + $0x20] sm:$0xff]
        %v9648 = vld [vmem:[%s2 + $0x28] sm:$0xff]
        %v9649 = vld [vmem:[%s2 + $0x30] sm:$0xff]
        %v9650 = vld [vmem:[%s2 + $0x38] sm:$0xff]
        %9652 = vset.pattern.permute.xlu0 11
        %9653 = vperm.xlu0 %9652, %v9643
        %v9654 = vpop.permute.xlu0 %9653
        %9657 = vset.pattern.permute.xlu0 11
        %9658 = vperm.xlu0 %9657, %v9644
        %v9659 = vpop.permute.xlu0 %9658
        %9662 = vset.pattern.permute.xlu0 11
        %9663 = vperm.xlu0 %9662, %v9645
        %v9664 = vpop.permute.xlu0 %9663
        %9667 = vset.pattern.permute.xlu0 11
        %9668 = vperm.xlu0 %9667, %v9646
        %v9669 = vpop.permute.xlu0 %9668
        %9672 = vset.pattern.permute.xlu0 11
        %9673 = vperm.xlu0 %9672, %v9647
        %v9674 = vpop.permute.xlu0 %9673
        %9677 = vset.pattern.permute.xlu0 11
        %9678 = vperm.xlu0 %9677, %v9648
        %v9679 = vpop.permute.xlu0 %9678
        %9682 = vset.pattern.permute.xlu0 11
        %9683 = vperm.xlu0 %9682, %v9649
        %v9684 = vpop.permute.xlu0 %9683
        %9687 = vset.pattern.permute.xlu0 11
        %9688 = vperm.xlu0 %9687, %v9650
        %v9689 = vpop.permute.xlu0 %9688
        %v9699 = vunpack.c.l.b16 %v9635
        %v9700 = vunpack.c.h.b16 %v9635
        %v9701 = vunpack.c.l.b16 %v9636
        %v9702 = vunpack.c.h.b16 %v9636
        %v9703 = vunpack.c.l.b16 %v9637
        %v9704 = vunpack.c.h.b16 %v9637
        %v9705 = vunpack.c.l.b16 %v9638
        %v9706 = vunpack.c.h.b16 %v9638
        %v9707 = vunpack.c.l.b16 %v9639
        %v9708 = vunpack.c.h.b16 %v9639
        %v9709 = vunpack.c.l.b16 %v9640
        %v9710 = vunpack.c.h.b16 %v9640
        %v9711 = vunpack.c.l.b16 %v9641
        %v9712 = vunpack.c.h.b16 %v9641
        %v9713 = vunpack.c.l.b16 %v9642
        %v9714 = vunpack.c.h.b16 %v9642
        %v9715 = vpack.c.b16 %v9701, %v9699
        %v9716 = vpack.c.b16 %v9702, %v9700
        %v9717 = vpack.c.b16 %v9705, %v9703
        %v9718 = vpack.c.b16 %v9706, %v9704
        %v9719 = vpack.c.b16 %v9709, %v9707
        %v9720 = vpack.c.b16 %v9710, %v9708
        %v9721 = vpack.c.b16 %v9713, %v9711
        %v9722 = vpack.c.b16 %v9714, %v9712
        %9731 = vmatprep.subr.bf16.mxu0 %v9604
        %9732 = vmatpush1.bf16.msra.mxu0 %v9603
        %9733 = vmatprep.subr.bf16.mxu0 %v9606
        %9734 = vmatpush1.bf16.msra.mxu0 %v9605
        %9735 = vmatprep.subr.bf16.mxu0 %v9608
        %9736 = vmatpush1.bf16.msra.mxu0 %v9607
        %9737 = vmatprep.subr.bf16.mxu0 %v9610
        %9738 = vmatpush1.bf16.msra.mxu0 %v9609
        %9739 = vmatprep.subr.bf16.mxu0 %v9612
        %9740 = vmatpush1.bf16.msra.mxu0 %v9611
        %9741 = vmatprep.subr.bf16.mxu0 %v9614
        %9742 = vmatpush1.bf16.msra.mxu0 %v9613
        %9743 = vmatprep.subr.bf16.mxu0 %v9616
        %9744 = vmatpush1.bf16.msra.mxu0 %v9615
        %9745 = vmatprep.subr.bf16.mxu0 %v9618
        %9746 = vmatpush1.bf16.msra.mxu0 %v9617
        %9747 = vmatprep.subr.bf16.mxu0 %v9620
        %9748 = vmatpush1.bf16.msra.mxu0 %v9619
        %9749 = vmatprep.subr.bf16.mxu0 %v9622
        %9750 = vmatpush1.bf16.msra.mxu0 %v9621
        %9751 = vmatprep.subr.bf16.mxu0 %v9624
        %9752 = vmatpush1.bf16.msra.mxu0 %v9623
        %9753 = vmatprep.subr.bf16.mxu0 %v9626
        %9754 = vmatpush1.bf16.msra.mxu0 %v9625
        %9755 = vmatprep.subr.bf16.mxu0 %v9628
        %9756 = vmatpush1.bf16.msra.mxu0 %v9627
        %9757 = vmatprep.subr.bf16.mxu0 %v9630
        %9758 = vmatpush1.bf16.msra.mxu0 %v9629
        %9759 = vmatprep.subr.bf16.mxu0 %v9632
        %9760 = vmatpush1.bf16.msra.mxu0 %v9631
        %9761 = vmatprep.subr.bf16.mxu0 %v9634
        %9762 = vmatpush1.bf16.msra.mxu0 %v9633
        %9763 = vmatprep.mubr.bf16.mxu0 %v9716
        %9764 = vmatmul.mubr.bf16.gmra.mrb[0].mxu0 %v9715
        %v9765 = vpop.f32.mrb[0].mxu0
        %v9766 = vadd.f32 %v9654, %v9765
        %v9767 = vpop.f32.mrb[0].mxu0
        %v9768 = vadd.f32 %v9654, %v9767
        %v9769 = vpop.f32.mrb[0].mxu0
        %v9770 = vadd.f32 %v9659, %v9769
        %v9771 = vpop.f32.mrb[0].mxu0
        %v9772 = vadd.f32 %v9659, %v9771
        %9773 = vmatprep.mubr.bf16.mxu0 %v9718
        %9774 = vmatmul.mubr.bf16.gmra.mrb[0].mxu0 %v9717
        %v9775 = vpop.f32.mrb[0].mxu0
        %v9776 = vadd.f32 %v9664, %v9775
        %v9777 = vpop.f32.mrb[0].mxu0
        %v9778 = vadd.f32 %v9664, %v9777
        %v9779 = vpop.f32.mrb[0].mxu0
        %v9780 = vadd.f32 %v9669, %v9779
        %v9781 = vpop.f32.mrb[0].mxu0
        %v9782 = vadd.f32 %v9669, %v9781
        %9783 = vmatprep.mubr.bf16.mxu0 %v9720
        %9784 = vmatmul.mubr.bf16.gmra.mrb[0].mxu0 %v9719
        %v9785 = vpop.f32.mrb[0].mxu0
        %v9786 = vadd.f32 %v9674, %v9785
        %v9787 = vpop.f32.mrb[0].mxu0
        %v9788 = vadd.f32 %v9674, %v9787
        %v9789 = vpop.f32.mrb[0].mxu0
        %v9790 = vadd.f32 %v9679, %v9789
        %v9791 = vpop.f32.mrb[0].mxu0
        %v9792 = vadd.f32 %v9679, %v9791
        %9793 = vmatprep.mubr.bf16.mxu0 %v9722
        %9794 = vmatmul.mubr.bf16.gmra.mrb[0].mxu0 %v9721
        %v9795 = vpop.f32.mrb[0].mxu0
        %v9796 = vadd.f32 %v9684, %v9795
        %v9797 = vpop.f32.mrb[0].mxu0
        %v9798 = vadd.f32 %v9684, %v9797
        %v9799 = vpop.f32.mrb[0].mxu0
        %v9800 = vadd.f32 %v9689, %v9799
        %v9801 = vpop.f32.mrb[0].mxu0
        %v9802 = vadd.f32 %v9689, %v9801
        %9803 = vdwg.mxu0
        %v9804 = vadd.f32 %v9766, %v6428
        %v9805 = vadd.f32 %v9768, %v6429
        %v9806 = vadd.f32 %v9770, %v6430
        %v9807 = vadd.f32 %v9772, %v6431
        %v9808 = vadd.f32 %v9776, %v6432
        %v9809 = vadd.f32 %v9778, %v6433
        %v9810 = vadd.f32 %v9780, %v6434
        %v9811 = vadd.f32 %v9782, %v6435
        %v9812 = vadd.f32 %v9786, %v6436
        %v9813 = vadd.f32 %v9788, %v6437
        %v9814 = vadd.f32 %v9790, %v6438
        %v9815 = vadd.f32 %v9792, %v6439
        %v9816 = vadd.f32 %v9796, %v6440
        %v9817 = vadd.f32 %v9798, %v6441
        %v9818 = vadd.f32 %v9800, %v6442
        %v9819 = vadd.f32 %v9802, %v6443
        %s9820 = scalar_lea.vmem %s5, 128
        %v9821 = vld [vmem:[%s9820] sm:$0xf]
        %v9822 = vld [vmem:[%s9820 + $0x4] sm:$0xf]
        %v9823 = vld [vmem:[%s9820 + $0x8] sm:$0xf]
        %v9824 = vld [vmem:[%s9820 + $0xc] sm:$0xf]
        %v9825 = vld [vmem:[%s9820 + $0x10] sm:$0xf]
        %v9826 = vld [vmem:[%s9820 + $0x14] sm:$0xf]
        %v9827 = vld [vmem:[%s9820 + $0x18] sm:$0xf]
        %v9828 = vld [vmem:[%s9820 + $0x1c] sm:$0xf]
        %v9829 = vpack.c.bf16 %v9806, %v9804
        %v9830 = vpack.c.bf16 %v9807, %v9805
        %v9831 = vpack.c.bf16 %v9810, %v9808
        %v9832 = vpack.c.bf16 %v9811, %v9809
        %v9833 = vpack.c.bf16 %v9814, %v9812
        %v9834 = vpack.c.bf16 %v9815, %v9813
        %v9835 = vpack.c.bf16 %v9818, %v9816
        %v9836 = vpack.c.bf16 %v9819, %v9817
        %9837 = vset.pattern.permute.xlu0 12
        %9838 = vperm.xlu0 %9837, %v9643
        %v9839 = vpop.permute.xlu0 %9838
        %9841 = vset.pattern.permute.xlu0 12
        %9842 = vperm.xlu0 %9841, %v9644
        %v9843 = vpop.permute.xlu0 %9842
        %9845 = vset.pattern.permute.xlu0 12
        %9846 = vperm.xlu0 %9845, %v9645
        %v9847 = vpop.permute.xlu0 %9846
        %9849 = vset.pattern.permute.xlu0 12
        %9850 = vperm.xlu0 %9849, %v9646
        %v9851 = vpop.permute.xlu0 %9850
        %9853 = vset.pattern.permute.xlu0 12
        %9854 = vperm.xlu0 %9853, %v9647
        %v9855 = vpop.permute.xlu0 %9854
        %9857 = vset.pattern.permute.xlu0 12
        %9858 = vperm.xlu0 %9857, %v9648
        %v9859 = vpop.permute.xlu0 %9858
        %9861 = vset.pattern.permute.xlu0 12
        %9862 = vperm.xlu0 %9861, %v9649
        %v9863 = vpop.permute.xlu0 %9862
        %9865 = vset.pattern.permute.xlu0 12
        %9866 = vperm.xlu0 %9865, %v9650
        %v9867 = vpop.permute.xlu0 %9866
        %v9877 = vunpack.c.l.b16 %v9821
        %v9878 = vunpack.c.l.b16 %v9822
        %v9879 = vunpack.c.l.b16 %v9823
        %v9880 = vunpack.c.l.b16 %v9824
        %v9881 = vunpack.c.l.b16 %v9825
        %v9882 = vunpack.c.l.b16 %v9826
        %v9883 = vunpack.c.l.b16 %v9827
        %v9884 = vunpack.c.l.b16 %v9828
        %v9885 = vpack.c.b16 %v9878, %v9877
        %v9886 = vpack.c.b16 %v9880, %v9879
        %v9887 = vpack.c.b16 %v9882, %v9881
        %v9888 = vpack.c.b16 %v9884, %v9883
        %v9890 = vsel %vm431, %v9885, 0
        %v9893 = vsel %vm431, %v9886, 0
        %v9896 = vsel %vm431, %v9887, 0
        %v9899 = vsel %vm431, %v9888, 0
        %9901 = vmatprep.subr.bf16.mxu0 %v9830
        %9902 = vmatpush1.bf16.msra.mxu0 %v9829
        %9903 = vmatprep.subr.bf16.mxu0 %v9832
        %9904 = vmatpush1.bf16.msra.mxu0 %v9831
        %9905 = vmatprep.subr.bf16.mxu0 %v9834
        %9906 = vmatpush1.bf16.msra.mxu0 %v9833
        %9907 = vmatprep.subr.bf16.mxu0 %v9836
        %9908 = vmatpush1.bf16.msra.mxu0 %v9835
        %9909 = vmatprep.subr.bf16.mxu0 0
        %9910 = vmatpush1.bf16.msra.mxu0 0
        %9911 = vmatprep.subr.bf16.mxu0 0
        %9912 = vmatpush1.bf16.msra.mxu0 0
        %9913 = vmatprep.subr.bf16.mxu0 0
        %9914 = vmatpush1.bf16.msra.mxu0 0
        %9915 = vmatprep.subr.bf16.mxu0 0
        %9916 = vmatpush1.bf16.msra.mxu0 0
        %9917 = vmatprep.subr.bf16.mxu0 0
        %9918 = vmatpush1.bf16.msra.mxu0 0
        %9919 = vmatprep.subr.bf16.mxu0 0
        %9920 = vmatpush1.bf16.msra.mxu0 0
        %9921 = vmatprep.subr.bf16.mxu0 0
        %9922 = vmatpush1.bf16.msra.mxu0 0
        %9923 = vmatprep.subr.bf16.mxu0 0
        %9924 = vmatpush1.bf16.msra.mxu0 0
        %9925 = vmatprep.subr.bf16.mxu0 0
        %9926 = vmatpush1.bf16.msra.mxu0 0
        %9927 = vmatprep.subr.bf16.mxu0 0
        %9928 = vmatpush1.bf16.msra.mxu0 0
        %9929 = vmatprep.subr.bf16.mxu0 0
        %9930 = vmatpush1.bf16.msra.mxu0 0
        %9931 = vmatprep.subr.bf16.mxu0 0
        %9932 = vmatpush1.bf16.msra.mxu0 0
        %9933 = vmatprep.mubr.bf16.mxu0 0
        %9934 = vmatmul.mubr.bf16.gmra.mrb[0].mxu0 %v9890
        %v9935 = vpop.f32.mrb[0].mxu0
        %v9936 = vadd.f32 %v9839, %v9935
        %v9937 = vpop.f32.mrb[0].mxu0
        %v9938 = vadd.f32 %v9839, %v9937
        %v9939 = vpop.f32.mrb[0].mxu0
        %v9940 = vadd.f32 %v9843, %v9939
        %v9941 = vpop.f32.mrb[0].mxu0
        %v9942 = vadd.f32 %v9843, %v9941
        %9943 = vmatprep.mubr.bf16.mxu0 0
        %9944 = vmatmul.mubr.bf16.gmra.mrb[0].mxu0 %v9893
        %v9945 = vpop.f32.mrb[0].mxu0
        %v9946 = vadd.f32 %v9847, %v9945
        %v9947 = vpop.f32.mrb[0].mxu0
        %v9948 = vadd.f32 %v9847, %v9947
        %v9949 = vpop.f32.mrb[0].mxu0
        %v9950 = vadd.f32 %v9851, %v9949
        %v9951 = vpop.f32.mrb[0].mxu0
        %v9952 = vadd.f32 %v9851, %v9951
        %9953 = vmatprep.mubr.bf16.mxu0 0
        %9954 = vmatmul.mubr.bf16.gmra.mrb[0].mxu0 %v9896
        %v9955 = vpop.f32.mrb[0].mxu0
        %v9956 = vadd.f32 %v9855, %v9955
        %v9957 = vpop.f32.mrb[0].mxu0
        %v9958 = vadd.f32 %v9855, %v9957
        %v9959 = vpop.f32.mrb[0].mxu0
        %v9960 = vadd.f32 %v9859, %v9959
        %v9961 = vpop.f32.mrb[0].mxu0
        %v9962 = vadd.f32 %v9859, %v9961
        %9963 = vmatprep.mubr.bf16.mxu0 0
        %9964 = vmatmul.mubr.bf16.gmra.mrb[0].mxu0 %v9899
        %v9965 = vpop.f32.mrb[0].mxu0
        %v9966 = vadd.f32 %v9863, %v9965
        %v9967 = vpop.f32.mrb[0].mxu0
        %v9968 = vadd.f32 %v9863, %v9967
        %v9969 = vpop.f32.mrb[0].mxu0
        %v9970 = vadd.f32 %v9867, %v9969
        %v9971 = vpop.f32.mrb[0].mxu0
        %v9972 = vadd.f32 %v9867, %v9971
        %9973 = vdwg.mxu0
        %v9974 = vld [vmem:[%s372] sm:$0xff]
        %v9975 = vld [vmem:[%s372 + $0x8] sm:$0xff]
        %v9976 = vld [vmem:[%s372 + $0x10] sm:$0xff]
        %v9977 = vld [vmem:[%s372 + $0x18] sm:$0xff]
        %v9978 = vld [vmem:[%s372 + $0x20] sm:$0xff]
        %v9979 = vld [vmem:[%s372 + $0x28] sm:$0xff]
        %v9980 = vld [vmem:[%s372 + $0x30] sm:$0xff]
        %v9981 = vld [vmem:[%s372 + $0x38] sm:$0xff]
        %v9982 = vld [vmem:[%s372 + $0x40] sm:$0xff]
        %v9983 = vld [vmem:[%s372 + $0x48] sm:$0xff]
        %v9984 = vld [vmem:[%s372 + $0x50] sm:$0xff]
        %v9985 = vld [vmem:[%s372 + $0x58] sm:$0xff]
        %v9986 = vld [vmem:[%s372 + $0x60] sm:$0xff]
        %v9987 = vld [vmem:[%s372 + $0x68] sm:$0xff]
        %v9988 = vld [vmem:[%s372 + $0x70] sm:$0xff]
        %v9989 = vld [vmem:[%s372 + $0x78] sm:$0xff]
        %v9990 = vadd.f32 %v9936, %v9974
        %v9991 = vadd.f32 %v9938, %v9975
        %v9992 = vadd.f32 %v9940, %v9976
        %v9993 = vadd.f32 %v9942, %v9977
        %v9994 = vadd.f32 %v9946, %v9978
        %v9995 = vadd.f32 %v9948, %v9979
        %v9996 = vadd.f32 %v9950, %v9980
        %v9997 = vadd.f32 %v9952, %v9981
        %v9998 = vadd.f32 %v9956, %v9982
        %v9999 = vadd.f32 %v9958, %v9983
        %v10000 = vadd.f32 %v9960, %v9984
        %v10001 = vadd.f32 %v9962, %v9985
        %v10002 = vadd.f32 %v9966, %v9986
        %v10003 = vadd.f32 %v9968, %v9987
        %v10004 = vadd.f32 %v9970, %v9988
        %v10005 = vadd.f32 %v9972, %v9989
        %10006 = vst [vmem:[%s367] sm:$0xff] %v9990
        %10007 = vst [vmem:[%s367 + $0x8] sm:$0xff] %v9991
        %10008 = vst [vmem:[%s367 + $0x10] sm:$0xff] %v9992
        %10009 = vst [vmem:[%s367 + $0x18] sm:$0xff] %v9993
        %10010 = vst [vmem:[%s367 + $0x20] sm:$0xff] %v9994
        %10011 = vst [vmem:[%s367 + $0x28] sm:$0xff] %v9995
        %10012 = vst [vmem:[%s367 + $0x30] sm:$0xff] %v9996
        %10013 = vst [vmem:[%s367 + $0x38] sm:$0xff] %v9997
        %10014 = vst [vmem:[%s367 + $0x40] sm:$0xff] %v9998
        %10015 = vst [vmem:[%s367 + $0x48] sm:$0xff] %v9999
        %10016 = vst [vmem:[%s367 + $0x50] sm:$0xff] %v10000
        %10017 = vst [vmem:[%s367 + $0x58] sm:$0xff] %v10001
        %10018 = vst [vmem:[%s367 + $0x60] sm:$0xff] %v10002
        %10019 = vst [vmem:[%s367 + $0x68] sm:$0xff] %v10003
        %10020 = vst [vmem:[%s367 + $0x70] sm:$0xff] %v10004
        %10021 = vst [vmem:[%s367 + $0x78] sm:$0xff] %v10005
        %s10022 = sand.u32 %s252, 1
        %s10023 = scalar_lea.sflag [#allocation5], %s10022
        %s10024 = sand.u32 %s252, 1
        %s10025 = smul.addr %s10024, 128
        %s10026 = scalar_lea.vmem [#allocation4], %s10025
        // Predicated region
        $region61: #{tpu_custom_call.1} parent=59 // pred_check
          %p10027 = pneg %p262
        $region62: #{tpu_custom_call.1} parent=59 // pred_check_branch
          %10029 = sbr.rel (%p10027) target = $region64
        $region63: #{tpu_custom_call.1} parent=59 // pred_region
          %s10031 = ssub.s32 2048, 2048
          %10032 = vsyncadd %s10023, %s10031
          %s10033 = smul.addr %s24, 16
          %s10034 = smul.addr %s10033, 128
          %s10035 = scalar_lea.hbm %s10, %s10034
          %s10036 = sshll.u32 %s10026, 4
          %s10037 = int_to_ptr.vmem [resolvable:$true] %s10036
          %10042 = dma.vmem_to_hbm [thread:$0]  %s10037, 2048, %s10035, %s10023, 256, 256, 16
        $region64: #{tpu_custom_call.1} parent=59 // pred_fallthru
          _
      $region60: #{tpu_custom_call.1} parent=5 // pred_fallthru
        _
      %p10043 = scmp.le.s32.totalorder 2, %s19
      // Predicated region
      $region65: #{tpu_custom_call.1} parent=5 // pred_check
        %p10044 = pneg %p10043
      $region66: #{tpu_custom_call.1} parent=5 // pred_check_branch
        %10046 = sbr.rel (%p10044) target = $region68
      $region67: #{tpu_custom_call.1} parent=5 // pred_region
        %s10047 = ssub.s32 %s19, 2
        // Predicated region
        $region69: #{tpu_custom_call.1} parent=67 // pred_check
          %p10048 = pneg %p268
        $region70: #{tpu_custom_call.1} parent=67 // pred_check_branch
          %10050 = sbr.rel (%p10048) target = $region72
        $region71: #{tpu_custom_call.1} parent=67 // pred_region
          %s10051 = sand.u32 %s253, 1
          %s10052 = scalar_lea.sflag [#allocation5], %s10051
          %s10053 = sand.u32 %s253, 1
          %s10054 = smul.addr %s10053, 128
          %s10055 = scalar_lea.vmem [#allocation4], %s10054
          %10056 = dma.done %s10052, 2048
        $region72: #{tpu_custom_call.1} parent=67 // pred_fallthru
          _
      $region68: #{tpu_custom_call.1} parent=5 // pred_fallthru
        _
    $region6: #{tpu_custom_call.1} parent=1 // loop_footer
      %s23 = sadd.s32 1, %s19
    $region7: #{tpu_custom_call.1} parent=1 // loop_footer_branch
      %18 = sbr.rel target = $region3
    $region8: #{tpu_custom_call.1} parent=1 // loop_exit
      _
    %10057 = vsyncpa [#allocation5], 1
    %s10058 = scalar_lea.sflag [#allocation5], 1
    %10059 = vsyncpa %s10058, 1

</llo_original>
